<compile_context>
chip_gen: v5e
topology: v5e:2x2
jax: 0.10.0
libtpu: 0.0.40
codegen_flags: <defaults>
</compile_context>

<pallas_src>
import functools

import numpy as np
import jax
import jax.numpy as jnp
from jax.experimental import pallas as pl
from jax.experimental.pallas import tpu as pltpu


# ---------------------------------------------------------------------------
# Kernel: pure data movement, native dtype.
# ---------------------------------------------------------------------------
def _pixel_shuffle3d_kernel(x_ref, o_ref, *, r, H, W, cg, combined_store):
    """x_ref: (cg*r^3, dc, H, W)  ->  o_ref: (cg, dc*r, H, r*W*r)."""
    dc = x_ref.shape[1]
    for g in range(cg):                                   # static unroll (tiny)
        base = g * r ** 3
        groups = []
        for r2 in range(r):
            ys = []
            for r1 in range(r):
                # The r input planes that interleave along W for this (r1, r2).
                planes = [x_ref[base + (r1 * r + r2) * r + r3]
                          for r3 in range(r)]                       # (dc, H, W)
                # W (lane) interleave: new trailing axis + minor-dim merge.
                y = jnp.stack(planes, axis=-1).reshape(dc, H, W * r)
                ys.append(y)
            # Depth (D) interleave: merge leading dims only (layout-safe).
            z = jnp.stack(ys, axis=1).reshape(dc * r, H, W * r)
            groups.append(z)
        if combined_store:
            # H interleave is carried by the (H, r*W*r) output layout; build
            # the whole block in-register and do one lane-dense full store.
            full = jnp.stack(groups, axis=2).reshape(dc * r, H, r * W * r)
            o_ref[g] = full
        else:
            # Verified fallback: one contiguous lane-slice store per r2.
            for r2 in range(r):
                o_ref[g, :, :, r2 * (W * r):(r2 + 1) * (W * r)] = groups[r2]


def _choose_chunks(Cout, D, r, H, W, itemsize, budget_bytes=2 * 1024 * 1024):
    """Pick (cg, dc): depth chunk first, then channel group if full D fits."""
    plane = (r ** 3) * H * W * itemsize      # one out-channel, one depth slice
    dc = 1
    for cand in range(1, D + 1):
        if D % cand == 0 and cand * plane <= budget_bytes:
            dc = cand
    cg = 1
    if dc == D:
        for cand in range(1, Cout + 1):
            if Cout % cand == 0 and cand * D * plane <= budget_bytes:
                cg = cand
    return cg, dc


def _pixel_shuffle_3d_pallas(x, r, combined_store):
    B, C, D, H, W = x.shape
    Cout = C // r ** 3
    itemsize = jnp.dtype(x.dtype).itemsize
    cg, dc = _choose_chunks(Cout, D, r, H, W, itemsize)

    kernel = functools.partial(_pixel_shuffle3d_kernel, r=r, H=H, W=W, cg=cg,
                               combined_store=combined_store)

    # Output declared as (B, Cout, D*r, H, r*W*r); reshaping afterwards to
    # (B, Cout, D*r, H*r, W*r) is free (same contiguous memory order).
    out = pl.pallas_call(
        kernel,
        out_shape=jax.ShapeDtypeStruct((B, Cout, D * r, H, r * W * r), x.dtype),
        grid=(B, Cout // cg, D // dc),
        in_specs=[
            # cg output channels worth of source channels (cg*r^3), a depth
            # chunk, and full (H, W) planes -> long contiguous input DMAs.
            pl.BlockSpec((None, cg * r ** 3, dc, H, W),
                         lambda b, c, d: (b, c, d, 0, 0)),
        ],
        out_specs=pl.BlockSpec((None, cg, dc * r, H, r * W * r),
                               lambda b, c, d: (b, c, d, 0, 0)),
        compiler_params=pltpu.CompilerParams(
            dimension_semantics=("parallel", "parallel", "parallel"),
            vmem_limit_bytes=32 * 1024 * 1024),
    )(x)
    return out.reshape(B, Cout, D * r, H * r, W * r)


# ---------------------------------------------------------------------------
# Public entry point.
# ---------------------------------------------------------------------------
def pixel_shuffle_3d(x, upscale_factor):
    r = int(upscale_factor)
    B, C, D, H, W = x.shape
    assert C % (r ** 3) == 0, "channels must be divisible by upscale_factor^3"
    if r == 1:
        return x
    try:
        out = _pixel_shuffle_3d_pallas(x, r, combined_store=True)
        return jax.block_until_ready(out)
    except Exception:
        # TODO(synk): drop this fallback once the combined in-register store is
        # confirmed to lower on all toolchains; slice-store path is verified.
        return _pixel_shuffle_3d_pallas(x, r, combined_store=False)


def pixel_shuffle_3d_ref(x, r):
    """Pure-JAX reference matching the PyTorch forward exactly."""
    B, C, D, H, W = x.shape
    Cout = C // r ** 3
    y = x.reshape(B, Cout, r, r, r, D, H, W)
    y = jnp.transpose(y, (0, 1, 5, 2, 6, 3, 7, 4))
    return y.reshape(B, Cout, D * r, H * r, W * r)


if __name__ == "__main__":
    key = jax.random.PRNGKey(0)

    # Case 1: matches the small module-implied shapes.
    r = 2
    B, C, D, H, W = 2, 16, 4, 4, 4      # -> out (2, 2, 8, 8, 8)
    k1, k2 = jax.random.split(key)
    x1 = jax.random.normal(k1, (B, C, D, H, W), dtype=jnp.float32)
    out1 = jax.block_until_ready(pixel_shuffle_3d(x1, r))
    ref1 = pixel_shuffle_3d_ref(x1, r)
    np.testing.assert_allclose(np.asarray(out1), np.asarray(ref1),
                               rtol=1e-6, atol=1e-6)

    # Case 2: slightly larger spatial extent (exercises lane-dense store path).
    x2 = jax.random.normal(k2, (1, 8, 2, 8, 8), dtype=jnp.float32)
    out2 = jax.block_until_ready(pixel_shuffle_3d(x2, 2))
    ref2 = pixel_shuffle_3d_ref(x2, 2)
    np.testing.assert_allclose(np.asarray(out2), np.asarray(ref2),
                               rtol=1e-6, atol=1e-6)

    print("KERNEL_OK")
</pallas_src>

<mosaic_0001>
module attributes {stable_mosaic.version = 11 : i64} {
  func.func @_pixel_shuffle3d_kernel(%arg0: i32, %arg1: i32, %arg2: i32, %arg3: memref<1x16x4x4x4xf32, #tpu.memory_space<vmem>>, %arg4: memref<1x2x8x4x16xf32, #tpu.memory_space<vmem>>) attributes {dimension_semantics = [#tpu.dimension_semantics<parallel>, #tpu.dimension_semantics<parallel>, #tpu.dimension_semantics<parallel>], iteration_bounds = array<i64: 2, 1, 1>, scalar_prefetch = 0 : i64, scratch_operands = 0 : i64, tpu.core_type = #tpu.core_type<tc>, window_params = [{transform_indices = @transform_0, window_bounds = array<i64: 1, 16, 4, 4, 4>}, {transform_indices = @transform_1, window_bounds = array<i64: 1, 2, 8, 4, 16>}]} {
    %c0 = arith.constant 0 : index
    %c0_0 = arith.constant 0 : index
    %c0_1 = arith.constant 0 : index
    %c0_2 = arith.constant 0 : index
    %c0_3 = arith.constant 0 : index
    %0 = vector.load %arg3[%c0, %c0_0, %c0_1, %c0_2, %c0_3] : memref<1x16x4x4x4xf32, #tpu.memory_space<vmem>>, vector<1x1x4x4x4xf32>
    %1 = vector.shape_cast %0 : vector<1x1x4x4x4xf32> to vector<4x4x4xf32>
    %c0_4 = arith.constant 0 : index
    %c1 = arith.constant 1 : index
    %c0_5 = arith.constant 0 : index
    %c0_6 = arith.constant 0 : index
    %c0_7 = arith.constant 0 : index
    %2 = vector.load %arg3[%c0_4, %c1, %c0_5, %c0_6, %c0_7] : memref<1x16x4x4x4xf32, #tpu.memory_space<vmem>>, vector<1x1x4x4x4xf32>
    %3 = vector.shape_cast %2 : vector<1x1x4x4x4xf32> to vector<4x4x4xf32>
    %4 = vector.shape_cast %1 : vector<4x4x4xf32> to vector<4x4x4x1xf32>
    %5 = vector.shape_cast %3 : vector<4x4x4xf32> to vector<4x4x4x1xf32>
    %6 = tpu.concatenate %4, %5 in 3 : vector<4x4x4x1xf32>, vector<4x4x4x1xf32> -> vector<4x4x4x2xf32>
    %7 = vector.shape_cast %6 : vector<4x4x4x2xf32> to vector<4x4x8xf32>
    %c0_8 = arith.constant 0 : index
    %c4 = arith.constant 4 : index
    %c0_9 = arith.constant 0 : index
    %c0_10 = arith.constant 0 : index
    %c0_11 = arith.constant 0 : index
    %8 = vector.load %arg3[%c0_8, %c4, %c0_9, %c0_10, %c0_11] : memref<1x16x4x4x4xf32, #tpu.memory_space<vmem>>, vector<1x1x4x4x4xf32>
    %9 = vector.shape_cast %8 : vector<1x1x4x4x4xf32> to vector<4x4x4xf32>
    %c0_12 = arith.constant 0 : index
    %c5 = arith.constant 5 : index
    %c0_13 = arith.constant 0 : index
    %c0_14 = arith.constant 0 : index
    %c0_15 = arith.constant 0 : index
    %10 = vector.load %arg3[%c0_12, %c5, %c0_13, %c0_14, %c0_15] : memref<1x16x4x4x4xf32, #tpu.memory_space<vmem>>, vector<1x1x4x4x4xf32>
    %11 = vector.shape_cast %10 : vector<1x1x4x4x4xf32> to vector<4x4x4xf32>
    %12 = vector.shape_cast %9 : vector<4x4x4xf32> to vector<4x4x4x1xf32>
    %13 = vector.shape_cast %11 : vector<4x4x4xf32> to vector<4x4x4x1xf32>
    %14 = tpu.concatenate %12, %13 in 3 : vector<4x4x4x1xf32>, vector<4x4x4x1xf32> -> vector<4x4x4x2xf32>
    %15 = vector.shape_cast %14 : vector<4x4x4x2xf32> to vector<4x4x8xf32>
    %16 = vector.shape_cast %7 : vector<4x4x8xf32> to vector<4x1x4x8xf32>
    %17 = vector.shape_cast %15 : vector<4x4x8xf32> to vector<4x1x4x8xf32>
    %18 = tpu.concatenate %16, %17 in 1 : vector<4x1x4x8xf32>, vector<4x1x4x8xf32> -> vector<4x2x4x8xf32>
    %19 = vector.shape_cast %18 : vector<4x2x4x8xf32> to vector<8x4x8xf32>
    %c0_16 = arith.constant 0 : index
    %c2 = arith.constant 2 : index
    %c0_17 = arith.constant 0 : index
    %c0_18 = arith.constant 0 : index
    %c0_19 = arith.constant 0 : index
    %20 = vector.load %arg3[%c0_16, %c2, %c0_17, %c0_18, %c0_19] : memref<1x16x4x4x4xf32, #tpu.memory_space<vmem>>, vector<1x1x4x4x4xf32>
    %21 = vector.shape_cast %20 : vector<1x1x4x4x4xf32> to vector<4x4x4xf32>
    %c0_20 = arith.constant 0 : index
    %c3 = arith.constant 3 : index
    %c0_21 = arith.constant 0 : index
    %c0_22 = arith.constant 0 : index
    %c0_23 = arith.constant 0 : index
    %22 = vector.load %arg3[%c0_20, %c3, %c0_21, %c0_22, %c0_23] : memref<1x16x4x4x4xf32, #tpu.memory_space<vmem>>, vector<1x1x4x4x4xf32>
    %23 = vector.shape_cast %22 : vector<1x1x4x4x4xf32> to vector<4x4x4xf32>
    %24 = vector.shape_cast %21 : vector<4x4x4xf32> to vector<4x4x4x1xf32>
    %25 = vector.shape_cast %23 : vector<4x4x4xf32> to vector<4x4x4x1xf32>
    %26 = tpu.concatenate %24, %25 in 3 : vector<4x4x4x1xf32>, vector<4x4x4x1xf32> -> vector<4x4x4x2xf32>
    %27 = vector.shape_cast %26 : vector<4x4x4x2xf32> to vector<4x4x8xf32>
    %c0_24 = arith.constant 0 : index
    %c6 = arith.constant 6 : index
    %c0_25 = arith.constant 0 : index
    %c0_26 = arith.constant 0 : index
    %c0_27 = arith.constant 0 : index
    %28 = vector.load %arg3[%c0_24, %c6, %c0_25, %c0_26, %c0_27] : memref<1x16x4x4x4xf32, #tpu.memory_space<vmem>>, vector<1x1x4x4x4xf32>
    %29 = vector.shape_cast %28 : vector<1x1x4x4x4xf32> to vector<4x4x4xf32>
    %c0_28 = arith.constant 0 : index
    %c7 = arith.constant 7 : index
    %c0_29 = arith.constant 0 : index
    %c0_30 = arith.constant 0 : index
    %c0_31 = arith.constant 0 : index
    %30 = vector.load %arg3[%c0_28, %c7, %c0_29, %c0_30, %c0_31] : memref<1x16x4x4x4xf32, #tpu.memory_space<vmem>>, vector<1x1x4x4x4xf32>
    %31 = vector.shape_cast %30 : vector<1x1x4x4x4xf32> to vector<4x4x4xf32>
    %32 = vector.shape_cast %29 : vector<4x4x4xf32> to vector<4x4x4x1xf32>
    %33 = vector.shape_cast %31 : vector<4x4x4xf32> to vector<4x4x4x1xf32>
    %34 = tpu.concatenate %32, %33 in 3 : vector<4x4x4x1xf32>, vector<4x4x4x1xf32> -> vector<4x4x4x2xf32>
    %35 = vector.shape_cast %34 : vector<4x4x4x2xf32> to vector<4x4x8xf32>
    %36 = vector.shape_cast %27 : vector<4x4x8xf32> to vector<4x1x4x8xf32>
    %37 = vector.shape_cast %35 : vector<4x4x8xf32> to vector<4x1x4x8xf32>
    %38 = tpu.concatenate %36, %37 in 1 : vector<4x1x4x8xf32>, vector<4x1x4x8xf32> -> vector<4x2x4x8xf32>
    %39 = vector.shape_cast %38 : vector<4x2x4x8xf32> to vector<8x4x8xf32>
    %40 = vector.shape_cast %19 : vector<8x4x8xf32> to vector<8x4x1x8xf32>
    %41 = vector.shape_cast %39 : vector<8x4x8xf32> to vector<8x4x1x8xf32>
    %42 = tpu.concatenate %40, %41 in 2 : vector<8x4x1x8xf32>, vector<8x4x1x8xf32> -> vector<8x4x2x8xf32>
    %43 = vector.shape_cast %42 : vector<8x4x2x8xf32> to vector<8x4x16xf32>
    %c0_32 = arith.constant 0 : index
    %c0_33 = arith.constant 0 : index
    %c0_34 = arith.constant 0 : index
    %c0_35 = arith.constant 0 : index
    %c0_36 = arith.constant 0 : index
    %44 = vector.load %arg4[%c0_32, %c0_33, %c0_34, %c0_35, %c0_36] : memref<1x2x8x4x16xf32, #tpu.memory_space<vmem>>, vector<1x1x8x4x16xf32>
    %45 = vector.shape_cast %44 : vector<1x1x8x4x16xf32> to vector<8x4x16xf32>
    %46 = vector.shape_cast %43 : vector<8x4x16xf32> to vector<1x1x8x4x16xf32>
    tpu.vector_store %arg4[%c0_32, %c0_33, %c0_34, %c0_35, %c0_36], %46 {strides = array<i32>} : memref<1x2x8x4x16xf32, #tpu.memory_space<vmem>>, vector<1x1x8x4x16xf32>,
    %c0_37 = arith.constant 0 : index
    %c8 = arith.constant 8 : index
    %c0_38 = arith.constant 0 : index
    %c0_39 = arith.constant 0 : index
    %c0_40 = arith.constant 0 : index
    %47 = vector.load %arg3[%c0_37, %c8, %c0_38, %c0_39, %c0_40] : memref<1x16x4x4x4xf32, #tpu.memory_space<vmem>>, vector<1x1x4x4x4xf32>
    %48 = vector.shape_cast %47 : vector<1x1x4x4x4xf32> to vector<4x4x4xf32>
    %c0_41 = arith.constant 0 : index
    %c9 = arith.constant 9 : index
    %c0_42 = arith.constant 0 : index
    %c0_43 = arith.constant 0 : index
    %c0_44 = arith.constant 0 : index
    %49 = vector.load %arg3[%c0_41, %c9, %c0_42, %c0_43, %c0_44] : memref<1x16x4x4x4xf32, #tpu.memory_space<vmem>>, vector<1x1x4x4x4xf32>
    %50 = vector.shape_cast %49 : vector<1x1x4x4x4xf32> to vector<4x4x4xf32>
    %51 = vector.shape_cast %48 : vector<4x4x4xf32> to vector<4x4x4x1xf32>
    %52 = vector.shape_cast %50 : vector<4x4x4xf32> to vector<4x4x4x1xf32>
    %53 = tpu.concatenate %51, %52 in 3 : vector<4x4x4x1xf32>, vector<4x4x4x1xf32> -> vector<4x4x4x2xf32>
    %54 = vector.shape_cast %53 : vector<4x4x4x2xf32> to vector<4x4x8xf32>
    %c0_45 = arith.constant 0 : index
    %c12 = arith.constant 12 : index
    %c0_46 = arith.constant 0 : index
    %c0_47 = arith.constant 0 : index
    %c0_48 = arith.constant 0 : index
    %55 = vector.load %arg3[%c0_45, %c12, %c0_46, %c0_47, %c0_48] : memref<1x16x4x4x4xf32, #tpu.memory_space<vmem>>, vector<1x1x4x4x4xf32>
    %56 = vector.shape_cast %55 : vector<1x1x4x4x4xf32> to vector<4x4x4xf32>
    %c0_49 = arith.constant 0 : index
    %c13 = arith.constant 13 : index
    %c0_50 = arith.constant 0 : index
    %c0_51 = arith.constant 0 : index
    %c0_52 = arith.constant 0 : index
    %57 = vector.load %arg3[%c0_49, %c13, %c0_50, %c0_51, %c0_52] : memref<1x16x4x4x4xf32, #tpu.memory_space<vmem>>, vector<1x1x4x4x4xf32>
    %58 = vector.shape_cast %57 : vector<1x1x4x4x4xf32> to vector<4x4x4xf32>
    %59 = vector.shape_cast %56 : vector<4x4x4xf32> to vector<4x4x4x1xf32>
    %60 = vector.shape_cast %58 : vector<4x4x4xf32> to vector<4x4x4x1xf32>
    %61 = tpu.concatenate %59, %60 in 3 : vector<4x4x4x1xf32>, vector<4x4x4x1xf32> -> vector<4x4x4x2xf32>
    %62 = vector.shape_cast %61 : vector<4x4x4x2xf32> to vector<4x4x8xf32>
    %63 = vector.shape_cast %54 : vector<4x4x8xf32> to vector<4x1x4x8xf32>
    %64 = vector.shape_cast %62 : vector<4x4x8xf32> to vector<4x1x4x8xf32>
    %65 = tpu.concatenate %63, %64 in 1 : vector<4x1x4x8xf32>, vector<4x1x4x8xf32> -> vector<4x2x4x8xf32>
    %66 = vector.shape_cast %65 : vector<4x2x4x8xf32> to vector<8x4x8xf32>
    %c0_53 = arith.constant 0 : index
    %c10 = arith.constant 10 : index
    %c0_54 = arith.constant 0 : index
    %c0_55 = arith.constant 0 : index
    %c0_56 = arith.constant 0 : index
    %67 = vector.load %arg3[%c0_53, %c10, %c0_54, %c0_55, %c0_56] : memref<1x16x4x4x4xf32, #tpu.memory_space<vmem>>, vector<1x1x4x4x4xf32>
    %68 = vector.shape_cast %67 : vector<1x1x4x4x4xf32> to vector<4x4x4xf32>
    %c0_57 = arith.constant 0 : index
    %c11 = arith.constant 11 : index
    %c0_58 = arith.constant 0 : index
    %c0_59 = arith.constant 0 : index
    %c0_60 = arith.constant 0 : index
    %69 = vector.load %arg3[%c0_57, %c11, %c0_58, %c0_59, %c0_60] : memref<1x16x4x4x4xf32, #tpu.memory_space<vmem>>, vector<1x1x4x4x4xf32>
    %70 = vector.shape_cast %69 : vector<1x1x4x4x4xf32> to vector<4x4x4xf32>
    %71 = vector.shape_cast %68 : vector<4x4x4xf32> to vector<4x4x4x1xf32>
    %72 = vector.shape_cast %70 : vector<4x4x4xf32> to vector<4x4x4x1xf32>
    %73 = tpu.concatenate %71, %72 in 3 : vector<4x4x4x1xf32>, vector<4x4x4x1xf32> -> vector<4x4x4x2xf32>
    %74 = vector.shape_cast %73 : vector<4x4x4x2xf32> to vector<4x4x8xf32>
    %c0_61 = arith.constant 0 : index
    %c14 = arith.constant 14 : index
    %c0_62 = arith.constant 0 : index
    %c0_63 = arith.constant 0 : index
    %c0_64 = arith.constant 0 : index
    %75 = vector.load %arg3[%c0_61, %c14, %c0_62, %c0_63, %c0_64] : memref<1x16x4x4x4xf32, #tpu.memory_space<vmem>>, vector<1x1x4x4x4xf32>
    %76 = vector.shape_cast %75 : vector<1x1x4x4x4xf32> to vector<4x4x4xf32>
    %c0_65 = arith.constant 0 : index
    %c15 = arith.constant 15 : index
    %c0_66 = arith.constant 0 : index
    %c0_67 = arith.constant 0 : index
    %c0_68 = arith.constant 0 : index
    %77 = vector.load %arg3[%c0_65, %c15, %c0_66, %c0_67, %c0_68] : memref<1x16x4x4x4xf32, #tpu.memory_space<vmem>>, vector<1x1x4x4x4xf32>
    %78 = vector.shape_cast %77 : vector<1x1x4x4x4xf32> to vector<4x4x4xf32>
    %79 = vector.shape_cast %76 : vector<4x4x4xf32> to vector<4x4x4x1xf32>
    %80 = vector.shape_cast %78 : vector<4x4x4xf32> to vector<4x4x4x1xf32>
    %81 = tpu.concatenate %79, %80 in 3 : vector<4x4x4x1xf32>, vector<4x4x4x1xf32> -> vector<4x4x4x2xf32>
    %82 = vector.shape_cast %81 : vector<4x4x4x2xf32> to vector<4x4x8xf32>
    %83 = vector.shape_cast %74 : vector<4x4x8xf32> to vector<4x1x4x8xf32>
    %84 = vector.shape_cast %82 : vector<4x4x8xf32> to vector<4x1x4x8xf32>
    %85 = tpu.concatenate %83, %84 in 1 : vector<4x1x4x8xf32>, vector<4x1x4x8xf32> -> vector<4x2x4x8xf32>
    %86 = vector.shape_cast %85 : vector<4x2x4x8xf32> to vector<8x4x8xf32>
    %87 = vector.shape_cast %66 : vector<8x4x8xf32> to vector<8x4x1x8xf32>
    %88 = vector.shape_cast %86 : vector<8x4x8xf32> to vector<8x4x1x8xf32>
    %89 = tpu.concatenate %87, %88 in 2 : vector<8x4x1x8xf32>, vector<8x4x1x8xf32> -> vector<8x4x2x8xf32>
    %90 = vector.shape_cast %89 : vector<8x4x2x8xf32> to vector<8x4x16xf32>
    %c0_69 = arith.constant 0 : index
    %c1_70 = arith.constant 1 : index
    %c0_71 = arith.constant 0 : index
    %c0_72 = arith.constant 0 : index
    %c0_73 = arith.constant 0 : index
    %91 = vector.load %arg4[%c0_69, %c1_70, %c0_71, %c0_72, %c0_73] : memref<1x2x8x4x16xf32, #tpu.memory_space<vmem>>, vector<1x1x8x4x16xf32>
    %92 = vector.shape_cast %91 : vector<1x1x8x4x16xf32> to vector<8x4x16xf32>
    %93 = vector.shape_cast %90 : vector<8x4x16xf32> to vector<1x1x8x4x16xf32>
    tpu.vector_store %arg4[%c0_69, %c1_70, %c0_71, %c0_72, %c0_73], %93 {strides = array<i32>} : memref<1x2x8x4x16xf32, #tpu.memory_space<vmem>>, vector<1x1x8x4x16xf32>,
    return
  }
  func.func @transform_0(%arg0: i32, %arg1: i32, %arg2: i32) -> (i32, i32, i32, i32, i32) {
    %c0_i32 = arith.constant 0 : i32
    %c0_i32_0 = arith.constant 0 : i32
    %c0_i32_1 = arith.constant 0 : i32
    return %arg0, %arg1, %arg2, %c0_i32, %c0_i32_0 : i32, i32, i32, i32, i32
  }
  func.func @transform_1(%arg0: i32, %arg1: i32, %arg2: i32) -> (i32, i32, i32, i32, i32) {
    %c0_i32 = arith.constant 0 : i32
    %c0_i32_0 = arith.constant 0 : i32
    %c0_i32_1 = arith.constant 0 : i32
    return %arg0, %arg1, %arg2, %c0_i32, %c0_i32_0 : i32, i32, i32, i32, i32
  }
}

module attributes {stable_mosaic.version = 11 : i64} {
  func.func @_pixel_shuffle3d_kernel(%arg0: i32, %arg1: i32, %arg2: i32, %arg3: memref<1x16x4x4x4xf32, #tpu.memory_space<vmem>>, %arg4: memref<1x2x8x4x16xf32, #tpu.memory_space<vmem>>) attributes {dimension_semantics = [#tpu.dimension_semantics<parallel>, #tpu.dimension_semantics<parallel>, #tpu.dimension_semantics<parallel>], iteration_bounds = array<i64: 2, 1, 1>, scalar_prefetch = 0 : i64, scratch_operands = 0 : i64, tpu.core_type = #tpu.core_type<tc>, window_params = [{transform_indices = @transform_0, window_bounds = array<i64: 1, 16, 4, 4, 4>}, {transform_indices = @transform_1, window_bounds = array<i64: 1, 2, 8, 4, 16>}]} {
    %c0 = arith.constant 0 : index
    %c0_0 = arith.constant 0 : index
    %c0_1 = arith.constant 0 : index
    %c0_2 = arith.constant 0 : index
    %c0_3 = arith.constant 0 : index
    %0 = vector.load %arg3[%c0, %c0_0, %c0_1, %c0_2, %c0_3] : memref<1x16x4x4x4xf32, #tpu.memory_space<vmem>>, vector<1x1x4x4x4xf32>
    %1 = vector.shape_cast %0 : vector<1x1x4x4x4xf32> to vector<4x4x4xf32>
    %c0_4 = arith.constant 0 : index
    %c1 = arith.constant 1 : index
    %c0_5 = arith.constant 0 : index
    %c0_6 = arith.constant 0 : index
    %c0_7 = arith.constant 0 : index
    %2 = vector.load %arg3[%c0_4, %c1, %c0_5, %c0_6, %c0_7] : memref<1x16x4x4x4xf32, #tpu.memory_space<vmem>>, vector<1x1x4x4x4xf32>
    %3 = vector.shape_cast %2 : vector<1x1x4x4x4xf32> to vector<4x4x4xf32>
    %4 = vector.shape_cast %1 : vector<4x4x4xf32> to vector<4x4x4x1xf32>
    %5 = vector.shape_cast %3 : vector<4x4x4xf32> to vector<4x4x4x1xf32>
    %6 = tpu.concatenate %4, %5 in 3 : vector<4x4x4x1xf32>, vector<4x4x4x1xf32> -> vector<4x4x4x2xf32>
    %7 = vector.shape_cast %6 : vector<4x4x4x2xf32> to vector<4x4x8xf32>
    %c0_8 = arith.constant 0 : index
    %c4 = arith.constant 4 : index
    %c0_9 = arith.constant 0 : index
    %c0_10 = arith.constant 0 : index
    %c0_11 = arith.constant 0 : index
    %8 = vector.load %arg3[%c0_8, %c4, %c0_9, %c0_10, %c0_11] : memref<1x16x4x4x4xf32, #tpu.memory_space<vmem>>, vector<1x1x4x4x4xf32>
    %9 = vector.shape_cast %8 : vector<1x1x4x4x4xf32> to vector<4x4x4xf32>
    %c0_12 = arith.constant 0 : index
    %c5 = arith.constant 5 : index
    %c0_13 = arith.constant 0 : index
    %c0_14 = arith.constant 0 : index
    %c0_15 = arith.constant 0 : index
    %10 = vector.load %arg3[%c0_12, %c5, %c0_13, %c0_14, %c0_15] : memref<1x16x4x4x4xf32, #tpu.memory_space<vmem>>, vector<1x1x4x4x4xf32>
    %11 = vector.shape_cast %10 : vector<1x1x4x4x4xf32> to vector<4x4x4xf32>
    %12 = vector.shape_cast %9 : vector<4x4x4xf32> to vector<4x4x4x1xf32>
    %13 = vector.shape_cast %11 : vector<4x4x4xf32> to vector<4x4x4x1xf32>
    %14 = tpu.concatenate %12, %13 in 3 : vector<4x4x4x1xf32>, vector<4x4x4x1xf32> -> vector<4x4x4x2xf32>
    %15 = vector.shape_cast %14 : vector<4x4x4x2xf32> to vector<4x4x8xf32>
    %16 = vector.shape_cast %7 : vector<4x4x8xf32> to vector<4x1x4x8xf32>
    %17 = vector.shape_cast %15 : vector<4x4x8xf32> to vector<4x1x4x8xf32>
    %18 = tpu.concatenate %16, %17 in 1 : vector<4x1x4x8xf32>, vector<4x1x4x8xf32> -> vector<4x2x4x8xf32>
    %19 = vector.shape_cast %18 : vector<4x2x4x8xf32> to vector<8x4x8xf32>
    %c0_16 = arith.constant 0 : index
    %c2 = arith.constant 2 : index
    %c0_17 = arith.constant 0 : index
    %c0_18 = arith.constant 0 : index
    %c0_19 = arith.constant 0 : index
    %20 = vector.load %arg3[%c0_16, %c2, %c0_17, %c0_18, %c0_19] : memref<1x16x4x4x4xf32, #tpu.memory_space<vmem>>, vector<1x1x4x4x4xf32>
    %21 = vector.shape_cast %20 : vector<1x1x4x4x4xf32> to vector<4x4x4xf32>
    %c0_20 = arith.constant 0 : index
    %c3 = arith.constant 3 : index
    %c0_21 = arith.constant 0 : index
    %c0_22 = arith.constant 0 : index
    %c0_23 = arith.constant 0 : index
    %22 = vector.load %arg3[%c0_20, %c3, %c0_21, %c0_22, %c0_23] : memref<1x16x4x4x4xf32, #tpu.memory_space<vmem>>, vector<1x1x4x4x4xf32>
    %23 = vector.shape_cast %22 : vector<1x1x4x4x4xf32> to vector<4x4x4xf32>
    %24 = vector.shape_cast %21 : vector<4x4x4xf32> to vector<4x4x4x1xf32>
    %25 = vector.shape_cast %23 : vector<4x4x4xf32> to vector<4x4x4x1xf32>
    %26 = tpu.concatenate %24, %25 in 3 : vector<4x4x4x1xf32>, vector<4x4x4x1xf32> -> vector<4x4x4x2xf32>
    %27 = vector.shape_cast %26 : vector<4x4x4x2xf32> to vector<4x4x8xf32>
    %c0_24 = arith.constant 0 : index
    %c6 = arith.constant 6 : index
    %c0_25 = arith.constant 0 : index
    %c0_26 = arith.constant 0 : index
    %c0_27 = arith.constant 0 : index
    %28 = vector.load %arg3[%c0_24, %c6, %c0_25, %c0_26, %c0_27] : memref<1x16x4x4x4xf32, #tpu.memory_space<vmem>>, vector<1x1x4x4x4xf32>
    %29 = vector.shape_cast %28 : vector<1x1x4x4x4xf32> to vector<4x4x4xf32>
    %c0_28 = arith.constant 0 : index
    %c7 = arith.constant 7 : index
    %c0_29 = arith.constant 0 : index
    %c0_30 = arith.constant 0 : index
    %c0_31 = arith.constant 0 : index
    %30 = vector.load %arg3[%c0_28, %c7, %c0_29, %c0_30, %c0_31] : memref<1x16x4x4x4xf32, #tpu.memory_space<vmem>>, vector<1x1x4x4x4xf32>
    %31 = vector.shape_cast %30 : vector<1x1x4x4x4xf32> to vector<4x4x4xf32>
    %32 = vector.shape_cast %29 : vector<4x4x4xf32> to vector<4x4x4x1xf32>
    %33 = vector.shape_cast %31 : vector<4x4x4xf32> to vector<4x4x4x1xf32>
    %34 = tpu.concatenate %32, %33 in 3 : vector<4x4x4x1xf32>, vector<4x4x4x1xf32> -> vector<4x4x4x2xf32>
    %35 = vector.shape_cast %34 : vector<4x4x4x2xf32> to vector<4x4x8xf32>
    %36 = vector.shape_cast %27 : vector<4x4x8xf32> to vector<4x1x4x8xf32>
    %37 = vector.shape_cast %35 : vector<4x4x8xf32> to vector<4x1x4x8xf32>
    %38 = tpu.concatenate %36, %37 in 1 : vector<4x1x4x8xf32>, vector<4x1x4x8xf32> -> vector<4x2x4x8xf32>
    %39 = vector.shape_cast %38 : vector<4x2x4x8xf32> to vector<8x4x8xf32>
    %c0_32 = arith.constant 0 : index
    %c0_33 = arith.constant 0 : index
    %c0_34 = arith.constant 0 : index
    %c0_35 = arith.constant 0 : index
    %c0_36 = arith.constant 0 : index
    %40 = vector.load %arg4[%c0_32, %c0_33, %c0_34, %c0_35, %c0_36] : memref<1x2x8x4x16xf32, #tpu.memory_space<vmem>>, vector<1x1x8x4x8xf32>
    %41 = vector.shape_cast %40 : vector<1x1x8x4x8xf32> to vector<8x4x8xf32>
    %42 = vector.shape_cast %19 : vector<8x4x8xf32> to vector<1x1x8x4x8xf32>
    tpu.vector_store %arg4[%c0_32, %c0_33, %c0_34, %c0_35, %c0_36], %42 {strides = array<i32>} : memref<1x2x8x4x16xf32, #tpu.memory_space<vmem>>, vector<1x1x8x4x8xf32>,
    %c0_37 = arith.constant 0 : index
    %c0_38 = arith.constant 0 : index
    %c0_39 = arith.constant 0 : index
    %c0_40 = arith.constant 0 : index
    %c8 = arith.constant 8 : index
    %43 = vector.load %arg4[%c0_37, %c0_38, %c0_39, %c0_40, %c8] : memref<1x2x8x4x16xf32, #tpu.memory_space<vmem>>, vector<1x1x8x4x8xf32>
    %44 = vector.shape_cast %43 : vector<1x1x8x4x8xf32> to vector<8x4x8xf32>
    %45 = vector.shape_cast %39 : vector<8x4x8xf32> to vector<1x1x8x4x8xf32>
    tpu.vector_store %arg4[%c0_37, %c0_38, %c0_39, %c0_40, %c8], %45 {strides = array<i32>} : memref<1x2x8x4x16xf32, #tpu.memory_space<vmem>>, vector<1x1x8x4x8xf32>,
    %c0_41 = arith.constant 0 : index
    %c8_42 = arith.constant 8 : index
    %c0_43 = arith.constant 0 : index
    %c0_44 = arith.constant 0 : index
    %c0_45 = arith.constant 0 : index
    %46 = vector.load %arg3[%c0_41, %c8_42, %c0_43, %c0_44, %c0_45] : memref<1x16x4x4x4xf32, #tpu.memory_space<vmem>>, vector<1x1x4x4x4xf32>
    %47 = vector.shape_cast %46 : vector<1x1x4x4x4xf32> to vector<4x4x4xf32>
    %c0_46 = arith.constant 0 : index
    %c9 = arith.constant 9 : index
    %c0_47 = arith.constant 0 : index
    %c0_48 = arith.constant 0 : index
    %c0_49 = arith.constant 0 : index
    %48 = vector.load %arg3[%c0_46, %c9, %c0_47, %c0_48, %c0_49] : memref<1x16x4x4x4xf32, #tpu.memory_space<vmem>>, vector<1x1x4x4x4xf32>
    %49 = vector.shape_cast %48 : vector<1x1x4x4x4xf32> to vector<4x4x4xf32>
    %50 = vector.shape_cast %47 : vector<4x4x4xf32> to vector<4x4x4x1xf32>
    %51 = vector.shape_cast %49 : vector<4x4x4xf32> to vector<4x4x4x1xf32>
    %52 = tpu.concatenate %50, %51 in 3 : vector<4x4x4x1xf32>, vector<4x4x4x1xf32> -> vector<4x4x4x2xf32>
    %53 = vector.shape_cast %52 : vector<4x4x4x2xf32> to vector<4x4x8xf32>
    %c0_50 = arith.constant 0 : index
    %c12 = arith.constant 12 : index
    %c0_51 = arith.constant 0 : index
    %c0_52 = arith.constant 0 : index
    %c0_53 = arith.constant 0 : index
    %54 = vector.load %arg3[%c0_50, %c12, %c0_51, %c0_52, %c0_53] : memref<1x16x4x4x4xf32, #tpu.memory_space<vmem>>, vector<1x1x4x4x4xf32>
    %55 = vector.shape_cast %54 : vector<1x1x4x4x4xf32> to vector<4x4x4xf32>
    %c0_54 = arith.constant 0 : index
    %c13 = arith.constant 13 : index
    %c0_55 = arith.constant 0 : index
    %c0_56 = arith.constant 0 : index
    %c0_57 = arith.constant 0 : index
    %56 = vector.load %arg3[%c0_54, %c13, %c0_55, %c0_56, %c0_57] : memref<1x16x4x4x4xf32, #tpu.memory_space<vmem>>, vector<1x1x4x4x4xf32>
    %57 = vector.shape_cast %56 : vector<1x1x4x4x4xf32> to vector<4x4x4xf32>
    %58 = vector.shape_cast %55 : vector<4x4x4xf32> to vector<4x4x4x1xf32>
    %59 = vector.shape_cast %57 : vector<4x4x4xf32> to vector<4x4x4x1xf32>
    %60 = tpu.concatenate %58, %59 in 3 : vector<4x4x4x1xf32>, vector<4x4x4x1xf32> -> vector<4x4x4x2xf32>
    %61 = vector.shape_cast %60 : vector<4x4x4x2xf32> to vector<4x4x8xf32>
    %62 = vector.shape_cast %53 : vector<4x4x8xf32> to vector<4x1x4x8xf32>
    %63 = vector.shape_cast %61 : vector<4x4x8xf32> to vector<4x1x4x8xf32>
    %64 = tpu.concatenate %62, %63 in 1 : vector<4x1x4x8xf32>, vector<4x1x4x8xf32> -> vector<4x2x4x8xf32>
    %65 = vector.shape_cast %64 : vector<4x2x4x8xf32> to vector<8x4x8xf32>
    %c0_58 = arith.constant 0 : index
    %c10 = arith.constant 10 : index
    %c0_59 = arith.constant 0 : index
    %c0_60 = arith.constant 0 : index
    %c0_61 = arith.constant 0 : index
    %66 = vector.load %arg3[%c0_58, %c10, %c0_59, %c0_60, %c0_61] : memref<1x16x4x4x4xf32, #tpu.memory_space<vmem>>, vector<1x1x4x4x4xf32>
    %67 = vector.shape_cast %66 : vector<1x1x4x4x4xf32> to vector<4x4x4xf32>
    %c0_62 = arith.constant 0 : index
    %c11 = arith.constant 11 : index
    %c0_63 = arith.constant 0 : index
    %c0_64 = arith.constant 0 : index
    %c0_65 = arith.constant 0 : index
    %68 = vector.load %arg3[%c0_62, %c11, %c0_63, %c0_64, %c0_65] : memref<1x16x4x4x4xf32, #tpu.memory_space<vmem>>, vector<1x1x4x4x4xf32>
    %69 = vector.shape_cast %68 : vector<1x1x4x4x4xf32> to vector<4x4x4xf32>
    %70 = vector.shape_cast %67 : vector<4x4x4xf32> to vector<4x4x4x1xf32>
    %71 = vector.shape_cast %69 : vector<4x4x4xf32> to vector<4x4x4x1xf32>
    %72 = tpu.concatenate %70, %71 in 3 : vector<4x4x4x1xf32>, vector<4x4x4x1xf32> -> vector<4x4x4x2xf32>
    %73 = vector.shape_cast %72 : vector<4x4x4x2xf32> to vector<4x4x8xf32>
    %c0_66 = arith.constant 0 : index
    %c14 = arith.constant 14 : index
    %c0_67 = arith.constant 0 : index
    %c0_68 = arith.constant 0 : index
    %c0_69 = arith.constant 0 : index
    %74 = vector.load %arg3[%c0_66, %c14, %c0_67, %c0_68, %c0_69] : memref<1x16x4x4x4xf32, #tpu.memory_space<vmem>>, vector<1x1x4x4x4xf32>
    %75 = vector.shape_cast %74 : vector<1x1x4x4x4xf32> to vector<4x4x4xf32>
    %c0_70 = arith.constant 0 : index
    %c15 = arith.constant 15 : index
    %c0_71 = arith.constant 0 : index
    %c0_72 = arith.constant 0 : index
    %c0_73 = arith.constant 0 : index
    %76 = vector.load %arg3[%c0_70, %c15, %c0_71, %c0_72, %c0_73] : memref<1x16x4x4x4xf32, #tpu.memory_space<vmem>>, vector<1x1x4x4x4xf32>
    %77 = vector.shape_cast %76 : vector<1x1x4x4x4xf32> to vector<4x4x4xf32>
    %78 = vector.shape_cast %75 : vector<4x4x4xf32> to vector<4x4x4x1xf32>
    %79 = vector.shape_cast %77 : vector<4x4x4xf32> to vector<4x4x4x1xf32>
    %80 = tpu.concatenate %78, %79 in 3 : vector<4x4x4x1xf32>, vector<4x4x4x1xf32> -> vector<4x4x4x2xf32>
    %81 = vector.shape_cast %80 : vector<4x4x4x2xf32> to vector<4x4x8xf32>
    %82 = vector.shape_cast %73 : vector<4x4x8xf32> to vector<4x1x4x8xf32>
    %83 = vector.shape_cast %81 : vector<4x4x8xf32> to vector<4x1x4x8xf32>
    %84 = tpu.concatenate %82, %83 in 1 : vector<4x1x4x8xf32>, vector<4x1x4x8xf32> -> vector<4x2x4x8xf32>
    %85 = vector.shape_cast %84 : vector<4x2x4x8xf32> to vector<8x4x8xf32>
    %c0_74 = arith.constant 0 : index
    %c1_75 = arith.constant 1 : index
    %c0_76 = arith.constant 0 : index
    %c0_77 = arith.constant 0 : index
    %c0_78 = arith.constant 0 : index
    %86 = vector.load %arg4[%c0_74, %c1_75, %c0_76, %c0_77, %c0_78] : memref<1x2x8x4x16xf32, #tpu.memory_space<vmem>>, vector<1x1x8x4x8xf32>
    %87 = vector.shape_cast %86 : vector<1x1x8x4x8xf32> to vector<8x4x8xf32>
    %88 = vector.shape_cast %65 : vector<8x4x8xf32> to vector<1x1x8x4x8xf32>
    tpu.vector_store %arg4[%c0_74, %c1_75, %c0_76, %c0_77, %c0_78], %88 {strides = array<i32>} : memref<1x2x8x4x16xf32, #tpu.memory_space<vmem>>, vector<1x1x8x4x8xf32>,
    %c0_79 = arith.constant 0 : index
    %c1_80 = arith.constant 1 : index
    %c0_81 = arith.constant 0 : index
    %c0_82 = arith.constant 0 : index
    %c8_83 = arith.constant 8 : index
    %89 = vector.load %arg4[%c0_79, %c1_80, %c0_81, %c0_82, %c8_83] : memref<1x2x8x4x16xf32, #tpu.memory_space<vmem>>, vector<1x1x8x4x8xf32>
    %90 = vector.shape_cast %89 : vector<1x1x8x4x8xf32> to vector<8x4x8xf32>
    %91 = vector.shape_cast %85 : vector<8x4x8xf32> to vector<1x1x8x4x8xf32>
    tpu.vector_store %arg4[%c0_79, %c1_80, %c0_81, %c0_82, %c8_83], %91 {strides = array<i32>} : memref<1x2x8x4x16xf32, #tpu.memory_space<vmem>>, vector<1x1x8x4x8xf32>,
    return
  }
  func.func @transform_0(%arg0: i32, %arg1: i32, %arg2: i32) -> (i32, i32, i32, i32, i32) {
    %c0_i32 = arith.constant 0 : i32
    %c0_i32_0 = arith.constant 0 : i32
    %c0_i32_1 = arith.constant 0 : i32
    return %arg0, %arg1, %arg2, %c0_i32, %c0_i32_0 : i32, i32, i32, i32, i32
  }
  func.func @transform_1(%arg0: i32, %arg1: i32, %arg2: i32) -> (i32, i32, i32, i32, i32) {
    %c0_i32 = arith.constant 0 : i32
    %c0_i32_0 = arith.constant 0 : i32
    %c0_i32_1 = arith.constant 0 : i32
    return %arg0, %arg1, %arg2, %c0_i32, %c0_i32_0 : i32, i32, i32, i32, i32
  }
}

</mosaic_0001>

<llo_original>
// kernel: tpu_custom_call.1
$region0: #{tpu_custom_call.1}
  #allocation0 [shape = 'u32[]', space=smem, size = 0x4, offset = 0x4, fixed_abs, tag = 'smem constant byte address 0x4 - core index']
  #allocation1 [shape = 'u32[72,128]{1,0:T(1,128)}', space=vmem, size = 0x9000, scoped, tag = 'internal scratch']
  %s0 = inlined_call_operand.vmem [shape: f32[2,16,4,4,4], index: 0, kind: input, shape index: {}]
  %s1 = inlined_call_operand.hbm [shape: f32[2,2,8,4,16], index: 1, kind: output, shape index: {}]
  %s2 = sld [smem:[#allocation0]]
  $region37: #{tpu_custom_call.1} parent=0
    _
  %s4 = ssub.s32 1, %s2
  %s5 = scalar_select 0, %s4, %s2
  $region1: #{tpu_custom_call.1} parent=0
    #allocation2 [shape = 'u8[65536]{0}', space=vmem, size = 0x10000, scoped, tag = 'output window, operand 0']
    #allocation3 [shape = 's32[2]{0}', space=sflag, size = 0x8, scoped, tag = 'scoped memory for tpu_custom_call.1']
    %6 = vsyncpa [#allocation3], 0
    %s7 = scalar_lea.sflag [#allocation3], 1
    %8 = vsyncpa %s7, 0
    loop: start=0, step=1, limit=4
    $region2: #{tpu_custom_call.1} parent=1 // loop_pre_header
      _
    $region3: #{tpu_custom_call.1} parent=1 // loop_header
      %s10 = sphi 0, %s14
      %p11 = scmp.ge.s32.totalorder %s10, 4
      %s17 = sphi 0, %s36
      %s18 = sphi 0, %s32
      %s19 = sphi 0, %s28
      %s20 = sphi 0, %s17
      %s21 = sphi 0, %s18
      %s22 = sphi 0, %s19
      %s23 = sphi 0, %s20
      %s24 = sphi 0, %s21
      %s25 = sphi 0, %s22
      %s43 = sphi 0, %s45
      %s46 = sphi 0, %s43
      %s47 = sphi 0, %s46
      %s63 = sphi 0, %s47
      %s73 = sphi 0, %s75
      %s76 = sphi 0, %s73
      %s77 = sphi 0, %s76
      %s93 = sphi 0, %s77
    $region4: #{tpu_custom_call.1} parent=1 // loop_header_branch
      %13 = sbr.rel (%p11) target = $region8
    $region5: #{tpu_custom_call.1} parent=1 // loop_body
      %s15 = ssub.s32 %s10, 1
      %s16 = ssub.s32 %s10, 2
      %s26 = sadd.s32 1, %s19
      %p27 = scmp.ge.s32.totalorder %s26, 1
      %s28 = scalar_select %p27, 0, %s26
      %s29 = sadd.s32 1, %s18
      %s30 = scalar_select %p27, %s29, %s18
      %p31 = scmp.ge.s32.totalorder %s30, 1
      %s32 = scalar_select %p31, 0, %s30
      %s33 = sadd.s32 1, %s17
      %s34 = scalar_select %p31, %s33, %s17
      %p35 = scmp.ge.s32.totalorder %s34, 2
      %s36 = scalar_select %p35, 0, %s34
      %s37 = ssub.s32 %s17, %s36
      %s38 = ssub.s32 %s18, %s32
      %s39 = sor.u32 %s37, %s38
      %s40 = ssub.s32 %s19, %s28
      %s41 = sor.u32 %s39, %s40
      %p42 = scmp.eq.s32.totalorder %s41, 0
      %s44 = sadd.s32 %s43, 1
      %s45 = scalar_select %p42, %s43, %s44
      %p48 = pneg %p42
      %p49 = scmp.eq.s32.totalorder %s10, 1
      %p50 = por %p48, %p49
      %p51 = scmp.ne.s32.totalorder %s43, %s46
      %p52 = scmp.eq.s32.totalorder %s10, 0
      %p53 = por %p51, %p52
      %p54 = scmp.ne.s32.totalorder %s43, %s46
      %p55 = scmp.eq.s32.totalorder %s15, 1
      %p56 = por %p54, %p55
      %p57 = scmp.ne.s32.totalorder %s46, %s47
      %p58 = scmp.eq.s32.totalorder %s15, 0
      %p59 = por %p57, %p58
      %p60 = scmp.ne.s32.totalorder %s46, %s47
      %p61 = scmp.eq.s32.totalorder %s16, 1
      %p62 = por %p60, %p61
      %p64 = scmp.ne.s32.totalorder %s47, %s63
      %p65 = scmp.eq.s32.totalorder %s16, 0
      %p66 = por %p64, %p65
      %s67 = ssub.s32 %s17, %s36
      %s68 = ssub.s32 %s18, %s32
      %s69 = sor.u32 %s67, %s68
      %s70 = ssub.s32 %s19, %s28
      %s71 = sor.u32 %s69, %s70
      %p72 = scmp.eq.s32.totalorder %s71, 0
      %s74 = sadd.s32 %s73, 1
      %s75 = scalar_select %p72, %s73, %s74
      %p78 = pneg %p72
      %p79 = scmp.eq.s32.totalorder %s10, 1
      %p80 = por %p78, %p79
      %p81 = scmp.ne.s32.totalorder %s73, %s76
      %p82 = scmp.eq.s32.totalorder %s10, 0
      %p83 = por %p81, %p82
      %p84 = scmp.ne.s32.totalorder %s73, %s76
      %p85 = scmp.eq.s32.totalorder %s15, 1
      %p86 = por %p84, %p85
      %p87 = scmp.ne.s32.totalorder %s76, %s77
      %p88 = scmp.eq.s32.totalorder %s15, 0
      %p89 = por %p87, %p88
      %p90 = scmp.ne.s32.totalorder %s76, %s77
      %p91 = scmp.eq.s32.totalorder %s16, 1
      %p92 = por %p90, %p91
      %p94 = scmp.ne.s32.totalorder %s77, %s93
      %p95 = scmp.eq.s32.totalorder %s16, 0
      %p96 = por %p94, %p95
      %p97 = scmp.le.s32.totalorder 1, %s10
      %p98 = scmp.lt.s32.totalorder %s10, 3
      %p99 = pnand %p97, %p98
      %p100 = pneg %p99
      // Predicated region
      $region9: #{tpu_custom_call.1} parent=5 // pred_check
        _
      $region10: #{tpu_custom_call.1} parent=5 // pred_check_branch
        %102 = sbr.rel (%p99) target = $region12
      $region11: #{tpu_custom_call.1} parent=5 // pred_region
        %s103 = ssub.s32 %s10, 1
      $region12: #{tpu_custom_call.1} parent=5 // pred_fallthru
        _
      %p104 = scmp.lt.s32.totalorder %s10, 2
      // Predicated region
      $region13: #{tpu_custom_call.1} parent=5 // pred_check
        %p105 = pneg %p104
      $region14: #{tpu_custom_call.1} parent=5 // pred_check_branch
        %107 = sbr.rel (%p105) target = $region16
      $region15: #{tpu_custom_call.1} parent=5 // pred_region
        // Predicated region
        $region17: #{tpu_custom_call.1} parent=15 // pred_check
          %p108 = pneg %p53
        $region18: #{tpu_custom_call.1} parent=15 // pred_check_branch
          %110 = sbr.rel (%p108) target = $region20
        $region19: #{tpu_custom_call.1} parent=15 // pred_region
          %s111 = smul.u32 16, %s18
          %s112 = smul.u32 4, %s19
          %p113 = scmp.lt.s32.totalorder %s17, 1
          %s114 = scalar_select %p113, %s17, 1
          %p115 = scmp.lt.s32.totalorder %s111, 15
          %s116 = scalar_select %p115, %s111, 15
          %p117 = scmp.lt.s32.totalorder %s112, 3
          %s118 = scalar_select %p117, %s112, 3
          %s119 = smul.addr %s116, 4
          %s120 = sadd.s32 %s118, %s119
          %s121 = smul.addr %s114, 64
          %s122 = sadd.s32 %s120, %s121
          %s123 = smul.addr %s122, 4
          %s124 = scalar_lea.vmem %s0, %s123
          %s125 = smul.u32 16, %s18
          %s126 = smul.u32 4, %s19
        $region20: #{tpu_custom_call.1} parent=15 // pred_fallthru
          _
      $region16: #{tpu_custom_call.1} parent=5 // pred_fallthru
        _
      %p127 = scmp.le.s32.totalorder 1, %s10
      %p128 = scmp.lt.s32.totalorder %s10, 3
      %p129 = pnand %p127, %p128
      %p130 = pneg %p129
      // Predicated region
      $region21: #{tpu_custom_call.1} parent=5 // pred_check
        _
      $region22: #{tpu_custom_call.1} parent=5 // pred_check_branch
        %132 = sbr.rel (%p129) target = $region24
      $region23: #{tpu_custom_call.1} parent=5 // pred_region
        %s133 = ssub.s32 %s10, 1
        %s134 = smul.u32 16, %s21
        %s135 = smul.u32 4, %s22
        %p136 = scmp.lt.s32.totalorder %s20, 1
        %s137 = scalar_select %p136, %s20, 1
        %p138 = scmp.lt.s32.totalorder %s134, 15
        %s139 = scalar_select %p138, %s134, 15
        %p140 = scmp.lt.s32.totalorder %s135, 3
        %s141 = scalar_select %p140, %s135, 3
        %s142 = smul.addr %s139, 4
        %s143 = sadd.s32 %s141, %s142
        %s144 = smul.addr %s137, 64
        %s145 = sadd.s32 %s143, %s144
        %s146 = smul.addr %s145, 4
        %s147 = scalar_lea.vmem %s0, %s146
        %p148 = pneg %p59
        %p149 = pneg %p56
        %p150 = pneg %p89
        %p151 = pneg %p86
        %s152 = sand.u32 %s76, 1
        %s153 = scalar_lea.sflag [#allocation3], %s152
        %s154 = sand.u32 %s76, 1
        %s155 = smul.addr %s154, 64
        %s156 = scalar_lea.vmem [#allocation2], %s155
        %s157 = smul.u32 16, %s21
        %s158 = smul.u32 4, %s22
        %p159 = scmp.lt.s32.totalorder %s20, 1
        %s160 = scalar_select %p159, %s20, 1
        %p161 = scmp.lt.s32.totalorder %s157, 15
        %s162 = scalar_select %p161, %s157, 15
        %p163 = scmp.lt.s32.totalorder %s158, 3
        %s164 = scalar_select %p163, %s158, 3
        %s165 = smul.addr %s162, 4
        %s166 = sadd.s32 %s164, %s165
        %s167 = smul.addr %s160, 64
        %s168 = sadd.s32 %s166, %s167
        %s169 = smul.addr %s168, 4
        %s170 = scalar_lea.vmem %s0, %s169
        %s171 = smul.u32 16, %s21
        %s172 = smul.u32 4, %s22
        %s173 = smul.u32 2, %s21
        %s174 = smul.u32 8, %s22
        %v175 = vld [vmem:[%s170] sm:$0xf]
        %v176 = vld [vmem:[%s170 + $0x4] sm:$0xf]
        %v177 = vld [vmem:[%s170 + $0x8] sm:$0xf]
        %v178 = vld [vmem:[%s170 + $0xc] sm:$0xf]
        %s179 = scalar_lea.vmem %s170, 16
        %v180 = vld [vmem:[%s179] sm:$0xf]
        %v181 = vld [vmem:[%s179 + $0x4] sm:$0xf]
        %v182 = vld [vmem:[%s179 + $0x8] sm:$0xf]
        %v183 = vld [vmem:[%s179 + $0xc] sm:$0xf]
        %v184 = vperm.slane %v175, 0
        %v185 = vlaneseq
        %v186 = vshrl.u32 %v185, 7
        %188 = vset.pattern.permute.xlu0 %v186
        %189 = vperm.xlu0 %188, %v184
        %v190 = vpop.permute.xlu0 %189
        %v191 = vperm.slane %v175, 1
        %v192 = vlaneseq
        %v193 = vshrl.u32 %v192, 7
        %195 = vset.pattern.permute.xlu0 %v193
        %196 = vperm.xlu0 %195, %v191
        %v197 = vpop.permute.xlu0 %196
        %v198 = vperm.slane %v175, 2
        %v199 = vlaneseq
        %v200 = vshrl.u32 %v199, 7
        %202 = vset.pattern.permute.xlu0 %v200
        %203 = vperm.xlu0 %202, %v198
        %v204 = vpop.permute.xlu0 %203
        %v205 = vperm.slane %v175, 3
        %v206 = vlaneseq
        %v207 = vshrl.u32 %v206, 7
        %209 = vset.pattern.permute.xlu0 %v207
        %210 = vperm.xlu0 %209, %v205
        %v211 = vpop.permute.xlu0 %210
        %v212 = vperm.slane %v176, 0
        %v213 = vlaneseq
        %v214 = vshrl.u32 %v213, 7
        %216 = vset.pattern.permute.xlu0 %v214
        %217 = vperm.xlu0 %216, %v212
        %v218 = vpop.permute.xlu0 %217
        %v219 = vperm.slane %v176, 1
        %v220 = vlaneseq
        %v221 = vshrl.u32 %v220, 7
        %223 = vset.pattern.permute.xlu0 %v221
        %224 = vperm.xlu0 %223, %v219
        %v225 = vpop.permute.xlu0 %224
        %v226 = vperm.slane %v176, 2
        %v227 = vlaneseq
        %v228 = vshrl.u32 %v227, 7
        %230 = vset.pattern.permute.xlu0 %v228
        %231 = vperm.xlu0 %230, %v226
        %v232 = vpop.permute.xlu0 %231
        %v233 = vperm.slane %v176, 3
        %v234 = vlaneseq
        %v235 = vshrl.u32 %v234, 7
        %237 = vset.pattern.permute.xlu0 %v235
        %238 = vperm.xlu0 %237, %v233
        %v239 = vpop.permute.xlu0 %238
        %v240 = vperm.slane %v177, 0
        %v241 = vlaneseq
        %v242 = vshrl.u32 %v241, 7
        %244 = vset.pattern.permute.xlu0 %v242
        %245 = vperm.xlu0 %244, %v240
        %v246 = vpop.permute.xlu0 %245
        %v247 = vperm.slane %v177, 1
        %v248 = vlaneseq
        %v249 = vshrl.u32 %v248, 7
        %251 = vset.pattern.permute.xlu0 %v249
        %252 = vperm.xlu0 %251, %v247
        %v253 = vpop.permute.xlu0 %252
        %v254 = vperm.slane %v177, 2
        %v255 = vlaneseq
        %v256 = vshrl.u32 %v255, 7
        %258 = vset.pattern.permute.xlu0 %v256
        %259 = vperm.xlu0 %258, %v254
        %v260 = vpop.permute.xlu0 %259
        %v261 = vperm.slane %v177, 3
        %v262 = vlaneseq
        %v263 = vshrl.u32 %v262, 7
        %265 = vset.pattern.permute.xlu0 %v263
        %266 = vperm.xlu0 %265, %v261
        %v267 = vpop.permute.xlu0 %266
        %v268 = vperm.slane %v178, 0
        %v269 = vlaneseq
        %v270 = vshrl.u32 %v269, 7
        %272 = vset.pattern.permute.xlu0 %v270
        %273 = vperm.xlu0 %272, %v268
        %v274 = vpop.permute.xlu0 %273
        %v275 = vperm.slane %v178, 1
        %v276 = vlaneseq
        %v277 = vshrl.u32 %v276, 7
        %279 = vset.pattern.permute.xlu0 %v277
        %280 = vperm.xlu0 %279, %v275
        %v281 = vpop.permute.xlu0 %280
        %v282 = vperm.slane %v178, 2
        %v283 = vlaneseq
        %v284 = vshrl.u32 %v283, 7
        %286 = vset.pattern.permute.xlu0 %v284
        %287 = vperm.xlu0 %286, %v282
        %v288 = vpop.permute.xlu0 %287
        %v289 = vperm.slane %v178, 3
        %v290 = vlaneseq
        %v291 = vshrl.u32 %v290, 7
        %293 = vset.pattern.permute.xlu0 %v291
        %294 = vperm.xlu0 %293, %v289
        %v295 = vpop.permute.xlu0 %294
        %v296 = vperm.slane %v180, 0
        %v297 = vlaneseq
        %v298 = vshrl.u32 %v297, 7
        %300 = vset.pattern.permute.xlu0 %v298
        %301 = vperm.xlu0 %300, %v296
        %v302 = vpop.permute.xlu0 %301
        %v303 = vperm.slane %v180, 1
        %v304 = vlaneseq
        %v305 = vshrl.u32 %v304, 7
        %307 = vset.pattern.permute.xlu0 %v305
        %308 = vperm.xlu0 %307, %v303
        %v309 = vpop.permute.xlu0 %308
        %v310 = vperm.slane %v180, 2
        %v311 = vlaneseq
        %v312 = vshrl.u32 %v311, 7
        %314 = vset.pattern.permute.xlu0 %v312
        %315 = vperm.xlu0 %314, %v310
        %v316 = vpop.permute.xlu0 %315
        %v317 = vperm.slane %v180, 3
        %v318 = vlaneseq
        %v319 = vshrl.u32 %v318, 7
        %321 = vset.pattern.permute.xlu0 %v319
        %322 = vperm.xlu0 %321, %v317
        %v323 = vpop.permute.xlu0 %322
        %v324 = vperm.slane %v181, 0
        %v325 = vlaneseq
        %v326 = vshrl.u32 %v325, 7
        %328 = vset.pattern.permute.xlu0 %v326
        %329 = vperm.xlu0 %328, %v324
        %v330 = vpop.permute.xlu0 %329
        %v331 = vperm.slane %v181, 1
        %v332 = vlaneseq
        %v333 = vshrl.u32 %v332, 7
        %335 = vset.pattern.permute.xlu0 %v333
        %336 = vperm.xlu0 %335, %v331
        %v337 = vpop.permute.xlu0 %336
        %v338 = vperm.slane %v181, 2
        %v339 = vlaneseq
        %v340 = vshrl.u32 %v339, 7
        %342 = vset.pattern.permute.xlu0 %v340
        %343 = vperm.xlu0 %342, %v338
        %v344 = vpop.permute.xlu0 %343
        %v345 = vperm.slane %v181, 3
        %v346 = vlaneseq
        %v347 = vshrl.u32 %v346, 7
        %349 = vset.pattern.permute.xlu0 %v347
        %350 = vperm.xlu0 %349, %v345
        %v351 = vpop.permute.xlu0 %350
        %v352 = vperm.slane %v182, 0
        %v353 = vlaneseq
        %v354 = vshrl.u32 %v353, 7
        %356 = vset.pattern.permute.xlu0 %v354
        %357 = vperm.xlu0 %356, %v352
        %v358 = vpop.permute.xlu0 %357
        %v359 = vperm.slane %v182, 1
        %v360 = vlaneseq
        %v361 = vshrl.u32 %v360, 7
        %363 = vset.pattern.permute.xlu0 %v361
        %364 = vperm.xlu0 %363, %v359
        %v365 = vpop.permute.xlu0 %364
        %v366 = vperm.slane %v182, 2
        %v367 = vlaneseq
        %v368 = vshrl.u32 %v367, 7
        %370 = vset.pattern.permute.xlu0 %v368
        %371 = vperm.xlu0 %370, %v366
        %v372 = vpop.permute.xlu0 %371
        %v373 = vperm.slane %v182, 3
        %v374 = vlaneseq
        %v375 = vshrl.u32 %v374, 7
        %377 = vset.pattern.permute.xlu0 %v375
        %378 = vperm.xlu0 %377, %v373
        %v379 = vpop.permute.xlu0 %378
        %v380 = vperm.slane %v183, 0
        %v381 = vlaneseq
        %v382 = vshrl.u32 %v381, 7
        %384 = vset.pattern.permute.xlu0 %v382
        %385 = vperm.xlu0 %384, %v380
        %v386 = vpop.permute.xlu0 %385
        %v387 = vperm.slane %v183, 1
        %v388 = vlaneseq
        %v389 = vshrl.u32 %v388, 7
        %391 = vset.pattern.permute.xlu0 %v389
        %392 = vperm.xlu0 %391, %v387
        %v393 = vpop.permute.xlu0 %392
        %v394 = vperm.slane %v183, 2
        %v395 = vlaneseq
        %v396 = vshrl.u32 %v395, 7
        %398 = vset.pattern.permute.xlu0 %v396
        %399 = vperm.xlu0 %398, %v394
        %v400 = vpop.permute.xlu0 %399
        %v401 = vperm.slane %v183, 3
        %v402 = vlaneseq
        %v403 = vshrl.u32 %v402, 7
        %405 = vset.pattern.permute.xlu0 %v403
        %406 = vperm.xlu0 %405, %v401
        %v407 = vpop.permute.xlu0 %406
        %vm408 = vcmask 7168
        %v409 = vsel %vm408, %v190, %v302
        %v410 = vsel %vm408, %v197, %v309
        %v411 = vsel %vm408, %v204, %v316
        %v412 = vsel %vm408, %v211, %v323
        %v413 = vsel %vm408, %v218, %v330
        %v414 = vsel %vm408, %v225, %v337
        %v415 = vsel %vm408, %v232, %v344
        %v416 = vsel %vm408, %v239, %v351
        %v417 = vsel %vm408, %v246, %v358
        %v418 = vsel %vm408, %v253, %v365
        %v419 = vsel %vm408, %v260, %v372
        %v420 = vsel %vm408, %v267, %v379
        %v421 = vsel %vm408, %v274, %v386
        %v422 = vsel %vm408, %v281, %v393
        %v423 = vsel %vm408, %v288, %v400
        %v424 = vsel %vm408, %v295, %v407
        %s425 = scalar_lea.vmem %s170, 64
        %v426 = vld [vmem:[%s425] sm:$0xf]
        %v427 = vld [vmem:[%s425 + $0x4] sm:$0xf]
        %v428 = vld [vmem:[%s425 + $0x8] sm:$0xf]
        %v429 = vld [vmem:[%s425 + $0xc] sm:$0xf]
        %s430 = scalar_lea.vmem %s170, 80
        %v431 = vld [vmem:[%s430] sm:$0xf]
        %v432 = vld [vmem:[%s430 + $0x4] sm:$0xf]
        %v433 = vld [vmem:[%s430 + $0x8] sm:$0xf]
        %v434 = vld [vmem:[%s430 + $0xc] sm:$0xf]
        %v435 = vperm.slane %v426, 0
        %v436 = vlaneseq
        %v437 = vshrl.u32 %v436, 7
        %439 = vset.pattern.permute.xlu0 %v437
        %440 = vperm.xlu0 %439, %v435
        %v441 = vpop.permute.xlu0 %440
        %v442 = vperm.slane %v426, 1
        %v443 = vlaneseq
        %v444 = vshrl.u32 %v443, 7
        %446 = vset.pattern.permute.xlu0 %v444
        %447 = vperm.xlu0 %446, %v442
        %v448 = vpop.permute.xlu0 %447
        %v449 = vperm.slane %v426, 2
        %v450 = vlaneseq
        %v451 = vshrl.u32 %v450, 7
        %453 = vset.pattern.permute.xlu0 %v451
        %454 = vperm.xlu0 %453, %v449
        %v455 = vpop.permute.xlu0 %454
        %v456 = vperm.slane %v426, 3
        %v457 = vlaneseq
        %v458 = vshrl.u32 %v457, 7
        %460 = vset.pattern.permute.xlu0 %v458
        %461 = vperm.xlu0 %460, %v456
        %v462 = vpop.permute.xlu0 %461
        %v463 = vperm.slane %v427, 0
        %v464 = vlaneseq
        %v465 = vshrl.u32 %v464, 7
        %467 = vset.pattern.permute.xlu0 %v465
        %468 = vperm.xlu0 %467, %v463
        %v469 = vpop.permute.xlu0 %468
        %v470 = vperm.slane %v427, 1
        %v471 = vlaneseq
        %v472 = vshrl.u32 %v471, 7
        %474 = vset.pattern.permute.xlu0 %v472
        %475 = vperm.xlu0 %474, %v470
        %v476 = vpop.permute.xlu0 %475
        %v477 = vperm.slane %v427, 2
        %v478 = vlaneseq
        %v479 = vshrl.u32 %v478, 7
        %481 = vset.pattern.permute.xlu0 %v479
        %482 = vperm.xlu0 %481, %v477
        %v483 = vpop.permute.xlu0 %482
        %v484 = vperm.slane %v427, 3
        %v485 = vlaneseq
        %v486 = vshrl.u32 %v485, 7
        %488 = vset.pattern.permute.xlu0 %v486
        %489 = vperm.xlu0 %488, %v484
        %v490 = vpop.permute.xlu0 %489
        %v491 = vperm.slane %v428, 0
        %v492 = vlaneseq
        %v493 = vshrl.u32 %v492, 7
        %495 = vset.pattern.permute.xlu0 %v493
        %496 = vperm.xlu0 %495, %v491
        %v497 = vpop.permute.xlu0 %496
        %v498 = vperm.slane %v428, 1
        %v499 = vlaneseq
        %v500 = vshrl.u32 %v499, 7
        %502 = vset.pattern.permute.xlu0 %v500
        %503 = vperm.xlu0 %502, %v498
        %v504 = vpop.permute.xlu0 %503
        %v505 = vperm.slane %v428, 2
        %v506 = vlaneseq
        %v507 = vshrl.u32 %v506, 7
        %509 = vset.pattern.permute.xlu0 %v507
        %510 = vperm.xlu0 %509, %v505
        %v511 = vpop.permute.xlu0 %510
        %v512 = vperm.slane %v428, 3
        %v513 = vlaneseq
        %v514 = vshrl.u32 %v513, 7
        %516 = vset.pattern.permute.xlu0 %v514
        %517 = vperm.xlu0 %516, %v512
        %v518 = vpop.permute.xlu0 %517
        %v519 = vperm.slane %v429, 0
        %v520 = vlaneseq
        %v521 = vshrl.u32 %v520, 7
        %523 = vset.pattern.permute.xlu0 %v521
        %524 = vperm.xlu0 %523, %v519
        %v525 = vpop.permute.xlu0 %524
        %v526 = vperm.slane %v429, 1
        %v527 = vlaneseq
        %v528 = vshrl.u32 %v527, 7
        %530 = vset.pattern.permute.xlu0 %v528
        %531 = vperm.xlu0 %530, %v526
        %v532 = vpop.permute.xlu0 %531
        %v533 = vperm.slane %v429, 2
        %v534 = vlaneseq
        %v535 = vshrl.u32 %v534, 7
        %537 = vset.pattern.permute.xlu0 %v535
        %538 = vperm.xlu0 %537, %v533
        %v539 = vpop.permute.xlu0 %538
        %v540 = vperm.slane %v429, 3
        %v541 = vlaneseq
        %v542 = vshrl.u32 %v541, 7
        %544 = vset.pattern.permute.xlu0 %v542
        %545 = vperm.xlu0 %544, %v540
        %v546 = vpop.permute.xlu0 %545
        %v547 = vperm.slane %v431, 0
        %v548 = vlaneseq
        %v549 = vshrl.u32 %v548, 7
        %551 = vset.pattern.permute.xlu0 %v549
        %552 = vperm.xlu0 %551, %v547
        %v553 = vpop.permute.xlu0 %552
        %v554 = vperm.slane %v431, 1
        %v555 = vlaneseq
        %v556 = vshrl.u32 %v555, 7
        %558 = vset.pattern.permute.xlu0 %v556
        %559 = vperm.xlu0 %558, %v554
        %v560 = vpop.permute.xlu0 %559
        %v561 = vperm.slane %v431, 2
        %v562 = vlaneseq
        %v563 = vshrl.u32 %v562, 7
        %565 = vset.pattern.permute.xlu0 %v563
        %566 = vperm.xlu0 %565, %v561
        %v567 = vpop.permute.xlu0 %566
        %v568 = vperm.slane %v431, 3
        %v569 = vlaneseq
        %v570 = vshrl.u32 %v569, 7
        %572 = vset.pattern.permute.xlu0 %v570
        %573 = vperm.xlu0 %572, %v568
        %v574 = vpop.permute.xlu0 %573
        %v575 = vperm.slane %v432, 0
        %v576 = vlaneseq
        %v577 = vshrl.u32 %v576, 7
        %579 = vset.pattern.permute.xlu0 %v577
        %580 = vperm.xlu0 %579, %v575
        %v581 = vpop.permute.xlu0 %580
        %v582 = vperm.slane %v432, 1
        %v583 = vlaneseq
        %v584 = vshrl.u32 %v583, 7
        %586 = vset.pattern.permute.xlu0 %v584
        %587 = vperm.xlu0 %586, %v582
        %v588 = vpop.permute.xlu0 %587
        %v589 = vperm.slane %v432, 2
        %v590 = vlaneseq
        %v591 = vshrl.u32 %v590, 7
        %593 = vset.pattern.permute.xlu0 %v591
        %594 = vperm.xlu0 %593, %v589
        %v595 = vpop.permute.xlu0 %594
        %v596 = vperm.slane %v432, 3
        %v597 = vlaneseq
        %v598 = vshrl.u32 %v597, 7
        %600 = vset.pattern.permute.xlu0 %v598
        %601 = vperm.xlu0 %600, %v596
        %v602 = vpop.permute.xlu0 %601
        %v603 = vperm.slane %v433, 0
        %v604 = vlaneseq
        %v605 = vshrl.u32 %v604, 7
        %607 = vset.pattern.permute.xlu0 %v605
        %608 = vperm.xlu0 %607, %v603
        %v609 = vpop.permute.xlu0 %608
        %v610 = vperm.slane %v433, 1
        %v611 = vlaneseq
        %v612 = vshrl.u32 %v611, 7
        %614 = vset.pattern.permute.xlu0 %v612
        %615 = vperm.xlu0 %614, %v610
        %v616 = vpop.permute.xlu0 %615
        %v617 = vperm.slane %v433, 2
        %v618 = vlaneseq
        %v619 = vshrl.u32 %v618, 7
        %621 = vset.pattern.permute.xlu0 %v619
        %622 = vperm.xlu0 %621, %v617
        %v623 = vpop.permute.xlu0 %622
        %v624 = vperm.slane %v433, 3
        %v625 = vlaneseq
        %v626 = vshrl.u32 %v625, 7
        %628 = vset.pattern.permute.xlu0 %v626
        %629 = vperm.xlu0 %628, %v624
        %v630 = vpop.permute.xlu0 %629
        %v631 = vperm.slane %v434, 0
        %v632 = vlaneseq
        %v633 = vshrl.u32 %v632, 7
        %635 = vset.pattern.permute.xlu0 %v633
        %636 = vperm.xlu0 %635, %v631
        %v637 = vpop.permute.xlu0 %636
        %v638 = vperm.slane %v434, 1
        %v639 = vlaneseq
        %v640 = vshrl.u32 %v639, 7
        %642 = vset.pattern.permute.xlu0 %v640
        %643 = vperm.xlu0 %642, %v638
        %v644 = vpop.permute.xlu0 %643
        %v645 = vperm.slane %v434, 2
        %v646 = vlaneseq
        %v647 = vshrl.u32 %v646, 7
        %649 = vset.pattern.permute.xlu0 %v647
        %650 = vperm.xlu0 %649, %v645
        %v651 = vpop.permute.xlu0 %650
        %v652 = vperm.slane %v434, 3
        %v653 = vlaneseq
        %v654 = vshrl.u32 %v653, 7
        %656 = vset.pattern.permute.xlu0 %v654
        %657 = vperm.xlu0 %656, %v652
        %v658 = vpop.permute.xlu0 %657
        %v659 = vsel %vm408, %v441, %v553
        %v660 = vsel %vm408, %v448, %v560
        %v661 = vsel %vm408, %v455, %v567
        %v662 = vsel %vm408, %v462, %v574
        %v663 = vsel %vm408, %v469, %v581
        %v664 = vsel %vm408, %v476, %v588
        %v665 = vsel %vm408, %v483, %v595
        %v666 = vsel %vm408, %v490, %v602
        %v667 = vsel %vm408, %v497, %v609
        %v668 = vsel %vm408, %v504, %v616
        %v669 = vsel %vm408, %v511, %v623
        %v670 = vsel %vm408, %v518, %v630
        %v671 = vsel %vm408, %v525, %v637
        %v672 = vsel %vm408, %v532, %v644
        %v673 = vsel %vm408, %v539, %v651
        %v674 = vsel %vm408, %v546, %v658
        %v675 = vrot.slane %v411, 4
        %vm676 = vcmask 1047556
        %v677 = vsel %vm676, %v675, %v409
        %v679 = vunpack.c.l.s4 1983009808
        %v680 = vunpack.c.0.s8 %v679
        %v681 = vperm.slane %v677, %v680
        %v682 = vrot.slane %v412, 4
        %v683 = vsel %vm676, %v682, %v410
        %v685 = vunpack.c.l.s4 1983009808
        %v686 = vunpack.c.0.s8 %v685
        %v687 = vperm.slane %v683, %v686
        %v688 = vrot.slane %v687, 4
        %v689 = vsel %vm676, %v688, %v681
        %v690 = vrot.slane %v681, 4
        %v691 = vsel %vm676, %v687, %v690
        %v693 = vunpack.c.l.s4 1934713408
        %v694 = vunpack.c.0.s8 %v693
        %v695 = vperm.slane %v689, %v694
        %v697 = vunpack.c.l.s4 1934713408
        %v698 = vunpack.c.0.s8 %v697
        %v699 = vperm.slane %v691, %v698
        %v700 = vrot.slane %v695, 4
        %v701 = vsel %vm676, 0.0, %v700
        %v702 = vrot.slane %v699, 4
        %v703 = vsel %vm676, 0.0, %v702
        %v704 = vrot.slane %v415, 4
        %v705 = vsel %vm676, %v704, %v413
        %v707 = vunpack.c.l.s4 1983009808
        %v708 = vunpack.c.0.s8 %v707
        %v709 = vperm.slane %v705, %v708
        %v710 = vrot.slane %v416, 4
        %v711 = vsel %vm676, %v710, %v414
        %v713 = vunpack.c.l.s4 1983009808
        %v714 = vunpack.c.0.s8 %v713
        %v715 = vperm.slane %v711, %v714
        %v716 = vrot.slane %v715, 4
        %v717 = vsel %vm676, %v716, %v709
        %v718 = vrot.slane %v709, 4
        %v719 = vsel %vm676, %v715, %v718
        %v721 = vunpack.c.l.s4 1934713408
        %v722 = vunpack.c.0.s8 %v721
        %v723 = vperm.slane %v717, %v722
        %v725 = vunpack.c.l.s4 1934713408
        %v726 = vunpack.c.0.s8 %v725
        %v727 = vperm.slane %v719, %v726
        %v728 = vrot.slane %v723, 4
        %v729 = vsel %vm676, 0.0, %v728
        %v730 = vrot.slane %v727, 4
        %v731 = vsel %vm676, 0.0, %v730
        %v732 = vrot.slane %v419, 4
        %v733 = vsel %vm676, %v732, %v417
        %v735 = vunpack.c.l.s4 1983009808
        %v736 = vunpack.c.0.s8 %v735
        %v737 = vperm.slane %v733, %v736
        %v738 = vrot.slane %v420, 4
        %v739 = vsel %vm676, %v738, %v418
        %v741 = vunpack.c.l.s4 1983009808
        %v742 = vunpack.c.0.s8 %v741
        %v743 = vperm.slane %v739, %v742
        %v744 = vrot.slane %v743, 4
        %v745 = vsel %vm676, %v744, %v737
        %v746 = vrot.slane %v737, 4
        %v747 = vsel %vm676, %v743, %v746
        %v749 = vunpack.c.l.s4 1934713408
        %v750 = vunpack.c.0.s8 %v749
        %v751 = vperm.slane %v745, %v750
        %v753 = vunpack.c.l.s4 1934713408
        %v754 = vunpack.c.0.s8 %v753
        %v755 = vperm.slane %v747, %v754
        %v756 = vrot.slane %v751, 4
        %v757 = vsel %vm676, 0.0, %v756
        %v758 = vrot.slane %v755, 4
        %v759 = vsel %vm676, 0.0, %v758
        %v760 = vrot.slane %v423, 4
        %v761 = vsel %vm676, %v760, %v421
        %v763 = vunpack.c.l.s4 1983009808
        %v764 = vunpack.c.0.s8 %v763
        %v765 = vperm.slane %v761, %v764
        %v766 = vrot.slane %v424, 4
        %v767 = vsel %vm676, %v766, %v422
        %v769 = vunpack.c.l.s4 1983009808
        %v770 = vunpack.c.0.s8 %v769
        %v771 = vperm.slane %v767, %v770
        %v772 = vrot.slane %v771, 4
        %v773 = vsel %vm676, %v772, %v765
        %v774 = vrot.slane %v765, 4
        %v775 = vsel %vm676, %v771, %v774
        %v777 = vunpack.c.l.s4 1934713408
        %v778 = vunpack.c.0.s8 %v777
        %v779 = vperm.slane %v773, %v778
        %v781 = vunpack.c.l.s4 1934713408
        %v782 = vunpack.c.0.s8 %v781
        %v783 = vperm.slane %v775, %v782
        %v784 = vrot.slane %v779, 4
        %v785 = vsel %vm676, 0.0, %v784
        %v786 = vrot.slane %v783, 4
        %v787 = vsel %vm676, 0.0, %v786
        %792 = vrot.lane.b32.xlu0 %v701, 2
        %v793 = vpop.permute.xlu0 %792
        %794 = vrot.lane.b32.xlu0 %v729, 2
        %v795 = vpop.permute.xlu0 %794
        %796 = vrot.lane.b32.xlu0 %v757, 2
        %v797 = vpop.permute.xlu0 %796
        %798 = vrot.lane.b32.xlu0 %v785, 2
        %v799 = vpop.permute.xlu0 %798
        %808 = vrot.lane.b32.xlu0 %v699, 4
        %v809 = vpop.permute.xlu0 %808
        %810 = vrot.lane.b32.xlu0 %v727, 4
        %v811 = vpop.permute.xlu0 %810
        %812 = vrot.lane.b32.xlu0 %v755, 4
        %v813 = vpop.permute.xlu0 %812
        %814 = vrot.lane.b32.xlu0 %v783, 4
        %v815 = vpop.permute.xlu0 %814
        %824 = vrot.lane.b32.xlu0 %v703, 6
        %v825 = vpop.permute.xlu0 %824
        %826 = vrot.lane.b32.xlu0 %v731, 6
        %v827 = vpop.permute.xlu0 %826
        %828 = vrot.lane.b32.xlu0 %v759, 6
        %v829 = vpop.permute.xlu0 %828
        %830 = vrot.lane.b32.xlu0 %v787, 6
        %v831 = vpop.permute.xlu0 %830
        %vm836 = vcmask 15360
        %v837 = vsel %vm836, %v695, %v793
        %v838 = vsel %vm836, %v723, %v795
        %v839 = vsel %vm836, %v751, %v797
        %v840 = vsel %vm836, %v779, %v799
        %vm841 = vcmask 31744
        %v842 = vsel %vm841, %v837, %v809
        %v843 = vsel %vm841, %v838, %v811
        %v844 = vsel %vm841, %v839, %v813
        %v845 = vsel %vm841, %v840, %v815
        %vm846 = vcmask 48128
        %v847 = vsel %vm846, %v842, %v825
        %v848 = vsel %vm846, %v843, %v827
        %v849 = vsel %vm846, %v844, %v829
        %v850 = vsel %vm846, %v845, %v831
        %v851 = vrot.slane %v661, 4
        %v852 = vsel %vm676, %v851, %v659
        %v854 = vunpack.c.l.s4 1983009808
        %v855 = vunpack.c.0.s8 %v854
        %v856 = vperm.slane %v852, %v855
        %v857 = vrot.slane %v662, 4
        %v858 = vsel %vm676, %v857, %v660
        %v860 = vunpack.c.l.s4 1983009808
        %v861 = vunpack.c.0.s8 %v860
        %v862 = vperm.slane %v858, %v861
        %v863 = vrot.slane %v862, 4
        %v864 = vsel %vm676, %v863, %v856
        %v865 = vrot.slane %v856, 4
        %v866 = vsel %vm676, %v862, %v865
        %v868 = vunpack.c.l.s4 1934713408
        %v869 = vunpack.c.0.s8 %v868
        %v870 = vperm.slane %v864, %v869
        %v872 = vunpack.c.l.s4 1934713408
        %v873 = vunpack.c.0.s8 %v872
        %v874 = vperm.slane %v866, %v873
        %v875 = vrot.slane %v870, 4
        %v876 = vsel %vm676, 0.0, %v875
        %v877 = vrot.slane %v874, 4
        %v878 = vsel %vm676, 0.0, %v877
        %v879 = vrot.slane %v665, 4
        %v880 = vsel %vm676, %v879, %v663
        %v882 = vunpack.c.l.s4 1983009808
        %v883 = vunpack.c.0.s8 %v882
        %v884 = vperm.slane %v880, %v883
        %v885 = vrot.slane %v666, 4
        %v886 = vsel %vm676, %v885, %v664
        %v888 = vunpack.c.l.s4 1983009808
        %v889 = vunpack.c.0.s8 %v888
        %v890 = vperm.slane %v886, %v889
        %v891 = vrot.slane %v890, 4
        %v892 = vsel %vm676, %v891, %v884
        %v893 = vrot.slane %v884, 4
        %v894 = vsel %vm676, %v890, %v893
        %v896 = vunpack.c.l.s4 1934713408
        %v897 = vunpack.c.0.s8 %v896
        %v898 = vperm.slane %v892, %v897
        %v900 = vunpack.c.l.s4 1934713408
        %v901 = vunpack.c.0.s8 %v900
        %v902 = vperm.slane %v894, %v901
        %v903 = vrot.slane %v898, 4
        %v904 = vsel %vm676, 0.0, %v903
        %v905 = vrot.slane %v902, 4
        %v906 = vsel %vm676, 0.0, %v905
        %v907 = vrot.slane %v669, 4
        %v908 = vsel %vm676, %v907, %v667
        %v910 = vunpack.c.l.s4 1983009808
        %v911 = vunpack.c.0.s8 %v910
        %v912 = vperm.slane %v908, %v911
        %v913 = vrot.slane %v670, 4
        %v914 = vsel %vm676, %v913, %v668
        %v916 = vunpack.c.l.s4 1983009808
        %v917 = vunpack.c.0.s8 %v916
        %v918 = vperm.slane %v914, %v917
        %v919 = vrot.slane %v918, 4
        %v920 = vsel %vm676, %v919, %v912
        %v921 = vrot.slane %v912, 4
        %v922 = vsel %vm676, %v918, %v921
        %v924 = vunpack.c.l.s4 1934713408
        %v925 = vunpack.c.0.s8 %v924
        %v926 = vperm.slane %v920, %v925
        %v928 = vunpack.c.l.s4 1934713408
        %v929 = vunpack.c.0.s8 %v928
        %v930 = vperm.slane %v922, %v929
        %v931 = vrot.slane %v926, 4
        %v932 = vsel %vm676, 0.0, %v931
        %v933 = vrot.slane %v930, 4
        %v934 = vsel %vm676, 0.0, %v933
        %v935 = vrot.slane %v673, 4
        %v936 = vsel %vm676, %v935, %v671
        %v938 = vunpack.c.l.s4 1983009808
        %v939 = vunpack.c.0.s8 %v938
        %v940 = vperm.slane %v936, %v939
        %v941 = vrot.slane %v674, 4
        %v942 = vsel %vm676, %v941, %v672
        %v944 = vunpack.c.l.s4 1983009808
        %v945 = vunpack.c.0.s8 %v944
        %v946 = vperm.slane %v942, %v945
        %v947 = vrot.slane %v946, 4
        %v948 = vsel %vm676, %v947, %v940
        %v949 = vrot.slane %v940, 4
        %v950 = vsel %vm676, %v946, %v949
        %v952 = vunpack.c.l.s4 1934713408
        %v953 = vunpack.c.0.s8 %v952
        %v954 = vperm.slane %v948, %v953
        %v956 = vunpack.c.l.s4 1934713408
        %v957 = vunpack.c.0.s8 %v956
        %v958 = vperm.slane %v950, %v957
        %v959 = vrot.slane %v954, 4
        %v960 = vsel %vm676, 0.0, %v959
        %v961 = vrot.slane %v958, 4
        %v962 = vsel %vm676, 0.0, %v961
        %967 = vrot.lane.b32.xlu0 %v876, 2
        %v968 = vpop.permute.xlu0 %967
        %969 = vrot.lane.b32.xlu0 %v904, 2
        %v970 = vpop.permute.xlu0 %969
        %971 = vrot.lane.b32.xlu0 %v932, 2
        %v972 = vpop.permute.xlu0 %971
        %973 = vrot.lane.b32.xlu0 %v960, 2
        %v974 = vpop.permute.xlu0 %973
        %983 = vrot.lane.b32.xlu0 %v874, 4
        %v984 = vpop.permute.xlu0 %983
        %985 = vrot.lane.b32.xlu0 %v902, 4
        %v986 = vpop.permute.xlu0 %985
        %987 = vrot.lane.b32.xlu0 %v930, 4
        %v988 = vpop.permute.xlu0 %987
        %989 = vrot.lane.b32.xlu0 %v958, 4
        %v990 = vpop.permute.xlu0 %989
        %999 = vrot.lane.b32.xlu0 %v878, 6
        %v1000 = vpop.permute.xlu0 %999
        %1001 = vrot.lane.b32.xlu0 %v906, 6
        %v1002 = vpop.permute.xlu0 %1001
        %1003 = vrot.lane.b32.xlu0 %v934, 6
        %v1004 = vpop.permute.xlu0 %1003
        %1005 = vrot.lane.b32.xlu0 %v962, 6
        %v1006 = vpop.permute.xlu0 %1005
        %v1011 = vsel %vm836, %v870, %v968
        %v1012 = vsel %vm836, %v898, %v970
        %v1013 = vsel %vm836, %v926, %v972
        %v1014 = vsel %vm836, %v954, %v974
        %v1015 = vsel %vm841, %v1011, %v984
        %v1016 = vsel %vm841, %v1012, %v986
        %v1017 = vsel %vm841, %v1013, %v988
        %v1018 = vsel %vm841, %v1014, %v990
        %v1019 = vsel %vm846, %v1015, %v1000
        %v1020 = vsel %vm846, %v1016, %v1002
        %v1021 = vsel %vm846, %v1017, %v1004
        %v1022 = vsel %vm846, %v1018, %v1006
        %s1023 = scalar_lea.vmem %s170, 32
        %v1024 = vld [vmem:[%s1023] sm:$0xf]
        %v1025 = vld [vmem:[%s1023 + $0x4] sm:$0xf]
        %v1026 = vld [vmem:[%s1023 + $0x8] sm:$0xf]
        %v1027 = vld [vmem:[%s1023 + $0xc] sm:$0xf]
        %s1028 = scalar_lea.vmem %s170, 48
        %v1029 = vld [vmem:[%s1028] sm:$0xf]
        %v1030 = vld [vmem:[%s1028 + $0x4] sm:$0xf]
        %v1031 = vld [vmem:[%s1028 + $0x8] sm:$0xf]
        %v1032 = vld [vmem:[%s1028 + $0xc] sm:$0xf]
        %v1033 = vperm.slane %v1024, 0
        %v1034 = vlaneseq
        %v1035 = vshrl.u32 %v1034, 7
        %1037 = vset.pattern.permute.xlu0 %v1035
        %1038 = vperm.xlu0 %1037, %v1033
        %v1039 = vpop.permute.xlu0 %1038
        %v1040 = vperm.slane %v1024, 1
        %v1041 = vlaneseq
        %v1042 = vshrl.u32 %v1041, 7
        %1044 = vset.pattern.permute.xlu0 %v1042
        %1045 = vperm.xlu0 %1044, %v1040
        %v1046 = vpop.permute.xlu0 %1045
        %v1047 = vperm.slane %v1024, 2
        %v1048 = vlaneseq
        %v1049 = vshrl.u32 %v1048, 7
        %1051 = vset.pattern.permute.xlu0 %v1049
        %1052 = vperm.xlu0 %1051, %v1047
        %v1053 = vpop.permute.xlu0 %1052
        %v1054 = vperm.slane %v1024, 3
        %v1055 = vlaneseq
        %v1056 = vshrl.u32 %v1055, 7
        %1058 = vset.pattern.permute.xlu0 %v1056
        %1059 = vperm.xlu0 %1058, %v1054
        %v1060 = vpop.permute.xlu0 %1059
        %v1061 = vperm.slane %v1025, 0
        %v1062 = vlaneseq
        %v1063 = vshrl.u32 %v1062, 7
        %1065 = vset.pattern.permute.xlu0 %v1063
        %1066 = vperm.xlu0 %1065, %v1061
        %v1067 = vpop.permute.xlu0 %1066
        %v1068 = vperm.slane %v1025, 1
        %v1069 = vlaneseq
        %v1070 = vshrl.u32 %v1069, 7
        %1072 = vset.pattern.permute.xlu0 %v1070
        %1073 = vperm.xlu0 %1072, %v1068
        %v1074 = vpop.permute.xlu0 %1073
        %v1075 = vperm.slane %v1025, 2
        %v1076 = vlaneseq
        %v1077 = vshrl.u32 %v1076, 7
        %1079 = vset.pattern.permute.xlu0 %v1077
        %1080 = vperm.xlu0 %1079, %v1075
        %v1081 = vpop.permute.xlu0 %1080
        %v1082 = vperm.slane %v1025, 3
        %v1083 = vlaneseq
        %v1084 = vshrl.u32 %v1083, 7
        %1086 = vset.pattern.permute.xlu0 %v1084
        %1087 = vperm.xlu0 %1086, %v1082
        %v1088 = vpop.permute.xlu0 %1087
        %v1089 = vperm.slane %v1026, 0
        %v1090 = vlaneseq
        %v1091 = vshrl.u32 %v1090, 7
        %1093 = vset.pattern.permute.xlu0 %v1091
        %1094 = vperm.xlu0 %1093, %v1089
        %v1095 = vpop.permute.xlu0 %1094
        %v1096 = vperm.slane %v1026, 1
        %v1097 = vlaneseq
        %v1098 = vshrl.u32 %v1097, 7
        %1100 = vset.pattern.permute.xlu0 %v1098
        %1101 = vperm.xlu0 %1100, %v1096
        %v1102 = vpop.permute.xlu0 %1101
        %v1103 = vperm.slane %v1026, 2
        %v1104 = vlaneseq
        %v1105 = vshrl.u32 %v1104, 7
        %1107 = vset.pattern.permute.xlu0 %v1105
        %1108 = vperm.xlu0 %1107, %v1103
        %v1109 = vpop.permute.xlu0 %1108
        %v1110 = vperm.slane %v1026, 3
        %v1111 = vlaneseq
        %v1112 = vshrl.u32 %v1111, 7
        %1114 = vset.pattern.permute.xlu0 %v1112
        %1115 = vperm.xlu0 %1114, %v1110
        %v1116 = vpop.permute.xlu0 %1115
        %v1117 = vperm.slane %v1027, 0
        %v1118 = vlaneseq
        %v1119 = vshrl.u32 %v1118, 7
        %1121 = vset.pattern.permute.xlu0 %v1119
        %1122 = vperm.xlu0 %1121, %v1117
        %v1123 = vpop.permute.xlu0 %1122
        %v1124 = vperm.slane %v1027, 1
        %v1125 = vlaneseq
        %v1126 = vshrl.u32 %v1125, 7
        %1128 = vset.pattern.permute.xlu0 %v1126
        %1129 = vperm.xlu0 %1128, %v1124
        %v1130 = vpop.permute.xlu0 %1129
        %v1131 = vperm.slane %v1027, 2
        %v1132 = vlaneseq
        %v1133 = vshrl.u32 %v1132, 7
        %1135 = vset.pattern.permute.xlu0 %v1133
        %1136 = vperm.xlu0 %1135, %v1131
        %v1137 = vpop.permute.xlu0 %1136
        %v1138 = vperm.slane %v1027, 3
        %v1139 = vlaneseq
        %v1140 = vshrl.u32 %v1139, 7
        %1142 = vset.pattern.permute.xlu0 %v1140
        %1143 = vperm.xlu0 %1142, %v1138
        %v1144 = vpop.permute.xlu0 %1143
        %v1145 = vperm.slane %v1029, 0
        %v1146 = vlaneseq
        %v1147 = vshrl.u32 %v1146, 7
        %1149 = vset.pattern.permute.xlu0 %v1147
        %1150 = vperm.xlu0 %1149, %v1145
        %v1151 = vpop.permute.xlu0 %1150
        %v1152 = vperm.slane %v1029, 1
        %v1153 = vlaneseq
        %v1154 = vshrl.u32 %v1153, 7
        %1156 = vset.pattern.permute.xlu0 %v1154
        %1157 = vperm.xlu0 %1156, %v1152
        %v1158 = vpop.permute.xlu0 %1157
        %v1159 = vperm.slane %v1029, 2
        %v1160 = vlaneseq
        %v1161 = vshrl.u32 %v1160, 7
        %1163 = vset.pattern.permute.xlu0 %v1161
        %1164 = vperm.xlu0 %1163, %v1159
        %v1165 = vpop.permute.xlu0 %1164
        %v1166 = vperm.slane %v1029, 3
        %v1167 = vlaneseq
        %v1168 = vshrl.u32 %v1167, 7
        %1170 = vset.pattern.permute.xlu0 %v1168
        %1171 = vperm.xlu0 %1170, %v1166
        %v1172 = vpop.permute.xlu0 %1171
        %v1173 = vperm.slane %v1030, 0
        %v1174 = vlaneseq
        %v1175 = vshrl.u32 %v1174, 7
        %1177 = vset.pattern.permute.xlu0 %v1175
        %1178 = vperm.xlu0 %1177, %v1173
        %v1179 = vpop.permute.xlu0 %1178
        %v1180 = vperm.slane %v1030, 1
        %v1181 = vlaneseq
        %v1182 = vshrl.u32 %v1181, 7
        %1184 = vset.pattern.permute.xlu0 %v1182
        %1185 = vperm.xlu0 %1184, %v1180
        %v1186 = vpop.permute.xlu0 %1185
        %v1187 = vperm.slane %v1030, 2
        %v1188 = vlaneseq
        %v1189 = vshrl.u32 %v1188, 7
        %1191 = vset.pattern.permute.xlu0 %v1189
        %1192 = vperm.xlu0 %1191, %v1187
        %v1193 = vpop.permute.xlu0 %1192
        %v1194 = vperm.slane %v1030, 3
        %v1195 = vlaneseq
        %v1196 = vshrl.u32 %v1195, 7
        %1198 = vset.pattern.permute.xlu0 %v1196
        %1199 = vperm.xlu0 %1198, %v1194
        %v1200 = vpop.permute.xlu0 %1199
        %v1201 = vperm.slane %v1031, 0
        %v1202 = vlaneseq
        %v1203 = vshrl.u32 %v1202, 7
        %1205 = vset.pattern.permute.xlu0 %v1203
        %1206 = vperm.xlu0 %1205, %v1201
        %v1207 = vpop.permute.xlu0 %1206
        %v1208 = vperm.slane %v1031, 1
        %v1209 = vlaneseq
        %v1210 = vshrl.u32 %v1209, 7
        %1212 = vset.pattern.permute.xlu0 %v1210
        %1213 = vperm.xlu0 %1212, %v1208
        %v1214 = vpop.permute.xlu0 %1213
        %v1215 = vperm.slane %v1031, 2
        %v1216 = vlaneseq
        %v1217 = vshrl.u32 %v1216, 7
        %1219 = vset.pattern.permute.xlu0 %v1217
        %1220 = vperm.xlu0 %1219, %v1215
        %v1221 = vpop.permute.xlu0 %1220
        %v1222 = vperm.slane %v1031, 3
        %v1223 = vlaneseq
        %v1224 = vshrl.u32 %v1223, 7
        %1226 = vset.pattern.permute.xlu0 %v1224
        %1227 = vperm.xlu0 %1226, %v1222
        %v1228 = vpop.permute.xlu0 %1227
        %v1229 = vperm.slane %v1032, 0
        %v1230 = vlaneseq
        %v1231 = vshrl.u32 %v1230, 7
        %1233 = vset.pattern.permute.xlu0 %v1231
        %1234 = vperm.xlu0 %1233, %v1229
        %v1235 = vpop.permute.xlu0 %1234
        %v1236 = vperm.slane %v1032, 1
        %v1237 = vlaneseq
        %v1238 = vshrl.u32 %v1237, 7
        %1240 = vset.pattern.permute.xlu0 %v1238
        %1241 = vperm.xlu0 %1240, %v1236
        %v1242 = vpop.permute.xlu0 %1241
        %v1243 = vperm.slane %v1032, 2
        %v1244 = vlaneseq
        %v1245 = vshrl.u32 %v1244, 7
        %1247 = vset.pattern.permute.xlu0 %v1245
        %1248 = vperm.xlu0 %1247, %v1243
        %v1249 = vpop.permute.xlu0 %1248
        %v1250 = vperm.slane %v1032, 3
        %v1251 = vlaneseq
        %v1252 = vshrl.u32 %v1251, 7
        %1254 = vset.pattern.permute.xlu0 %v1252
        %1255 = vperm.xlu0 %1254, %v1250
        %v1256 = vpop.permute.xlu0 %1255
        %v1257 = vsel %vm408, %v1039, %v1151
        %v1258 = vsel %vm408, %v1046, %v1158
        %v1259 = vsel %vm408, %v1053, %v1165
        %v1260 = vsel %vm408, %v1060, %v1172
        %v1261 = vsel %vm408, %v1067, %v1179
        %v1262 = vsel %vm408, %v1074, %v1186
        %v1263 = vsel %vm408, %v1081, %v1193
        %v1264 = vsel %vm408, %v1088, %v1200
        %v1265 = vsel %vm408, %v1095, %v1207
        %v1266 = vsel %vm408, %v1102, %v1214
        %v1267 = vsel %vm408, %v1109, %v1221
        %v1268 = vsel %vm408, %v1116, %v1228
        %v1269 = vsel %vm408, %v1123, %v1235
        %v1270 = vsel %vm408, %v1130, %v1242
        %v1271 = vsel %vm408, %v1137, %v1249
        %v1272 = vsel %vm408, %v1144, %v1256
        %s1273 = scalar_lea.vmem %s170, 96
        %v1274 = vld [vmem:[%s1273] sm:$0xf]
        %v1275 = vld [vmem:[%s1273 + $0x4] sm:$0xf]
        %v1276 = vld [vmem:[%s1273 + $0x8] sm:$0xf]
        %v1277 = vld [vmem:[%s1273 + $0xc] sm:$0xf]
        %s1278 = scalar_lea.vmem %s170, 112
        %v1279 = vld [vmem:[%s1278] sm:$0xf]
        %v1280 = vld [vmem:[%s1278 + $0x4] sm:$0xf]
        %v1281 = vld [vmem:[%s1278 + $0x8] sm:$0xf]
        %v1282 = vld [vmem:[%s1278 + $0xc] sm:$0xf]
        %v1283 = vperm.slane %v1274, 0
        %v1284 = vlaneseq
        %v1285 = vshrl.u32 %v1284, 7
        %1287 = vset.pattern.permute.xlu0 %v1285
        %1288 = vperm.xlu0 %1287, %v1283
        %v1289 = vpop.permute.xlu0 %1288
        %v1290 = vperm.slane %v1274, 1
        %v1291 = vlaneseq
        %v1292 = vshrl.u32 %v1291, 7
        %1294 = vset.pattern.permute.xlu0 %v1292
        %1295 = vperm.xlu0 %1294, %v1290
        %v1296 = vpop.permute.xlu0 %1295
        %v1297 = vperm.slane %v1274, 2
        %v1298 = vlaneseq
        %v1299 = vshrl.u32 %v1298, 7
        %1301 = vset.pattern.permute.xlu0 %v1299
        %1302 = vperm.xlu0 %1301, %v1297
        %v1303 = vpop.permute.xlu0 %1302
        %v1304 = vperm.slane %v1274, 3
        %v1305 = vlaneseq
        %v1306 = vshrl.u32 %v1305, 7
        %1308 = vset.pattern.permute.xlu0 %v1306
        %1309 = vperm.xlu0 %1308, %v1304
        %v1310 = vpop.permute.xlu0 %1309
        %v1311 = vperm.slane %v1275, 0
        %v1312 = vlaneseq
        %v1313 = vshrl.u32 %v1312, 7
        %1315 = vset.pattern.permute.xlu0 %v1313
        %1316 = vperm.xlu0 %1315, %v1311
        %v1317 = vpop.permute.xlu0 %1316
        %v1318 = vperm.slane %v1275, 1
        %v1319 = vlaneseq
        %v1320 = vshrl.u32 %v1319, 7
        %1322 = vset.pattern.permute.xlu0 %v1320
        %1323 = vperm.xlu0 %1322, %v1318
        %v1324 = vpop.permute.xlu0 %1323
        %v1325 = vperm.slane %v1275, 2
        %v1326 = vlaneseq
        %v1327 = vshrl.u32 %v1326, 7
        %1329 = vset.pattern.permute.xlu0 %v1327
        %1330 = vperm.xlu0 %1329, %v1325
        %v1331 = vpop.permute.xlu0 %1330
        %v1332 = vperm.slane %v1275, 3
        %v1333 = vlaneseq
        %v1334 = vshrl.u32 %v1333, 7
        %1336 = vset.pattern.permute.xlu0 %v1334
        %1337 = vperm.xlu0 %1336, %v1332
        %v1338 = vpop.permute.xlu0 %1337
        %v1339 = vperm.slane %v1276, 0
        %v1340 = vlaneseq
        %v1341 = vshrl.u32 %v1340, 7
        %1343 = vset.pattern.permute.xlu0 %v1341
        %1344 = vperm.xlu0 %1343, %v1339
        %v1345 = vpop.permute.xlu0 %1344
        %v1346 = vperm.slane %v1276, 1
        %v1347 = vlaneseq
        %v1348 = vshrl.u32 %v1347, 7
        %1350 = vset.pattern.permute.xlu0 %v1348
        %1351 = vperm.xlu0 %1350, %v1346
        %v1352 = vpop.permute.xlu0 %1351
        %v1353 = vperm.slane %v1276, 2
        %v1354 = vlaneseq
        %v1355 = vshrl.u32 %v1354, 7
        %1357 = vset.pattern.permute.xlu0 %v1355
        %1358 = vperm.xlu0 %1357, %v1353
        %v1359 = vpop.permute.xlu0 %1358
        %v1360 = vperm.slane %v1276, 3
        %v1361 = vlaneseq
        %v1362 = vshrl.u32 %v1361, 7
        %1364 = vset.pattern.permute.xlu0 %v1362
        %1365 = vperm.xlu0 %1364, %v1360
        %v1366 = vpop.permute.xlu0 %1365
        %v1367 = vperm.slane %v1277, 0
        %v1368 = vlaneseq
        %v1369 = vshrl.u32 %v1368, 7
        %1371 = vset.pattern.permute.xlu0 %v1369
        %1372 = vperm.xlu0 %1371, %v1367
        %v1373 = vpop.permute.xlu0 %1372
        %v1374 = vperm.slane %v1277, 1
        %v1375 = vlaneseq
        %v1376 = vshrl.u32 %v1375, 7
        %1378 = vset.pattern.permute.xlu0 %v1376
        %1379 = vperm.xlu0 %1378, %v1374
        %v1380 = vpop.permute.xlu0 %1379
        %v1381 = vperm.slane %v1277, 2
        %v1382 = vlaneseq
        %v1383 = vshrl.u32 %v1382, 7
        %1385 = vset.pattern.permute.xlu0 %v1383
        %1386 = vperm.xlu0 %1385, %v1381
        %v1387 = vpop.permute.xlu0 %1386
        %v1388 = vperm.slane %v1277, 3
        %v1389 = vlaneseq
        %v1390 = vshrl.u32 %v1389, 7
        %1392 = vset.pattern.permute.xlu0 %v1390
        %1393 = vperm.xlu0 %1392, %v1388
        %v1394 = vpop.permute.xlu0 %1393
        %v1395 = vperm.slane %v1279, 0
        %v1396 = vlaneseq
        %v1397 = vshrl.u32 %v1396, 7
        %1399 = vset.pattern.permute.xlu0 %v1397
        %1400 = vperm.xlu0 %1399, %v1395
        %v1401 = vpop.permute.xlu0 %1400
        %v1402 = vperm.slane %v1279, 1
        %v1403 = vlaneseq
        %v1404 = vshrl.u32 %v1403, 7
        %1406 = vset.pattern.permute.xlu0 %v1404
        %1407 = vperm.xlu0 %1406, %v1402
        %v1408 = vpop.permute.xlu0 %1407
        %v1409 = vperm.slane %v1279, 2
        %v1410 = vlaneseq
        %v1411 = vshrl.u32 %v1410, 7
        %1413 = vset.pattern.permute.xlu0 %v1411
        %1414 = vperm.xlu0 %1413, %v1409
        %v1415 = vpop.permute.xlu0 %1414
        %v1416 = vperm.slane %v1279, 3
        %v1417 = vlaneseq
        %v1418 = vshrl.u32 %v1417, 7
        %1420 = vset.pattern.permute.xlu0 %v1418
        %1421 = vperm.xlu0 %1420, %v1416
        %v1422 = vpop.permute.xlu0 %1421
        %v1423 = vperm.slane %v1280, 0
        %v1424 = vlaneseq
        %v1425 = vshrl.u32 %v1424, 7
        %1427 = vset.pattern.permute.xlu0 %v1425
        %1428 = vperm.xlu0 %1427, %v1423
        %v1429 = vpop.permute.xlu0 %1428
        %v1430 = vperm.slane %v1280, 1
        %v1431 = vlaneseq
        %v1432 = vshrl.u32 %v1431, 7
        %1434 = vset.pattern.permute.xlu0 %v1432
        %1435 = vperm.xlu0 %1434, %v1430
        %v1436 = vpop.permute.xlu0 %1435
        %v1437 = vperm.slane %v1280, 2
        %v1438 = vlaneseq
        %v1439 = vshrl.u32 %v1438, 7
        %1441 = vset.pattern.permute.xlu0 %v1439
        %1442 = vperm.xlu0 %1441, %v1437
        %v1443 = vpop.permute.xlu0 %1442
        %v1444 = vperm.slane %v1280, 3
        %v1445 = vlaneseq
        %v1446 = vshrl.u32 %v1445, 7
        %1448 = vset.pattern.permute.xlu0 %v1446
        %1449 = vperm.xlu0 %1448, %v1444
        %v1450 = vpop.permute.xlu0 %1449
        %v1451 = vperm.slane %v1281, 0
        %v1452 = vlaneseq
        %v1453 = vshrl.u32 %v1452, 7
        %1455 = vset.pattern.permute.xlu0 %v1453
        %1456 = vperm.xlu0 %1455, %v1451
        %v1457 = vpop.permute.xlu0 %1456
        %v1458 = vperm.slane %v1281, 1
        %v1459 = vlaneseq
        %v1460 = vshrl.u32 %v1459, 7
        %1462 = vset.pattern.permute.xlu0 %v1460
        %1463 = vperm.xlu0 %1462, %v1458
        %v1464 = vpop.permute.xlu0 %1463
        %v1465 = vperm.slane %v1281, 2
        %v1466 = vlaneseq
        %v1467 = vshrl.u32 %v1466, 7
        %1469 = vset.pattern.permute.xlu0 %v1467
        %1470 = vperm.xlu0 %1469, %v1465
        %v1471 = vpop.permute.xlu0 %1470
        %v1472 = vperm.slane %v1281, 3
        %v1473 = vlaneseq
        %v1474 = vshrl.u32 %v1473, 7
        %1476 = vset.pattern.permute.xlu0 %v1474
        %1477 = vperm.xlu0 %1476, %v1472
        %v1478 = vpop.permute.xlu0 %1477
        %v1479 = vperm.slane %v1282, 0
        %v1480 = vlaneseq
        %v1481 = vshrl.u32 %v1480, 7
        %1483 = vset.pattern.permute.xlu0 %v1481
        %1484 = vperm.xlu0 %1483, %v1479
        %v1485 = vpop.permute.xlu0 %1484
        %v1486 = vperm.slane %v1282, 1
        %v1487 = vlaneseq
        %v1488 = vshrl.u32 %v1487, 7
        %1490 = vset.pattern.permute.xlu0 %v1488
        %1491 = vperm.xlu0 %1490, %v1486
        %v1492 = vpop.permute.xlu0 %1491
        %v1493 = vperm.slane %v1282, 2
        %v1494 = vlaneseq
        %v1495 = vshrl.u32 %v1494, 7
        %1497 = vset.pattern.permute.xlu0 %v1495
        %1498 = vperm.xlu0 %1497, %v1493
        %v1499 = vpop.permute.xlu0 %1498
        %v1500 = vperm.slane %v1282, 3
        %v1501 = vlaneseq
        %v1502 = vshrl.u32 %v1501, 7
        %1504 = vset.pattern.permute.xlu0 %v1502
        %1505 = vperm.xlu0 %1504, %v1500
        %v1506 = vpop.permute.xlu0 %1505
        %v1507 = vsel %vm408, %v1289, %v1401
        %v1508 = vsel %vm408, %v1296, %v1408
        %v1509 = vsel %vm408, %v1303, %v1415
        %v1510 = vsel %vm408, %v1310, %v1422
        %v1511 = vsel %vm408, %v1317, %v1429
        %v1512 = vsel %vm408, %v1324, %v1436
        %v1513 = vsel %vm408, %v1331, %v1443
        %v1514 = vsel %vm408, %v1338, %v1450
        %v1515 = vsel %vm408, %v1345, %v1457
        %v1516 = vsel %vm408, %v1352, %v1464
        %v1517 = vsel %vm408, %v1359, %v1471
        %v1518 = vsel %vm408, %v1366, %v1478
        %v1519 = vsel %vm408, %v1373, %v1485
        %v1520 = vsel %vm408, %v1380, %v1492
        %v1521 = vsel %vm408, %v1387, %v1499
        %v1522 = vsel %vm408, %v1394, %v1506
        %v1523 = vrot.slane %v1259, 4
        %v1524 = vsel %vm676, %v1523, %v1257
        %v1526 = vunpack.c.l.s4 1983009808
        %v1527 = vunpack.c.0.s8 %v1526
        %v1528 = vperm.slane %v1524, %v1527
        %v1529 = vrot.slane %v1260, 4
        %v1530 = vsel %vm676, %v1529, %v1258
        %v1532 = vunpack.c.l.s4 1983009808
        %v1533 = vunpack.c.0.s8 %v1532
        %v1534 = vperm.slane %v1530, %v1533
        %v1535 = vrot.slane %v1534, 4
        %v1536 = vsel %vm676, %v1535, %v1528
        %v1537 = vrot.slane %v1528, 4
        %v1538 = vsel %vm676, %v1534, %v1537
        %v1540 = vunpack.c.l.s4 1934713408
        %v1541 = vunpack.c.0.s8 %v1540
        %v1542 = vperm.slane %v1536, %v1541
        %v1544 = vunpack.c.l.s4 1934713408
        %v1545 = vunpack.c.0.s8 %v1544
        %v1546 = vperm.slane %v1538, %v1545
        %v1547 = vrot.slane %v1542, 4
        %v1548 = vsel %vm676, 0.0, %v1547
        %v1549 = vrot.slane %v1546, 4
        %v1550 = vsel %vm676, 0.0, %v1549
        %v1551 = vrot.slane %v1263, 4
        %v1552 = vsel %vm676, %v1551, %v1261
        %v1554 = vunpack.c.l.s4 1983009808
        %v1555 = vunpack.c.0.s8 %v1554
        %v1556 = vperm.slane %v1552, %v1555
        %v1557 = vrot.slane %v1264, 4
        %v1558 = vsel %vm676, %v1557, %v1262
        %v1560 = vunpack.c.l.s4 1983009808
        %v1561 = vunpack.c.0.s8 %v1560
        %v1562 = vperm.slane %v1558, %v1561
        %v1563 = vrot.slane %v1562, 4
        %v1564 = vsel %vm676, %v1563, %v1556
        %v1565 = vrot.slane %v1556, 4
        %v1566 = vsel %vm676, %v1562, %v1565
        %v1568 = vunpack.c.l.s4 1934713408
        %v1569 = vunpack.c.0.s8 %v1568
        %v1570 = vperm.slane %v1564, %v1569
        %v1572 = vunpack.c.l.s4 1934713408
        %v1573 = vunpack.c.0.s8 %v1572
        %v1574 = vperm.slane %v1566, %v1573
        %v1575 = vrot.slane %v1570, 4
        %v1576 = vsel %vm676, 0.0, %v1575
        %v1577 = vrot.slane %v1574, 4
        %v1578 = vsel %vm676, 0.0, %v1577
        %v1579 = vrot.slane %v1267, 4
        %v1580 = vsel %vm676, %v1579, %v1265
        %v1582 = vunpack.c.l.s4 1983009808
        %v1583 = vunpack.c.0.s8 %v1582
        %v1584 = vperm.slane %v1580, %v1583
        %v1585 = vrot.slane %v1268, 4
        %v1586 = vsel %vm676, %v1585, %v1266
        %v1588 = vunpack.c.l.s4 1983009808
        %v1589 = vunpack.c.0.s8 %v1588
        %v1590 = vperm.slane %v1586, %v1589
        %v1591 = vrot.slane %v1590, 4
        %v1592 = vsel %vm676, %v1591, %v1584
        %v1593 = vrot.slane %v1584, 4
        %v1594 = vsel %vm676, %v1590, %v1593
        %v1596 = vunpack.c.l.s4 1934713408
        %v1597 = vunpack.c.0.s8 %v1596
        %v1598 = vperm.slane %v1592, %v1597
        %v1600 = vunpack.c.l.s4 1934713408
        %v1601 = vunpack.c.0.s8 %v1600
        %v1602 = vperm.slane %v1594, %v1601
        %v1603 = vrot.slane %v1598, 4
        %v1604 = vsel %vm676, 0.0, %v1603
        %v1605 = vrot.slane %v1602, 4
        %v1606 = vsel %vm676, 0.0, %v1605
        %v1607 = vrot.slane %v1271, 4
        %v1608 = vsel %vm676, %v1607, %v1269
        %v1610 = vunpack.c.l.s4 1983009808
        %v1611 = vunpack.c.0.s8 %v1610
        %v1612 = vperm.slane %v1608, %v1611
        %v1613 = vrot.slane %v1272, 4
        %v1614 = vsel %vm676, %v1613, %v1270
        %v1616 = vunpack.c.l.s4 1983009808
        %v1617 = vunpack.c.0.s8 %v1616
        %v1618 = vperm.slane %v1614, %v1617
        %v1619 = vrot.slane %v1618, 4
        %v1620 = vsel %vm676, %v1619, %v1612
        %v1621 = vrot.slane %v1612, 4
        %v1622 = vsel %vm676, %v1618, %v1621
        %v1624 = vunpack.c.l.s4 1934713408
        %v1625 = vunpack.c.0.s8 %v1624
        %v1626 = vperm.slane %v1620, %v1625
        %v1628 = vunpack.c.l.s4 1934713408
        %v1629 = vunpack.c.0.s8 %v1628
        %v1630 = vperm.slane %v1622, %v1629
        %v1631 = vrot.slane %v1626, 4
        %v1632 = vsel %vm676, 0.0, %v1631
        %v1633 = vrot.slane %v1630, 4
        %v1634 = vsel %vm676, 0.0, %v1633
        %1639 = vrot.lane.b32.xlu0 %v1548, 2
        %v1640 = vpop.permute.xlu0 %1639
        %1641 = vrot.lane.b32.xlu0 %v1576, 2
        %v1642 = vpop.permute.xlu0 %1641
        %1643 = vrot.lane.b32.xlu0 %v1604, 2
        %v1644 = vpop.permute.xlu0 %1643
        %1645 = vrot.lane.b32.xlu0 %v1632, 2
        %v1646 = vpop.permute.xlu0 %1645
        %1655 = vrot.lane.b32.xlu0 %v1546, 4
        %v1656 = vpop.permute.xlu0 %1655
        %1657 = vrot.lane.b32.xlu0 %v1574, 4
        %v1658 = vpop.permute.xlu0 %1657
        %1659 = vrot.lane.b32.xlu0 %v1602, 4
        %v1660 = vpop.permute.xlu0 %1659
        %1661 = vrot.lane.b32.xlu0 %v1630, 4
        %v1662 = vpop.permute.xlu0 %1661
        %1671 = vrot.lane.b32.xlu0 %v1550, 6
        %v1672 = vpop.permute.xlu0 %1671
        %1673 = vrot.lane.b32.xlu0 %v1578, 6
        %v1674 = vpop.permute.xlu0 %1673
        %1675 = vrot.lane.b32.xlu0 %v1606, 6
        %v1676 = vpop.permute.xlu0 %1675
        %1677 = vrot.lane.b32.xlu0 %v1634, 6
        %v1678 = vpop.permute.xlu0 %1677
        %v1683 = vsel %vm836, %v1542, %v1640
        %v1684 = vsel %vm836, %v1570, %v1642
        %v1685 = vsel %vm836, %v1598, %v1644
        %v1686 = vsel %vm836, %v1626, %v1646
        %v1687 = vsel %vm841, %v1683, %v1656
        %v1688 = vsel %vm841, %v1684, %v1658
        %v1689 = vsel %vm841, %v1685, %v1660
        %v1690 = vsel %vm841, %v1686, %v1662
        %v1691 = vsel %vm846, %v1687, %v1672
        %v1692 = vsel %vm846, %v1688, %v1674
        %v1693 = vsel %vm846, %v1689, %v1676
        %v1694 = vsel %vm846, %v1690, %v1678
        %v1695 = vrot.slane %v1509, 4
        %v1696 = vsel %vm676, %v1695, %v1507
        %v1698 = vunpack.c.l.s4 1983009808
        %v1699 = vunpack.c.0.s8 %v1698
        %v1700 = vperm.slane %v1696, %v1699
        %v1701 = vrot.slane %v1510, 4
        %v1702 = vsel %vm676, %v1701, %v1508
        %v1704 = vunpack.c.l.s4 1983009808
        %v1705 = vunpack.c.0.s8 %v1704
        %v1706 = vperm.slane %v1702, %v1705
        %v1707 = vrot.slane %v1706, 4
        %v1708 = vsel %vm676, %v1707, %v1700
        %v1709 = vrot.slane %v1700, 4
        %v1710 = vsel %vm676, %v1706, %v1709
        %v1712 = vunpack.c.l.s4 1934713408
        %v1713 = vunpack.c.0.s8 %v1712
        %v1714 = vperm.slane %v1708, %v1713
        %v1716 = vunpack.c.l.s4 1934713408
        %v1717 = vunpack.c.0.s8 %v1716
        %v1718 = vperm.slane %v1710, %v1717
        %v1719 = vrot.slane %v1714, 4
        %v1720 = vsel %vm676, 0.0, %v1719
        %v1721 = vrot.slane %v1718, 4
        %v1722 = vsel %vm676, 0.0, %v1721
        %v1723 = vrot.slane %v1513, 4
        %v1724 = vsel %vm676, %v1723, %v1511
        %v1726 = vunpack.c.l.s4 1983009808
        %v1727 = vunpack.c.0.s8 %v1726
        %v1728 = vperm.slane %v1724, %v1727
        %v1729 = vrot.slane %v1514, 4
        %v1730 = vsel %vm676, %v1729, %v1512
        %v1732 = vunpack.c.l.s4 1983009808
        %v1733 = vunpack.c.0.s8 %v1732
        %v1734 = vperm.slane %v1730, %v1733
        %v1735 = vrot.slane %v1734, 4
        %v1736 = vsel %vm676, %v1735, %v1728
        %v1737 = vrot.slane %v1728, 4
        %v1738 = vsel %vm676, %v1734, %v1737
        %v1740 = vunpack.c.l.s4 1934713408
        %v1741 = vunpack.c.0.s8 %v1740
        %v1742 = vperm.slane %v1736, %v1741
        %v1744 = vunpack.c.l.s4 1934713408
        %v1745 = vunpack.c.0.s8 %v1744
        %v1746 = vperm.slane %v1738, %v1745
        %v1747 = vrot.slane %v1742, 4
        %v1748 = vsel %vm676, 0.0, %v1747
        %v1749 = vrot.slane %v1746, 4
        %v1750 = vsel %vm676, 0.0, %v1749
        %v1751 = vrot.slane %v1517, 4
        %v1752 = vsel %vm676, %v1751, %v1515
        %v1754 = vunpack.c.l.s4 1983009808
        %v1755 = vunpack.c.0.s8 %v1754
        %v1756 = vperm.slane %v1752, %v1755
        %v1757 = vrot.slane %v1518, 4
        %v1758 = vsel %vm676, %v1757, %v1516
        %v1760 = vunpack.c.l.s4 1983009808
        %v1761 = vunpack.c.0.s8 %v1760
        %v1762 = vperm.slane %v1758, %v1761
        %v1763 = vrot.slane %v1762, 4
        %v1764 = vsel %vm676, %v1763, %v1756
        %v1765 = vrot.slane %v1756, 4
        %v1766 = vsel %vm676, %v1762, %v1765
        %v1768 = vunpack.c.l.s4 1934713408
        %v1769 = vunpack.c.0.s8 %v1768
        %v1770 = vperm.slane %v1764, %v1769
        %v1772 = vunpack.c.l.s4 1934713408
        %v1773 = vunpack.c.0.s8 %v1772
        %v1774 = vperm.slane %v1766, %v1773
        %v1775 = vrot.slane %v1770, 4
        %v1776 = vsel %vm676, 0.0, %v1775
        %v1777 = vrot.slane %v1774, 4
        %v1778 = vsel %vm676, 0.0, %v1777
        %v1779 = vrot.slane %v1521, 4
        %v1780 = vsel %vm676, %v1779, %v1519
        %v1782 = vunpack.c.l.s4 1983009808
        %v1783 = vunpack.c.0.s8 %v1782
        %v1784 = vperm.slane %v1780, %v1783
        %v1785 = vrot.slane %v1522, 4
        %v1786 = vsel %vm676, %v1785, %v1520
        %v1788 = vunpack.c.l.s4 1983009808
        %v1789 = vunpack.c.0.s8 %v1788
        %v1790 = vperm.slane %v1786, %v1789
        %v1791 = vrot.slane %v1790, 4
        %v1792 = vsel %vm676, %v1791, %v1784
        %v1793 = vrot.slane %v1784, 4
        %v1794 = vsel %vm676, %v1790, %v1793
        %v1796 = vunpack.c.l.s4 1934713408
        %v1797 = vunpack.c.0.s8 %v1796
        %v1798 = vperm.slane %v1792, %v1797
        %v1800 = vunpack.c.l.s4 1934713408
        %v1801 = vunpack.c.0.s8 %v1800
        %v1802 = vperm.slane %v1794, %v1801
        %v1803 = vrot.slane %v1798, 4
        %v1804 = vsel %vm676, 0.0, %v1803
        %v1805 = vrot.slane %v1802, 4
        %v1806 = vsel %vm676, 0.0, %v1805
        %1811 = vrot.lane.b32.xlu0 %v1720, 2
        %v1812 = vpop.permute.xlu0 %1811
        %1813 = vrot.lane.b32.xlu0 %v1748, 2
        %v1814 = vpop.permute.xlu0 %1813
        %1815 = vrot.lane.b32.xlu0 %v1776, 2
        %v1816 = vpop.permute.xlu0 %1815
        %1817 = vrot.lane.b32.xlu0 %v1804, 2
        %v1818 = vpop.permute.xlu0 %1817
        %1827 = vrot.lane.b32.xlu0 %v1718, 4
        %v1828 = vpop.permute.xlu0 %1827
        %1829 = vrot.lane.b32.xlu0 %v1746, 4
        %v1830 = vpop.permute.xlu0 %1829
        %1831 = vrot.lane.b32.xlu0 %v1774, 4
        %v1832 = vpop.permute.xlu0 %1831
        %1833 = vrot.lane.b32.xlu0 %v1802, 4
        %v1834 = vpop.permute.xlu0 %1833
        %1843 = vrot.lane.b32.xlu0 %v1722, 6
        %v1844 = vpop.permute.xlu0 %1843
        %1845 = vrot.lane.b32.xlu0 %v1750, 6
        %v1846 = vpop.permute.xlu0 %1845
        %1847 = vrot.lane.b32.xlu0 %v1778, 6
        %v1848 = vpop.permute.xlu0 %1847
        %1849 = vrot.lane.b32.xlu0 %v1806, 6
        %v1850 = vpop.permute.xlu0 %1849
        %v1855 = vsel %vm836, %v1714, %v1812
        %v1856 = vsel %vm836, %v1742, %v1814
        %v1857 = vsel %vm836, %v1770, %v1816
        %v1858 = vsel %vm836, %v1798, %v1818
        %v1859 = vsel %vm841, %v1855, %v1828
        %v1860 = vsel %vm841, %v1856, %v1830
        %v1861 = vsel %vm841, %v1857, %v1832
        %v1862 = vsel %vm841, %v1858, %v1834
        %v1863 = vsel %vm846, %v1859, %v1844
        %v1864 = vsel %vm846, %v1860, %v1846
        %v1865 = vsel %vm846, %v1861, %v1848
        %v1866 = vsel %vm846, %v1862, %v1850
        %v1875 = vrot.slane %v847, 1
        %v1876 = vrot.slane %v847, 2
        %v1877 = vrot.slane %v847, 3
        %v1878 = vrot.slane %v1019, 1
        %v1879 = vrot.slane %v1019, 2
        %v1880 = vrot.slane %v1019, 3
        %v1881 = vrot.slane %v848, 1
        %v1882 = vrot.slane %v848, 2
        %v1883 = vrot.slane %v848, 3
        %v1884 = vrot.slane %v1020, 1
        %v1885 = vrot.slane %v1020, 2
        %v1886 = vrot.slane %v1020, 3
        %v1887 = vrot.slane %v849, 1
        %v1888 = vrot.slane %v849, 2
        %v1889 = vrot.slane %v849, 3
        %v1890 = vrot.slane %v1021, 1
        %v1891 = vrot.slane %v1021, 2
        %v1892 = vrot.slane %v1021, 3
        %v1893 = vrot.slane %v850, 1
        %v1894 = vrot.slane %v850, 2
        %v1895 = vrot.slane %v850, 3
        %v1896 = vrot.slane %v1022, 1
        %v1897 = vrot.slane %v1022, 2
        %v1898 = vrot.slane %v1022, 3
        %v1931 = vrot.slane %v1691, 1
        %v1932 = vrot.slane %v1691, 2
        %v1933 = vrot.slane %v1691, 3
        %v1934 = vrot.slane %v1863, 1
        %v1935 = vrot.slane %v1863, 2
        %v1936 = vrot.slane %v1863, 3
        %v1937 = vrot.slane %v1692, 1
        %v1938 = vrot.slane %v1692, 2
        %v1939 = vrot.slane %v1692, 3
        %v1940 = vrot.slane %v1864, 1
        %v1941 = vrot.slane %v1864, 2
        %v1942 = vrot.slane %v1864, 3
        %v1943 = vrot.slane %v1693, 1
        %v1944 = vrot.slane %v1693, 2
        %v1945 = vrot.slane %v1693, 3
        %v1946 = vrot.slane %v1865, 1
        %v1947 = vrot.slane %v1865, 2
        %v1948 = vrot.slane %v1865, 3
        %v1949 = vrot.slane %v1694, 1
        %v1950 = vrot.slane %v1694, 2
        %v1951 = vrot.slane %v1694, 3
        %v1952 = vrot.slane %v1866, 1
        %v1953 = vrot.slane %v1866, 2
        %v1954 = vrot.slane %v1866, 3
        %v1955 = vperm.slane %v1691, 0
        %v1956 = vperm.slane %v1931, 0
        %v1957 = vperm.slane %v1932, 0
        %v1958 = vperm.slane %v1933, 0
        %v1959 = vperm.slane %v1863, 0
        %v1960 = vperm.slane %v1934, 0
        %v1961 = vperm.slane %v1935, 0
        %v1962 = vperm.slane %v1936, 0
        %v1963 = vperm.slane %v1692, 0
        %v1964 = vperm.slane %v1937, 0
        %v1965 = vperm.slane %v1938, 0
        %v1966 = vperm.slane %v1939, 0
        %v1967 = vperm.slane %v1864, 0
        %v1968 = vperm.slane %v1940, 0
        %v1969 = vperm.slane %v1941, 0
        %v1970 = vperm.slane %v1942, 0
        %v1971 = vperm.slane %v1693, 0
        %v1972 = vperm.slane %v1943, 0
        %v1973 = vperm.slane %v1944, 0
        %v1974 = vperm.slane %v1945, 0
        %v1975 = vperm.slane %v1865, 0
        %v1976 = vperm.slane %v1946, 0
        %v1977 = vperm.slane %v1947, 0
        %v1978 = vperm.slane %v1948, 0
        %v1979 = vperm.slane %v1694, 0
        %v1980 = vperm.slane %v1949, 0
        %v1981 = vperm.slane %v1950, 0
        %v1982 = vperm.slane %v1951, 0
        %v1983 = vperm.slane %v1866, 0
        %v1984 = vperm.slane %v1952, 0
        %v1985 = vperm.slane %v1953, 0
        %v1986 = vperm.slane %v1954, 0
        %vm2019 = vcmask 1040384
        %v2020 = vsel %vm2019, %v847, %v1955
        %v2021 = vsel %vm2019, %v1875, %v1956
        %v2022 = vsel %vm2019, %v1876, %v1957
        %v2023 = vsel %vm2019, %v1877, %v1958
        %v2024 = vsel %vm2019, %v1019, %v1959
        %v2025 = vsel %vm2019, %v1878, %v1960
        %v2026 = vsel %vm2019, %v1879, %v1961
        %v2027 = vsel %vm2019, %v1880, %v1962
        %v2028 = vsel %vm2019, %v848, %v1963
        %v2029 = vsel %vm2019, %v1881, %v1964
        %v2030 = vsel %vm2019, %v1882, %v1965
        %v2031 = vsel %vm2019, %v1883, %v1966
        %v2032 = vsel %vm2019, %v1020, %v1967
        %v2033 = vsel %vm2019, %v1884, %v1968
        %v2034 = vsel %vm2019, %v1885, %v1969
        %v2035 = vsel %vm2019, %v1886, %v1970
        %v2036 = vsel %vm2019, %v849, %v1971
        %v2037 = vsel %vm2019, %v1887, %v1972
        %v2038 = vsel %vm2019, %v1888, %v1973
        %v2039 = vsel %vm2019, %v1889, %v1974
        %v2040 = vsel %vm2019, %v1021, %v1975
        %v2041 = vsel %vm2019, %v1890, %v1976
        %v2042 = vsel %vm2019, %v1891, %v1977
        %v2043 = vsel %vm2019, %v1892, %v1978
        %v2044 = vsel %vm2019, %v850, %v1979
        %v2045 = vsel %vm2019, %v1893, %v1980
        %v2046 = vsel %vm2019, %v1894, %v1981
        %v2047 = vsel %vm2019, %v1895, %v1982
        %v2048 = vsel %vm2019, %v1022, %v1983
        %v2049 = vsel %vm2019, %v1896, %v1984
        %v2050 = vsel %vm2019, %v1897, %v1985
        %v2051 = vsel %vm2019, %v1898, %v1986
        %v2052 = vrot.slane %v2022, 4
        %v2053 = vsel %vm676, %v2052, %v2020
        %v2055 = vunpack.c.l.s4 1983009808
        %v2056 = vunpack.c.0.s8 %v2055
        %v2057 = vperm.slane %v2053, %v2056
        %v2058 = vrot.slane %v2023, 4
        %v2059 = vsel %vm676, %v2058, %v2021
        %v2061 = vunpack.c.l.s4 1983009808
        %v2062 = vunpack.c.0.s8 %v2061
        %v2063 = vperm.slane %v2059, %v2062
        %v2064 = vrot.slane %v2063, 4
        %v2065 = vsel %vm676, %v2064, %v2057
        %v2067 = vunpack.c.l.s4 1934713408
        %v2068 = vunpack.c.0.s8 %v2067
        %v2069 = vperm.slane %v2065, %v2068
        %v2070 = vrot.slane %v2069, 4
        %v2071 = vsel %vm676, 0.0, %v2070
        %v2072 = vrot.slane %v2026, 4
        %v2073 = vsel %vm676, %v2072, %v2024
        %v2075 = vunpack.c.l.s4 1983009808
        %v2076 = vunpack.c.0.s8 %v2075
        %v2077 = vperm.slane %v2073, %v2076
        %v2078 = vrot.slane %v2027, 4
        %v2079 = vsel %vm676, %v2078, %v2025
        %v2081 = vunpack.c.l.s4 1983009808
        %v2082 = vunpack.c.0.s8 %v2081
        %v2083 = vperm.slane %v2079, %v2082
        %v2084 = vrot.slane %v2083, 4
        %v2085 = vsel %vm676, %v2084, %v2077
        %v2087 = vunpack.c.l.s4 1934713408
        %v2088 = vunpack.c.0.s8 %v2087
        %v2089 = vperm.slane %v2085, %v2088
        %v2090 = vrot.slane %v2089, 4
        %v2091 = vsel %vm676, 0.0, %v2090
        %v2092 = vrot.slane %v2030, 4
        %v2093 = vsel %vm676, %v2092, %v2028
        %v2095 = vunpack.c.l.s4 1983009808
        %v2096 = vunpack.c.0.s8 %v2095
        %v2097 = vperm.slane %v2093, %v2096
        %v2098 = vrot.slane %v2031, 4
        %v2099 = vsel %vm676, %v2098, %v2029
        %v2101 = vunpack.c.l.s4 1983009808
        %v2102 = vunpack.c.0.s8 %v2101
        %v2103 = vperm.slane %v2099, %v2102
        %v2104 = vrot.slane %v2103, 4
        %v2105 = vsel %vm676, %v2104, %v2097
        %v2107 = vunpack.c.l.s4 1934713408
        %v2108 = vunpack.c.0.s8 %v2107
        %v2109 = vperm.slane %v2105, %v2108
        %v2110 = vrot.slane %v2109, 4
        %v2111 = vsel %vm676, 0.0, %v2110
        %v2112 = vrot.slane %v2034, 4
        %v2113 = vsel %vm676, %v2112, %v2032
        %v2115 = vunpack.c.l.s4 1983009808
        %v2116 = vunpack.c.0.s8 %v2115
        %v2117 = vperm.slane %v2113, %v2116
        %v2118 = vrot.slane %v2035, 4
        %v2119 = vsel %vm676, %v2118, %v2033
        %v2121 = vunpack.c.l.s4 1983009808
        %v2122 = vunpack.c.0.s8 %v2121
        %v2123 = vperm.slane %v2119, %v2122
        %v2124 = vrot.slane %v2123, 4
        %v2125 = vsel %vm676, %v2124, %v2117
        %v2127 = vunpack.c.l.s4 1934713408
        %v2128 = vunpack.c.0.s8 %v2127
        %v2129 = vperm.slane %v2125, %v2128
        %v2130 = vrot.slane %v2129, 4
        %v2131 = vsel %vm676, 0.0, %v2130
        %v2132 = vrot.slane %v2038, 4
        %v2133 = vsel %vm676, %v2132, %v2036
        %v2135 = vunpack.c.l.s4 1983009808
        %v2136 = vunpack.c.0.s8 %v2135
        %v2137 = vperm.slane %v2133, %v2136
        %v2138 = vrot.slane %v2039, 4
        %v2139 = vsel %vm676, %v2138, %v2037
        %v2141 = vunpack.c.l.s4 1983009808
        %v2142 = vunpack.c.0.s8 %v2141
        %v2143 = vperm.slane %v2139, %v2142
        %v2144 = vrot.slane %v2143, 4
        %v2145 = vsel %vm676, %v2144, %v2137
        %v2147 = vunpack.c.l.s4 1934713408
        %v2148 = vunpack.c.0.s8 %v2147
        %v2149 = vperm.slane %v2145, %v2148
        %v2150 = vrot.slane %v2149, 4
        %v2151 = vsel %vm676, 0.0, %v2150
        %v2152 = vrot.slane %v2042, 4
        %v2153 = vsel %vm676, %v2152, %v2040
        %v2155 = vunpack.c.l.s4 1983009808
        %v2156 = vunpack.c.0.s8 %v2155
        %v2157 = vperm.slane %v2153, %v2156
        %v2158 = vrot.slane %v2043, 4
        %v2159 = vsel %vm676, %v2158, %v2041
        %v2161 = vunpack.c.l.s4 1983009808
        %v2162 = vunpack.c.0.s8 %v2161
        %v2163 = vperm.slane %v2159, %v2162
        %v2164 = vrot.slane %v2163, 4
        %v2165 = vsel %vm676, %v2164, %v2157
        %v2167 = vunpack.c.l.s4 1934713408
        %v2168 = vunpack.c.0.s8 %v2167
        %v2169 = vperm.slane %v2165, %v2168
        %v2170 = vrot.slane %v2169, 4
        %v2171 = vsel %vm676, 0.0, %v2170
        %v2172 = vrot.slane %v2046, 4
        %v2173 = vsel %vm676, %v2172, %v2044
        %v2175 = vunpack.c.l.s4 1983009808
        %v2176 = vunpack.c.0.s8 %v2175
        %v2177 = vperm.slane %v2173, %v2176
        %v2178 = vrot.slane %v2047, 4
        %v2179 = vsel %vm676, %v2178, %v2045
        %v2181 = vunpack.c.l.s4 1983009808
        %v2182 = vunpack.c.0.s8 %v2181
        %v2183 = vperm.slane %v2179, %v2182
        %v2184 = vrot.slane %v2183, 4
        %v2185 = vsel %vm676, %v2184, %v2177
        %v2187 = vunpack.c.l.s4 1934713408
        %v2188 = vunpack.c.0.s8 %v2187
        %v2189 = vperm.slane %v2185, %v2188
        %v2190 = vrot.slane %v2189, 4
        %v2191 = vsel %vm676, 0.0, %v2190
        %v2192 = vrot.slane %v2050, 4
        %v2193 = vsel %vm676, %v2192, %v2048
        %v2195 = vunpack.c.l.s4 1983009808
        %v2196 = vunpack.c.0.s8 %v2195
        %v2197 = vperm.slane %v2193, %v2196
        %v2198 = vrot.slane %v2051, 4
        %v2199 = vsel %vm676, %v2198, %v2049
        %v2201 = vunpack.c.l.s4 1983009808
        %v2202 = vunpack.c.0.s8 %v2201
        %v2203 = vperm.slane %v2199, %v2202
        %v2204 = vrot.slane %v2203, 4
        %v2205 = vsel %vm676, %v2204, %v2197
        %v2207 = vunpack.c.l.s4 1934713408
        %v2208 = vunpack.c.0.s8 %v2207
        %v2209 = vperm.slane %v2205, %v2208
        %v2210 = vrot.slane %v2209, 4
        %v2211 = vsel %vm676, 0.0, %v2210
        %2220 = vrot.lane.b32.xlu0 %v2071, 8
        %v2221 = vpop.permute.xlu0 %2220
        %2222 = vrot.lane.b32.xlu0 %v2091, 8
        %v2223 = vpop.permute.xlu0 %2222
        %2224 = vrot.lane.b32.xlu0 %v2111, 8
        %v2225 = vpop.permute.xlu0 %2224
        %2226 = vrot.lane.b32.xlu0 %v2131, 8
        %v2227 = vpop.permute.xlu0 %2226
        %2228 = vrot.lane.b32.xlu0 %v2151, 8
        %v2229 = vpop.permute.xlu0 %2228
        %2230 = vrot.lane.b32.xlu0 %v2171, 8
        %v2231 = vpop.permute.xlu0 %2230
        %2232 = vrot.lane.b32.xlu0 %v2191, 8
        %v2233 = vpop.permute.xlu0 %2232
        %2234 = vrot.lane.b32.xlu0 %v2211, 8
        %v2235 = vpop.permute.xlu0 %2234
        %vm2244 = vcmask 64512
        %v2245 = vsel %vm2244, %v2069, %v2221
        %v2246 = vsel %vm2244, %v2089, %v2223
        %v2247 = vsel %vm2244, %v2109, %v2225
        %v2248 = vsel %vm2244, %v2129, %v2227
        %v2249 = vsel %vm2244, %v2149, %v2229
        %v2250 = vsel %vm2244, %v2169, %v2231
        %v2251 = vsel %vm2244, %v2189, %v2233
        %v2252 = vsel %vm2244, %v2209, %v2235
        %vm2253 = vcmask 125952
        %2254 = vst.msk [vmem:[%s156] sm:$0xf] %vm2253, %v2245
        %2255 = vst.msk [vmem:[%s156 + $0x4] sm:$0xf] %vm2253, %v2246
        %2256 = vst.msk [vmem:[%s156 + $0x8] sm:$0xf] %vm2253, %v2247
        %2257 = vst.msk [vmem:[%s156 + $0xc] sm:$0xf] %vm2253, %v2248
        %2258 = vst.msk [vmem:[%s156 + $0x10] sm:$0xf] %vm2253, %v2249
        %2259 = vst.msk [vmem:[%s156 + $0x14] sm:$0xf] %vm2253, %v2250
        %2260 = vst.msk [vmem:[%s156 + $0x18] sm:$0xf] %vm2253, %v2251
        %2261 = vst.msk [vmem:[%s156 + $0x1c] sm:$0xf] %vm2253, %v2252
        %s2262 = scalar_lea.vmem %s170, 128
        %v2263 = vld [vmem:[%s2262] sm:$0xf]
        %v2264 = vld [vmem:[%s2262 + $0x4] sm:$0xf]
        %v2265 = vld [vmem:[%s2262 + $0x8] sm:$0xf]
        %v2266 = vld [vmem:[%s2262 + $0xc] sm:$0xf]
        %s2267 = scalar_lea.vmem %s170, 144
        %v2268 = vld [vmem:[%s2267] sm:$0xf]
        %v2269 = vld [vmem:[%s2267 + $0x4] sm:$0xf]
        %v2270 = vld [vmem:[%s2267 + $0x8] sm:$0xf]
        %v2271 = vld [vmem:[%s2267 + $0xc] sm:$0xf]
        %v2272 = vperm.slane %v2263, 0
        %v2273 = vlaneseq
        %v2274 = vshrl.u32 %v2273, 7
        %2276 = vset.pattern.permute.xlu0 %v2274
        %2277 = vperm.xlu0 %2276, %v2272
        %v2278 = vpop.permute.xlu0 %2277
        %v2279 = vperm.slane %v2263, 1
        %v2280 = vlaneseq
        %v2281 = vshrl.u32 %v2280, 7
        %2283 = vset.pattern.permute.xlu0 %v2281
        %2284 = vperm.xlu0 %2283, %v2279
        %v2285 = vpop.permute.xlu0 %2284
        %v2286 = vperm.slane %v2263, 2
        %v2287 = vlaneseq
        %v2288 = vshrl.u32 %v2287, 7
        %2290 = vset.pattern.permute.xlu0 %v2288
        %2291 = vperm.xlu0 %2290, %v2286
        %v2292 = vpop.permute.xlu0 %2291
        %v2293 = vperm.slane %v2263, 3
        %v2294 = vlaneseq
        %v2295 = vshrl.u32 %v2294, 7
        %2297 = vset.pattern.permute.xlu0 %v2295
        %2298 = vperm.xlu0 %2297, %v2293
        %v2299 = vpop.permute.xlu0 %2298
        %v2300 = vperm.slane %v2264, 0
        %v2301 = vlaneseq
        %v2302 = vshrl.u32 %v2301, 7
        %2304 = vset.pattern.permute.xlu0 %v2302
        %2305 = vperm.xlu0 %2304, %v2300
        %v2306 = vpop.permute.xlu0 %2305
        %v2307 = vperm.slane %v2264, 1
        %v2308 = vlaneseq
        %v2309 = vshrl.u32 %v2308, 7
        %2311 = vset.pattern.permute.xlu0 %v2309
        %2312 = vperm.xlu0 %2311, %v2307
        %v2313 = vpop.permute.xlu0 %2312
        %v2314 = vperm.slane %v2264, 2
        %v2315 = vlaneseq
        %v2316 = vshrl.u32 %v2315, 7
        %2318 = vset.pattern.permute.xlu0 %v2316
        %2319 = vperm.xlu0 %2318, %v2314
        %v2320 = vpop.permute.xlu0 %2319
        %v2321 = vperm.slane %v2264, 3
        %v2322 = vlaneseq
        %v2323 = vshrl.u32 %v2322, 7
        %2325 = vset.pattern.permute.xlu0 %v2323
        %2326 = vperm.xlu0 %2325, %v2321
        %v2327 = vpop.permute.xlu0 %2326
        %v2328 = vperm.slane %v2265, 0
        %v2329 = vlaneseq
        %v2330 = vshrl.u32 %v2329, 7
        %2332 = vset.pattern.permute.xlu0 %v2330
        %2333 = vperm.xlu0 %2332, %v2328
        %v2334 = vpop.permute.xlu0 %2333
        %v2335 = vperm.slane %v2265, 1
        %v2336 = vlaneseq
        %v2337 = vshrl.u32 %v2336, 7
        %2339 = vset.pattern.permute.xlu0 %v2337
        %2340 = vperm.xlu0 %2339, %v2335
        %v2341 = vpop.permute.xlu0 %2340
        %v2342 = vperm.slane %v2265, 2
        %v2343 = vlaneseq
        %v2344 = vshrl.u32 %v2343, 7
        %2346 = vset.pattern.permute.xlu0 %v2344
        %2347 = vperm.xlu0 %2346, %v2342
        %v2348 = vpop.permute.xlu0 %2347
        %v2349 = vperm.slane %v2265, 3
        %v2350 = vlaneseq
        %v2351 = vshrl.u32 %v2350, 7
        %2353 = vset.pattern.permute.xlu0 %v2351
        %2354 = vperm.xlu0 %2353, %v2349
        %v2355 = vpop.permute.xlu0 %2354
        %v2356 = vperm.slane %v2266, 0
        %v2357 = vlaneseq
        %v2358 = vshrl.u32 %v2357, 7
        %2360 = vset.pattern.permute.xlu0 %v2358
        %2361 = vperm.xlu0 %2360, %v2356
        %v2362 = vpop.permute.xlu0 %2361
        %v2363 = vperm.slane %v2266, 1
        %v2364 = vlaneseq
        %v2365 = vshrl.u32 %v2364, 7
        %2367 = vset.pattern.permute.xlu0 %v2365
        %2368 = vperm.xlu0 %2367, %v2363
        %v2369 = vpop.permute.xlu0 %2368
        %v2370 = vperm.slane %v2266, 2
        %v2371 = vlaneseq
        %v2372 = vshrl.u32 %v2371, 7
        %2374 = vset.pattern.permute.xlu0 %v2372
        %2375 = vperm.xlu0 %2374, %v2370
        %v2376 = vpop.permute.xlu0 %2375
        %v2377 = vperm.slane %v2266, 3
        %v2378 = vlaneseq
        %v2379 = vshrl.u32 %v2378, 7
        %2381 = vset.pattern.permute.xlu0 %v2379
        %2382 = vperm.xlu0 %2381, %v2377
        %v2383 = vpop.permute.xlu0 %2382
        %v2384 = vperm.slane %v2268, 0
        %v2385 = vlaneseq
        %v2386 = vshrl.u32 %v2385, 7
        %2388 = vset.pattern.permute.xlu0 %v2386
        %2389 = vperm.xlu0 %2388, %v2384
        %v2390 = vpop.permute.xlu0 %2389
        %v2391 = vperm.slane %v2268, 1
        %v2392 = vlaneseq
        %v2393 = vshrl.u32 %v2392, 7
        %2395 = vset.pattern.permute.xlu0 %v2393
        %2396 = vperm.xlu0 %2395, %v2391
        %v2397 = vpop.permute.xlu0 %2396
        %v2398 = vperm.slane %v2268, 2
        %v2399 = vlaneseq
        %v2400 = vshrl.u32 %v2399, 7
        %2402 = vset.pattern.permute.xlu0 %v2400
        %2403 = vperm.xlu0 %2402, %v2398
        %v2404 = vpop.permute.xlu0 %2403
        %v2405 = vperm.slane %v2268, 3
        %v2406 = vlaneseq
        %v2407 = vshrl.u32 %v2406, 7
        %2409 = vset.pattern.permute.xlu0 %v2407
        %2410 = vperm.xlu0 %2409, %v2405
        %v2411 = vpop.permute.xlu0 %2410
        %v2412 = vperm.slane %v2269, 0
        %v2413 = vlaneseq
        %v2414 = vshrl.u32 %v2413, 7
        %2416 = vset.pattern.permute.xlu0 %v2414
        %2417 = vperm.xlu0 %2416, %v2412
        %v2418 = vpop.permute.xlu0 %2417
        %v2419 = vperm.slane %v2269, 1
        %v2420 = vlaneseq
        %v2421 = vshrl.u32 %v2420, 7
        %2423 = vset.pattern.permute.xlu0 %v2421
        %2424 = vperm.xlu0 %2423, %v2419
        %v2425 = vpop.permute.xlu0 %2424
        %v2426 = vperm.slane %v2269, 2
        %v2427 = vlaneseq
        %v2428 = vshrl.u32 %v2427, 7
        %2430 = vset.pattern.permute.xlu0 %v2428
        %2431 = vperm.xlu0 %2430, %v2426
        %v2432 = vpop.permute.xlu0 %2431
        %v2433 = vperm.slane %v2269, 3
        %v2434 = vlaneseq
        %v2435 = vshrl.u32 %v2434, 7
        %2437 = vset.pattern.permute.xlu0 %v2435
        %2438 = vperm.xlu0 %2437, %v2433
        %v2439 = vpop.permute.xlu0 %2438
        %v2440 = vperm.slane %v2270, 0
        %v2441 = vlaneseq
        %v2442 = vshrl.u32 %v2441, 7
        %2444 = vset.pattern.permute.xlu0 %v2442
        %2445 = vperm.xlu0 %2444, %v2440
        %v2446 = vpop.permute.xlu0 %2445
        %v2447 = vperm.slane %v2270, 1
        %v2448 = vlaneseq
        %v2449 = vshrl.u32 %v2448, 7
        %2451 = vset.pattern.permute.xlu0 %v2449
        %2452 = vperm.xlu0 %2451, %v2447
        %v2453 = vpop.permute.xlu0 %2452
        %v2454 = vperm.slane %v2270, 2
        %v2455 = vlaneseq
        %v2456 = vshrl.u32 %v2455, 7
        %2458 = vset.pattern.permute.xlu0 %v2456
        %2459 = vperm.xlu0 %2458, %v2454
        %v2460 = vpop.permute.xlu0 %2459
        %v2461 = vperm.slane %v2270, 3
        %v2462 = vlaneseq
        %v2463 = vshrl.u32 %v2462, 7
        %2465 = vset.pattern.permute.xlu0 %v2463
        %2466 = vperm.xlu0 %2465, %v2461
        %v2467 = vpop.permute.xlu0 %2466
        %v2468 = vperm.slane %v2271, 0
        %v2469 = vlaneseq
        %v2470 = vshrl.u32 %v2469, 7
        %2472 = vset.pattern.permute.xlu0 %v2470
        %2473 = vperm.xlu0 %2472, %v2468
        %v2474 = vpop.permute.xlu0 %2473
        %v2475 = vperm.slane %v2271, 1
        %v2476 = vlaneseq
        %v2477 = vshrl.u32 %v2476, 7
        %2479 = vset.pattern.permute.xlu0 %v2477
        %2480 = vperm.xlu0 %2479, %v2475
        %v2481 = vpop.permute.xlu0 %2480
        %v2482 = vperm.slane %v2271, 2
        %v2483 = vlaneseq
        %v2484 = vshrl.u32 %v2483, 7
        %2486 = vset.pattern.permute.xlu0 %v2484
        %2487 = vperm.xlu0 %2486, %v2482
        %v2488 = vpop.permute.xlu0 %2487
        %v2489 = vperm.slane %v2271, 3
        %v2490 = vlaneseq
        %v2491 = vshrl.u32 %v2490, 7
        %2493 = vset.pattern.permute.xlu0 %v2491
        %2494 = vperm.xlu0 %2493, %v2489
        %v2495 = vpop.permute.xlu0 %2494
        %v2496 = vsel %vm408, %v2278, %v2390
        %v2497 = vsel %vm408, %v2285, %v2397
        %v2498 = vsel %vm408, %v2292, %v2404
        %v2499 = vsel %vm408, %v2299, %v2411
        %v2500 = vsel %vm408, %v2306, %v2418
        %v2501 = vsel %vm408, %v2313, %v2425
        %v2502 = vsel %vm408, %v2320, %v2432
        %v2503 = vsel %vm408, %v2327, %v2439
        %v2504 = vsel %vm408, %v2334, %v2446
        %v2505 = vsel %vm408, %v2341, %v2453
        %v2506 = vsel %vm408, %v2348, %v2460
        %v2507 = vsel %vm408, %v2355, %v2467
        %v2508 = vsel %vm408, %v2362, %v2474
        %v2509 = vsel %vm408, %v2369, %v2481
        %v2510 = vsel %vm408, %v2376, %v2488
        %v2511 = vsel %vm408, %v2383, %v2495
        %s2512 = scalar_lea.vmem %s170, 192
        %v2513 = vld [vmem:[%s2512] sm:$0xf]
        %v2514 = vld [vmem:[%s2512 + $0x4] sm:$0xf]
        %v2515 = vld [vmem:[%s2512 + $0x8] sm:$0xf]
        %v2516 = vld [vmem:[%s2512 + $0xc] sm:$0xf]
        %s2517 = scalar_lea.vmem %s170, 208
        %v2518 = vld [vmem:[%s2517] sm:$0xf]
        %v2519 = vld [vmem:[%s2517 + $0x4] sm:$0xf]
        %v2520 = vld [vmem:[%s2517 + $0x8] sm:$0xf]
        %v2521 = vld [vmem:[%s2517 + $0xc] sm:$0xf]
        %v2522 = vperm.slane %v2513, 0
        %v2523 = vlaneseq
        %v2524 = vshrl.u32 %v2523, 7
        %2526 = vset.pattern.permute.xlu0 %v2524
        %2527 = vperm.xlu0 %2526, %v2522
        %v2528 = vpop.permute.xlu0 %2527
        %v2529 = vperm.slane %v2513, 1
        %v2530 = vlaneseq
        %v2531 = vshrl.u32 %v2530, 7
        %2533 = vset.pattern.permute.xlu0 %v2531
        %2534 = vperm.xlu0 %2533, %v2529
        %v2535 = vpop.permute.xlu0 %2534
        %v2536 = vperm.slane %v2513, 2
        %v2537 = vlaneseq
        %v2538 = vshrl.u32 %v2537, 7
        %2540 = vset.pattern.permute.xlu0 %v2538
        %2541 = vperm.xlu0 %2540, %v2536
        %v2542 = vpop.permute.xlu0 %2541
        %v2543 = vperm.slane %v2513, 3
        %v2544 = vlaneseq
        %v2545 = vshrl.u32 %v2544, 7
        %2547 = vset.pattern.permute.xlu0 %v2545
        %2548 = vperm.xlu0 %2547, %v2543
        %v2549 = vpop.permute.xlu0 %2548
        %v2550 = vperm.slane %v2514, 0
        %v2551 = vlaneseq
        %v2552 = vshrl.u32 %v2551, 7
        %2554 = vset.pattern.permute.xlu0 %v2552
        %2555 = vperm.xlu0 %2554, %v2550
        %v2556 = vpop.permute.xlu0 %2555
        %v2557 = vperm.slane %v2514, 1
        %v2558 = vlaneseq
        %v2559 = vshrl.u32 %v2558, 7
        %2561 = vset.pattern.permute.xlu0 %v2559
        %2562 = vperm.xlu0 %2561, %v2557
        %v2563 = vpop.permute.xlu0 %2562
        %v2564 = vperm.slane %v2514, 2
        %v2565 = vlaneseq
        %v2566 = vshrl.u32 %v2565, 7
        %2568 = vset.pattern.permute.xlu0 %v2566
        %2569 = vperm.xlu0 %2568, %v2564
        %v2570 = vpop.permute.xlu0 %2569
        %v2571 = vperm.slane %v2514, 3
        %v2572 = vlaneseq
        %v2573 = vshrl.u32 %v2572, 7
        %2575 = vset.pattern.permute.xlu0 %v2573
        %2576 = vperm.xlu0 %2575, %v2571
        %v2577 = vpop.permute.xlu0 %2576
        %v2578 = vperm.slane %v2515, 0
        %v2579 = vlaneseq
        %v2580 = vshrl.u32 %v2579, 7
        %2582 = vset.pattern.permute.xlu0 %v2580
        %2583 = vperm.xlu0 %2582, %v2578
        %v2584 = vpop.permute.xlu0 %2583
        %v2585 = vperm.slane %v2515, 1
        %v2586 = vlaneseq
        %v2587 = vshrl.u32 %v2586, 7
        %2589 = vset.pattern.permute.xlu0 %v2587
        %2590 = vperm.xlu0 %2589, %v2585
        %v2591 = vpop.permute.xlu0 %2590
        %v2592 = vperm.slane %v2515, 2
        %v2593 = vlaneseq
        %v2594 = vshrl.u32 %v2593, 7
        %2596 = vset.pattern.permute.xlu0 %v2594
        %2597 = vperm.xlu0 %2596, %v2592
        %v2598 = vpop.permute.xlu0 %2597
        %v2599 = vperm.slane %v2515, 3
        %v2600 = vlaneseq
        %v2601 = vshrl.u32 %v2600, 7
        %2603 = vset.pattern.permute.xlu0 %v2601
        %2604 = vperm.xlu0 %2603, %v2599
        %v2605 = vpop.permute.xlu0 %2604
        %v2606 = vperm.slane %v2516, 0
        %v2607 = vlaneseq
        %v2608 = vshrl.u32 %v2607, 7
        %2610 = vset.pattern.permute.xlu0 %v2608
        %2611 = vperm.xlu0 %2610, %v2606
        %v2612 = vpop.permute.xlu0 %2611
        %v2613 = vperm.slane %v2516, 1
        %v2614 = vlaneseq
        %v2615 = vshrl.u32 %v2614, 7
        %2617 = vset.pattern.permute.xlu0 %v2615
        %2618 = vperm.xlu0 %2617, %v2613
        %v2619 = vpop.permute.xlu0 %2618
        %v2620 = vperm.slane %v2516, 2
        %v2621 = vlaneseq
        %v2622 = vshrl.u32 %v2621, 7
        %2624 = vset.pattern.permute.xlu0 %v2622
        %2625 = vperm.xlu0 %2624, %v2620
        %v2626 = vpop.permute.xlu0 %2625
        %v2627 = vperm.slane %v2516, 3
        %v2628 = vlaneseq
        %v2629 = vshrl.u32 %v2628, 7
        %2631 = vset.pattern.permute.xlu0 %v2629
        %2632 = vperm.xlu0 %2631, %v2627
        %v2633 = vpop.permute.xlu0 %2632
        %v2634 = vperm.slane %v2518, 0
        %v2635 = vlaneseq
        %v2636 = vshrl.u32 %v2635, 7
        %2638 = vset.pattern.permute.xlu0 %v2636
        %2639 = vperm.xlu0 %2638, %v2634
        %v2640 = vpop.permute.xlu0 %2639
        %v2641 = vperm.slane %v2518, 1
        %v2642 = vlaneseq
        %v2643 = vshrl.u32 %v2642, 7
        %2645 = vset.pattern.permute.xlu0 %v2643
        %2646 = vperm.xlu0 %2645, %v2641
        %v2647 = vpop.permute.xlu0 %2646
        %v2648 = vperm.slane %v2518, 2
        %v2649 = vlaneseq
        %v2650 = vshrl.u32 %v2649, 7
        %2652 = vset.pattern.permute.xlu0 %v2650
        %2653 = vperm.xlu0 %2652, %v2648
        %v2654 = vpop.permute.xlu0 %2653
        %v2655 = vperm.slane %v2518, 3
        %v2656 = vlaneseq
        %v2657 = vshrl.u32 %v2656, 7
        %2659 = vset.pattern.permute.xlu0 %v2657
        %2660 = vperm.xlu0 %2659, %v2655
        %v2661 = vpop.permute.xlu0 %2660
        %v2662 = vperm.slane %v2519, 0
        %v2663 = vlaneseq
        %v2664 = vshrl.u32 %v2663, 7
        %2666 = vset.pattern.permute.xlu0 %v2664
        %2667 = vperm.xlu0 %2666, %v2662
        %v2668 = vpop.permute.xlu0 %2667
        %v2669 = vperm.slane %v2519, 1
        %v2670 = vlaneseq
        %v2671 = vshrl.u32 %v2670, 7
        %2673 = vset.pattern.permute.xlu0 %v2671
        %2674 = vperm.xlu0 %2673, %v2669
        %v2675 = vpop.permute.xlu0 %2674
        %v2676 = vperm.slane %v2519, 2
        %v2677 = vlaneseq
        %v2678 = vshrl.u32 %v2677, 7
        %2680 = vset.pattern.permute.xlu0 %v2678
        %2681 = vperm.xlu0 %2680, %v2676
        %v2682 = vpop.permute.xlu0 %2681
        %v2683 = vperm.slane %v2519, 3
        %v2684 = vlaneseq
        %v2685 = vshrl.u32 %v2684, 7
        %2687 = vset.pattern.permute.xlu0 %v2685
        %2688 = vperm.xlu0 %2687, %v2683
        %v2689 = vpop.permute.xlu0 %2688
        %v2690 = vperm.slane %v2520, 0
        %v2691 = vlaneseq
        %v2692 = vshrl.u32 %v2691, 7
        %2694 = vset.pattern.permute.xlu0 %v2692
        %2695 = vperm.xlu0 %2694, %v2690
        %v2696 = vpop.permute.xlu0 %2695
        %v2697 = vperm.slane %v2520, 1
        %v2698 = vlaneseq
        %v2699 = vshrl.u32 %v2698, 7
        %2701 = vset.pattern.permute.xlu0 %v2699
        %2702 = vperm.xlu0 %2701, %v2697
        %v2703 = vpop.permute.xlu0 %2702
        %v2704 = vperm.slane %v2520, 2
        %v2705 = vlaneseq
        %v2706 = vshrl.u32 %v2705, 7
        %2708 = vset.pattern.permute.xlu0 %v2706
        %2709 = vperm.xlu0 %2708, %v2704
        %v2710 = vpop.permute.xlu0 %2709
        %v2711 = vperm.slane %v2520, 3
        %v2712 = vlaneseq
        %v2713 = vshrl.u32 %v2712, 7
        %2715 = vset.pattern.permute.xlu0 %v2713
        %2716 = vperm.xlu0 %2715, %v2711
        %v2717 = vpop.permute.xlu0 %2716
        %v2718 = vperm.slane %v2521, 0
        %v2719 = vlaneseq
        %v2720 = vshrl.u32 %v2719, 7
        %2722 = vset.pattern.permute.xlu0 %v2720
        %2723 = vperm.xlu0 %2722, %v2718
        %v2724 = vpop.permute.xlu0 %2723
        %v2725 = vperm.slane %v2521, 1
        %v2726 = vlaneseq
        %v2727 = vshrl.u32 %v2726, 7
        %2729 = vset.pattern.permute.xlu0 %v2727
        %2730 = vperm.xlu0 %2729, %v2725
        %v2731 = vpop.permute.xlu0 %2730
        %v2732 = vperm.slane %v2521, 2
        %v2733 = vlaneseq
        %v2734 = vshrl.u32 %v2733, 7
        %2736 = vset.pattern.permute.xlu0 %v2734
        %2737 = vperm.xlu0 %2736, %v2732
        %v2738 = vpop.permute.xlu0 %2737
        %v2739 = vperm.slane %v2521, 3
        %v2740 = vlaneseq
        %v2741 = vshrl.u32 %v2740, 7
        %2743 = vset.pattern.permute.xlu0 %v2741
        %2744 = vperm.xlu0 %2743, %v2739
        %v2745 = vpop.permute.xlu0 %2744
        %v2746 = vsel %vm408, %v2528, %v2640
        %v2747 = vsel %vm408, %v2535, %v2647
        %v2748 = vsel %vm408, %v2542, %v2654
        %v2749 = vsel %vm408, %v2549, %v2661
        %v2750 = vsel %vm408, %v2556, %v2668
        %v2751 = vsel %vm408, %v2563, %v2675
        %v2752 = vsel %vm408, %v2570, %v2682
        %v2753 = vsel %vm408, %v2577, %v2689
        %v2754 = vsel %vm408, %v2584, %v2696
        %v2755 = vsel %vm408, %v2591, %v2703
        %v2756 = vsel %vm408, %v2598, %v2710
        %v2757 = vsel %vm408, %v2605, %v2717
        %v2758 = vsel %vm408, %v2612, %v2724
        %v2759 = vsel %vm408, %v2619, %v2731
        %v2760 = vsel %vm408, %v2626, %v2738
        %v2761 = vsel %vm408, %v2633, %v2745
        %v2762 = vrot.slane %v2498, 4
        %v2763 = vsel %vm676, %v2762, %v2496
        %v2765 = vunpack.c.l.s4 1983009808
        %v2766 = vunpack.c.0.s8 %v2765
        %v2767 = vperm.slane %v2763, %v2766
        %v2768 = vrot.slane %v2499, 4
        %v2769 = vsel %vm676, %v2768, %v2497
        %v2771 = vunpack.c.l.s4 1983009808
        %v2772 = vunpack.c.0.s8 %v2771
        %v2773 = vperm.slane %v2769, %v2772
        %v2774 = vrot.slane %v2773, 4
        %v2775 = vsel %vm676, %v2774, %v2767
        %v2776 = vrot.slane %v2767, 4
        %v2777 = vsel %vm676, %v2773, %v2776
        %v2779 = vunpack.c.l.s4 1934713408
        %v2780 = vunpack.c.0.s8 %v2779
        %v2781 = vperm.slane %v2775, %v2780
        %v2783 = vunpack.c.l.s4 1934713408
        %v2784 = vunpack.c.0.s8 %v2783
        %v2785 = vperm.slane %v2777, %v2784
        %v2786 = vrot.slane %v2781, 4
        %v2787 = vsel %vm676, 0.0, %v2786
        %v2788 = vrot.slane %v2785, 4
        %v2789 = vsel %vm676, 0.0, %v2788
        %v2790 = vrot.slane %v2502, 4
        %v2791 = vsel %vm676, %v2790, %v2500
        %v2793 = vunpack.c.l.s4 1983009808
        %v2794 = vunpack.c.0.s8 %v2793
        %v2795 = vperm.slane %v2791, %v2794
        %v2796 = vrot.slane %v2503, 4
        %v2797 = vsel %vm676, %v2796, %v2501
        %v2799 = vunpack.c.l.s4 1983009808
        %v2800 = vunpack.c.0.s8 %v2799
        %v2801 = vperm.slane %v2797, %v2800
        %v2802 = vrot.slane %v2801, 4
        %v2803 = vsel %vm676, %v2802, %v2795
        %v2804 = vrot.slane %v2795, 4
        %v2805 = vsel %vm676, %v2801, %v2804
        %v2807 = vunpack.c.l.s4 1934713408
        %v2808 = vunpack.c.0.s8 %v2807
        %v2809 = vperm.slane %v2803, %v2808
        %v2811 = vunpack.c.l.s4 1934713408
        %v2812 = vunpack.c.0.s8 %v2811
        %v2813 = vperm.slane %v2805, %v2812
        %v2814 = vrot.slane %v2809, 4
        %v2815 = vsel %vm676, 0.0, %v2814
        %v2816 = vrot.slane %v2813, 4
        %v2817 = vsel %vm676, 0.0, %v2816
        %v2818 = vrot.slane %v2506, 4
        %v2819 = vsel %vm676, %v2818, %v2504
        %v2821 = vunpack.c.l.s4 1983009808
        %v2822 = vunpack.c.0.s8 %v2821
        %v2823 = vperm.slane %v2819, %v2822
        %v2824 = vrot.slane %v2507, 4
        %v2825 = vsel %vm676, %v2824, %v2505
        %v2827 = vunpack.c.l.s4 1983009808
        %v2828 = vunpack.c.0.s8 %v2827
        %v2829 = vperm.slane %v2825, %v2828
        %v2830 = vrot.slane %v2829, 4
        %v2831 = vsel %vm676, %v2830, %v2823
        %v2832 = vrot.slane %v2823, 4
        %v2833 = vsel %vm676, %v2829, %v2832
        %v2835 = vunpack.c.l.s4 1934713408
        %v2836 = vunpack.c.0.s8 %v2835
        %v2837 = vperm.slane %v2831, %v2836
        %v2839 = vunpack.c.l.s4 1934713408
        %v2840 = vunpack.c.0.s8 %v2839
        %v2841 = vperm.slane %v2833, %v2840
        %v2842 = vrot.slane %v2837, 4
        %v2843 = vsel %vm676, 0.0, %v2842
        %v2844 = vrot.slane %v2841, 4
        %v2845 = vsel %vm676, 0.0, %v2844
        %v2846 = vrot.slane %v2510, 4
        %v2847 = vsel %vm676, %v2846, %v2508
        %v2849 = vunpack.c.l.s4 1983009808
        %v2850 = vunpack.c.0.s8 %v2849
        %v2851 = vperm.slane %v2847, %v2850
        %v2852 = vrot.slane %v2511, 4
        %v2853 = vsel %vm676, %v2852, %v2509
        %v2855 = vunpack.c.l.s4 1983009808
        %v2856 = vunpack.c.0.s8 %v2855
        %v2857 = vperm.slane %v2853, %v2856
        %v2858 = vrot.slane %v2857, 4
        %v2859 = vsel %vm676, %v2858, %v2851
        %v2860 = vrot.slane %v2851, 4
        %v2861 = vsel %vm676, %v2857, %v2860
        %v2863 = vunpack.c.l.s4 1934713408
        %v2864 = vunpack.c.0.s8 %v2863
        %v2865 = vperm.slane %v2859, %v2864
        %v2867 = vunpack.c.l.s4 1934713408
        %v2868 = vunpack.c.0.s8 %v2867
        %v2869 = vperm.slane %v2861, %v2868
        %v2870 = vrot.slane %v2865, 4
        %v2871 = vsel %vm676, 0.0, %v2870
        %v2872 = vrot.slane %v2869, 4
        %v2873 = vsel %vm676, 0.0, %v2872
        %2878 = vrot.lane.b32.xlu0 %v2787, 2
        %v2879 = vpop.permute.xlu0 %2878
        %2880 = vrot.lane.b32.xlu0 %v2815, 2
        %v2881 = vpop.permute.xlu0 %2880
        %2882 = vrot.lane.b32.xlu0 %v2843, 2
        %v2883 = vpop.permute.xlu0 %2882
        %2884 = vrot.lane.b32.xlu0 %v2871, 2
        %v2885 = vpop.permute.xlu0 %2884
        %2894 = vrot.lane.b32.xlu0 %v2785, 4
        %v2895 = vpop.permute.xlu0 %2894
        %2896 = vrot.lane.b32.xlu0 %v2813, 4
        %v2897 = vpop.permute.xlu0 %2896
        %2898 = vrot.lane.b32.xlu0 %v2841, 4
        %v2899 = vpop.permute.xlu0 %2898
        %2900 = vrot.lane.b32.xlu0 %v2869, 4
        %v2901 = vpop.permute.xlu0 %2900
        %2910 = vrot.lane.b32.xlu0 %v2789, 6
        %v2911 = vpop.permute.xlu0 %2910
        %2912 = vrot.lane.b32.xlu0 %v2817, 6
        %v2913 = vpop.permute.xlu0 %2912
        %2914 = vrot.lane.b32.xlu0 %v2845, 6
        %v2915 = vpop.permute.xlu0 %2914
        %2916 = vrot.lane.b32.xlu0 %v2873, 6
        %v2917 = vpop.permute.xlu0 %2916
        %v2922 = vsel %vm836, %v2781, %v2879
        %v2923 = vsel %vm836, %v2809, %v2881
        %v2924 = vsel %vm836, %v2837, %v2883
        %v2925 = vsel %vm836, %v2865, %v2885
        %v2926 = vsel %vm841, %v2922, %v2895
        %v2927 = vsel %vm841, %v2923, %v2897
        %v2928 = vsel %vm841, %v2924, %v2899
        %v2929 = vsel %vm841, %v2925, %v2901
        %v2930 = vsel %vm846, %v2926, %v2911
        %v2931 = vsel %vm846, %v2927, %v2913
        %v2932 = vsel %vm846, %v2928, %v2915
        %v2933 = vsel %vm846, %v2929, %v2917
        %v2934 = vrot.slane %v2748, 4
        %v2935 = vsel %vm676, %v2934, %v2746
        %v2937 = vunpack.c.l.s4 1983009808
        %v2938 = vunpack.c.0.s8 %v2937
        %v2939 = vperm.slane %v2935, %v2938
        %v2940 = vrot.slane %v2749, 4
        %v2941 = vsel %vm676, %v2940, %v2747
        %v2943 = vunpack.c.l.s4 1983009808
        %v2944 = vunpack.c.0.s8 %v2943
        %v2945 = vperm.slane %v2941, %v2944
        %v2946 = vrot.slane %v2945, 4
        %v2947 = vsel %vm676, %v2946, %v2939
        %v2948 = vrot.slane %v2939, 4
        %v2949 = vsel %vm676, %v2945, %v2948
        %v2951 = vunpack.c.l.s4 1934713408
        %v2952 = vunpack.c.0.s8 %v2951
        %v2953 = vperm.slane %v2947, %v2952
        %v2955 = vunpack.c.l.s4 1934713408
        %v2956 = vunpack.c.0.s8 %v2955
        %v2957 = vperm.slane %v2949, %v2956
        %v2958 = vrot.slane %v2953, 4
        %v2959 = vsel %vm676, 0.0, %v2958
        %v2960 = vrot.slane %v2957, 4
        %v2961 = vsel %vm676, 0.0, %v2960
        %v2962 = vrot.slane %v2752, 4
        %v2963 = vsel %vm676, %v2962, %v2750
        %v2965 = vunpack.c.l.s4 1983009808
        %v2966 = vunpack.c.0.s8 %v2965
        %v2967 = vperm.slane %v2963, %v2966
        %v2968 = vrot.slane %v2753, 4
        %v2969 = vsel %vm676, %v2968, %v2751
        %v2971 = vunpack.c.l.s4 1983009808
        %v2972 = vunpack.c.0.s8 %v2971
        %v2973 = vperm.slane %v2969, %v2972
        %v2974 = vrot.slane %v2973, 4
        %v2975 = vsel %vm676, %v2974, %v2967
        %v2976 = vrot.slane %v2967, 4
        %v2977 = vsel %vm676, %v2973, %v2976
        %v2979 = vunpack.c.l.s4 1934713408
        %v2980 = vunpack.c.0.s8 %v2979
        %v2981 = vperm.slane %v2975, %v2980
        %v2983 = vunpack.c.l.s4 1934713408
        %v2984 = vunpack.c.0.s8 %v2983
        %v2985 = vperm.slane %v2977, %v2984
        %v2986 = vrot.slane %v2981, 4
        %v2987 = vsel %vm676, 0.0, %v2986
        %v2988 = vrot.slane %v2985, 4
        %v2989 = vsel %vm676, 0.0, %v2988
        %v2990 = vrot.slane %v2756, 4
        %v2991 = vsel %vm676, %v2990, %v2754
        %v2993 = vunpack.c.l.s4 1983009808
        %v2994 = vunpack.c.0.s8 %v2993
        %v2995 = vperm.slane %v2991, %v2994
        %v2996 = vrot.slane %v2757, 4
        %v2997 = vsel %vm676, %v2996, %v2755
        %v2999 = vunpack.c.l.s4 1983009808
        %v3000 = vunpack.c.0.s8 %v2999
        %v3001 = vperm.slane %v2997, %v3000
        %v3002 = vrot.slane %v3001, 4
        %v3003 = vsel %vm676, %v3002, %v2995
        %v3004 = vrot.slane %v2995, 4
        %v3005 = vsel %vm676, %v3001, %v3004
        %v3007 = vunpack.c.l.s4 1934713408
        %v3008 = vunpack.c.0.s8 %v3007
        %v3009 = vperm.slane %v3003, %v3008
        %v3011 = vunpack.c.l.s4 1934713408
        %v3012 = vunpack.c.0.s8 %v3011
        %v3013 = vperm.slane %v3005, %v3012
        %v3014 = vrot.slane %v3009, 4
        %v3015 = vsel %vm676, 0.0, %v3014
        %v3016 = vrot.slane %v3013, 4
        %v3017 = vsel %vm676, 0.0, %v3016
        %v3018 = vrot.slane %v2760, 4
        %v3019 = vsel %vm676, %v3018, %v2758
        %v3021 = vunpack.c.l.s4 1983009808
        %v3022 = vunpack.c.0.s8 %v3021
        %v3023 = vperm.slane %v3019, %v3022
        %v3024 = vrot.slane %v2761, 4
        %v3025 = vsel %vm676, %v3024, %v2759
        %v3027 = vunpack.c.l.s4 1983009808
        %v3028 = vunpack.c.0.s8 %v3027
        %v3029 = vperm.slane %v3025, %v3028
        %v3030 = vrot.slane %v3029, 4
        %v3031 = vsel %vm676, %v3030, %v3023
        %v3032 = vrot.slane %v3023, 4
        %v3033 = vsel %vm676, %v3029, %v3032
        %v3035 = vunpack.c.l.s4 1934713408
        %v3036 = vunpack.c.0.s8 %v3035
        %v3037 = vperm.slane %v3031, %v3036
        %v3039 = vunpack.c.l.s4 1934713408
        %v3040 = vunpack.c.0.s8 %v3039
        %v3041 = vperm.slane %v3033, %v3040
        %v3042 = vrot.slane %v3037, 4
        %v3043 = vsel %vm676, 0.0, %v3042
        %v3044 = vrot.slane %v3041, 4
        %v3045 = vsel %vm676, 0.0, %v3044
        %3050 = vrot.lane.b32.xlu0 %v2959, 2
        %v3051 = vpop.permute.xlu0 %3050
        %3052 = vrot.lane.b32.xlu0 %v2987, 2
        %v3053 = vpop.permute.xlu0 %3052
        %3054 = vrot.lane.b32.xlu0 %v3015, 2
        %v3055 = vpop.permute.xlu0 %3054
        %3056 = vrot.lane.b32.xlu0 %v3043, 2
        %v3057 = vpop.permute.xlu0 %3056
        %3066 = vrot.lane.b32.xlu0 %v2957, 4
        %v3067 = vpop.permute.xlu0 %3066
        %3068 = vrot.lane.b32.xlu0 %v2985, 4
        %v3069 = vpop.permute.xlu0 %3068
        %3070 = vrot.lane.b32.xlu0 %v3013, 4
        %v3071 = vpop.permute.xlu0 %3070
        %3072 = vrot.lane.b32.xlu0 %v3041, 4
        %v3073 = vpop.permute.xlu0 %3072
        %3082 = vrot.lane.b32.xlu0 %v2961, 6
        %v3083 = vpop.permute.xlu0 %3082
        %3084 = vrot.lane.b32.xlu0 %v2989, 6
        %v3085 = vpop.permute.xlu0 %3084
        %3086 = vrot.lane.b32.xlu0 %v3017, 6
        %v3087 = vpop.permute.xlu0 %3086
        %3088 = vrot.lane.b32.xlu0 %v3045, 6
        %v3089 = vpop.permute.xlu0 %3088
        %v3094 = vsel %vm836, %v2953, %v3051
        %v3095 = vsel %vm836, %v2981, %v3053
        %v3096 = vsel %vm836, %v3009, %v3055
        %v3097 = vsel %vm836, %v3037, %v3057
        %v3098 = vsel %vm841, %v3094, %v3067
        %v3099 = vsel %vm841, %v3095, %v3069
        %v3100 = vsel %vm841, %v3096, %v3071
        %v3101 = vsel %vm841, %v3097, %v3073
        %v3102 = vsel %vm846, %v3098, %v3083
        %v3103 = vsel %vm846, %v3099, %v3085
        %v3104 = vsel %vm846, %v3100, %v3087
        %v3105 = vsel %vm846, %v3101, %v3089
        %s3106 = scalar_lea.vmem %s170, 160
        %v3107 = vld [vmem:[%s3106] sm:$0xf]
        %v3108 = vld [vmem:[%s3106 + $0x4] sm:$0xf]
        %v3109 = vld [vmem:[%s3106 + $0x8] sm:$0xf]
        %v3110 = vld [vmem:[%s3106 + $0xc] sm:$0xf]
        %s3111 = scalar_lea.vmem %s170, 176
        %v3112 = vld [vmem:[%s3111] sm:$0xf]
        %v3113 = vld [vmem:[%s3111 + $0x4] sm:$0xf]
        %v3114 = vld [vmem:[%s3111 + $0x8] sm:$0xf]
        %v3115 = vld [vmem:[%s3111 + $0xc] sm:$0xf]
        %v3116 = vperm.slane %v3107, 0
        %v3117 = vlaneseq
        %v3118 = vshrl.u32 %v3117, 7
        %3120 = vset.pattern.permute.xlu0 %v3118
        %3121 = vperm.xlu0 %3120, %v3116
        %v3122 = vpop.permute.xlu0 %3121
        %v3123 = vperm.slane %v3107, 1
        %v3124 = vlaneseq
        %v3125 = vshrl.u32 %v3124, 7
        %3127 = vset.pattern.permute.xlu0 %v3125
        %3128 = vperm.xlu0 %3127, %v3123
        %v3129 = vpop.permute.xlu0 %3128
        %v3130 = vperm.slane %v3107, 2
        %v3131 = vlaneseq
        %v3132 = vshrl.u32 %v3131, 7
        %3134 = vset.pattern.permute.xlu0 %v3132
        %3135 = vperm.xlu0 %3134, %v3130
        %v3136 = vpop.permute.xlu0 %3135
        %v3137 = vperm.slane %v3107, 3
        %v3138 = vlaneseq
        %v3139 = vshrl.u32 %v3138, 7
        %3141 = vset.pattern.permute.xlu0 %v3139
        %3142 = vperm.xlu0 %3141, %v3137
        %v3143 = vpop.permute.xlu0 %3142
        %v3144 = vperm.slane %v3108, 0
        %v3145 = vlaneseq
        %v3146 = vshrl.u32 %v3145, 7
        %3148 = vset.pattern.permute.xlu0 %v3146
        %3149 = vperm.xlu0 %3148, %v3144
        %v3150 = vpop.permute.xlu0 %3149
        %v3151 = vperm.slane %v3108, 1
        %v3152 = vlaneseq
        %v3153 = vshrl.u32 %v3152, 7
        %3155 = vset.pattern.permute.xlu0 %v3153
        %3156 = vperm.xlu0 %3155, %v3151
        %v3157 = vpop.permute.xlu0 %3156
        %v3158 = vperm.slane %v3108, 2
        %v3159 = vlaneseq
        %v3160 = vshrl.u32 %v3159, 7
        %3162 = vset.pattern.permute.xlu0 %v3160
        %3163 = vperm.xlu0 %3162, %v3158
        %v3164 = vpop.permute.xlu0 %3163
        %v3165 = vperm.slane %v3108, 3
        %v3166 = vlaneseq
        %v3167 = vshrl.u32 %v3166, 7
        %3169 = vset.pattern.permute.xlu0 %v3167
        %3170 = vperm.xlu0 %3169, %v3165
        %v3171 = vpop.permute.xlu0 %3170
        %v3172 = vperm.slane %v3109, 0
        %v3173 = vlaneseq
        %v3174 = vshrl.u32 %v3173, 7
        %3176 = vset.pattern.permute.xlu0 %v3174
        %3177 = vperm.xlu0 %3176, %v3172
        %v3178 = vpop.permute.xlu0 %3177
        %v3179 = vperm.slane %v3109, 1
        %v3180 = vlaneseq
        %v3181 = vshrl.u32 %v3180, 7
        %3183 = vset.pattern.permute.xlu0 %v3181
        %3184 = vperm.xlu0 %3183, %v3179
        %v3185 = vpop.permute.xlu0 %3184
        %v3186 = vperm.slane %v3109, 2
        %v3187 = vlaneseq
        %v3188 = vshrl.u32 %v3187, 7
        %3190 = vset.pattern.permute.xlu0 %v3188
        %3191 = vperm.xlu0 %3190, %v3186
        %v3192 = vpop.permute.xlu0 %3191
        %v3193 = vperm.slane %v3109, 3
        %v3194 = vlaneseq
        %v3195 = vshrl.u32 %v3194, 7
        %3197 = vset.pattern.permute.xlu0 %v3195
        %3198 = vperm.xlu0 %3197, %v3193
        %v3199 = vpop.permute.xlu0 %3198
        %v3200 = vperm.slane %v3110, 0
        %v3201 = vlaneseq
        %v3202 = vshrl.u32 %v3201, 7
        %3204 = vset.pattern.permute.xlu0 %v3202
        %3205 = vperm.xlu0 %3204, %v3200
        %v3206 = vpop.permute.xlu0 %3205
        %v3207 = vperm.slane %v3110, 1
        %v3208 = vlaneseq
        %v3209 = vshrl.u32 %v3208, 7
        %3211 = vset.pattern.permute.xlu0 %v3209
        %3212 = vperm.xlu0 %3211, %v3207
        %v3213 = vpop.permute.xlu0 %3212
        %v3214 = vperm.slane %v3110, 2
        %v3215 = vlaneseq
        %v3216 = vshrl.u32 %v3215, 7
        %3218 = vset.pattern.permute.xlu0 %v3216
        %3219 = vperm.xlu0 %3218, %v3214
        %v3220 = vpop.permute.xlu0 %3219
        %v3221 = vperm.slane %v3110, 3
        %v3222 = vlaneseq
        %v3223 = vshrl.u32 %v3222, 7
        %3225 = vset.pattern.permute.xlu0 %v3223
        %3226 = vperm.xlu0 %3225, %v3221
        %v3227 = vpop.permute.xlu0 %3226
        %v3228 = vperm.slane %v3112, 0
        %v3229 = vlaneseq
        %v3230 = vshrl.u32 %v3229, 7
        %3232 = vset.pattern.permute.xlu0 %v3230
        %3233 = vperm.xlu0 %3232, %v3228
        %v3234 = vpop.permute.xlu0 %3233
        %v3235 = vperm.slane %v3112, 1
        %v3236 = vlaneseq
        %v3237 = vshrl.u32 %v3236, 7
        %3239 = vset.pattern.permute.xlu0 %v3237
        %3240 = vperm.xlu0 %3239, %v3235
        %v3241 = vpop.permute.xlu0 %3240
        %v3242 = vperm.slane %v3112, 2
        %v3243 = vlaneseq
        %v3244 = vshrl.u32 %v3243, 7
        %3246 = vset.pattern.permute.xlu0 %v3244
        %3247 = vperm.xlu0 %3246, %v3242
        %v3248 = vpop.permute.xlu0 %3247
        %v3249 = vperm.slane %v3112, 3
        %v3250 = vlaneseq
        %v3251 = vshrl.u32 %v3250, 7
        %3253 = vset.pattern.permute.xlu0 %v3251
        %3254 = vperm.xlu0 %3253, %v3249
        %v3255 = vpop.permute.xlu0 %3254
        %v3256 = vperm.slane %v3113, 0
        %v3257 = vlaneseq
        %v3258 = vshrl.u32 %v3257, 7
        %3260 = vset.pattern.permute.xlu0 %v3258
        %3261 = vperm.xlu0 %3260, %v3256
        %v3262 = vpop.permute.xlu0 %3261
        %v3263 = vperm.slane %v3113, 1
        %v3264 = vlaneseq
        %v3265 = vshrl.u32 %v3264, 7
        %3267 = vset.pattern.permute.xlu0 %v3265
        %3268 = vperm.xlu0 %3267, %v3263
        %v3269 = vpop.permute.xlu0 %3268
        %v3270 = vperm.slane %v3113, 2
        %v3271 = vlaneseq
        %v3272 = vshrl.u32 %v3271, 7
        %3274 = vset.pattern.permute.xlu0 %v3272
        %3275 = vperm.xlu0 %3274, %v3270
        %v3276 = vpop.permute.xlu0 %3275
        %v3277 = vperm.slane %v3113, 3
        %v3278 = vlaneseq
        %v3279 = vshrl.u32 %v3278, 7
        %3281 = vset.pattern.permute.xlu0 %v3279
        %3282 = vperm.xlu0 %3281, %v3277
        %v3283 = vpop.permute.xlu0 %3282
        %v3284 = vperm.slane %v3114, 0
        %v3285 = vlaneseq
        %v3286 = vshrl.u32 %v3285, 7
        %3288 = vset.pattern.permute.xlu0 %v3286
        %3289 = vperm.xlu0 %3288, %v3284
        %v3290 = vpop.permute.xlu0 %3289
        %v3291 = vperm.slane %v3114, 1
        %v3292 = vlaneseq
        %v3293 = vshrl.u32 %v3292, 7
        %3295 = vset.pattern.permute.xlu0 %v3293
        %3296 = vperm.xlu0 %3295, %v3291
        %v3297 = vpop.permute.xlu0 %3296
        %v3298 = vperm.slane %v3114, 2
        %v3299 = vlaneseq
        %v3300 = vshrl.u32 %v3299, 7
        %3302 = vset.pattern.permute.xlu0 %v3300
        %3303 = vperm.xlu0 %3302, %v3298
        %v3304 = vpop.permute.xlu0 %3303
        %v3305 = vperm.slane %v3114, 3
        %v3306 = vlaneseq
        %v3307 = vshrl.u32 %v3306, 7
        %3309 = vset.pattern.permute.xlu0 %v3307
        %3310 = vperm.xlu0 %3309, %v3305
        %v3311 = vpop.permute.xlu0 %3310
        %v3312 = vperm.slane %v3115, 0
        %v3313 = vlaneseq
        %v3314 = vshrl.u32 %v3313, 7
        %3316 = vset.pattern.permute.xlu0 %v3314
        %3317 = vperm.xlu0 %3316, %v3312
        %v3318 = vpop.permute.xlu0 %3317
        %v3319 = vperm.slane %v3115, 1
        %v3320 = vlaneseq
        %v3321 = vshrl.u32 %v3320, 7
        %3323 = vset.pattern.permute.xlu0 %v3321
        %3324 = vperm.xlu0 %3323, %v3319
        %v3325 = vpop.permute.xlu0 %3324
        %v3326 = vperm.slane %v3115, 2
        %v3327 = vlaneseq
        %v3328 = vshrl.u32 %v3327, 7
        %3330 = vset.pattern.permute.xlu0 %v3328
        %3331 = vperm.xlu0 %3330, %v3326
        %v3332 = vpop.permute.xlu0 %3331
        %v3333 = vperm.slane %v3115, 3
        %v3334 = vlaneseq
        %v3335 = vshrl.u32 %v3334, 7
        %3337 = vset.pattern.permute.xlu0 %v3335
        %3338 = vperm.xlu0 %3337, %v3333
        %v3339 = vpop.permute.xlu0 %3338
        %v3340 = vsel %vm408, %v3122, %v3234
        %v3341 = vsel %vm408, %v3129, %v3241
        %v3342 = vsel %vm408, %v3136, %v3248
        %v3343 = vsel %vm408, %v3143, %v3255
        %v3344 = vsel %vm408, %v3150, %v3262
        %v3345 = vsel %vm408, %v3157, %v3269
        %v3346 = vsel %vm408, %v3164, %v3276
        %v3347 = vsel %vm408, %v3171, %v3283
        %v3348 = vsel %vm408, %v3178, %v3290
        %v3349 = vsel %vm408, %v3185, %v3297
        %v3350 = vsel %vm408, %v3192, %v3304
        %v3351 = vsel %vm408, %v3199, %v3311
        %v3352 = vsel %vm408, %v3206, %v3318
        %v3353 = vsel %vm408, %v3213, %v3325
        %v3354 = vsel %vm408, %v3220, %v3332
        %v3355 = vsel %vm408, %v3227, %v3339
        %s3356 = scalar_lea.vmem %s170, 224
        %v3357 = vld [vmem:[%s3356] sm:$0xf]
        %v3358 = vld [vmem:[%s3356 + $0x4] sm:$0xf]
        %v3359 = vld [vmem:[%s3356 + $0x8] sm:$0xf]
        %v3360 = vld [vmem:[%s3356 + $0xc] sm:$0xf]
        %s3361 = scalar_lea.vmem %s170, 240
        %v3362 = vld [vmem:[%s3361] sm:$0xf]
        %v3363 = vld [vmem:[%s3361 + $0x4] sm:$0xf]
        %v3364 = vld [vmem:[%s3361 + $0x8] sm:$0xf]
        %v3365 = vld [vmem:[%s3361 + $0xc] sm:$0xf]
        %v3366 = vperm.slane %v3357, 0
        %v3367 = vlaneseq
        %v3368 = vshrl.u32 %v3367, 7
        %3370 = vset.pattern.permute.xlu0 %v3368
        %3371 = vperm.xlu0 %3370, %v3366
        %v3372 = vpop.permute.xlu0 %3371
        %v3373 = vperm.slane %v3357, 1
        %v3374 = vlaneseq
        %v3375 = vshrl.u32 %v3374, 7
        %3377 = vset.pattern.permute.xlu0 %v3375
        %3378 = vperm.xlu0 %3377, %v3373
        %v3379 = vpop.permute.xlu0 %3378
        %v3380 = vperm.slane %v3357, 2
        %v3381 = vlaneseq
        %v3382 = vshrl.u32 %v3381, 7
        %3384 = vset.pattern.permute.xlu0 %v3382
        %3385 = vperm.xlu0 %3384, %v3380
        %v3386 = vpop.permute.xlu0 %3385
        %v3387 = vperm.slane %v3357, 3
        %v3388 = vlaneseq
        %v3389 = vshrl.u32 %v3388, 7
        %3391 = vset.pattern.permute.xlu0 %v3389
        %3392 = vperm.xlu0 %3391, %v3387
        %v3393 = vpop.permute.xlu0 %3392
        %v3394 = vperm.slane %v3358, 0
        %v3395 = vlaneseq
        %v3396 = vshrl.u32 %v3395, 7
        %3398 = vset.pattern.permute.xlu0 %v3396
        %3399 = vperm.xlu0 %3398, %v3394
        %v3400 = vpop.permute.xlu0 %3399
        %v3401 = vperm.slane %v3358, 1
        %v3402 = vlaneseq
        %v3403 = vshrl.u32 %v3402, 7
        %3405 = vset.pattern.permute.xlu0 %v3403
        %3406 = vperm.xlu0 %3405, %v3401
        %v3407 = vpop.permute.xlu0 %3406
        %v3408 = vperm.slane %v3358, 2
        %v3409 = vlaneseq
        %v3410 = vshrl.u32 %v3409, 7
        %3412 = vset.pattern.permute.xlu0 %v3410
        %3413 = vperm.xlu0 %3412, %v3408
        %v3414 = vpop.permute.xlu0 %3413
        %v3415 = vperm.slane %v3358, 3
        %v3416 = vlaneseq
        %v3417 = vshrl.u32 %v3416, 7
        %3419 = vset.pattern.permute.xlu0 %v3417
        %3420 = vperm.xlu0 %3419, %v3415
        %v3421 = vpop.permute.xlu0 %3420
        %v3422 = vperm.slane %v3359, 0
        %v3423 = vlaneseq
        %v3424 = vshrl.u32 %v3423, 7
        %3426 = vset.pattern.permute.xlu0 %v3424
        %3427 = vperm.xlu0 %3426, %v3422
        %v3428 = vpop.permute.xlu0 %3427
        %v3429 = vperm.slane %v3359, 1
        %v3430 = vlaneseq
        %v3431 = vshrl.u32 %v3430, 7
        %3433 = vset.pattern.permute.xlu0 %v3431
        %3434 = vperm.xlu0 %3433, %v3429
        %v3435 = vpop.permute.xlu0 %3434
        %v3436 = vperm.slane %v3359, 2
        %v3437 = vlaneseq
        %v3438 = vshrl.u32 %v3437, 7
        %3440 = vset.pattern.permute.xlu0 %v3438
        %3441 = vperm.xlu0 %3440, %v3436
        %v3442 = vpop.permute.xlu0 %3441
        %v3443 = vperm.slane %v3359, 3
        %v3444 = vlaneseq
        %v3445 = vshrl.u32 %v3444, 7
        %3447 = vset.pattern.permute.xlu0 %v3445
        %3448 = vperm.xlu0 %3447, %v3443
        %v3449 = vpop.permute.xlu0 %3448
        %v3450 = vperm.slane %v3360, 0
        %v3451 = vlaneseq
        %v3452 = vshrl.u32 %v3451, 7
        %3454 = vset.pattern.permute.xlu0 %v3452
        %3455 = vperm.xlu0 %3454, %v3450
        %v3456 = vpop.permute.xlu0 %3455
        %v3457 = vperm.slane %v3360, 1
        %v3458 = vlaneseq
        %v3459 = vshrl.u32 %v3458, 7
        %3461 = vset.pattern.permute.xlu0 %v3459
        %3462 = vperm.xlu0 %3461, %v3457
        %v3463 = vpop.permute.xlu0 %3462
        %v3464 = vperm.slane %v3360, 2
        %v3465 = vlaneseq
        %v3466 = vshrl.u32 %v3465, 7
        %3468 = vset.pattern.permute.xlu0 %v3466
        %3469 = vperm.xlu0 %3468, %v3464
        %v3470 = vpop.permute.xlu0 %3469
        %v3471 = vperm.slane %v3360, 3
        %v3472 = vlaneseq
        %v3473 = vshrl.u32 %v3472, 7
        %3475 = vset.pattern.permute.xlu0 %v3473
        %3476 = vperm.xlu0 %3475, %v3471
        %v3477 = vpop.permute.xlu0 %3476
        %v3478 = vperm.slane %v3362, 0
        %v3479 = vlaneseq
        %v3480 = vshrl.u32 %v3479, 7
        %3482 = vset.pattern.permute.xlu0 %v3480
        %3483 = vperm.xlu0 %3482, %v3478
        %v3484 = vpop.permute.xlu0 %3483
        %v3485 = vperm.slane %v3362, 1
        %v3486 = vlaneseq
        %v3487 = vshrl.u32 %v3486, 7
        %3489 = vset.pattern.permute.xlu0 %v3487
        %3490 = vperm.xlu0 %3489, %v3485
        %v3491 = vpop.permute.xlu0 %3490
        %v3492 = vperm.slane %v3362, 2
        %v3493 = vlaneseq
        %v3494 = vshrl.u32 %v3493, 7
        %3496 = vset.pattern.permute.xlu0 %v3494
        %3497 = vperm.xlu0 %3496, %v3492
        %v3498 = vpop.permute.xlu0 %3497
        %v3499 = vperm.slane %v3362, 3
        %v3500 = vlaneseq
        %v3501 = vshrl.u32 %v3500, 7
        %3503 = vset.pattern.permute.xlu0 %v3501
        %3504 = vperm.xlu0 %3503, %v3499
        %v3505 = vpop.permute.xlu0 %3504
        %v3506 = vperm.slane %v3363, 0
        %v3507 = vlaneseq
        %v3508 = vshrl.u32 %v3507, 7
        %3510 = vset.pattern.permute.xlu0 %v3508
        %3511 = vperm.xlu0 %3510, %v3506
        %v3512 = vpop.permute.xlu0 %3511
        %v3513 = vperm.slane %v3363, 1
        %v3514 = vlaneseq
        %v3515 = vshrl.u32 %v3514, 7
        %3517 = vset.pattern.permute.xlu0 %v3515
        %3518 = vperm.xlu0 %3517, %v3513
        %v3519 = vpop.permute.xlu0 %3518
        %v3520 = vperm.slane %v3363, 2
        %v3521 = vlaneseq
        %v3522 = vshrl.u32 %v3521, 7
        %3524 = vset.pattern.permute.xlu0 %v3522
        %3525 = vperm.xlu0 %3524, %v3520
        %v3526 = vpop.permute.xlu0 %3525
        %v3527 = vperm.slane %v3363, 3
        %v3528 = vlaneseq
        %v3529 = vshrl.u32 %v3528, 7
        %3531 = vset.pattern.permute.xlu0 %v3529
        %3532 = vperm.xlu0 %3531, %v3527
        %v3533 = vpop.permute.xlu0 %3532
        %v3534 = vperm.slane %v3364, 0
        %v3535 = vlaneseq
        %v3536 = vshrl.u32 %v3535, 7
        %3538 = vset.pattern.permute.xlu0 %v3536
        %3539 = vperm.xlu0 %3538, %v3534
        %v3540 = vpop.permute.xlu0 %3539
        %v3541 = vperm.slane %v3364, 1
        %v3542 = vlaneseq
        %v3543 = vshrl.u32 %v3542, 7
        %3545 = vset.pattern.permute.xlu0 %v3543
        %3546 = vperm.xlu0 %3545, %v3541
        %v3547 = vpop.permute.xlu0 %3546
        %v3548 = vperm.slane %v3364, 2
        %v3549 = vlaneseq
        %v3550 = vshrl.u32 %v3549, 7
        %3552 = vset.pattern.permute.xlu0 %v3550
        %3553 = vperm.xlu0 %3552, %v3548
        %v3554 = vpop.permute.xlu0 %3553
        %v3555 = vperm.slane %v3364, 3
        %v3556 = vlaneseq
        %v3557 = vshrl.u32 %v3556, 7
        %3559 = vset.pattern.permute.xlu0 %v3557
        %3560 = vperm.xlu0 %3559, %v3555
        %v3561 = vpop.permute.xlu0 %3560
        %v3562 = vperm.slane %v3365, 0
        %v3563 = vlaneseq
        %v3564 = vshrl.u32 %v3563, 7
        %3566 = vset.pattern.permute.xlu0 %v3564
        %3567 = vperm.xlu0 %3566, %v3562
        %v3568 = vpop.permute.xlu0 %3567
        %v3569 = vperm.slane %v3365, 1
        %v3570 = vlaneseq
        %v3571 = vshrl.u32 %v3570, 7
        %3573 = vset.pattern.permute.xlu0 %v3571
        %3574 = vperm.xlu0 %3573, %v3569
        %v3575 = vpop.permute.xlu0 %3574
        %v3576 = vperm.slane %v3365, 2
        %v3577 = vlaneseq
        %v3578 = vshrl.u32 %v3577, 7
        %3580 = vset.pattern.permute.xlu0 %v3578
        %3581 = vperm.xlu0 %3580, %v3576
        %v3582 = vpop.permute.xlu0 %3581
        %v3583 = vperm.slane %v3365, 3
        %v3584 = vlaneseq
        %v3585 = vshrl.u32 %v3584, 7
        %3587 = vset.pattern.permute.xlu0 %v3585
        %3588 = vperm.xlu0 %3587, %v3583
        %v3589 = vpop.permute.xlu0 %3588
        %v3590 = vsel %vm408, %v3372, %v3484
        %v3591 = vsel %vm408, %v3379, %v3491
        %v3592 = vsel %vm408, %v3386, %v3498
        %v3593 = vsel %vm408, %v3393, %v3505
        %v3594 = vsel %vm408, %v3400, %v3512
        %v3595 = vsel %vm408, %v3407, %v3519
        %v3596 = vsel %vm408, %v3414, %v3526
        %v3597 = vsel %vm408, %v3421, %v3533
        %v3598 = vsel %vm408, %v3428, %v3540
        %v3599 = vsel %vm408, %v3435, %v3547
        %v3600 = vsel %vm408, %v3442, %v3554
        %v3601 = vsel %vm408, %v3449, %v3561
        %v3602 = vsel %vm408, %v3456, %v3568
        %v3603 = vsel %vm408, %v3463, %v3575
        %v3604 = vsel %vm408, %v3470, %v3582
        %v3605 = vsel %vm408, %v3477, %v3589
        %v3606 = vrot.slane %v3342, 4
        %v3607 = vsel %vm676, %v3606, %v3340
        %v3609 = vunpack.c.l.s4 1983009808
        %v3610 = vunpack.c.0.s8 %v3609
        %v3611 = vperm.slane %v3607, %v3610
        %v3612 = vrot.slane %v3343, 4
        %v3613 = vsel %vm676, %v3612, %v3341
        %v3615 = vunpack.c.l.s4 1983009808
        %v3616 = vunpack.c.0.s8 %v3615
        %v3617 = vperm.slane %v3613, %v3616
        %v3618 = vrot.slane %v3617, 4
        %v3619 = vsel %vm676, %v3618, %v3611
        %v3620 = vrot.slane %v3611, 4
        %v3621 = vsel %vm676, %v3617, %v3620
        %v3623 = vunpack.c.l.s4 1934713408
        %v3624 = vunpack.c.0.s8 %v3623
        %v3625 = vperm.slane %v3619, %v3624
        %v3627 = vunpack.c.l.s4 1934713408
        %v3628 = vunpack.c.0.s8 %v3627
        %v3629 = vperm.slane %v3621, %v3628
        %v3630 = vrot.slane %v3625, 4
        %v3631 = vsel %vm676, 0.0, %v3630
        %v3632 = vrot.slane %v3629, 4
        %v3633 = vsel %vm676, 0.0, %v3632
        %v3634 = vrot.slane %v3346, 4
        %v3635 = vsel %vm676, %v3634, %v3344
        %v3637 = vunpack.c.l.s4 1983009808
        %v3638 = vunpack.c.0.s8 %v3637
        %v3639 = vperm.slane %v3635, %v3638
        %v3640 = vrot.slane %v3347, 4
        %v3641 = vsel %vm676, %v3640, %v3345
        %v3643 = vunpack.c.l.s4 1983009808
        %v3644 = vunpack.c.0.s8 %v3643
        %v3645 = vperm.slane %v3641, %v3644
        %v3646 = vrot.slane %v3645, 4
        %v3647 = vsel %vm676, %v3646, %v3639
        %v3648 = vrot.slane %v3639, 4
        %v3649 = vsel %vm676, %v3645, %v3648
        %v3651 = vunpack.c.l.s4 1934713408
        %v3652 = vunpack.c.0.s8 %v3651
        %v3653 = vperm.slane %v3647, %v3652
        %v3655 = vunpack.c.l.s4 1934713408
        %v3656 = vunpack.c.0.s8 %v3655
        %v3657 = vperm.slane %v3649, %v3656
        %v3658 = vrot.slane %v3653, 4
        %v3659 = vsel %vm676, 0.0, %v3658
        %v3660 = vrot.slane %v3657, 4
        %v3661 = vsel %vm676, 0.0, %v3660
        %v3662 = vrot.slane %v3350, 4
        %v3663 = vsel %vm676, %v3662, %v3348
        %v3665 = vunpack.c.l.s4 1983009808
        %v3666 = vunpack.c.0.s8 %v3665
        %v3667 = vperm.slane %v3663, %v3666
        %v3668 = vrot.slane %v3351, 4
        %v3669 = vsel %vm676, %v3668, %v3349
        %v3671 = vunpack.c.l.s4 1983009808
        %v3672 = vunpack.c.0.s8 %v3671
        %v3673 = vperm.slane %v3669, %v3672
        %v3674 = vrot.slane %v3673, 4
        %v3675 = vsel %vm676, %v3674, %v3667
        %v3676 = vrot.slane %v3667, 4
        %v3677 = vsel %vm676, %v3673, %v3676
        %v3679 = vunpack.c.l.s4 1934713408
        %v3680 = vunpack.c.0.s8 %v3679
        %v3681 = vperm.slane %v3675, %v3680
        %v3683 = vunpack.c.l.s4 1934713408
        %v3684 = vunpack.c.0.s8 %v3683
        %v3685 = vperm.slane %v3677, %v3684
        %v3686 = vrot.slane %v3681, 4
        %v3687 = vsel %vm676, 0.0, %v3686
        %v3688 = vrot.slane %v3685, 4
        %v3689 = vsel %vm676, 0.0, %v3688
        %v3690 = vrot.slane %v3354, 4
        %v3691 = vsel %vm676, %v3690, %v3352
        %v3693 = vunpack.c.l.s4 1983009808
        %v3694 = vunpack.c.0.s8 %v3693
        %v3695 = vperm.slane %v3691, %v3694
        %v3696 = vrot.slane %v3355, 4
        %v3697 = vsel %vm676, %v3696, %v3353
        %v3699 = vunpack.c.l.s4 1983009808
        %v3700 = vunpack.c.0.s8 %v3699
        %v3701 = vperm.slane %v3697, %v3700
        %v3702 = vrot.slane %v3701, 4
        %v3703 = vsel %vm676, %v3702, %v3695
        %v3704 = vrot.slane %v3695, 4
        %v3705 = vsel %vm676, %v3701, %v3704
        %v3707 = vunpack.c.l.s4 1934713408
        %v3708 = vunpack.c.0.s8 %v3707
        %v3709 = vperm.slane %v3703, %v3708
        %v3711 = vunpack.c.l.s4 1934713408
        %v3712 = vunpack.c.0.s8 %v3711
        %v3713 = vperm.slane %v3705, %v3712
        %v3714 = vrot.slane %v3709, 4
        %v3715 = vsel %vm676, 0.0, %v3714
        %v3716 = vrot.slane %v3713, 4
        %v3717 = vsel %vm676, 0.0, %v3716
        %3722 = vrot.lane.b32.xlu0 %v3631, 2
        %v3723 = vpop.permute.xlu0 %3722
        %3724 = vrot.lane.b32.xlu0 %v3659, 2
        %v3725 = vpop.permute.xlu0 %3724
        %3726 = vrot.lane.b32.xlu0 %v3687, 2
        %v3727 = vpop.permute.xlu0 %3726
        %3728 = vrot.lane.b32.xlu0 %v3715, 2
        %v3729 = vpop.permute.xlu0 %3728
        %3738 = vrot.lane.b32.xlu0 %v3629, 4
        %v3739 = vpop.permute.xlu0 %3738
        %3740 = vrot.lane.b32.xlu0 %v3657, 4
        %v3741 = vpop.permute.xlu0 %3740
        %3742 = vrot.lane.b32.xlu0 %v3685, 4
        %v3743 = vpop.permute.xlu0 %3742
        %3744 = vrot.lane.b32.xlu0 %v3713, 4
        %v3745 = vpop.permute.xlu0 %3744
        %3754 = vrot.lane.b32.xlu0 %v3633, 6
        %v3755 = vpop.permute.xlu0 %3754
        %3756 = vrot.lane.b32.xlu0 %v3661, 6
        %v3757 = vpop.permute.xlu0 %3756
        %3758 = vrot.lane.b32.xlu0 %v3689, 6
        %v3759 = vpop.permute.xlu0 %3758
        %3760 = vrot.lane.b32.xlu0 %v3717, 6
        %v3761 = vpop.permute.xlu0 %3760
        %v3766 = vsel %vm836, %v3625, %v3723
        %v3767 = vsel %vm836, %v3653, %v3725
        %v3768 = vsel %vm836, %v3681, %v3727
        %v3769 = vsel %vm836, %v3709, %v3729
        %v3770 = vsel %vm841, %v3766, %v3739
        %v3771 = vsel %vm841, %v3767, %v3741
        %v3772 = vsel %vm841, %v3768, %v3743
        %v3773 = vsel %vm841, %v3769, %v3745
        %v3774 = vsel %vm846, %v3770, %v3755
        %v3775 = vsel %vm846, %v3771, %v3757
        %v3776 = vsel %vm846, %v3772, %v3759
        %v3777 = vsel %vm846, %v3773, %v3761
        %v3778 = vrot.slane %v3592, 4
        %v3779 = vsel %vm676, %v3778, %v3590
        %v3781 = vunpack.c.l.s4 1983009808
        %v3782 = vunpack.c.0.s8 %v3781
        %v3783 = vperm.slane %v3779, %v3782
        %v3784 = vrot.slane %v3593, 4
        %v3785 = vsel %vm676, %v3784, %v3591
        %v3787 = vunpack.c.l.s4 1983009808
        %v3788 = vunpack.c.0.s8 %v3787
        %v3789 = vperm.slane %v3785, %v3788
        %v3790 = vrot.slane %v3789, 4
        %v3791 = vsel %vm676, %v3790, %v3783
        %v3792 = vrot.slane %v3783, 4
        %v3793 = vsel %vm676, %v3789, %v3792
        %v3795 = vunpack.c.l.s4 1934713408
        %v3796 = vunpack.c.0.s8 %v3795
        %v3797 = vperm.slane %v3791, %v3796
        %v3799 = vunpack.c.l.s4 1934713408
        %v3800 = vunpack.c.0.s8 %v3799
        %v3801 = vperm.slane %v3793, %v3800
        %v3802 = vrot.slane %v3797, 4
        %v3803 = vsel %vm676, 0.0, %v3802
        %v3804 = vrot.slane %v3801, 4
        %v3805 = vsel %vm676, 0.0, %v3804
        %v3806 = vrot.slane %v3596, 4
        %v3807 = vsel %vm676, %v3806, %v3594
        %v3809 = vunpack.c.l.s4 1983009808
        %v3810 = vunpack.c.0.s8 %v3809
        %v3811 = vperm.slane %v3807, %v3810
        %v3812 = vrot.slane %v3597, 4
        %v3813 = vsel %vm676, %v3812, %v3595
        %v3815 = vunpack.c.l.s4 1983009808
        %v3816 = vunpack.c.0.s8 %v3815
        %v3817 = vperm.slane %v3813, %v3816
        %v3818 = vrot.slane %v3817, 4
        %v3819 = vsel %vm676, %v3818, %v3811
        %v3820 = vrot.slane %v3811, 4
        %v3821 = vsel %vm676, %v3817, %v3820
        %v3823 = vunpack.c.l.s4 1934713408
        %v3824 = vunpack.c.0.s8 %v3823
        %v3825 = vperm.slane %v3819, %v3824
        %v3827 = vunpack.c.l.s4 1934713408
        %v3828 = vunpack.c.0.s8 %v3827
        %v3829 = vperm.slane %v3821, %v3828
        %v3830 = vrot.slane %v3825, 4
        %v3831 = vsel %vm676, 0.0, %v3830
        %v3832 = vrot.slane %v3829, 4
        %v3833 = vsel %vm676, 0.0, %v3832
        %v3834 = vrot.slane %v3600, 4
        %v3835 = vsel %vm676, %v3834, %v3598
        %v3837 = vunpack.c.l.s4 1983009808
        %v3838 = vunpack.c.0.s8 %v3837
        %v3839 = vperm.slane %v3835, %v3838
        %v3840 = vrot.slane %v3601, 4
        %v3841 = vsel %vm676, %v3840, %v3599
        %v3843 = vunpack.c.l.s4 1983009808
        %v3844 = vunpack.c.0.s8 %v3843
        %v3845 = vperm.slane %v3841, %v3844
        %v3846 = vrot.slane %v3845, 4
        %v3847 = vsel %vm676, %v3846, %v3839
        %v3848 = vrot.slane %v3839, 4
        %v3849 = vsel %vm676, %v3845, %v3848
        %v3851 = vunpack.c.l.s4 1934713408
        %v3852 = vunpack.c.0.s8 %v3851
        %v3853 = vperm.slane %v3847, %v3852
        %v3855 = vunpack.c.l.s4 1934713408
        %v3856 = vunpack.c.0.s8 %v3855
        %v3857 = vperm.slane %v3849, %v3856
        %v3858 = vrot.slane %v3853, 4
        %v3859 = vsel %vm676, 0.0, %v3858
        %v3860 = vrot.slane %v3857, 4
        %v3861 = vsel %vm676, 0.0, %v3860
        %v3862 = vrot.slane %v3604, 4
        %v3863 = vsel %vm676, %v3862, %v3602
        %v3865 = vunpack.c.l.s4 1983009808
        %v3866 = vunpack.c.0.s8 %v3865
        %v3867 = vperm.slane %v3863, %v3866
        %v3868 = vrot.slane %v3605, 4
        %v3869 = vsel %vm676, %v3868, %v3603
        %v3871 = vunpack.c.l.s4 1983009808
        %v3872 = vunpack.c.0.s8 %v3871
        %v3873 = vperm.slane %v3869, %v3872
        %v3874 = vrot.slane %v3873, 4
        %v3875 = vsel %vm676, %v3874, %v3867
        %v3876 = vrot.slane %v3867, 4
        %v3877 = vsel %vm676, %v3873, %v3876
        %v3879 = vunpack.c.l.s4 1934713408
        %v3880 = vunpack.c.0.s8 %v3879
        %v3881 = vperm.slane %v3875, %v3880
        %v3883 = vunpack.c.l.s4 1934713408
        %v3884 = vunpack.c.0.s8 %v3883
        %v3885 = vperm.slane %v3877, %v3884
        %v3886 = vrot.slane %v3881, 4
        %v3887 = vsel %vm676, 0.0, %v3886
        %v3888 = vrot.slane %v3885, 4
        %v3889 = vsel %vm676, 0.0, %v3888
        %3894 = vrot.lane.b32.xlu0 %v3803, 2
        %v3895 = vpop.permute.xlu0 %3894
        %3896 = vrot.lane.b32.xlu0 %v3831, 2
        %v3897 = vpop.permute.xlu0 %3896
        %3898 = vrot.lane.b32.xlu0 %v3859, 2
        %v3899 = vpop.permute.xlu0 %3898
        %3900 = vrot.lane.b32.xlu0 %v3887, 2
        %v3901 = vpop.permute.xlu0 %3900
        %3910 = vrot.lane.b32.xlu0 %v3801, 4
        %v3911 = vpop.permute.xlu0 %3910
        %3912 = vrot.lane.b32.xlu0 %v3829, 4
        %v3913 = vpop.permute.xlu0 %3912
        %3914 = vrot.lane.b32.xlu0 %v3857, 4
        %v3915 = vpop.permute.xlu0 %3914
        %3916 = vrot.lane.b32.xlu0 %v3885, 4
        %v3917 = vpop.permute.xlu0 %3916
        %3926 = vrot.lane.b32.xlu0 %v3805, 6
        %v3927 = vpop.permute.xlu0 %3926
        %3928 = vrot.lane.b32.xlu0 %v3833, 6
        %v3929 = vpop.permute.xlu0 %3928
        %3930 = vrot.lane.b32.xlu0 %v3861, 6
        %v3931 = vpop.permute.xlu0 %3930
        %3932 = vrot.lane.b32.xlu0 %v3889, 6
        %v3933 = vpop.permute.xlu0 %3932
        %v3938 = vsel %vm836, %v3797, %v3895
        %v3939 = vsel %vm836, %v3825, %v3897
        %v3940 = vsel %vm836, %v3853, %v3899
        %v3941 = vsel %vm836, %v3881, %v3901
        %v3942 = vsel %vm841, %v3938, %v3911
        %v3943 = vsel %vm841, %v3939, %v3913
        %v3944 = vsel %vm841, %v3940, %v3915
        %v3945 = vsel %vm841, %v3941, %v3917
        %v3946 = vsel %vm846, %v3942, %v3927
        %v3947 = vsel %vm846, %v3943, %v3929
        %v3948 = vsel %vm846, %v3944, %v3931
        %v3949 = vsel %vm846, %v3945, %v3933
        %v3958 = vrot.slane %v2930, 1
        %v3959 = vrot.slane %v2930, 2
        %v3960 = vrot.slane %v2930, 3
        %v3961 = vrot.slane %v3102, 1
        %v3962 = vrot.slane %v3102, 2
        %v3963 = vrot.slane %v3102, 3
        %v3964 = vrot.slane %v2931, 1
        %v3965 = vrot.slane %v2931, 2
        %v3966 = vrot.slane %v2931, 3
        %v3967 = vrot.slane %v3103, 1
        %v3968 = vrot.slane %v3103, 2
        %v3969 = vrot.slane %v3103, 3
        %v3970 = vrot.slane %v2932, 1
        %v3971 = vrot.slane %v2932, 2
        %v3972 = vrot.slane %v2932, 3
        %v3973 = vrot.slane %v3104, 1
        %v3974 = vrot.slane %v3104, 2
        %v3975 = vrot.slane %v3104, 3
        %v3976 = vrot.slane %v2933, 1
        %v3977 = vrot.slane %v2933, 2
        %v3978 = vrot.slane %v2933, 3
        %v3979 = vrot.slane %v3105, 1
        %v3980 = vrot.slane %v3105, 2
        %v3981 = vrot.slane %v3105, 3
        %v4014 = vrot.slane %v3774, 1
        %v4015 = vrot.slane %v3774, 2
        %v4016 = vrot.slane %v3774, 3
        %v4017 = vrot.slane %v3946, 1
        %v4018 = vrot.slane %v3946, 2
        %v4019 = vrot.slane %v3946, 3
        %v4020 = vrot.slane %v3775, 1
        %v4021 = vrot.slane %v3775, 2
        %v4022 = vrot.slane %v3775, 3
        %v4023 = vrot.slane %v3947, 1
        %v4024 = vrot.slane %v3947, 2
        %v4025 = vrot.slane %v3947, 3
        %v4026 = vrot.slane %v3776, 1
        %v4027 = vrot.slane %v3776, 2
        %v4028 = vrot.slane %v3776, 3
        %v4029 = vrot.slane %v3948, 1
        %v4030 = vrot.slane %v3948, 2
        %v4031 = vrot.slane %v3948, 3
        %v4032 = vrot.slane %v3777, 1
        %v4033 = vrot.slane %v3777, 2
        %v4034 = vrot.slane %v3777, 3
        %v4035 = vrot.slane %v3949, 1
        %v4036 = vrot.slane %v3949, 2
        %v4037 = vrot.slane %v3949, 3
        %v4038 = vperm.slane %v3774, 0
        %v4039 = vperm.slane %v4014, 0
        %v4040 = vperm.slane %v4015, 0
        %v4041 = vperm.slane %v4016, 0
        %v4042 = vperm.slane %v3946, 0
        %v4043 = vperm.slane %v4017, 0
        %v4044 = vperm.slane %v4018, 0
        %v4045 = vperm.slane %v4019, 0
        %v4046 = vperm.slane %v3775, 0
        %v4047 = vperm.slane %v4020, 0
        %v4048 = vperm.slane %v4021, 0
        %v4049 = vperm.slane %v4022, 0
        %v4050 = vperm.slane %v3947, 0
        %v4051 = vperm.slane %v4023, 0
        %v4052 = vperm.slane %v4024, 0
        %v4053 = vperm.slane %v4025, 0
        %v4054 = vperm.slane %v3776, 0
        %v4055 = vperm.slane %v4026, 0
        %v4056 = vperm.slane %v4027, 0
        %v4057 = vperm.slane %v4028, 0
        %v4058 = vperm.slane %v3948, 0
        %v4059 = vperm.slane %v4029, 0
        %v4060 = vperm.slane %v4030, 0
        %v4061 = vperm.slane %v4031, 0
        %v4062 = vperm.slane %v3777, 0
        %v4063 = vperm.slane %v4032, 0
        %v4064 = vperm.slane %v4033, 0
        %v4065 = vperm.slane %v4034, 0
        %v4066 = vperm.slane %v3949, 0
        %v4067 = vperm.slane %v4035, 0
        %v4068 = vperm.slane %v4036, 0
        %v4069 = vperm.slane %v4037, 0
        %v4102 = vsel %vm2019, %v2930, %v4038
        %v4103 = vsel %vm2019, %v3958, %v4039
        %v4104 = vsel %vm2019, %v3959, %v4040
        %v4105 = vsel %vm2019, %v3960, %v4041
        %v4106 = vsel %vm2019, %v3102, %v4042
        %v4107 = vsel %vm2019, %v3961, %v4043
        %v4108 = vsel %vm2019, %v3962, %v4044
        %v4109 = vsel %vm2019, %v3963, %v4045
        %v4110 = vsel %vm2019, %v2931, %v4046
        %v4111 = vsel %vm2019, %v3964, %v4047
        %v4112 = vsel %vm2019, %v3965, %v4048
        %v4113 = vsel %vm2019, %v3966, %v4049
        %v4114 = vsel %vm2019, %v3103, %v4050
        %v4115 = vsel %vm2019, %v3967, %v4051
        %v4116 = vsel %vm2019, %v3968, %v4052
        %v4117 = vsel %vm2019, %v3969, %v4053
        %v4118 = vsel %vm2019, %v2932, %v4054
        %v4119 = vsel %vm2019, %v3970, %v4055
        %v4120 = vsel %vm2019, %v3971, %v4056
        %v4121 = vsel %vm2019, %v3972, %v4057
        %v4122 = vsel %vm2019, %v3104, %v4058
        %v4123 = vsel %vm2019, %v3973, %v4059
        %v4124 = vsel %vm2019, %v3974, %v4060
        %v4125 = vsel %vm2019, %v3975, %v4061
        %v4126 = vsel %vm2019, %v2933, %v4062
        %v4127 = vsel %vm2019, %v3976, %v4063
        %v4128 = vsel %vm2019, %v3977, %v4064
        %v4129 = vsel %vm2019, %v3978, %v4065
        %v4130 = vsel %vm2019, %v3105, %v4066
        %v4131 = vsel %vm2019, %v3979, %v4067
        %v4132 = vsel %vm2019, %v3980, %v4068
        %v4133 = vsel %vm2019, %v3981, %v4069
        %v4134 = vrot.slane %v4104, 4
        %v4135 = vsel %vm676, %v4134, %v4102
        %v4137 = vunpack.c.l.s4 1983009808
        %v4138 = vunpack.c.0.s8 %v4137
        %v4139 = vperm.slane %v4135, %v4138
        %v4140 = vrot.slane %v4105, 4
        %v4141 = vsel %vm676, %v4140, %v4103
        %v4143 = vunpack.c.l.s4 1983009808
        %v4144 = vunpack.c.0.s8 %v4143
        %v4145 = vperm.slane %v4141, %v4144
        %v4146 = vrot.slane %v4145, 4
        %v4147 = vsel %vm676, %v4146, %v4139
        %v4149 = vunpack.c.l.s4 1934713408
        %v4150 = vunpack.c.0.s8 %v4149
        %v4151 = vperm.slane %v4147, %v4150
        %v4152 = vrot.slane %v4151, 4
        %v4153 = vsel %vm676, 0.0, %v4152
        %v4154 = vrot.slane %v4108, 4
        %v4155 = vsel %vm676, %v4154, %v4106
        %v4157 = vunpack.c.l.s4 1983009808
        %v4158 = vunpack.c.0.s8 %v4157
        %v4159 = vperm.slane %v4155, %v4158
        %v4160 = vrot.slane %v4109, 4
        %v4161 = vsel %vm676, %v4160, %v4107
        %v4163 = vunpack.c.l.s4 1983009808
        %v4164 = vunpack.c.0.s8 %v4163
        %v4165 = vperm.slane %v4161, %v4164
        %v4166 = vrot.slane %v4165, 4
        %v4167 = vsel %vm676, %v4166, %v4159
        %v4169 = vunpack.c.l.s4 1934713408
        %v4170 = vunpack.c.0.s8 %v4169
        %v4171 = vperm.slane %v4167, %v4170
        %v4172 = vrot.slane %v4171, 4
        %v4173 = vsel %vm676, 0.0, %v4172
        %v4174 = vrot.slane %v4112, 4
        %v4175 = vsel %vm676, %v4174, %v4110
        %v4177 = vunpack.c.l.s4 1983009808
        %v4178 = vunpack.c.0.s8 %v4177
        %v4179 = vperm.slane %v4175, %v4178
        %v4180 = vrot.slane %v4113, 4
        %v4181 = vsel %vm676, %v4180, %v4111
        %v4183 = vunpack.c.l.s4 1983009808
        %v4184 = vunpack.c.0.s8 %v4183
        %v4185 = vperm.slane %v4181, %v4184
        %v4186 = vrot.slane %v4185, 4
        %v4187 = vsel %vm676, %v4186, %v4179
        %v4189 = vunpack.c.l.s4 1934713408
        %v4190 = vunpack.c.0.s8 %v4189
        %v4191 = vperm.slane %v4187, %v4190
        %v4192 = vrot.slane %v4191, 4
        %v4193 = vsel %vm676, 0.0, %v4192
        %v4194 = vrot.slane %v4116, 4
        %v4195 = vsel %vm676, %v4194, %v4114
        %v4197 = vunpack.c.l.s4 1983009808
        %v4198 = vunpack.c.0.s8 %v4197
        %v4199 = vperm.slane %v4195, %v4198
        %v4200 = vrot.slane %v4117, 4
        %v4201 = vsel %vm676, %v4200, %v4115
        %v4203 = vunpack.c.l.s4 1983009808
        %v4204 = vunpack.c.0.s8 %v4203
        %v4205 = vperm.slane %v4201, %v4204
        %v4206 = vrot.slane %v4205, 4
        %v4207 = vsel %vm676, %v4206, %v4199
        %v4209 = vunpack.c.l.s4 1934713408
        %v4210 = vunpack.c.0.s8 %v4209
        %v4211 = vperm.slane %v4207, %v4210
        %v4212 = vrot.slane %v4211, 4
        %v4213 = vsel %vm676, 0.0, %v4212
        %v4214 = vrot.slane %v4120, 4
        %v4215 = vsel %vm676, %v4214, %v4118
        %v4217 = vunpack.c.l.s4 1983009808
        %v4218 = vunpack.c.0.s8 %v4217
        %v4219 = vperm.slane %v4215, %v4218
        %v4220 = vrot.slane %v4121, 4
        %v4221 = vsel %vm676, %v4220, %v4119
        %v4223 = vunpack.c.l.s4 1983009808
        %v4224 = vunpack.c.0.s8 %v4223
        %v4225 = vperm.slane %v4221, %v4224
        %v4226 = vrot.slane %v4225, 4
        %v4227 = vsel %vm676, %v4226, %v4219
        %v4229 = vunpack.c.l.s4 1934713408
        %v4230 = vunpack.c.0.s8 %v4229
        %v4231 = vperm.slane %v4227, %v4230
        %v4232 = vrot.slane %v4231, 4
        %v4233 = vsel %vm676, 0.0, %v4232
        %v4234 = vrot.slane %v4124, 4
        %v4235 = vsel %vm676, %v4234, %v4122
        %v4237 = vunpack.c.l.s4 1983009808
        %v4238 = vunpack.c.0.s8 %v4237
        %v4239 = vperm.slane %v4235, %v4238
        %v4240 = vrot.slane %v4125, 4
        %v4241 = vsel %vm676, %v4240, %v4123
        %v4243 = vunpack.c.l.s4 1983009808
        %v4244 = vunpack.c.0.s8 %v4243
        %v4245 = vperm.slane %v4241, %v4244
        %v4246 = vrot.slane %v4245, 4
        %v4247 = vsel %vm676, %v4246, %v4239
        %v4249 = vunpack.c.l.s4 1934713408
        %v4250 = vunpack.c.0.s8 %v4249
        %v4251 = vperm.slane %v4247, %v4250
        %v4252 = vrot.slane %v4251, 4
        %v4253 = vsel %vm676, 0.0, %v4252
        %v4254 = vrot.slane %v4128, 4
        %v4255 = vsel %vm676, %v4254, %v4126
        %v4257 = vunpack.c.l.s4 1983009808
        %v4258 = vunpack.c.0.s8 %v4257
        %v4259 = vperm.slane %v4255, %v4258
        %v4260 = vrot.slane %v4129, 4
        %v4261 = vsel %vm676, %v4260, %v4127
        %v4263 = vunpack.c.l.s4 1983009808
        %v4264 = vunpack.c.0.s8 %v4263
        %v4265 = vperm.slane %v4261, %v4264
        %v4266 = vrot.slane %v4265, 4
        %v4267 = vsel %vm676, %v4266, %v4259
        %v4269 = vunpack.c.l.s4 1934713408
        %v4270 = vunpack.c.0.s8 %v4269
        %v4271 = vperm.slane %v4267, %v4270
        %v4272 = vrot.slane %v4271, 4
        %v4273 = vsel %vm676, 0.0, %v4272
        %v4274 = vrot.slane %v4132, 4
        %v4275 = vsel %vm676, %v4274, %v4130
        %v4277 = vunpack.c.l.s4 1983009808
        %v4278 = vunpack.c.0.s8 %v4277
        %v4279 = vperm.slane %v4275, %v4278
        %v4280 = vrot.slane %v4133, 4
        %v4281 = vsel %vm676, %v4280, %v4131
        %v4283 = vunpack.c.l.s4 1983009808
        %v4284 = vunpack.c.0.s8 %v4283
        %v4285 = vperm.slane %v4281, %v4284
        %v4286 = vrot.slane %v4285, 4
        %v4287 = vsel %vm676, %v4286, %v4279
        %v4289 = vunpack.c.l.s4 1934713408
        %v4290 = vunpack.c.0.s8 %v4289
        %v4291 = vperm.slane %v4287, %v4290
        %v4292 = vrot.slane %v4291, 4
        %v4293 = vsel %vm676, 0.0, %v4292
        %4302 = vrot.lane.b32.xlu0 %v4153, 8
        %v4303 = vpop.permute.xlu0 %4302
        %4304 = vrot.lane.b32.xlu0 %v4173, 8
        %v4305 = vpop.permute.xlu0 %4304
        %4306 = vrot.lane.b32.xlu0 %v4193, 8
        %v4307 = vpop.permute.xlu0 %4306
        %4308 = vrot.lane.b32.xlu0 %v4213, 8
        %v4309 = vpop.permute.xlu0 %4308
        %4310 = vrot.lane.b32.xlu0 %v4233, 8
        %v4311 = vpop.permute.xlu0 %4310
        %4312 = vrot.lane.b32.xlu0 %v4253, 8
        %v4313 = vpop.permute.xlu0 %4312
        %4314 = vrot.lane.b32.xlu0 %v4273, 8
        %v4315 = vpop.permute.xlu0 %4314
        %4316 = vrot.lane.b32.xlu0 %v4293, 8
        %v4317 = vpop.permute.xlu0 %4316
        %v4326 = vsel %vm2244, %v4151, %v4303
        %v4327 = vsel %vm2244, %v4171, %v4305
        %v4328 = vsel %vm2244, %v4191, %v4307
        %v4329 = vsel %vm2244, %v4211, %v4309
        %v4330 = vsel %vm2244, %v4231, %v4311
        %v4331 = vsel %vm2244, %v4251, %v4313
        %v4332 = vsel %vm2244, %v4271, %v4315
        %v4333 = vsel %vm2244, %v4291, %v4317
        %s4334 = scalar_lea.vmem %s156, 32 [#allocation2]
        %4335 = vst.msk [vmem:[%s4334] sm:$0xf] %vm2253, %v4326
        %4336 = vst.msk [vmem:[%s4334 + $0x4] sm:$0xf] %vm2253, %v4327
        %4337 = vst.msk [vmem:[%s4334 + $0x8] sm:$0xf] %vm2253, %v4328
        %4338 = vst.msk [vmem:[%s4334 + $0xc] sm:$0xf] %vm2253, %v4329
        %4339 = vst.msk [vmem:[%s4334 + $0x10] sm:$0xf] %vm2253, %v4330
        %4340 = vst.msk [vmem:[%s4334 + $0x14] sm:$0xf] %vm2253, %v4331
        %4341 = vst.msk [vmem:[%s4334 + $0x18] sm:$0xf] %vm2253, %v4332
        %4342 = vst.msk [vmem:[%s4334 + $0x1c] sm:$0xf] %vm2253, %v4333
        %s4343 = sand.u32 %s76, 1
        %s4344 = scalar_lea.sflag [#allocation3], %s4343
        %s4345 = sand.u32 %s76, 1
        %s4346 = smul.addr %s4345, 64
        %s4347 = scalar_lea.vmem [#allocation2], %s4346
        // Predicated region
        $region25: #{tpu_custom_call.1} parent=23 // pred_check
          %p4348 = pneg %p86
        $region26: #{tpu_custom_call.1} parent=23 // pred_check_branch
          %4350 = sbr.rel (%p4348) target = $region28
        $region27: #{tpu_custom_call.1} parent=23 // pred_region
          %s4351 = smul.u32 2, %s21
          %s4352 = smul.u32 8, %s22
          %4354 = vsyncadd %s4344, 0
          %s4355 = smul.addr %s4351, 8
          %s4356 = sadd.s32 %s4352, %s4355
          %s4357 = smul.addr %s20, 16
          %s4358 = sadd.s32 %s4356, %s4357
          %s4359 = smul.addr %s4358, 4
          %s4360 = scalar_lea.hbm %s1, %s4359
          %s4361 = sshll.u32 %s4347, 4
          %s4362 = int_to_ptr.vmem [resolvable:$true] %s4361
          %s4363 = sshll.u32 %s4360, 4
          %s4364 = int_to_ptr.hbm [resolvable:$true] %s4363
          %4369 = dma.vmem_to_hbm [thread:$0]  %s4362, 1024, %s4364, %s4344, 64, 64, 4
        $region28: #{tpu_custom_call.1} parent=23 // pred_fallthru
          _
      $region24: #{tpu_custom_call.1} parent=5 // pred_fallthru
        _
      %p4370 = scmp.le.s32.totalorder 2, %s10
      // Predicated region
      $region29: #{tpu_custom_call.1} parent=5 // pred_check
        %p4371 = pneg %p4370
      $region30: #{tpu_custom_call.1} parent=5 // pred_check_branch
        %4373 = sbr.rel (%p4371) target = $region32
      $region31: #{tpu_custom_call.1} parent=5 // pred_region
        %s4374 = ssub.s32 %s10, 2
        // Predicated region
        $region33: #{tpu_custom_call.1} parent=31 // pred_check
          %p4375 = pneg %p92
        $region34: #{tpu_custom_call.1} parent=31 // pred_check_branch
          %4377 = sbr.rel (%p4375) target = $region36
        $region35: #{tpu_custom_call.1} parent=31 // pred_region
          %s4378 = sand.u32 %s77, 1
          %s4379 = scalar_lea.sflag [#allocation3], %s4378
          %s4380 = sand.u32 %s77, 1
          %s4381 = smul.addr %s4380, 64
          %s4382 = scalar_lea.vmem [#allocation2], %s4381
          %4384 = dma.done %s4379, 1024
        $region36: #{tpu_custom_call.1} parent=31 // pred_fallthru
          _
      $region32: #{tpu_custom_call.1} parent=5 // pred_fallthru
        _
    $region6: #{tpu_custom_call.1} parent=1 // loop_footer
      %s14 = sadd.s32 1, %s10
    $region7: #{tpu_custom_call.1} parent=1 // loop_footer_branch
      %9 = sbr.rel target = $region3
    $region8: #{tpu_custom_call.1} parent=1 // loop_exit
      _
    %4385 = vsyncpa [#allocation3], 1
    %s4386 = scalar_lea.sflag [#allocation3], 1
    %4387 = vsyncpa %s4386, 1

// kernel: tpu_custom_call.1
$region0: #{tpu_custom_call.1}
  #allocation0 [shape = 'u32[]', space=smem, size = 0x4, offset = 0x4, fixed_abs, tag = 'smem constant byte address 0x4 - core index']
  #allocation1 [shape = 'u32[72,128]{1,0:T(1,128)}', space=vmem, size = 0x9000, scoped, tag = 'internal scratch']
  %s0 = inlined_call_operand.vmem [shape: f32[2,16,4,4,4], index: 0, kind: input, shape index: {}]
  %s1 = inlined_call_operand.hbm [shape: f32[2,2,8,4,16], index: 1, kind: output, shape index: {}]
  %s2 = sld [smem:[#allocation0]]
  $region37: #{tpu_custom_call.1} parent=0
    _
  %s4 = ssub.s32 1, %s2
  %s5 = scalar_select 0, %s4, %s2
  $region1: #{tpu_custom_call.1} parent=0
    #allocation2 [shape = 'u8[65536]{0}', space=vmem, size = 0x10000, scoped, tag = 'output window, operand 0']
    #allocation3 [shape = 's32[2]{0}', space=sflag, size = 0x8, scoped, tag = 'scoped memory for tpu_custom_call.1']
    %6 = vsyncpa [#allocation3], 0
    %s7 = scalar_lea.sflag [#allocation3], 1
    %8 = vsyncpa %s7, 0
    loop: start=0, step=1, limit=4
    $region2: #{tpu_custom_call.1} parent=1 // loop_pre_header
      _
    $region3: #{tpu_custom_call.1} parent=1 // loop_header
      %s10 = sphi 0, %s14
      %p11 = scmp.ge.s32.totalorder %s10, 4
      %s17 = sphi 0, %s36
      %s18 = sphi 0, %s32
      %s19 = sphi 0, %s28
      %s20 = sphi 0, %s17
      %s21 = sphi 0, %s18
      %s22 = sphi 0, %s19
      %s23 = sphi 0, %s20
      %s24 = sphi 0, %s21
      %s25 = sphi 0, %s22
      %s43 = sphi 0, %s45
      %s46 = sphi 0, %s43
      %s47 = sphi 0, %s46
      %s63 = sphi 0, %s47
      %s73 = sphi 0, %s75
      %s76 = sphi 0, %s73
      %s77 = sphi 0, %s76
      %s93 = sphi 0, %s77
    $region4: #{tpu_custom_call.1} parent=1 // loop_header_branch
      %13 = sbr.rel (%p11) target = $region8
    $region5: #{tpu_custom_call.1} parent=1 // loop_body
      %s15 = ssub.s32 %s10, 1
      %s16 = ssub.s32 %s10, 2
      %s26 = sadd.s32 1, %s19
      %p27 = scmp.ge.s32.totalorder %s26, 1
      %s28 = scalar_select %p27, 0, %s26
      %s29 = sadd.s32 1, %s18
      %s30 = scalar_select %p27, %s29, %s18
      %p31 = scmp.ge.s32.totalorder %s30, 1
      %s32 = scalar_select %p31, 0, %s30
      %s33 = sadd.s32 1, %s17
      %s34 = scalar_select %p31, %s33, %s17
      %p35 = scmp.ge.s32.totalorder %s34, 2
      %s36 = scalar_select %p35, 0, %s34
      %s37 = ssub.s32 %s17, %s36
      %s38 = ssub.s32 %s18, %s32
      %s39 = sor.u32 %s37, %s38
      %s40 = ssub.s32 %s19, %s28
      %s41 = sor.u32 %s39, %s40
      %p42 = scmp.eq.s32.totalorder %s41, 0
      %s44 = sadd.s32 %s43, 1
      %s45 = scalar_select %p42, %s43, %s44
      %p48 = pneg %p42
      %p49 = scmp.eq.s32.totalorder %s10, 1
      %p50 = por %p48, %p49
      %p51 = scmp.ne.s32.totalorder %s43, %s46
      %p52 = scmp.eq.s32.totalorder %s10, 0
      %p53 = por %p51, %p52
      %p54 = scmp.ne.s32.totalorder %s43, %s46
      %p55 = scmp.eq.s32.totalorder %s15, 1
      %p56 = por %p54, %p55
      %p57 = scmp.ne.s32.totalorder %s46, %s47
      %p58 = scmp.eq.s32.totalorder %s15, 0
      %p59 = por %p57, %p58
      %p60 = scmp.ne.s32.totalorder %s46, %s47
      %p61 = scmp.eq.s32.totalorder %s16, 1
      %p62 = por %p60, %p61
      %p64 = scmp.ne.s32.totalorder %s47, %s63
      %p65 = scmp.eq.s32.totalorder %s16, 0
      %p66 = por %p64, %p65
      %s67 = ssub.s32 %s17, %s36
      %s68 = ssub.s32 %s18, %s32
      %s69 = sor.u32 %s67, %s68
      %s70 = ssub.s32 %s19, %s28
      %s71 = sor.u32 %s69, %s70
      %p72 = scmp.eq.s32.totalorder %s71, 0
      %s74 = sadd.s32 %s73, 1
      %s75 = scalar_select %p72, %s73, %s74
      %p78 = pneg %p72
      %p79 = scmp.eq.s32.totalorder %s10, 1
      %p80 = por %p78, %p79
      %p81 = scmp.ne.s32.totalorder %s73, %s76
      %p82 = scmp.eq.s32.totalorder %s10, 0
      %p83 = por %p81, %p82
      %p84 = scmp.ne.s32.totalorder %s73, %s76
      %p85 = scmp.eq.s32.totalorder %s15, 1
      %p86 = por %p84, %p85
      %p87 = scmp.ne.s32.totalorder %s76, %s77
      %p88 = scmp.eq.s32.totalorder %s15, 0
      %p89 = por %p87, %p88
      %p90 = scmp.ne.s32.totalorder %s76, %s77
      %p91 = scmp.eq.s32.totalorder %s16, 1
      %p92 = por %p90, %p91
      %p94 = scmp.ne.s32.totalorder %s77, %s93
      %p95 = scmp.eq.s32.totalorder %s16, 0
      %p96 = por %p94, %p95
      %p97 = scmp.le.s32.totalorder 1, %s10
      %p98 = scmp.lt.s32.totalorder %s10, 3
      %p99 = pnand %p97, %p98
      %p100 = pneg %p99
      // Predicated region
      $region9: #{tpu_custom_call.1} parent=5 // pred_check
        _
      $region10: #{tpu_custom_call.1} parent=5 // pred_check_branch
        %102 = sbr.rel (%p99) target = $region12
      $region11: #{tpu_custom_call.1} parent=5 // pred_region
        %s103 = ssub.s32 %s10, 1
      $region12: #{tpu_custom_call.1} parent=5 // pred_fallthru
        _
      %p104 = scmp.lt.s32.totalorder %s10, 2
      // Predicated region
      $region13: #{tpu_custom_call.1} parent=5 // pred_check
        %p105 = pneg %p104
      $region14: #{tpu_custom_call.1} parent=5 // pred_check_branch
        %107 = sbr.rel (%p105) target = $region16
      $region15: #{tpu_custom_call.1} parent=5 // pred_region
        // Predicated region
        $region17: #{tpu_custom_call.1} parent=15 // pred_check
          %p108 = pneg %p53
        $region18: #{tpu_custom_call.1} parent=15 // pred_check_branch
          %110 = sbr.rel (%p108) target = $region20
        $region19: #{tpu_custom_call.1} parent=15 // pred_region
          %s111 = smul.u32 16, %s18
          %s112 = smul.u32 4, %s19
          %p113 = scmp.lt.s32.totalorder %s17, 1
          %s114 = scalar_select %p113, %s17, 1
          %p115 = scmp.lt.s32.totalorder %s111, 15
          %s116 = scalar_select %p115, %s111, 15
          %p117 = scmp.lt.s32.totalorder %s112, 3
          %s118 = scalar_select %p117, %s112, 3
          %s119 = smul.addr %s116, 4
          %s120 = sadd.s32 %s118, %s119
          %s121 = smul.addr %s114, 64
          %s122 = sadd.s32 %s120, %s121
          %s123 = smul.addr %s122, 4
          %s124 = scalar_lea.vmem %s0, %s123
          %s125 = smul.u32 16, %s18
          %s126 = smul.u32 4, %s19
        $region20: #{tpu_custom_call.1} parent=15 // pred_fallthru
          _
      $region16: #{tpu_custom_call.1} parent=5 // pred_fallthru
        _
      %p127 = scmp.le.s32.totalorder 1, %s10
      %p128 = scmp.lt.s32.totalorder %s10, 3
      %p129 = pnand %p127, %p128
      %p130 = pneg %p129
      // Predicated region
      $region21: #{tpu_custom_call.1} parent=5 // pred_check
        _
      $region22: #{tpu_custom_call.1} parent=5 // pred_check_branch
        %132 = sbr.rel (%p129) target = $region24
      $region23: #{tpu_custom_call.1} parent=5 // pred_region
        %s133 = ssub.s32 %s10, 1
        %s134 = smul.u32 16, %s21
        %s135 = smul.u32 4, %s22
        %p136 = scmp.lt.s32.totalorder %s20, 1
        %s137 = scalar_select %p136, %s20, 1
        %p138 = scmp.lt.s32.totalorder %s134, 15
        %s139 = scalar_select %p138, %s134, 15
        %p140 = scmp.lt.s32.totalorder %s135, 3
        %s141 = scalar_select %p140, %s135, 3
        %s142 = smul.addr %s139, 4
        %s143 = sadd.s32 %s141, %s142
        %s144 = smul.addr %s137, 64
        %s145 = sadd.s32 %s143, %s144
        %s146 = smul.addr %s145, 4
        %s147 = scalar_lea.vmem %s0, %s146
        %p148 = pneg %p59
        %p149 = pneg %p56
        %p150 = pneg %p89
        %p151 = pneg %p86
        %s152 = sand.u32 %s76, 1
        %s153 = scalar_lea.sflag [#allocation3], %s152
        %s154 = sand.u32 %s76, 1
        %s155 = smul.addr %s154, 64
        %s156 = scalar_lea.vmem [#allocation2], %s155
        %s157 = smul.u32 16, %s21
        %s158 = smul.u32 4, %s22
        %p159 = scmp.lt.s32.totalorder %s20, 1
        %s160 = scalar_select %p159, %s20, 1
        %p161 = scmp.lt.s32.totalorder %s157, 15
        %s162 = scalar_select %p161, %s157, 15
        %p163 = scmp.lt.s32.totalorder %s158, 3
        %s164 = scalar_select %p163, %s158, 3
        %s165 = smul.addr %s162, 4
        %s166 = sadd.s32 %s164, %s165
        %s167 = smul.addr %s160, 64
        %s168 = sadd.s32 %s166, %s167
        %s169 = smul.addr %s168, 4
        %s170 = scalar_lea.vmem %s0, %s169
        %s171 = smul.u32 16, %s21
        %s172 = smul.u32 4, %s22
        %s173 = smul.u32 2, %s21
        %s174 = smul.u32 8, %s22
        %v175 = vld [vmem:[%s170] sm:$0xf]
        %v176 = vld [vmem:[%s170 + $0x4] sm:$0xf]
        %v177 = vld [vmem:[%s170 + $0x8] sm:$0xf]
        %v178 = vld [vmem:[%s170 + $0xc] sm:$0xf]
        %s179 = scalar_lea.vmem %s170, 16
        %v180 = vld [vmem:[%s179] sm:$0xf]
        %v181 = vld [vmem:[%s179 + $0x4] sm:$0xf]
        %v182 = vld [vmem:[%s179 + $0x8] sm:$0xf]
        %v183 = vld [vmem:[%s179 + $0xc] sm:$0xf]
        %v184 = vperm.slane %v175, 0
        %v185 = vlaneseq
        %v186 = vshrl.u32 %v185, 7
        %188 = vset.pattern.permute.xlu0 %v186
        %189 = vperm.xlu0 %188, %v184
        %v190 = vpop.permute.xlu0 %189
        %v191 = vperm.slane %v175, 1
        %v192 = vlaneseq
        %v193 = vshrl.u32 %v192, 7
        %195 = vset.pattern.permute.xlu0 %v193
        %196 = vperm.xlu0 %195, %v191
        %v197 = vpop.permute.xlu0 %196
        %v198 = vperm.slane %v175, 2
        %v199 = vlaneseq
        %v200 = vshrl.u32 %v199, 7
        %202 = vset.pattern.permute.xlu0 %v200
        %203 = vperm.xlu0 %202, %v198
        %v204 = vpop.permute.xlu0 %203
        %v205 = vperm.slane %v175, 3
        %v206 = vlaneseq
        %v207 = vshrl.u32 %v206, 7
        %209 = vset.pattern.permute.xlu0 %v207
        %210 = vperm.xlu0 %209, %v205
        %v211 = vpop.permute.xlu0 %210
        %v212 = vperm.slane %v176, 0
        %v213 = vlaneseq
        %v214 = vshrl.u32 %v213, 7
        %216 = vset.pattern.permute.xlu0 %v214
        %217 = vperm.xlu0 %216, %v212
        %v218 = vpop.permute.xlu0 %217
        %v219 = vperm.slane %v176, 1
        %v220 = vlaneseq
        %v221 = vshrl.u32 %v220, 7
        %223 = vset.pattern.permute.xlu0 %v221
        %224 = vperm.xlu0 %223, %v219
        %v225 = vpop.permute.xlu0 %224
        %v226 = vperm.slane %v176, 2
        %v227 = vlaneseq
        %v228 = vshrl.u32 %v227, 7
        %230 = vset.pattern.permute.xlu0 %v228
        %231 = vperm.xlu0 %230, %v226
        %v232 = vpop.permute.xlu0 %231
        %v233 = vperm.slane %v176, 3
        %v234 = vlaneseq
        %v235 = vshrl.u32 %v234, 7
        %237 = vset.pattern.permute.xlu0 %v235
        %238 = vperm.xlu0 %237, %v233
        %v239 = vpop.permute.xlu0 %238
        %v240 = vperm.slane %v177, 0
        %v241 = vlaneseq
        %v242 = vshrl.u32 %v241, 7
        %244 = vset.pattern.permute.xlu0 %v242
        %245 = vperm.xlu0 %244, %v240
        %v246 = vpop.permute.xlu0 %245
        %v247 = vperm.slane %v177, 1
        %v248 = vlaneseq
        %v249 = vshrl.u32 %v248, 7
        %251 = vset.pattern.permute.xlu0 %v249
        %252 = vperm.xlu0 %251, %v247
        %v253 = vpop.permute.xlu0 %252
        %v254 = vperm.slane %v177, 2
        %v255 = vlaneseq
        %v256 = vshrl.u32 %v255, 7
        %258 = vset.pattern.permute.xlu0 %v256
        %259 = vperm.xlu0 %258, %v254
        %v260 = vpop.permute.xlu0 %259
        %v261 = vperm.slane %v177, 3
        %v262 = vlaneseq
        %v263 = vshrl.u32 %v262, 7
        %265 = vset.pattern.permute.xlu0 %v263
        %266 = vperm.xlu0 %265, %v261
        %v267 = vpop.permute.xlu0 %266
        %v268 = vperm.slane %v178, 0
        %v269 = vlaneseq
        %v270 = vshrl.u32 %v269, 7
        %272 = vset.pattern.permute.xlu0 %v270
        %273 = vperm.xlu0 %272, %v268
        %v274 = vpop.permute.xlu0 %273
        %v275 = vperm.slane %v178, 1
        %v276 = vlaneseq
        %v277 = vshrl.u32 %v276, 7
        %279 = vset.pattern.permute.xlu0 %v277
        %280 = vperm.xlu0 %279, %v275
        %v281 = vpop.permute.xlu0 %280
        %v282 = vperm.slane %v178, 2
        %v283 = vlaneseq
        %v284 = vshrl.u32 %v283, 7
        %286 = vset.pattern.permute.xlu0 %v284
        %287 = vperm.xlu0 %286, %v282
        %v288 = vpop.permute.xlu0 %287
        %v289 = vperm.slane %v178, 3
        %v290 = vlaneseq
        %v291 = vshrl.u32 %v290, 7
        %293 = vset.pattern.permute.xlu0 %v291
        %294 = vperm.xlu0 %293, %v289
        %v295 = vpop.permute.xlu0 %294
        %v296 = vperm.slane %v180, 0
        %v297 = vlaneseq
        %v298 = vshrl.u32 %v297, 7
        %300 = vset.pattern.permute.xlu0 %v298
        %301 = vperm.xlu0 %300, %v296
        %v302 = vpop.permute.xlu0 %301
        %v303 = vperm.slane %v180, 1
        %v304 = vlaneseq
        %v305 = vshrl.u32 %v304, 7
        %307 = vset.pattern.permute.xlu0 %v305
        %308 = vperm.xlu0 %307, %v303
        %v309 = vpop.permute.xlu0 %308
        %v310 = vperm.slane %v180, 2
        %v311 = vlaneseq
        %v312 = vshrl.u32 %v311, 7
        %314 = vset.pattern.permute.xlu0 %v312
        %315 = vperm.xlu0 %314, %v310
        %v316 = vpop.permute.xlu0 %315
        %v317 = vperm.slane %v180, 3
        %v318 = vlaneseq
        %v319 = vshrl.u32 %v318, 7
        %321 = vset.pattern.permute.xlu0 %v319
        %322 = vperm.xlu0 %321, %v317
        %v323 = vpop.permute.xlu0 %322
        %v324 = vperm.slane %v181, 0
        %v325 = vlaneseq
        %v326 = vshrl.u32 %v325, 7
        %328 = vset.pattern.permute.xlu0 %v326
        %329 = vperm.xlu0 %328, %v324
        %v330 = vpop.permute.xlu0 %329
        %v331 = vperm.slane %v181, 1
        %v332 = vlaneseq
        %v333 = vshrl.u32 %v332, 7
        %335 = vset.pattern.permute.xlu0 %v333
        %336 = vperm.xlu0 %335, %v331
        %v337 = vpop.permute.xlu0 %336
        %v338 = vperm.slane %v181, 2
        %v339 = vlaneseq
        %v340 = vshrl.u32 %v339, 7
        %342 = vset.pattern.permute.xlu0 %v340
        %343 = vperm.xlu0 %342, %v338
        %v344 = vpop.permute.xlu0 %343
        %v345 = vperm.slane %v181, 3
        %v346 = vlaneseq
        %v347 = vshrl.u32 %v346, 7
        %349 = vset.pattern.permute.xlu0 %v347
        %350 = vperm.xlu0 %349, %v345
        %v351 = vpop.permute.xlu0 %350
        %v352 = vperm.slane %v182, 0
        %v353 = vlaneseq
        %v354 = vshrl.u32 %v353, 7
        %356 = vset.pattern.permute.xlu0 %v354
        %357 = vperm.xlu0 %356, %v352
        %v358 = vpop.permute.xlu0 %357
        %v359 = vperm.slane %v182, 1
        %v360 = vlaneseq
        %v361 = vshrl.u32 %v360, 7
        %363 = vset.pattern.permute.xlu0 %v361
        %364 = vperm.xlu0 %363, %v359
        %v365 = vpop.permute.xlu0 %364
        %v366 = vperm.slane %v182, 2
        %v367 = vlaneseq
        %v368 = vshrl.u32 %v367, 7
        %370 = vset.pattern.permute.xlu0 %v368
        %371 = vperm.xlu0 %370, %v366
        %v372 = vpop.permute.xlu0 %371
        %v373 = vperm.slane %v182, 3
        %v374 = vlaneseq
        %v375 = vshrl.u32 %v374, 7
        %377 = vset.pattern.permute.xlu0 %v375
        %378 = vperm.xlu0 %377, %v373
        %v379 = vpop.permute.xlu0 %378
        %v380 = vperm.slane %v183, 0
        %v381 = vlaneseq
        %v382 = vshrl.u32 %v381, 7
        %384 = vset.pattern.permute.xlu0 %v382
        %385 = vperm.xlu0 %384, %v380
        %v386 = vpop.permute.xlu0 %385
        %v387 = vperm.slane %v183, 1
        %v388 = vlaneseq
        %v389 = vshrl.u32 %v388, 7
        %391 = vset.pattern.permute.xlu0 %v389
        %392 = vperm.xlu0 %391, %v387
        %v393 = vpop.permute.xlu0 %392
        %v394 = vperm.slane %v183, 2
        %v395 = vlaneseq
        %v396 = vshrl.u32 %v395, 7
        %398 = vset.pattern.permute.xlu0 %v396
        %399 = vperm.xlu0 %398, %v394
        %v400 = vpop.permute.xlu0 %399
        %v401 = vperm.slane %v183, 3
        %v402 = vlaneseq
        %v403 = vshrl.u32 %v402, 7
        %405 = vset.pattern.permute.xlu0 %v403
        %406 = vperm.xlu0 %405, %v401
        %v407 = vpop.permute.xlu0 %406
        %vm408 = vcmask 7168
        %v409 = vsel %vm408, %v190, %v302
        %v410 = vsel %vm408, %v197, %v309
        %v411 = vsel %vm408, %v204, %v316
        %v412 = vsel %vm408, %v211, %v323
        %v413 = vsel %vm408, %v218, %v330
        %v414 = vsel %vm408, %v225, %v337
        %v415 = vsel %vm408, %v232, %v344
        %v416 = vsel %vm408, %v239, %v351
        %v417 = vsel %vm408, %v246, %v358
        %v418 = vsel %vm408, %v253, %v365
        %v419 = vsel %vm408, %v260, %v372
        %v420 = vsel %vm408, %v267, %v379
        %v421 = vsel %vm408, %v274, %v386
        %v422 = vsel %vm408, %v281, %v393
        %v423 = vsel %vm408, %v288, %v400
        %v424 = vsel %vm408, %v295, %v407
        %s425 = scalar_lea.vmem %s170, 64
        %v426 = vld [vmem:[%s425] sm:$0xf]
        %v427 = vld [vmem:[%s425 + $0x4] sm:$0xf]
        %v428 = vld [vmem:[%s425 + $0x8] sm:$0xf]
        %v429 = vld [vmem:[%s425 + $0xc] sm:$0xf]
        %s430 = scalar_lea.vmem %s170, 80
        %v431 = vld [vmem:[%s430] sm:$0xf]
        %v432 = vld [vmem:[%s430 + $0x4] sm:$0xf]
        %v433 = vld [vmem:[%s430 + $0x8] sm:$0xf]
        %v434 = vld [vmem:[%s430 + $0xc] sm:$0xf]
        %v435 = vperm.slane %v426, 0
        %v436 = vlaneseq
        %v437 = vshrl.u32 %v436, 7
        %439 = vset.pattern.permute.xlu0 %v437
        %440 = vperm.xlu0 %439, %v435
        %v441 = vpop.permute.xlu0 %440
        %v442 = vperm.slane %v426, 1
        %v443 = vlaneseq
        %v444 = vshrl.u32 %v443, 7
        %446 = vset.pattern.permute.xlu0 %v444
        %447 = vperm.xlu0 %446, %v442
        %v448 = vpop.permute.xlu0 %447
        %v449 = vperm.slane %v426, 2
        %v450 = vlaneseq
        %v451 = vshrl.u32 %v450, 7
        %453 = vset.pattern.permute.xlu0 %v451
        %454 = vperm.xlu0 %453, %v449
        %v455 = vpop.permute.xlu0 %454
        %v456 = vperm.slane %v426, 3
        %v457 = vlaneseq
        %v458 = vshrl.u32 %v457, 7
        %460 = vset.pattern.permute.xlu0 %v458
        %461 = vperm.xlu0 %460, %v456
        %v462 = vpop.permute.xlu0 %461
        %v463 = vperm.slane %v427, 0
        %v464 = vlaneseq
        %v465 = vshrl.u32 %v464, 7
        %467 = vset.pattern.permute.xlu0 %v465
        %468 = vperm.xlu0 %467, %v463
        %v469 = vpop.permute.xlu0 %468
        %v470 = vperm.slane %v427, 1
        %v471 = vlaneseq
        %v472 = vshrl.u32 %v471, 7
        %474 = vset.pattern.permute.xlu0 %v472
        %475 = vperm.xlu0 %474, %v470
        %v476 = vpop.permute.xlu0 %475
        %v477 = vperm.slane %v427, 2
        %v478 = vlaneseq
        %v479 = vshrl.u32 %v478, 7
        %481 = vset.pattern.permute.xlu0 %v479
        %482 = vperm.xlu0 %481, %v477
        %v483 = vpop.permute.xlu0 %482
        %v484 = vperm.slane %v427, 3
        %v485 = vlaneseq
        %v486 = vshrl.u32 %v485, 7
        %488 = vset.pattern.permute.xlu0 %v486
        %489 = vperm.xlu0 %488, %v484
        %v490 = vpop.permute.xlu0 %489
        %v491 = vperm.slane %v428, 0
        %v492 = vlaneseq
        %v493 = vshrl.u32 %v492, 7
        %495 = vset.pattern.permute.xlu0 %v493
        %496 = vperm.xlu0 %495, %v491
        %v497 = vpop.permute.xlu0 %496
        %v498 = vperm.slane %v428, 1
        %v499 = vlaneseq
        %v500 = vshrl.u32 %v499, 7
        %502 = vset.pattern.permute.xlu0 %v500
        %503 = vperm.xlu0 %502, %v498
        %v504 = vpop.permute.xlu0 %503
        %v505 = vperm.slane %v428, 2
        %v506 = vlaneseq
        %v507 = vshrl.u32 %v506, 7
        %509 = vset.pattern.permute.xlu0 %v507
        %510 = vperm.xlu0 %509, %v505
        %v511 = vpop.permute.xlu0 %510
        %v512 = vperm.slane %v428, 3
        %v513 = vlaneseq
        %v514 = vshrl.u32 %v513, 7
        %516 = vset.pattern.permute.xlu0 %v514
        %517 = vperm.xlu0 %516, %v512
        %v518 = vpop.permute.xlu0 %517
        %v519 = vperm.slane %v429, 0
        %v520 = vlaneseq
        %v521 = vshrl.u32 %v520, 7
        %523 = vset.pattern.permute.xlu0 %v521
        %524 = vperm.xlu0 %523, %v519
        %v525 = vpop.permute.xlu0 %524
        %v526 = vperm.slane %v429, 1
        %v527 = vlaneseq
        %v528 = vshrl.u32 %v527, 7
        %530 = vset.pattern.permute.xlu0 %v528
        %531 = vperm.xlu0 %530, %v526
        %v532 = vpop.permute.xlu0 %531
        %v533 = vperm.slane %v429, 2
        %v534 = vlaneseq
        %v535 = vshrl.u32 %v534, 7
        %537 = vset.pattern.permute.xlu0 %v535
        %538 = vperm.xlu0 %537, %v533
        %v539 = vpop.permute.xlu0 %538
        %v540 = vperm.slane %v429, 3
        %v541 = vlaneseq
        %v542 = vshrl.u32 %v541, 7
        %544 = vset.pattern.permute.xlu0 %v542
        %545 = vperm.xlu0 %544, %v540
        %v546 = vpop.permute.xlu0 %545
        %v547 = vperm.slane %v431, 0
        %v548 = vlaneseq
        %v549 = vshrl.u32 %v548, 7
        %551 = vset.pattern.permute.xlu0 %v549
        %552 = vperm.xlu0 %551, %v547
        %v553 = vpop.permute.xlu0 %552
        %v554 = vperm.slane %v431, 1
        %v555 = vlaneseq
        %v556 = vshrl.u32 %v555, 7
        %558 = vset.pattern.permute.xlu0 %v556
        %559 = vperm.xlu0 %558, %v554
        %v560 = vpop.permute.xlu0 %559
        %v561 = vperm.slane %v431, 2
        %v562 = vlaneseq
        %v563 = vshrl.u32 %v562, 7
        %565 = vset.pattern.permute.xlu0 %v563
        %566 = vperm.xlu0 %565, %v561
        %v567 = vpop.permute.xlu0 %566
        %v568 = vperm.slane %v431, 3
        %v569 = vlaneseq
        %v570 = vshrl.u32 %v569, 7
        %572 = vset.pattern.permute.xlu0 %v570
        %573 = vperm.xlu0 %572, %v568
        %v574 = vpop.permute.xlu0 %573
        %v575 = vperm.slane %v432, 0
        %v576 = vlaneseq
        %v577 = vshrl.u32 %v576, 7
        %579 = vset.pattern.permute.xlu0 %v577
        %580 = vperm.xlu0 %579, %v575
        %v581 = vpop.permute.xlu0 %580
        %v582 = vperm.slane %v432, 1
        %v583 = vlaneseq
        %v584 = vshrl.u32 %v583, 7
        %586 = vset.pattern.permute.xlu0 %v584
        %587 = vperm.xlu0 %586, %v582
        %v588 = vpop.permute.xlu0 %587
        %v589 = vperm.slane %v432, 2
        %v590 = vlaneseq
        %v591 = vshrl.u32 %v590, 7
        %593 = vset.pattern.permute.xlu0 %v591
        %594 = vperm.xlu0 %593, %v589
        %v595 = vpop.permute.xlu0 %594
        %v596 = vperm.slane %v432, 3
        %v597 = vlaneseq
        %v598 = vshrl.u32 %v597, 7
        %600 = vset.pattern.permute.xlu0 %v598
        %601 = vperm.xlu0 %600, %v596
        %v602 = vpop.permute.xlu0 %601
        %v603 = vperm.slane %v433, 0
        %v604 = vlaneseq
        %v605 = vshrl.u32 %v604, 7
        %607 = vset.pattern.permute.xlu0 %v605
        %608 = vperm.xlu0 %607, %v603
        %v609 = vpop.permute.xlu0 %608
        %v610 = vperm.slane %v433, 1
        %v611 = vlaneseq
        %v612 = vshrl.u32 %v611, 7
        %614 = vset.pattern.permute.xlu0 %v612
        %615 = vperm.xlu0 %614, %v610
        %v616 = vpop.permute.xlu0 %615
        %v617 = vperm.slane %v433, 2
        %v618 = vlaneseq
        %v619 = vshrl.u32 %v618, 7
        %621 = vset.pattern.permute.xlu0 %v619
        %622 = vperm.xlu0 %621, %v617
        %v623 = vpop.permute.xlu0 %622
        %v624 = vperm.slane %v433, 3
        %v625 = vlaneseq
        %v626 = vshrl.u32 %v625, 7
        %628 = vset.pattern.permute.xlu0 %v626
        %629 = vperm.xlu0 %628, %v624
        %v630 = vpop.permute.xlu0 %629
        %v631 = vperm.slane %v434, 0
        %v632 = vlaneseq
        %v633 = vshrl.u32 %v632, 7
        %635 = vset.pattern.permute.xlu0 %v633
        %636 = vperm.xlu0 %635, %v631
        %v637 = vpop.permute.xlu0 %636
        %v638 = vperm.slane %v434, 1
        %v639 = vlaneseq
        %v640 = vshrl.u32 %v639, 7
        %642 = vset.pattern.permute.xlu0 %v640
        %643 = vperm.xlu0 %642, %v638
        %v644 = vpop.permute.xlu0 %643
        %v645 = vperm.slane %v434, 2
        %v646 = vlaneseq
        %v647 = vshrl.u32 %v646, 7
        %649 = vset.pattern.permute.xlu0 %v647
        %650 = vperm.xlu0 %649, %v645
        %v651 = vpop.permute.xlu0 %650
        %v652 = vperm.slane %v434, 3
        %v653 = vlaneseq
        %v654 = vshrl.u32 %v653, 7
        %656 = vset.pattern.permute.xlu0 %v654
        %657 = vperm.xlu0 %656, %v652
        %v658 = vpop.permute.xlu0 %657
        %v659 = vsel %vm408, %v441, %v553
        %v660 = vsel %vm408, %v448, %v560
        %v661 = vsel %vm408, %v455, %v567
        %v662 = vsel %vm408, %v462, %v574
        %v663 = vsel %vm408, %v469, %v581
        %v664 = vsel %vm408, %v476, %v588
        %v665 = vsel %vm408, %v483, %v595
        %v666 = vsel %vm408, %v490, %v602
        %v667 = vsel %vm408, %v497, %v609
        %v668 = vsel %vm408, %v504, %v616
        %v669 = vsel %vm408, %v511, %v623
        %v670 = vsel %vm408, %v518, %v630
        %v671 = vsel %vm408, %v525, %v637
        %v672 = vsel %vm408, %v532, %v644
        %v673 = vsel %vm408, %v539, %v651
        %v674 = vsel %vm408, %v546, %v658
        %v675 = vrot.slane %v411, 4
        %vm676 = vcmask 1047556
        %v677 = vsel %vm676, %v675, %v409
        %v679 = vunpack.c.l.s4 1983009808
        %v680 = vunpack.c.0.s8 %v679
        %v681 = vperm.slane %v677, %v680
        %v682 = vrot.slane %v412, 4
        %v683 = vsel %vm676, %v682, %v410
        %v685 = vunpack.c.l.s4 1983009808
        %v686 = vunpack.c.0.s8 %v685
        %v687 = vperm.slane %v683, %v686
        %v688 = vrot.slane %v687, 4
        %v689 = vsel %vm676, %v688, %v681
        %v690 = vrot.slane %v681, 4
        %v691 = vsel %vm676, %v687, %v690
        %v693 = vunpack.c.l.s4 1934713408
        %v694 = vunpack.c.0.s8 %v693
        %v695 = vperm.slane %v689, %v694
        %v697 = vunpack.c.l.s4 1934713408
        %v698 = vunpack.c.0.s8 %v697
        %v699 = vperm.slane %v691, %v698
        %v700 = vrot.slane %v695, 4
        %v701 = vsel %vm676, 0.0, %v700
        %v702 = vrot.slane %v699, 4
        %v703 = vsel %vm676, 0.0, %v702
        %v704 = vrot.slane %v415, 4
        %v705 = vsel %vm676, %v704, %v413
        %v707 = vunpack.c.l.s4 1983009808
        %v708 = vunpack.c.0.s8 %v707
        %v709 = vperm.slane %v705, %v708
        %v710 = vrot.slane %v416, 4
        %v711 = vsel %vm676, %v710, %v414
        %v713 = vunpack.c.l.s4 1983009808
        %v714 = vunpack.c.0.s8 %v713
        %v715 = vperm.slane %v711, %v714
        %v716 = vrot.slane %v715, 4
        %v717 = vsel %vm676, %v716, %v709
        %v718 = vrot.slane %v709, 4
        %v719 = vsel %vm676, %v715, %v718
        %v721 = vunpack.c.l.s4 1934713408
        %v722 = vunpack.c.0.s8 %v721
        %v723 = vperm.slane %v717, %v722
        %v725 = vunpack.c.l.s4 1934713408
        %v726 = vunpack.c.0.s8 %v725
        %v727 = vperm.slane %v719, %v726
        %v728 = vrot.slane %v723, 4
        %v729 = vsel %vm676, 0.0, %v728
        %v730 = vrot.slane %v727, 4
        %v731 = vsel %vm676, 0.0, %v730
        %v732 = vrot.slane %v419, 4
        %v733 = vsel %vm676, %v732, %v417
        %v735 = vunpack.c.l.s4 1983009808
        %v736 = vunpack.c.0.s8 %v735
        %v737 = vperm.slane %v733, %v736
        %v738 = vrot.slane %v420, 4
        %v739 = vsel %vm676, %v738, %v418
        %v741 = vunpack.c.l.s4 1983009808
        %v742 = vunpack.c.0.s8 %v741
        %v743 = vperm.slane %v739, %v742
        %v744 = vrot.slane %v743, 4
        %v745 = vsel %vm676, %v744, %v737
        %v746 = vrot.slane %v737, 4
        %v747 = vsel %vm676, %v743, %v746
        %v749 = vunpack.c.l.s4 1934713408
        %v750 = vunpack.c.0.s8 %v749
        %v751 = vperm.slane %v745, %v750
        %v753 = vunpack.c.l.s4 1934713408
        %v754 = vunpack.c.0.s8 %v753
        %v755 = vperm.slane %v747, %v754
        %v756 = vrot.slane %v751, 4
        %v757 = vsel %vm676, 0.0, %v756
        %v758 = vrot.slane %v755, 4
        %v759 = vsel %vm676, 0.0, %v758
        %v760 = vrot.slane %v423, 4
        %v761 = vsel %vm676, %v760, %v421
        %v763 = vunpack.c.l.s4 1983009808
        %v764 = vunpack.c.0.s8 %v763
        %v765 = vperm.slane %v761, %v764
        %v766 = vrot.slane %v424, 4
        %v767 = vsel %vm676, %v766, %v422
        %v769 = vunpack.c.l.s4 1983009808
        %v770 = vunpack.c.0.s8 %v769
        %v771 = vperm.slane %v767, %v770
        %v772 = vrot.slane %v771, 4
        %v773 = vsel %vm676, %v772, %v765
        %v774 = vrot.slane %v765, 4
        %v775 = vsel %vm676, %v771, %v774
        %v777 = vunpack.c.l.s4 1934713408
        %v778 = vunpack.c.0.s8 %v777
        %v779 = vperm.slane %v773, %v778
        %v781 = vunpack.c.l.s4 1934713408
        %v782 = vunpack.c.0.s8 %v781
        %v783 = vperm.slane %v775, %v782
        %v784 = vrot.slane %v779, 4
        %v785 = vsel %vm676, 0.0, %v784
        %v786 = vrot.slane %v783, 4
        %v787 = vsel %vm676, 0.0, %v786
        %792 = vrot.lane.b32.xlu0 %v701, 2
        %v793 = vpop.permute.xlu0 %792
        %794 = vrot.lane.b32.xlu0 %v729, 2
        %v795 = vpop.permute.xlu0 %794
        %796 = vrot.lane.b32.xlu0 %v757, 2
        %v797 = vpop.permute.xlu0 %796
        %798 = vrot.lane.b32.xlu0 %v785, 2
        %v799 = vpop.permute.xlu0 %798
        %808 = vrot.lane.b32.xlu0 %v699, 4
        %v809 = vpop.permute.xlu0 %808
        %810 = vrot.lane.b32.xlu0 %v727, 4
        %v811 = vpop.permute.xlu0 %810
        %812 = vrot.lane.b32.xlu0 %v755, 4
        %v813 = vpop.permute.xlu0 %812
        %814 = vrot.lane.b32.xlu0 %v783, 4
        %v815 = vpop.permute.xlu0 %814
        %824 = vrot.lane.b32.xlu0 %v703, 6
        %v825 = vpop.permute.xlu0 %824
        %826 = vrot.lane.b32.xlu0 %v731, 6
        %v827 = vpop.permute.xlu0 %826
        %828 = vrot.lane.b32.xlu0 %v759, 6
        %v829 = vpop.permute.xlu0 %828
        %830 = vrot.lane.b32.xlu0 %v787, 6
        %v831 = vpop.permute.xlu0 %830
        %vm836 = vcmask 15360
        %v837 = vsel %vm836, %v695, %v793
        %v838 = vsel %vm836, %v723, %v795
        %v839 = vsel %vm836, %v751, %v797
        %v840 = vsel %vm836, %v779, %v799
        %vm841 = vcmask 31744
        %v842 = vsel %vm841, %v837, %v809
        %v843 = vsel %vm841, %v838, %v811
        %v844 = vsel %vm841, %v839, %v813
        %v845 = vsel %vm841, %v840, %v815
        %vm846 = vcmask 48128
        %v847 = vsel %vm846, %v842, %v825
        %v848 = vsel %vm846, %v843, %v827
        %v849 = vsel %vm846, %v844, %v829
        %v850 = vsel %vm846, %v845, %v831
        %v851 = vrot.slane %v661, 4
        %v852 = vsel %vm676, %v851, %v659
        %v854 = vunpack.c.l.s4 1983009808
        %v855 = vunpack.c.0.s8 %v854
        %v856 = vperm.slane %v852, %v855
        %v857 = vrot.slane %v662, 4
        %v858 = vsel %vm676, %v857, %v660
        %v860 = vunpack.c.l.s4 1983009808
        %v861 = vunpack.c.0.s8 %v860
        %v862 = vperm.slane %v858, %v861
        %v863 = vrot.slane %v862, 4
        %v864 = vsel %vm676, %v863, %v856
        %v865 = vrot.slane %v856, 4
        %v866 = vsel %vm676, %v862, %v865
        %v868 = vunpack.c.l.s4 1934713408
        %v869 = vunpack.c.0.s8 %v868
        %v870 = vperm.slane %v864, %v869
        %v872 = vunpack.c.l.s4 1934713408
        %v873 = vunpack.c.0.s8 %v872
        %v874 = vperm.slane %v866, %v873
        %v875 = vrot.slane %v870, 4
        %v876 = vsel %vm676, 0.0, %v875
        %v877 = vrot.slane %v874, 4
        %v878 = vsel %vm676, 0.0, %v877
        %v879 = vrot.slane %v665, 4
        %v880 = vsel %vm676, %v879, %v663
        %v882 = vunpack.c.l.s4 1983009808
        %v883 = vunpack.c.0.s8 %v882
        %v884 = vperm.slane %v880, %v883
        %v885 = vrot.slane %v666, 4
        %v886 = vsel %vm676, %v885, %v664
        %v888 = vunpack.c.l.s4 1983009808
        %v889 = vunpack.c.0.s8 %v888
        %v890 = vperm.slane %v886, %v889
        %v891 = vrot.slane %v890, 4
        %v892 = vsel %vm676, %v891, %v884
        %v893 = vrot.slane %v884, 4
        %v894 = vsel %vm676, %v890, %v893
        %v896 = vunpack.c.l.s4 1934713408
        %v897 = vunpack.c.0.s8 %v896
        %v898 = vperm.slane %v892, %v897
        %v900 = vunpack.c.l.s4 1934713408
        %v901 = vunpack.c.0.s8 %v900
        %v902 = vperm.slane %v894, %v901
        %v903 = vrot.slane %v898, 4
        %v904 = vsel %vm676, 0.0, %v903
        %v905 = vrot.slane %v902, 4
        %v906 = vsel %vm676, 0.0, %v905
        %v907 = vrot.slane %v669, 4
        %v908 = vsel %vm676, %v907, %v667
        %v910 = vunpack.c.l.s4 1983009808
        %v911 = vunpack.c.0.s8 %v910
        %v912 = vperm.slane %v908, %v911
        %v913 = vrot.slane %v670, 4
        %v914 = vsel %vm676, %v913, %v668
        %v916 = vunpack.c.l.s4 1983009808
        %v917 = vunpack.c.0.s8 %v916
        %v918 = vperm.slane %v914, %v917
        %v919 = vrot.slane %v918, 4
        %v920 = vsel %vm676, %v919, %v912
        %v921 = vrot.slane %v912, 4
        %v922 = vsel %vm676, %v918, %v921
        %v924 = vunpack.c.l.s4 1934713408
        %v925 = vunpack.c.0.s8 %v924
        %v926 = vperm.slane %v920, %v925
        %v928 = vunpack.c.l.s4 1934713408
        %v929 = vunpack.c.0.s8 %v928
        %v930 = vperm.slane %v922, %v929
        %v931 = vrot.slane %v926, 4
        %v932 = vsel %vm676, 0.0, %v931
        %v933 = vrot.slane %v930, 4
        %v934 = vsel %vm676, 0.0, %v933
        %v935 = vrot.slane %v673, 4
        %v936 = vsel %vm676, %v935, %v671
        %v938 = vunpack.c.l.s4 1983009808
        %v939 = vunpack.c.0.s8 %v938
        %v940 = vperm.slane %v936, %v939
        %v941 = vrot.slane %v674, 4
        %v942 = vsel %vm676, %v941, %v672
        %v944 = vunpack.c.l.s4 1983009808
        %v945 = vunpack.c.0.s8 %v944
        %v946 = vperm.slane %v942, %v945
        %v947 = vrot.slane %v946, 4
        %v948 = vsel %vm676, %v947, %v940
        %v949 = vrot.slane %v940, 4
        %v950 = vsel %vm676, %v946, %v949
        %v952 = vunpack.c.l.s4 1934713408
        %v953 = vunpack.c.0.s8 %v952
        %v954 = vperm.slane %v948, %v953
        %v956 = vunpack.c.l.s4 1934713408
        %v957 = vunpack.c.0.s8 %v956
        %v958 = vperm.slane %v950, %v957
        %v959 = vrot.slane %v954, 4
        %v960 = vsel %vm676, 0.0, %v959
        %v961 = vrot.slane %v958, 4
        %v962 = vsel %vm676, 0.0, %v961
        %967 = vrot.lane.b32.xlu0 %v876, 2
        %v968 = vpop.permute.xlu0 %967
        %969 = vrot.lane.b32.xlu0 %v904, 2
        %v970 = vpop.permute.xlu0 %969
        %971 = vrot.lane.b32.xlu0 %v932, 2
        %v972 = vpop.permute.xlu0 %971
        %973 = vrot.lane.b32.xlu0 %v960, 2
        %v974 = vpop.permute.xlu0 %973
        %983 = vrot.lane.b32.xlu0 %v874, 4
        %v984 = vpop.permute.xlu0 %983
        %985 = vrot.lane.b32.xlu0 %v902, 4
        %v986 = vpop.permute.xlu0 %985
        %987 = vrot.lane.b32.xlu0 %v930, 4
        %v988 = vpop.permute.xlu0 %987
        %989 = vrot.lane.b32.xlu0 %v958, 4
        %v990 = vpop.permute.xlu0 %989
        %999 = vrot.lane.b32.xlu0 %v878, 6
        %v1000 = vpop.permute.xlu0 %999
        %1001 = vrot.lane.b32.xlu0 %v906, 6
        %v1002 = vpop.permute.xlu0 %1001
        %1003 = vrot.lane.b32.xlu0 %v934, 6
        %v1004 = vpop.permute.xlu0 %1003
        %1005 = vrot.lane.b32.xlu0 %v962, 6
        %v1006 = vpop.permute.xlu0 %1005
        %v1011 = vsel %vm836, %v870, %v968
        %v1012 = vsel %vm836, %v898, %v970
        %v1013 = vsel %vm836, %v926, %v972
        %v1014 = vsel %vm836, %v954, %v974
        %v1015 = vsel %vm841, %v1011, %v984
        %v1016 = vsel %vm841, %v1012, %v986
        %v1017 = vsel %vm841, %v1013, %v988
        %v1018 = vsel %vm841, %v1014, %v990
        %v1019 = vsel %vm846, %v1015, %v1000
        %v1020 = vsel %vm846, %v1016, %v1002
        %v1021 = vsel %vm846, %v1017, %v1004
        %v1022 = vsel %vm846, %v1018, %v1006
        %s1023 = scalar_lea.vmem %s170, 32
        %v1024 = vld [vmem:[%s1023] sm:$0xf]
        %v1025 = vld [vmem:[%s1023 + $0x4] sm:$0xf]
        %v1026 = vld [vmem:[%s1023 + $0x8] sm:$0xf]
        %v1027 = vld [vmem:[%s1023 + $0xc] sm:$0xf]
        %s1028 = scalar_lea.vmem %s170, 48
        %v1029 = vld [vmem:[%s1028] sm:$0xf]
        %v1030 = vld [vmem:[%s1028 + $0x4] sm:$0xf]
        %v1031 = vld [vmem:[%s1028 + $0x8] sm:$0xf]
        %v1032 = vld [vmem:[%s1028 + $0xc] sm:$0xf]
        %v1033 = vperm.slane %v1024, 0
        %v1034 = vlaneseq
        %v1035 = vshrl.u32 %v1034, 7
        %1037 = vset.pattern.permute.xlu0 %v1035
        %1038 = vperm.xlu0 %1037, %v1033
        %v1039 = vpop.permute.xlu0 %1038
        %v1040 = vperm.slane %v1024, 1
        %v1041 = vlaneseq
        %v1042 = vshrl.u32 %v1041, 7
        %1044 = vset.pattern.permute.xlu0 %v1042
        %1045 = vperm.xlu0 %1044, %v1040
        %v1046 = vpop.permute.xlu0 %1045
        %v1047 = vperm.slane %v1024, 2
        %v1048 = vlaneseq
        %v1049 = vshrl.u32 %v1048, 7
        %1051 = vset.pattern.permute.xlu0 %v1049
        %1052 = vperm.xlu0 %1051, %v1047
        %v1053 = vpop.permute.xlu0 %1052
        %v1054 = vperm.slane %v1024, 3
        %v1055 = vlaneseq
        %v1056 = vshrl.u32 %v1055, 7
        %1058 = vset.pattern.permute.xlu0 %v1056
        %1059 = vperm.xlu0 %1058, %v1054
        %v1060 = vpop.permute.xlu0 %1059
        %v1061 = vperm.slane %v1025, 0
        %v1062 = vlaneseq
        %v1063 = vshrl.u32 %v1062, 7
        %1065 = vset.pattern.permute.xlu0 %v1063
        %1066 = vperm.xlu0 %1065, %v1061
        %v1067 = vpop.permute.xlu0 %1066
        %v1068 = vperm.slane %v1025, 1
        %v1069 = vlaneseq
        %v1070 = vshrl.u32 %v1069, 7
        %1072 = vset.pattern.permute.xlu0 %v1070
        %1073 = vperm.xlu0 %1072, %v1068
        %v1074 = vpop.permute.xlu0 %1073
        %v1075 = vperm.slane %v1025, 2
        %v1076 = vlaneseq
        %v1077 = vshrl.u32 %v1076, 7
        %1079 = vset.pattern.permute.xlu0 %v1077
        %1080 = vperm.xlu0 %1079, %v1075
        %v1081 = vpop.permute.xlu0 %1080
        %v1082 = vperm.slane %v1025, 3
        %v1083 = vlaneseq
        %v1084 = vshrl.u32 %v1083, 7
        %1086 = vset.pattern.permute.xlu0 %v1084
        %1087 = vperm.xlu0 %1086, %v1082
        %v1088 = vpop.permute.xlu0 %1087
        %v1089 = vperm.slane %v1026, 0
        %v1090 = vlaneseq
        %v1091 = vshrl.u32 %v1090, 7
        %1093 = vset.pattern.permute.xlu0 %v1091
        %1094 = vperm.xlu0 %1093, %v1089
        %v1095 = vpop.permute.xlu0 %1094
        %v1096 = vperm.slane %v1026, 1
        %v1097 = vlaneseq
        %v1098 = vshrl.u32 %v1097, 7
        %1100 = vset.pattern.permute.xlu0 %v1098
        %1101 = vperm.xlu0 %1100, %v1096
        %v1102 = vpop.permute.xlu0 %1101
        %v1103 = vperm.slane %v1026, 2
        %v1104 = vlaneseq
        %v1105 = vshrl.u32 %v1104, 7
        %1107 = vset.pattern.permute.xlu0 %v1105
        %1108 = vperm.xlu0 %1107, %v1103
        %v1109 = vpop.permute.xlu0 %1108
        %v1110 = vperm.slane %v1026, 3
        %v1111 = vlaneseq
        %v1112 = vshrl.u32 %v1111, 7
        %1114 = vset.pattern.permute.xlu0 %v1112
        %1115 = vperm.xlu0 %1114, %v1110
        %v1116 = vpop.permute.xlu0 %1115
        %v1117 = vperm.slane %v1027, 0
        %v1118 = vlaneseq
        %v1119 = vshrl.u32 %v1118, 7
        %1121 = vset.pattern.permute.xlu0 %v1119
        %1122 = vperm.xlu0 %1121, %v1117
        %v1123 = vpop.permute.xlu0 %1122
        %v1124 = vperm.slane %v1027, 1
        %v1125 = vlaneseq
        %v1126 = vshrl.u32 %v1125, 7
        %1128 = vset.pattern.permute.xlu0 %v1126
        %1129 = vperm.xlu0 %1128, %v1124
        %v1130 = vpop.permute.xlu0 %1129
        %v1131 = vperm.slane %v1027, 2
        %v1132 = vlaneseq
        %v1133 = vshrl.u32 %v1132, 7
        %1135 = vset.pattern.permute.xlu0 %v1133
        %1136 = vperm.xlu0 %1135, %v1131
        %v1137 = vpop.permute.xlu0 %1136
        %v1138 = vperm.slane %v1027, 3
        %v1139 = vlaneseq
        %v1140 = vshrl.u32 %v1139, 7
        %1142 = vset.pattern.permute.xlu0 %v1140
        %1143 = vperm.xlu0 %1142, %v1138
        %v1144 = vpop.permute.xlu0 %1143
        %v1145 = vperm.slane %v1029, 0
        %v1146 = vlaneseq
        %v1147 = vshrl.u32 %v1146, 7
        %1149 = vset.pattern.permute.xlu0 %v1147
        %1150 = vperm.xlu0 %1149, %v1145
        %v1151 = vpop.permute.xlu0 %1150
        %v1152 = vperm.slane %v1029, 1
        %v1153 = vlaneseq
        %v1154 = vshrl.u32 %v1153, 7
        %1156 = vset.pattern.permute.xlu0 %v1154
        %1157 = vperm.xlu0 %1156, %v1152
        %v1158 = vpop.permute.xlu0 %1157
        %v1159 = vperm.slane %v1029, 2
        %v1160 = vlaneseq
        %v1161 = vshrl.u32 %v1160, 7
        %1163 = vset.pattern.permute.xlu0 %v1161
        %1164 = vperm.xlu0 %1163, %v1159
        %v1165 = vpop.permute.xlu0 %1164
        %v1166 = vperm.slane %v1029, 3
        %v1167 = vlaneseq
        %v1168 = vshrl.u32 %v1167, 7
        %1170 = vset.pattern.permute.xlu0 %v1168
        %1171 = vperm.xlu0 %1170, %v1166
        %v1172 = vpop.permute.xlu0 %1171
        %v1173 = vperm.slane %v1030, 0
        %v1174 = vlaneseq
        %v1175 = vshrl.u32 %v1174, 7
        %1177 = vset.pattern.permute.xlu0 %v1175
        %1178 = vperm.xlu0 %1177, %v1173
        %v1179 = vpop.permute.xlu0 %1178
        %v1180 = vperm.slane %v1030, 1
        %v1181 = vlaneseq
        %v1182 = vshrl.u32 %v1181, 7
        %1184 = vset.pattern.permute.xlu0 %v1182
        %1185 = vperm.xlu0 %1184, %v1180
        %v1186 = vpop.permute.xlu0 %1185
        %v1187 = vperm.slane %v1030, 2
        %v1188 = vlaneseq
        %v1189 = vshrl.u32 %v1188, 7
        %1191 = vset.pattern.permute.xlu0 %v1189
        %1192 = vperm.xlu0 %1191, %v1187
        %v1193 = vpop.permute.xlu0 %1192
        %v1194 = vperm.slane %v1030, 3
        %v1195 = vlaneseq
        %v1196 = vshrl.u32 %v1195, 7
        %1198 = vset.pattern.permute.xlu0 %v1196
        %1199 = vperm.xlu0 %1198, %v1194
        %v1200 = vpop.permute.xlu0 %1199
        %v1201 = vperm.slane %v1031, 0
        %v1202 = vlaneseq
        %v1203 = vshrl.u32 %v1202, 7
        %1205 = vset.pattern.permute.xlu0 %v1203
        %1206 = vperm.xlu0 %1205, %v1201
        %v1207 = vpop.permute.xlu0 %1206
        %v1208 = vperm.slane %v1031, 1
        %v1209 = vlaneseq
        %v1210 = vshrl.u32 %v1209, 7
        %1212 = vset.pattern.permute.xlu0 %v1210
        %1213 = vperm.xlu0 %1212, %v1208
        %v1214 = vpop.permute.xlu0 %1213
        %v1215 = vperm.slane %v1031, 2
        %v1216 = vlaneseq
        %v1217 = vshrl.u32 %v1216, 7
        %1219 = vset.pattern.permute.xlu0 %v1217
        %1220 = vperm.xlu0 %1219, %v1215
        %v1221 = vpop.permute.xlu0 %1220
        %v1222 = vperm.slane %v1031, 3
        %v1223 = vlaneseq
        %v1224 = vshrl.u32 %v1223, 7
        %1226 = vset.pattern.permute.xlu0 %v1224
        %1227 = vperm.xlu0 %1226, %v1222
        %v1228 = vpop.permute.xlu0 %1227
        %v1229 = vperm.slane %v1032, 0
        %v1230 = vlaneseq
        %v1231 = vshrl.u32 %v1230, 7
        %1233 = vset.pattern.permute.xlu0 %v1231
        %1234 = vperm.xlu0 %1233, %v1229
        %v1235 = vpop.permute.xlu0 %1234
        %v1236 = vperm.slane %v1032, 1
        %v1237 = vlaneseq
        %v1238 = vshrl.u32 %v1237, 7
        %1240 = vset.pattern.permute.xlu0 %v1238
        %1241 = vperm.xlu0 %1240, %v1236
        %v1242 = vpop.permute.xlu0 %1241
        %v1243 = vperm.slane %v1032, 2
        %v1244 = vlaneseq
        %v1245 = vshrl.u32 %v1244, 7
        %1247 = vset.pattern.permute.xlu0 %v1245
        %1248 = vperm.xlu0 %1247, %v1243
        %v1249 = vpop.permute.xlu0 %1248
        %v1250 = vperm.slane %v1032, 3
        %v1251 = vlaneseq
        %v1252 = vshrl.u32 %v1251, 7
        %1254 = vset.pattern.permute.xlu0 %v1252
        %1255 = vperm.xlu0 %1254, %v1250
        %v1256 = vpop.permute.xlu0 %1255
        %v1257 = vsel %vm408, %v1039, %v1151
        %v1258 = vsel %vm408, %v1046, %v1158
        %v1259 = vsel %vm408, %v1053, %v1165
        %v1260 = vsel %vm408, %v1060, %v1172
        %v1261 = vsel %vm408, %v1067, %v1179
        %v1262 = vsel %vm408, %v1074, %v1186
        %v1263 = vsel %vm408, %v1081, %v1193
        %v1264 = vsel %vm408, %v1088, %v1200
        %v1265 = vsel %vm408, %v1095, %v1207
        %v1266 = vsel %vm408, %v1102, %v1214
        %v1267 = vsel %vm408, %v1109, %v1221
        %v1268 = vsel %vm408, %v1116, %v1228
        %v1269 = vsel %vm408, %v1123, %v1235
        %v1270 = vsel %vm408, %v1130, %v1242
        %v1271 = vsel %vm408, %v1137, %v1249
        %v1272 = vsel %vm408, %v1144, %v1256
        %s1273 = scalar_lea.vmem %s170, 96
        %v1274 = vld [vmem:[%s1273] sm:$0xf]
        %v1275 = vld [vmem:[%s1273 + $0x4] sm:$0xf]
        %v1276 = vld [vmem:[%s1273 + $0x8] sm:$0xf]
        %v1277 = vld [vmem:[%s1273 + $0xc] sm:$0xf]
        %s1278 = scalar_lea.vmem %s170, 112
        %v1279 = vld [vmem:[%s1278] sm:$0xf]
        %v1280 = vld [vmem:[%s1278 + $0x4] sm:$0xf]
        %v1281 = vld [vmem:[%s1278 + $0x8] sm:$0xf]
        %v1282 = vld [vmem:[%s1278 + $0xc] sm:$0xf]
        %v1283 = vperm.slane %v1274, 0
        %v1284 = vlaneseq
        %v1285 = vshrl.u32 %v1284, 7
        %1287 = vset.pattern.permute.xlu0 %v1285
        %1288 = vperm.xlu0 %1287, %v1283
        %v1289 = vpop.permute.xlu0 %1288
        %v1290 = vperm.slane %v1274, 1
        %v1291 = vlaneseq
        %v1292 = vshrl.u32 %v1291, 7
        %1294 = vset.pattern.permute.xlu0 %v1292
        %1295 = vperm.xlu0 %1294, %v1290
        %v1296 = vpop.permute.xlu0 %1295
        %v1297 = vperm.slane %v1274, 2
        %v1298 = vlaneseq
        %v1299 = vshrl.u32 %v1298, 7
        %1301 = vset.pattern.permute.xlu0 %v1299
        %1302 = vperm.xlu0 %1301, %v1297
        %v1303 = vpop.permute.xlu0 %1302
        %v1304 = vperm.slane %v1274, 3
        %v1305 = vlaneseq
        %v1306 = vshrl.u32 %v1305, 7
        %1308 = vset.pattern.permute.xlu0 %v1306
        %1309 = vperm.xlu0 %1308, %v1304
        %v1310 = vpop.permute.xlu0 %1309
        %v1311 = vperm.slane %v1275, 0
        %v1312 = vlaneseq
        %v1313 = vshrl.u32 %v1312, 7
        %1315 = vset.pattern.permute.xlu0 %v1313
        %1316 = vperm.xlu0 %1315, %v1311
        %v1317 = vpop.permute.xlu0 %1316
        %v1318 = vperm.slane %v1275, 1
        %v1319 = vlaneseq
        %v1320 = vshrl.u32 %v1319, 7
        %1322 = vset.pattern.permute.xlu0 %v1320
        %1323 = vperm.xlu0 %1322, %v1318
        %v1324 = vpop.permute.xlu0 %1323
        %v1325 = vperm.slane %v1275, 2
        %v1326 = vlaneseq
        %v1327 = vshrl.u32 %v1326, 7
        %1329 = vset.pattern.permute.xlu0 %v1327
        %1330 = vperm.xlu0 %1329, %v1325
        %v1331 = vpop.permute.xlu0 %1330
        %v1332 = vperm.slane %v1275, 3
        %v1333 = vlaneseq
        %v1334 = vshrl.u32 %v1333, 7
        %1336 = vset.pattern.permute.xlu0 %v1334
        %1337 = vperm.xlu0 %1336, %v1332
        %v1338 = vpop.permute.xlu0 %1337
        %v1339 = vperm.slane %v1276, 0
        %v1340 = vlaneseq
        %v1341 = vshrl.u32 %v1340, 7
        %1343 = vset.pattern.permute.xlu0 %v1341
        %1344 = vperm.xlu0 %1343, %v1339
        %v1345 = vpop.permute.xlu0 %1344
        %v1346 = vperm.slane %v1276, 1
        %v1347 = vlaneseq
        %v1348 = vshrl.u32 %v1347, 7
        %1350 = vset.pattern.permute.xlu0 %v1348
        %1351 = vperm.xlu0 %1350, %v1346
        %v1352 = vpop.permute.xlu0 %1351
        %v1353 = vperm.slane %v1276, 2
        %v1354 = vlaneseq
        %v1355 = vshrl.u32 %v1354, 7
        %1357 = vset.pattern.permute.xlu0 %v1355
        %1358 = vperm.xlu0 %1357, %v1353
        %v1359 = vpop.permute.xlu0 %1358
        %v1360 = vperm.slane %v1276, 3
        %v1361 = vlaneseq
        %v1362 = vshrl.u32 %v1361, 7
        %1364 = vset.pattern.permute.xlu0 %v1362
        %1365 = vperm.xlu0 %1364, %v1360
        %v1366 = vpop.permute.xlu0 %1365
        %v1367 = vperm.slane %v1277, 0
        %v1368 = vlaneseq
        %v1369 = vshrl.u32 %v1368, 7
        %1371 = vset.pattern.permute.xlu0 %v1369
        %1372 = vperm.xlu0 %1371, %v1367
        %v1373 = vpop.permute.xlu0 %1372
        %v1374 = vperm.slane %v1277, 1
        %v1375 = vlaneseq
        %v1376 = vshrl.u32 %v1375, 7
        %1378 = vset.pattern.permute.xlu0 %v1376
        %1379 = vperm.xlu0 %1378, %v1374
        %v1380 = vpop.permute.xlu0 %1379
        %v1381 = vperm.slane %v1277, 2
        %v1382 = vlaneseq
        %v1383 = vshrl.u32 %v1382, 7
        %1385 = vset.pattern.permute.xlu0 %v1383
        %1386 = vperm.xlu0 %1385, %v1381
        %v1387 = vpop.permute.xlu0 %1386
        %v1388 = vperm.slane %v1277, 3
        %v1389 = vlaneseq
        %v1390 = vshrl.u32 %v1389, 7
        %1392 = vset.pattern.permute.xlu0 %v1390
        %1393 = vperm.xlu0 %1392, %v1388
        %v1394 = vpop.permute.xlu0 %1393
        %v1395 = vperm.slane %v1279, 0
        %v1396 = vlaneseq
        %v1397 = vshrl.u32 %v1396, 7
        %1399 = vset.pattern.permute.xlu0 %v1397
        %1400 = vperm.xlu0 %1399, %v1395
        %v1401 = vpop.permute.xlu0 %1400
        %v1402 = vperm.slane %v1279, 1
        %v1403 = vlaneseq
        %v1404 = vshrl.u32 %v1403, 7
        %1406 = vset.pattern.permute.xlu0 %v1404
        %1407 = vperm.xlu0 %1406, %v1402
        %v1408 = vpop.permute.xlu0 %1407
        %v1409 = vperm.slane %v1279, 2
        %v1410 = vlaneseq
        %v1411 = vshrl.u32 %v1410, 7
        %1413 = vset.pattern.permute.xlu0 %v1411
        %1414 = vperm.xlu0 %1413, %v1409
        %v1415 = vpop.permute.xlu0 %1414
        %v1416 = vperm.slane %v1279, 3
        %v1417 = vlaneseq
        %v1418 = vshrl.u32 %v1417, 7
        %1420 = vset.pattern.permute.xlu0 %v1418
        %1421 = vperm.xlu0 %1420, %v1416
        %v1422 = vpop.permute.xlu0 %1421
        %v1423 = vperm.slane %v1280, 0
        %v1424 = vlaneseq
        %v1425 = vshrl.u32 %v1424, 7
        %1427 = vset.pattern.permute.xlu0 %v1425
        %1428 = vperm.xlu0 %1427, %v1423
        %v1429 = vpop.permute.xlu0 %1428
        %v1430 = vperm.slane %v1280, 1
        %v1431 = vlaneseq
        %v1432 = vshrl.u32 %v1431, 7
        %1434 = vset.pattern.permute.xlu0 %v1432
        %1435 = vperm.xlu0 %1434, %v1430
        %v1436 = vpop.permute.xlu0 %1435
        %v1437 = vperm.slane %v1280, 2
        %v1438 = vlaneseq
        %v1439 = vshrl.u32 %v1438, 7
        %1441 = vset.pattern.permute.xlu0 %v1439
        %1442 = vperm.xlu0 %1441, %v1437
        %v1443 = vpop.permute.xlu0 %1442
        %v1444 = vperm.slane %v1280, 3
        %v1445 = vlaneseq
        %v1446 = vshrl.u32 %v1445, 7
        %1448 = vset.pattern.permute.xlu0 %v1446
        %1449 = vperm.xlu0 %1448, %v1444
        %v1450 = vpop.permute.xlu0 %1449
        %v1451 = vperm.slane %v1281, 0
        %v1452 = vlaneseq
        %v1453 = vshrl.u32 %v1452, 7
        %1455 = vset.pattern.permute.xlu0 %v1453
        %1456 = vperm.xlu0 %1455, %v1451
        %v1457 = vpop.permute.xlu0 %1456
        %v1458 = vperm.slane %v1281, 1
        %v1459 = vlaneseq
        %v1460 = vshrl.u32 %v1459, 7
        %1462 = vset.pattern.permute.xlu0 %v1460
        %1463 = vperm.xlu0 %1462, %v1458
        %v1464 = vpop.permute.xlu0 %1463
        %v1465 = vperm.slane %v1281, 2
        %v1466 = vlaneseq
        %v1467 = vshrl.u32 %v1466, 7
        %1469 = vset.pattern.permute.xlu0 %v1467
        %1470 = vperm.xlu0 %1469, %v1465
        %v1471 = vpop.permute.xlu0 %1470
        %v1472 = vperm.slane %v1281, 3
        %v1473 = vlaneseq
        %v1474 = vshrl.u32 %v1473, 7
        %1476 = vset.pattern.permute.xlu0 %v1474
        %1477 = vperm.xlu0 %1476, %v1472
        %v1478 = vpop.permute.xlu0 %1477
        %v1479 = vperm.slane %v1282, 0
        %v1480 = vlaneseq
        %v1481 = vshrl.u32 %v1480, 7
        %1483 = vset.pattern.permute.xlu0 %v1481
        %1484 = vperm.xlu0 %1483, %v1479
        %v1485 = vpop.permute.xlu0 %1484
        %v1486 = vperm.slane %v1282, 1
        %v1487 = vlaneseq
        %v1488 = vshrl.u32 %v1487, 7
        %1490 = vset.pattern.permute.xlu0 %v1488
        %1491 = vperm.xlu0 %1490, %v1486
        %v1492 = vpop.permute.xlu0 %1491
        %v1493 = vperm.slane %v1282, 2
        %v1494 = vlaneseq
        %v1495 = vshrl.u32 %v1494, 7
        %1497 = vset.pattern.permute.xlu0 %v1495
        %1498 = vperm.xlu0 %1497, %v1493
        %v1499 = vpop.permute.xlu0 %1498
        %v1500 = vperm.slane %v1282, 3
        %v1501 = vlaneseq
        %v1502 = vshrl.u32 %v1501, 7
        %1504 = vset.pattern.permute.xlu0 %v1502
        %1505 = vperm.xlu0 %1504, %v1500
        %v1506 = vpop.permute.xlu0 %1505
        %v1507 = vsel %vm408, %v1289, %v1401
        %v1508 = vsel %vm408, %v1296, %v1408
        %v1509 = vsel %vm408, %v1303, %v1415
        %v1510 = vsel %vm408, %v1310, %v1422
        %v1511 = vsel %vm408, %v1317, %v1429
        %v1512 = vsel %vm408, %v1324, %v1436
        %v1513 = vsel %vm408, %v1331, %v1443
        %v1514 = vsel %vm408, %v1338, %v1450
        %v1515 = vsel %vm408, %v1345, %v1457
        %v1516 = vsel %vm408, %v1352, %v1464
        %v1517 = vsel %vm408, %v1359, %v1471
        %v1518 = vsel %vm408, %v1366, %v1478
        %v1519 = vsel %vm408, %v1373, %v1485
        %v1520 = vsel %vm408, %v1380, %v1492
        %v1521 = vsel %vm408, %v1387, %v1499
        %v1522 = vsel %vm408, %v1394, %v1506
        %v1523 = vrot.slane %v1259, 4
        %v1524 = vsel %vm676, %v1523, %v1257
        %v1526 = vunpack.c.l.s4 1983009808
        %v1527 = vunpack.c.0.s8 %v1526
        %v1528 = vperm.slane %v1524, %v1527
        %v1529 = vrot.slane %v1260, 4
        %v1530 = vsel %vm676, %v1529, %v1258
        %v1532 = vunpack.c.l.s4 1983009808
        %v1533 = vunpack.c.0.s8 %v1532
        %v1534 = vperm.slane %v1530, %v1533
        %v1535 = vrot.slane %v1534, 4
        %v1536 = vsel %vm676, %v1535, %v1528
        %v1537 = vrot.slane %v1528, 4
        %v1538 = vsel %vm676, %v1534, %v1537
        %v1540 = vunpack.c.l.s4 1934713408
        %v1541 = vunpack.c.0.s8 %v1540
        %v1542 = vperm.slane %v1536, %v1541
        %v1544 = vunpack.c.l.s4 1934713408
        %v1545 = vunpack.c.0.s8 %v1544
        %v1546 = vperm.slane %v1538, %v1545
        %v1547 = vrot.slane %v1542, 4
        %v1548 = vsel %vm676, 0.0, %v1547
        %v1549 = vrot.slane %v1546, 4
        %v1550 = vsel %vm676, 0.0, %v1549
        %v1551 = vrot.slane %v1263, 4
        %v1552 = vsel %vm676, %v1551, %v1261
        %v1554 = vunpack.c.l.s4 1983009808
        %v1555 = vunpack.c.0.s8 %v1554
        %v1556 = vperm.slane %v1552, %v1555
        %v1557 = vrot.slane %v1264, 4
        %v1558 = vsel %vm676, %v1557, %v1262
        %v1560 = vunpack.c.l.s4 1983009808
        %v1561 = vunpack.c.0.s8 %v1560
        %v1562 = vperm.slane %v1558, %v1561
        %v1563 = vrot.slane %v1562, 4
        %v1564 = vsel %vm676, %v1563, %v1556
        %v1565 = vrot.slane %v1556, 4
        %v1566 = vsel %vm676, %v1562, %v1565
        %v1568 = vunpack.c.l.s4 1934713408
        %v1569 = vunpack.c.0.s8 %v1568
        %v1570 = vperm.slane %v1564, %v1569
        %v1572 = vunpack.c.l.s4 1934713408
        %v1573 = vunpack.c.0.s8 %v1572
        %v1574 = vperm.slane %v1566, %v1573
        %v1575 = vrot.slane %v1570, 4
        %v1576 = vsel %vm676, 0.0, %v1575
        %v1577 = vrot.slane %v1574, 4
        %v1578 = vsel %vm676, 0.0, %v1577
        %v1579 = vrot.slane %v1267, 4
        %v1580 = vsel %vm676, %v1579, %v1265
        %v1582 = vunpack.c.l.s4 1983009808
        %v1583 = vunpack.c.0.s8 %v1582
        %v1584 = vperm.slane %v1580, %v1583
        %v1585 = vrot.slane %v1268, 4
        %v1586 = vsel %vm676, %v1585, %v1266
        %v1588 = vunpack.c.l.s4 1983009808
        %v1589 = vunpack.c.0.s8 %v1588
        %v1590 = vperm.slane %v1586, %v1589
        %v1591 = vrot.slane %v1590, 4
        %v1592 = vsel %vm676, %v1591, %v1584
        %v1593 = vrot.slane %v1584, 4
        %v1594 = vsel %vm676, %v1590, %v1593
        %v1596 = vunpack.c.l.s4 1934713408
        %v1597 = vunpack.c.0.s8 %v1596
        %v1598 = vperm.slane %v1592, %v1597
        %v1600 = vunpack.c.l.s4 1934713408
        %v1601 = vunpack.c.0.s8 %v1600
        %v1602 = vperm.slane %v1594, %v1601
        %v1603 = vrot.slane %v1598, 4
        %v1604 = vsel %vm676, 0.0, %v1603
        %v1605 = vrot.slane %v1602, 4
        %v1606 = vsel %vm676, 0.0, %v1605
        %v1607 = vrot.slane %v1271, 4
        %v1608 = vsel %vm676, %v1607, %v1269
        %v1610 = vunpack.c.l.s4 1983009808
        %v1611 = vunpack.c.0.s8 %v1610
        %v1612 = vperm.slane %v1608, %v1611
        %v1613 = vrot.slane %v1272, 4
        %v1614 = vsel %vm676, %v1613, %v1270
        %v1616 = vunpack.c.l.s4 1983009808
        %v1617 = vunpack.c.0.s8 %v1616
        %v1618 = vperm.slane %v1614, %v1617
        %v1619 = vrot.slane %v1618, 4
        %v1620 = vsel %vm676, %v1619, %v1612
        %v1621 = vrot.slane %v1612, 4
        %v1622 = vsel %vm676, %v1618, %v1621
        %v1624 = vunpack.c.l.s4 1934713408
        %v1625 = vunpack.c.0.s8 %v1624
        %v1626 = vperm.slane %v1620, %v1625
        %v1628 = vunpack.c.l.s4 1934713408
        %v1629 = vunpack.c.0.s8 %v1628
        %v1630 = vperm.slane %v1622, %v1629
        %v1631 = vrot.slane %v1626, 4
        %v1632 = vsel %vm676, 0.0, %v1631
        %v1633 = vrot.slane %v1630, 4
        %v1634 = vsel %vm676, 0.0, %v1633
        %1639 = vrot.lane.b32.xlu0 %v1548, 2
        %v1640 = vpop.permute.xlu0 %1639
        %1641 = vrot.lane.b32.xlu0 %v1576, 2
        %v1642 = vpop.permute.xlu0 %1641
        %1643 = vrot.lane.b32.xlu0 %v1604, 2
        %v1644 = vpop.permute.xlu0 %1643
        %1645 = vrot.lane.b32.xlu0 %v1632, 2
        %v1646 = vpop.permute.xlu0 %1645
        %1655 = vrot.lane.b32.xlu0 %v1546, 4
        %v1656 = vpop.permute.xlu0 %1655
        %1657 = vrot.lane.b32.xlu0 %v1574, 4
        %v1658 = vpop.permute.xlu0 %1657
        %1659 = vrot.lane.b32.xlu0 %v1602, 4
        %v1660 = vpop.permute.xlu0 %1659
        %1661 = vrot.lane.b32.xlu0 %v1630, 4
        %v1662 = vpop.permute.xlu0 %1661
        %1671 = vrot.lane.b32.xlu0 %v1550, 6
        %v1672 = vpop.permute.xlu0 %1671
        %1673 = vrot.lane.b32.xlu0 %v1578, 6
        %v1674 = vpop.permute.xlu0 %1673
        %1675 = vrot.lane.b32.xlu0 %v1606, 6
        %v1676 = vpop.permute.xlu0 %1675
        %1677 = vrot.lane.b32.xlu0 %v1634, 6
        %v1678 = vpop.permute.xlu0 %1677
        %v1683 = vsel %vm836, %v1542, %v1640
        %v1684 = vsel %vm836, %v1570, %v1642
        %v1685 = vsel %vm836, %v1598, %v1644
        %v1686 = vsel %vm836, %v1626, %v1646
        %v1687 = vsel %vm841, %v1683, %v1656
        %v1688 = vsel %vm841, %v1684, %v1658
        %v1689 = vsel %vm841, %v1685, %v1660
        %v1690 = vsel %vm841, %v1686, %v1662
        %v1691 = vsel %vm846, %v1687, %v1672
        %v1692 = vsel %vm846, %v1688, %v1674
        %v1693 = vsel %vm846, %v1689, %v1676
        %v1694 = vsel %vm846, %v1690, %v1678
        %v1695 = vrot.slane %v1509, 4
        %v1696 = vsel %vm676, %v1695, %v1507
        %v1698 = vunpack.c.l.s4 1983009808
        %v1699 = vunpack.c.0.s8 %v1698
        %v1700 = vperm.slane %v1696, %v1699
        %v1701 = vrot.slane %v1510, 4
        %v1702 = vsel %vm676, %v1701, %v1508
        %v1704 = vunpack.c.l.s4 1983009808
        %v1705 = vunpack.c.0.s8 %v1704
        %v1706 = vperm.slane %v1702, %v1705
        %v1707 = vrot.slane %v1706, 4
        %v1708 = vsel %vm676, %v1707, %v1700
        %v1709 = vrot.slane %v1700, 4
        %v1710 = vsel %vm676, %v1706, %v1709
        %v1712 = vunpack.c.l.s4 1934713408
        %v1713 = vunpack.c.0.s8 %v1712
        %v1714 = vperm.slane %v1708, %v1713
        %v1716 = vunpack.c.l.s4 1934713408
        %v1717 = vunpack.c.0.s8 %v1716
        %v1718 = vperm.slane %v1710, %v1717
        %v1719 = vrot.slane %v1714, 4
        %v1720 = vsel %vm676, 0.0, %v1719
        %v1721 = vrot.slane %v1718, 4
        %v1722 = vsel %vm676, 0.0, %v1721
        %v1723 = vrot.slane %v1513, 4
        %v1724 = vsel %vm676, %v1723, %v1511
        %v1726 = vunpack.c.l.s4 1983009808
        %v1727 = vunpack.c.0.s8 %v1726
        %v1728 = vperm.slane %v1724, %v1727
        %v1729 = vrot.slane %v1514, 4
        %v1730 = vsel %vm676, %v1729, %v1512
        %v1732 = vunpack.c.l.s4 1983009808
        %v1733 = vunpack.c.0.s8 %v1732
        %v1734 = vperm.slane %v1730, %v1733
        %v1735 = vrot.slane %v1734, 4
        %v1736 = vsel %vm676, %v1735, %v1728
        %v1737 = vrot.slane %v1728, 4
        %v1738 = vsel %vm676, %v1734, %v1737
        %v1740 = vunpack.c.l.s4 1934713408
        %v1741 = vunpack.c.0.s8 %v1740
        %v1742 = vperm.slane %v1736, %v1741
        %v1744 = vunpack.c.l.s4 1934713408
        %v1745 = vunpack.c.0.s8 %v1744
        %v1746 = vperm.slane %v1738, %v1745
        %v1747 = vrot.slane %v1742, 4
        %v1748 = vsel %vm676, 0.0, %v1747
        %v1749 = vrot.slane %v1746, 4
        %v1750 = vsel %vm676, 0.0, %v1749
        %v1751 = vrot.slane %v1517, 4
        %v1752 = vsel %vm676, %v1751, %v1515
        %v1754 = vunpack.c.l.s4 1983009808
        %v1755 = vunpack.c.0.s8 %v1754
        %v1756 = vperm.slane %v1752, %v1755
        %v1757 = vrot.slane %v1518, 4
        %v1758 = vsel %vm676, %v1757, %v1516
        %v1760 = vunpack.c.l.s4 1983009808
        %v1761 = vunpack.c.0.s8 %v1760
        %v1762 = vperm.slane %v1758, %v1761
        %v1763 = vrot.slane %v1762, 4
        %v1764 = vsel %vm676, %v1763, %v1756
        %v1765 = vrot.slane %v1756, 4
        %v1766 = vsel %vm676, %v1762, %v1765
        %v1768 = vunpack.c.l.s4 1934713408
        %v1769 = vunpack.c.0.s8 %v1768
        %v1770 = vperm.slane %v1764, %v1769
        %v1772 = vunpack.c.l.s4 1934713408
        %v1773 = vunpack.c.0.s8 %v1772
        %v1774 = vperm.slane %v1766, %v1773
        %v1775 = vrot.slane %v1770, 4
        %v1776 = vsel %vm676, 0.0, %v1775
        %v1777 = vrot.slane %v1774, 4
        %v1778 = vsel %vm676, 0.0, %v1777
        %v1779 = vrot.slane %v1521, 4
        %v1780 = vsel %vm676, %v1779, %v1519
        %v1782 = vunpack.c.l.s4 1983009808
        %v1783 = vunpack.c.0.s8 %v1782
        %v1784 = vperm.slane %v1780, %v1783
        %v1785 = vrot.slane %v1522, 4
        %v1786 = vsel %vm676, %v1785, %v1520
        %v1788 = vunpack.c.l.s4 1983009808
        %v1789 = vunpack.c.0.s8 %v1788
        %v1790 = vperm.slane %v1786, %v1789
        %v1791 = vrot.slane %v1790, 4
        %v1792 = vsel %vm676, %v1791, %v1784
        %v1793 = vrot.slane %v1784, 4
        %v1794 = vsel %vm676, %v1790, %v1793
        %v1796 = vunpack.c.l.s4 1934713408
        %v1797 = vunpack.c.0.s8 %v1796
        %v1798 = vperm.slane %v1792, %v1797
        %v1800 = vunpack.c.l.s4 1934713408
        %v1801 = vunpack.c.0.s8 %v1800
        %v1802 = vperm.slane %v1794, %v1801
        %v1803 = vrot.slane %v1798, 4
        %v1804 = vsel %vm676, 0.0, %v1803
        %v1805 = vrot.slane %v1802, 4
        %v1806 = vsel %vm676, 0.0, %v1805
        %1811 = vrot.lane.b32.xlu0 %v1720, 2
        %v1812 = vpop.permute.xlu0 %1811
        %1813 = vrot.lane.b32.xlu0 %v1748, 2
        %v1814 = vpop.permute.xlu0 %1813
        %1815 = vrot.lane.b32.xlu0 %v1776, 2
        %v1816 = vpop.permute.xlu0 %1815
        %1817 = vrot.lane.b32.xlu0 %v1804, 2
        %v1818 = vpop.permute.xlu0 %1817
        %1827 = vrot.lane.b32.xlu0 %v1718, 4
        %v1828 = vpop.permute.xlu0 %1827
        %1829 = vrot.lane.b32.xlu0 %v1746, 4
        %v1830 = vpop.permute.xlu0 %1829
        %1831 = vrot.lane.b32.xlu0 %v1774, 4
        %v1832 = vpop.permute.xlu0 %1831
        %1833 = vrot.lane.b32.xlu0 %v1802, 4
        %v1834 = vpop.permute.xlu0 %1833
        %1843 = vrot.lane.b32.xlu0 %v1722, 6
        %v1844 = vpop.permute.xlu0 %1843
        %1845 = vrot.lane.b32.xlu0 %v1750, 6
        %v1846 = vpop.permute.xlu0 %1845
        %1847 = vrot.lane.b32.xlu0 %v1778, 6
        %v1848 = vpop.permute.xlu0 %1847
        %1849 = vrot.lane.b32.xlu0 %v1806, 6
        %v1850 = vpop.permute.xlu0 %1849
        %v1855 = vsel %vm836, %v1714, %v1812
        %v1856 = vsel %vm836, %v1742, %v1814
        %v1857 = vsel %vm836, %v1770, %v1816
        %v1858 = vsel %vm836, %v1798, %v1818
        %v1859 = vsel %vm841, %v1855, %v1828
        %v1860 = vsel %vm841, %v1856, %v1830
        %v1861 = vsel %vm841, %v1857, %v1832
        %v1862 = vsel %vm841, %v1858, %v1834
        %v1863 = vsel %vm846, %v1859, %v1844
        %v1864 = vsel %vm846, %v1860, %v1846
        %v1865 = vsel %vm846, %v1861, %v1848
        %v1866 = vsel %vm846, %v1862, %v1850
        %vm1867 = vcmask 60416
        %1868 = vst.msk [vmem:[%s156] sm:$0xf] %vm1867, %v847
        %1869 = vst.msk [vmem:[%s156 + $0x4] sm:$0xf] %vm1867, %v1019
        %1870 = vst.msk [vmem:[%s156 + $0x8] sm:$0xf] %vm1867, %v848
        %1871 = vst.msk [vmem:[%s156 + $0xc] sm:$0xf] %vm1867, %v1020
        %1872 = vst.msk [vmem:[%s156 + $0x10] sm:$0xf] %vm1867, %v849
        %1873 = vst.msk [vmem:[%s156 + $0x14] sm:$0xf] %vm1867, %v1021
        %1874 = vst.msk [vmem:[%s156 + $0x18] sm:$0xf] %vm1867, %v850
        %1875 = vst.msk [vmem:[%s156 + $0x1c] sm:$0xf] %vm1867, %v1022
        %1884 = vrot.lane.b32.xlu0 %v1691, 8
        %v1885 = vpop.permute.xlu0 %1884
        %1886 = vrot.lane.b32.xlu0 %v1863, 8
        %v1887 = vpop.permute.xlu0 %1886
        %1888 = vrot.lane.b32.xlu0 %v1692, 8
        %v1889 = vpop.permute.xlu0 %1888
        %1890 = vrot.lane.b32.xlu0 %v1864, 8
        %v1891 = vpop.permute.xlu0 %1890
        %1892 = vrot.lane.b32.xlu0 %v1693, 8
        %v1893 = vpop.permute.xlu0 %1892
        %1894 = vrot.lane.b32.xlu0 %v1865, 8
        %v1895 = vpop.permute.xlu0 %1894
        %1896 = vrot.lane.b32.xlu0 %v1694, 8
        %v1897 = vpop.permute.xlu0 %1896
        %1898 = vrot.lane.b32.xlu0 %v1866, 8
        %v1899 = vpop.permute.xlu0 %1898
        %vm1908 = vcmask 126016
        %1909 = vst.msk [vmem:[%s156] sm:$0xf] %vm1908, %v1885
        %1910 = vst.msk [vmem:[%s156 + $0x4] sm:$0xf] %vm1908, %v1887
        %1911 = vst.msk [vmem:[%s156 + $0x8] sm:$0xf] %vm1908, %v1889
        %1912 = vst.msk [vmem:[%s156 + $0xc] sm:$0xf] %vm1908, %v1891
        %1913 = vst.msk [vmem:[%s156 + $0x10] sm:$0xf] %vm1908, %v1893
        %1914 = vst.msk [vmem:[%s156 + $0x14] sm:$0xf] %vm1908, %v1895
        %1915 = vst.msk [vmem:[%s156 + $0x18] sm:$0xf] %vm1908, %v1897
        %1916 = vst.msk [vmem:[%s156 + $0x1c] sm:$0xf] %vm1908, %v1899
        %s1917 = scalar_lea.vmem %s170, 128
        %v1918 = vld [vmem:[%s1917] sm:$0xf]
        %v1919 = vld [vmem:[%s1917 + $0x4] sm:$0xf]
        %v1920 = vld [vmem:[%s1917 + $0x8] sm:$0xf]
        %v1921 = vld [vmem:[%s1917 + $0xc] sm:$0xf]
        %s1922 = scalar_lea.vmem %s170, 144
        %v1923 = vld [vmem:[%s1922] sm:$0xf]
        %v1924 = vld [vmem:[%s1922 + $0x4] sm:$0xf]
        %v1925 = vld [vmem:[%s1922 + $0x8] sm:$0xf]
        %v1926 = vld [vmem:[%s1922 + $0xc] sm:$0xf]
        %v1927 = vperm.slane %v1918, 0
        %v1928 = vlaneseq
        %v1929 = vshrl.u32 %v1928, 7
        %1931 = vset.pattern.permute.xlu0 %v1929
        %1932 = vperm.xlu0 %1931, %v1927
        %v1933 = vpop.permute.xlu0 %1932
        %v1934 = vperm.slane %v1918, 1
        %v1935 = vlaneseq
        %v1936 = vshrl.u32 %v1935, 7
        %1938 = vset.pattern.permute.xlu0 %v1936
        %1939 = vperm.xlu0 %1938, %v1934
        %v1940 = vpop.permute.xlu0 %1939
        %v1941 = vperm.slane %v1918, 2
        %v1942 = vlaneseq
        %v1943 = vshrl.u32 %v1942, 7
        %1945 = vset.pattern.permute.xlu0 %v1943
        %1946 = vperm.xlu0 %1945, %v1941
        %v1947 = vpop.permute.xlu0 %1946
        %v1948 = vperm.slane %v1918, 3
        %v1949 = vlaneseq
        %v1950 = vshrl.u32 %v1949, 7
        %1952 = vset.pattern.permute.xlu0 %v1950
        %1953 = vperm.xlu0 %1952, %v1948
        %v1954 = vpop.permute.xlu0 %1953
        %v1955 = vperm.slane %v1919, 0
        %v1956 = vlaneseq
        %v1957 = vshrl.u32 %v1956, 7
        %1959 = vset.pattern.permute.xlu0 %v1957
        %1960 = vperm.xlu0 %1959, %v1955
        %v1961 = vpop.permute.xlu0 %1960
        %v1962 = vperm.slane %v1919, 1
        %v1963 = vlaneseq
        %v1964 = vshrl.u32 %v1963, 7
        %1966 = vset.pattern.permute.xlu0 %v1964
        %1967 = vperm.xlu0 %1966, %v1962
        %v1968 = vpop.permute.xlu0 %1967
        %v1969 = vperm.slane %v1919, 2
        %v1970 = vlaneseq
        %v1971 = vshrl.u32 %v1970, 7
        %1973 = vset.pattern.permute.xlu0 %v1971
        %1974 = vperm.xlu0 %1973, %v1969
        %v1975 = vpop.permute.xlu0 %1974
        %v1976 = vperm.slane %v1919, 3
        %v1977 = vlaneseq
        %v1978 = vshrl.u32 %v1977, 7
        %1980 = vset.pattern.permute.xlu0 %v1978
        %1981 = vperm.xlu0 %1980, %v1976
        %v1982 = vpop.permute.xlu0 %1981
        %v1983 = vperm.slane %v1920, 0
        %v1984 = vlaneseq
        %v1985 = vshrl.u32 %v1984, 7
        %1987 = vset.pattern.permute.xlu0 %v1985
        %1988 = vperm.xlu0 %1987, %v1983
        %v1989 = vpop.permute.xlu0 %1988
        %v1990 = vperm.slane %v1920, 1
        %v1991 = vlaneseq
        %v1992 = vshrl.u32 %v1991, 7
        %1994 = vset.pattern.permute.xlu0 %v1992
        %1995 = vperm.xlu0 %1994, %v1990
        %v1996 = vpop.permute.xlu0 %1995
        %v1997 = vperm.slane %v1920, 2
        %v1998 = vlaneseq
        %v1999 = vshrl.u32 %v1998, 7
        %2001 = vset.pattern.permute.xlu0 %v1999
        %2002 = vperm.xlu0 %2001, %v1997
        %v2003 = vpop.permute.xlu0 %2002
        %v2004 = vperm.slane %v1920, 3
        %v2005 = vlaneseq
        %v2006 = vshrl.u32 %v2005, 7
        %2008 = vset.pattern.permute.xlu0 %v2006
        %2009 = vperm.xlu0 %2008, %v2004
        %v2010 = vpop.permute.xlu0 %2009
        %v2011 = vperm.slane %v1921, 0
        %v2012 = vlaneseq
        %v2013 = vshrl.u32 %v2012, 7
        %2015 = vset.pattern.permute.xlu0 %v2013
        %2016 = vperm.xlu0 %2015, %v2011
        %v2017 = vpop.permute.xlu0 %2016
        %v2018 = vperm.slane %v1921, 1
        %v2019 = vlaneseq
        %v2020 = vshrl.u32 %v2019, 7
        %2022 = vset.pattern.permute.xlu0 %v2020
        %2023 = vperm.xlu0 %2022, %v2018
        %v2024 = vpop.permute.xlu0 %2023
        %v2025 = vperm.slane %v1921, 2
        %v2026 = vlaneseq
        %v2027 = vshrl.u32 %v2026, 7
        %2029 = vset.pattern.permute.xlu0 %v2027
        %2030 = vperm.xlu0 %2029, %v2025
        %v2031 = vpop.permute.xlu0 %2030
        %v2032 = vperm.slane %v1921, 3
        %v2033 = vlaneseq
        %v2034 = vshrl.u32 %v2033, 7
        %2036 = vset.pattern.permute.xlu0 %v2034
        %2037 = vperm.xlu0 %2036, %v2032
        %v2038 = vpop.permute.xlu0 %2037
        %v2039 = vperm.slane %v1923, 0
        %v2040 = vlaneseq
        %v2041 = vshrl.u32 %v2040, 7
        %2043 = vset.pattern.permute.xlu0 %v2041
        %2044 = vperm.xlu0 %2043, %v2039
        %v2045 = vpop.permute.xlu0 %2044
        %v2046 = vperm.slane %v1923, 1
        %v2047 = vlaneseq
        %v2048 = vshrl.u32 %v2047, 7
        %2050 = vset.pattern.permute.xlu0 %v2048
        %2051 = vperm.xlu0 %2050, %v2046
        %v2052 = vpop.permute.xlu0 %2051
        %v2053 = vperm.slane %v1923, 2
        %v2054 = vlaneseq
        %v2055 = vshrl.u32 %v2054, 7
        %2057 = vset.pattern.permute.xlu0 %v2055
        %2058 = vperm.xlu0 %2057, %v2053
        %v2059 = vpop.permute.xlu0 %2058
        %v2060 = vperm.slane %v1923, 3
        %v2061 = vlaneseq
        %v2062 = vshrl.u32 %v2061, 7
        %2064 = vset.pattern.permute.xlu0 %v2062
        %2065 = vperm.xlu0 %2064, %v2060
        %v2066 = vpop.permute.xlu0 %2065
        %v2067 = vperm.slane %v1924, 0
        %v2068 = vlaneseq
        %v2069 = vshrl.u32 %v2068, 7
        %2071 = vset.pattern.permute.xlu0 %v2069
        %2072 = vperm.xlu0 %2071, %v2067
        %v2073 = vpop.permute.xlu0 %2072
        %v2074 = vperm.slane %v1924, 1
        %v2075 = vlaneseq
        %v2076 = vshrl.u32 %v2075, 7
        %2078 = vset.pattern.permute.xlu0 %v2076
        %2079 = vperm.xlu0 %2078, %v2074
        %v2080 = vpop.permute.xlu0 %2079
        %v2081 = vperm.slane %v1924, 2
        %v2082 = vlaneseq
        %v2083 = vshrl.u32 %v2082, 7
        %2085 = vset.pattern.permute.xlu0 %v2083
        %2086 = vperm.xlu0 %2085, %v2081
        %v2087 = vpop.permute.xlu0 %2086
        %v2088 = vperm.slane %v1924, 3
        %v2089 = vlaneseq
        %v2090 = vshrl.u32 %v2089, 7
        %2092 = vset.pattern.permute.xlu0 %v2090
        %2093 = vperm.xlu0 %2092, %v2088
        %v2094 = vpop.permute.xlu0 %2093
        %v2095 = vperm.slane %v1925, 0
        %v2096 = vlaneseq
        %v2097 = vshrl.u32 %v2096, 7
        %2099 = vset.pattern.permute.xlu0 %v2097
        %2100 = vperm.xlu0 %2099, %v2095
        %v2101 = vpop.permute.xlu0 %2100
        %v2102 = vperm.slane %v1925, 1
        %v2103 = vlaneseq
        %v2104 = vshrl.u32 %v2103, 7
        %2106 = vset.pattern.permute.xlu0 %v2104
        %2107 = vperm.xlu0 %2106, %v2102
        %v2108 = vpop.permute.xlu0 %2107
        %v2109 = vperm.slane %v1925, 2
        %v2110 = vlaneseq
        %v2111 = vshrl.u32 %v2110, 7
        %2113 = vset.pattern.permute.xlu0 %v2111
        %2114 = vperm.xlu0 %2113, %v2109
        %v2115 = vpop.permute.xlu0 %2114
        %v2116 = vperm.slane %v1925, 3
        %v2117 = vlaneseq
        %v2118 = vshrl.u32 %v2117, 7
        %2120 = vset.pattern.permute.xlu0 %v2118
        %2121 = vperm.xlu0 %2120, %v2116
        %v2122 = vpop.permute.xlu0 %2121
        %v2123 = vperm.slane %v1926, 0
        %v2124 = vlaneseq
        %v2125 = vshrl.u32 %v2124, 7
        %2127 = vset.pattern.permute.xlu0 %v2125
        %2128 = vperm.xlu0 %2127, %v2123
        %v2129 = vpop.permute.xlu0 %2128
        %v2130 = vperm.slane %v1926, 1
        %v2131 = vlaneseq
        %v2132 = vshrl.u32 %v2131, 7
        %2134 = vset.pattern.permute.xlu0 %v2132
        %2135 = vperm.xlu0 %2134, %v2130
        %v2136 = vpop.permute.xlu0 %2135
        %v2137 = vperm.slane %v1926, 2
        %v2138 = vlaneseq
        %v2139 = vshrl.u32 %v2138, 7
        %2141 = vset.pattern.permute.xlu0 %v2139
        %2142 = vperm.xlu0 %2141, %v2137
        %v2143 = vpop.permute.xlu0 %2142
        %v2144 = vperm.slane %v1926, 3
        %v2145 = vlaneseq
        %v2146 = vshrl.u32 %v2145, 7
        %2148 = vset.pattern.permute.xlu0 %v2146
        %2149 = vperm.xlu0 %2148, %v2144
        %v2150 = vpop.permute.xlu0 %2149
        %v2151 = vsel %vm408, %v1933, %v2045
        %v2152 = vsel %vm408, %v1940, %v2052
        %v2153 = vsel %vm408, %v1947, %v2059
        %v2154 = vsel %vm408, %v1954, %v2066
        %v2155 = vsel %vm408, %v1961, %v2073
        %v2156 = vsel %vm408, %v1968, %v2080
        %v2157 = vsel %vm408, %v1975, %v2087
        %v2158 = vsel %vm408, %v1982, %v2094
        %v2159 = vsel %vm408, %v1989, %v2101
        %v2160 = vsel %vm408, %v1996, %v2108
        %v2161 = vsel %vm408, %v2003, %v2115
        %v2162 = vsel %vm408, %v2010, %v2122
        %v2163 = vsel %vm408, %v2017, %v2129
        %v2164 = vsel %vm408, %v2024, %v2136
        %v2165 = vsel %vm408, %v2031, %v2143
        %v2166 = vsel %vm408, %v2038, %v2150
        %s2167 = scalar_lea.vmem %s170, 192
        %v2168 = vld [vmem:[%s2167] sm:$0xf]
        %v2169 = vld [vmem:[%s2167 + $0x4] sm:$0xf]
        %v2170 = vld [vmem:[%s2167 + $0x8] sm:$0xf]
        %v2171 = vld [vmem:[%s2167 + $0xc] sm:$0xf]
        %s2172 = scalar_lea.vmem %s170, 208
        %v2173 = vld [vmem:[%s2172] sm:$0xf]
        %v2174 = vld [vmem:[%s2172 + $0x4] sm:$0xf]
        %v2175 = vld [vmem:[%s2172 + $0x8] sm:$0xf]
        %v2176 = vld [vmem:[%s2172 + $0xc] sm:$0xf]
        %v2177 = vperm.slane %v2168, 0
        %v2178 = vlaneseq
        %v2179 = vshrl.u32 %v2178, 7
        %2181 = vset.pattern.permute.xlu0 %v2179
        %2182 = vperm.xlu0 %2181, %v2177
        %v2183 = vpop.permute.xlu0 %2182
        %v2184 = vperm.slane %v2168, 1
        %v2185 = vlaneseq
        %v2186 = vshrl.u32 %v2185, 7
        %2188 = vset.pattern.permute.xlu0 %v2186
        %2189 = vperm.xlu0 %2188, %v2184
        %v2190 = vpop.permute.xlu0 %2189
        %v2191 = vperm.slane %v2168, 2
        %v2192 = vlaneseq
        %v2193 = vshrl.u32 %v2192, 7
        %2195 = vset.pattern.permute.xlu0 %v2193
        %2196 = vperm.xlu0 %2195, %v2191
        %v2197 = vpop.permute.xlu0 %2196
        %v2198 = vperm.slane %v2168, 3
        %v2199 = vlaneseq
        %v2200 = vshrl.u32 %v2199, 7
        %2202 = vset.pattern.permute.xlu0 %v2200
        %2203 = vperm.xlu0 %2202, %v2198
        %v2204 = vpop.permute.xlu0 %2203
        %v2205 = vperm.slane %v2169, 0
        %v2206 = vlaneseq
        %v2207 = vshrl.u32 %v2206, 7
        %2209 = vset.pattern.permute.xlu0 %v2207
        %2210 = vperm.xlu0 %2209, %v2205
        %v2211 = vpop.permute.xlu0 %2210
        %v2212 = vperm.slane %v2169, 1
        %v2213 = vlaneseq
        %v2214 = vshrl.u32 %v2213, 7
        %2216 = vset.pattern.permute.xlu0 %v2214
        %2217 = vperm.xlu0 %2216, %v2212
        %v2218 = vpop.permute.xlu0 %2217
        %v2219 = vperm.slane %v2169, 2
        %v2220 = vlaneseq
        %v2221 = vshrl.u32 %v2220, 7
        %2223 = vset.pattern.permute.xlu0 %v2221
        %2224 = vperm.xlu0 %2223, %v2219
        %v2225 = vpop.permute.xlu0 %2224
        %v2226 = vperm.slane %v2169, 3
        %v2227 = vlaneseq
        %v2228 = vshrl.u32 %v2227, 7
        %2230 = vset.pattern.permute.xlu0 %v2228
        %2231 = vperm.xlu0 %2230, %v2226
        %v2232 = vpop.permute.xlu0 %2231
        %v2233 = vperm.slane %v2170, 0
        %v2234 = vlaneseq
        %v2235 = vshrl.u32 %v2234, 7
        %2237 = vset.pattern.permute.xlu0 %v2235
        %2238 = vperm.xlu0 %2237, %v2233
        %v2239 = vpop.permute.xlu0 %2238
        %v2240 = vperm.slane %v2170, 1
        %v2241 = vlaneseq
        %v2242 = vshrl.u32 %v2241, 7
        %2244 = vset.pattern.permute.xlu0 %v2242
        %2245 = vperm.xlu0 %2244, %v2240
        %v2246 = vpop.permute.xlu0 %2245
        %v2247 = vperm.slane %v2170, 2
        %v2248 = vlaneseq
        %v2249 = vshrl.u32 %v2248, 7
        %2251 = vset.pattern.permute.xlu0 %v2249
        %2252 = vperm.xlu0 %2251, %v2247
        %v2253 = vpop.permute.xlu0 %2252
        %v2254 = vperm.slane %v2170, 3
        %v2255 = vlaneseq
        %v2256 = vshrl.u32 %v2255, 7
        %2258 = vset.pattern.permute.xlu0 %v2256
        %2259 = vperm.xlu0 %2258, %v2254
        %v2260 = vpop.permute.xlu0 %2259
        %v2261 = vperm.slane %v2171, 0
        %v2262 = vlaneseq
        %v2263 = vshrl.u32 %v2262, 7
        %2265 = vset.pattern.permute.xlu0 %v2263
        %2266 = vperm.xlu0 %2265, %v2261
        %v2267 = vpop.permute.xlu0 %2266
        %v2268 = vperm.slane %v2171, 1
        %v2269 = vlaneseq
        %v2270 = vshrl.u32 %v2269, 7
        %2272 = vset.pattern.permute.xlu0 %v2270
        %2273 = vperm.xlu0 %2272, %v2268
        %v2274 = vpop.permute.xlu0 %2273
        %v2275 = vperm.slane %v2171, 2
        %v2276 = vlaneseq
        %v2277 = vshrl.u32 %v2276, 7
        %2279 = vset.pattern.permute.xlu0 %v2277
        %2280 = vperm.xlu0 %2279, %v2275
        %v2281 = vpop.permute.xlu0 %2280
        %v2282 = vperm.slane %v2171, 3
        %v2283 = vlaneseq
        %v2284 = vshrl.u32 %v2283, 7
        %2286 = vset.pattern.permute.xlu0 %v2284
        %2287 = vperm.xlu0 %2286, %v2282
        %v2288 = vpop.permute.xlu0 %2287
        %v2289 = vperm.slane %v2173, 0
        %v2290 = vlaneseq
        %v2291 = vshrl.u32 %v2290, 7
        %2293 = vset.pattern.permute.xlu0 %v2291
        %2294 = vperm.xlu0 %2293, %v2289
        %v2295 = vpop.permute.xlu0 %2294
        %v2296 = vperm.slane %v2173, 1
        %v2297 = vlaneseq
        %v2298 = vshrl.u32 %v2297, 7
        %2300 = vset.pattern.permute.xlu0 %v2298
        %2301 = vperm.xlu0 %2300, %v2296
        %v2302 = vpop.permute.xlu0 %2301
        %v2303 = vperm.slane %v2173, 2
        %v2304 = vlaneseq
        %v2305 = vshrl.u32 %v2304, 7
        %2307 = vset.pattern.permute.xlu0 %v2305
        %2308 = vperm.xlu0 %2307, %v2303
        %v2309 = vpop.permute.xlu0 %2308
        %v2310 = vperm.slane %v2173, 3
        %v2311 = vlaneseq
        %v2312 = vshrl.u32 %v2311, 7
        %2314 = vset.pattern.permute.xlu0 %v2312
        %2315 = vperm.xlu0 %2314, %v2310
        %v2316 = vpop.permute.xlu0 %2315
        %v2317 = vperm.slane %v2174, 0
        %v2318 = vlaneseq
        %v2319 = vshrl.u32 %v2318, 7
        %2321 = vset.pattern.permute.xlu0 %v2319
        %2322 = vperm.xlu0 %2321, %v2317
        %v2323 = vpop.permute.xlu0 %2322
        %v2324 = vperm.slane %v2174, 1
        %v2325 = vlaneseq
        %v2326 = vshrl.u32 %v2325, 7
        %2328 = vset.pattern.permute.xlu0 %v2326
        %2329 = vperm.xlu0 %2328, %v2324
        %v2330 = vpop.permute.xlu0 %2329
        %v2331 = vperm.slane %v2174, 2
        %v2332 = vlaneseq
        %v2333 = vshrl.u32 %v2332, 7
        %2335 = vset.pattern.permute.xlu0 %v2333
        %2336 = vperm.xlu0 %2335, %v2331
        %v2337 = vpop.permute.xlu0 %2336
        %v2338 = vperm.slane %v2174, 3
        %v2339 = vlaneseq
        %v2340 = vshrl.u32 %v2339, 7
        %2342 = vset.pattern.permute.xlu0 %v2340
        %2343 = vperm.xlu0 %2342, %v2338
        %v2344 = vpop.permute.xlu0 %2343
        %v2345 = vperm.slane %v2175, 0
        %v2346 = vlaneseq
        %v2347 = vshrl.u32 %v2346, 7
        %2349 = vset.pattern.permute.xlu0 %v2347
        %2350 = vperm.xlu0 %2349, %v2345
        %v2351 = vpop.permute.xlu0 %2350
        %v2352 = vperm.slane %v2175, 1
        %v2353 = vlaneseq
        %v2354 = vshrl.u32 %v2353, 7
        %2356 = vset.pattern.permute.xlu0 %v2354
        %2357 = vperm.xlu0 %2356, %v2352
        %v2358 = vpop.permute.xlu0 %2357
        %v2359 = vperm.slane %v2175, 2
        %v2360 = vlaneseq
        %v2361 = vshrl.u32 %v2360, 7
        %2363 = vset.pattern.permute.xlu0 %v2361
        %2364 = vperm.xlu0 %2363, %v2359
        %v2365 = vpop.permute.xlu0 %2364
        %v2366 = vperm.slane %v2175, 3
        %v2367 = vlaneseq
        %v2368 = vshrl.u32 %v2367, 7
        %2370 = vset.pattern.permute.xlu0 %v2368
        %2371 = vperm.xlu0 %2370, %v2366
        %v2372 = vpop.permute.xlu0 %2371
        %v2373 = vperm.slane %v2176, 0
        %v2374 = vlaneseq
        %v2375 = vshrl.u32 %v2374, 7
        %2377 = vset.pattern.permute.xlu0 %v2375
        %2378 = vperm.xlu0 %2377, %v2373
        %v2379 = vpop.permute.xlu0 %2378
        %v2380 = vperm.slane %v2176, 1
        %v2381 = vlaneseq
        %v2382 = vshrl.u32 %v2381, 7
        %2384 = vset.pattern.permute.xlu0 %v2382
        %2385 = vperm.xlu0 %2384, %v2380
        %v2386 = vpop.permute.xlu0 %2385
        %v2387 = vperm.slane %v2176, 2
        %v2388 = vlaneseq
        %v2389 = vshrl.u32 %v2388, 7
        %2391 = vset.pattern.permute.xlu0 %v2389
        %2392 = vperm.xlu0 %2391, %v2387
        %v2393 = vpop.permute.xlu0 %2392
        %v2394 = vperm.slane %v2176, 3
        %v2395 = vlaneseq
        %v2396 = vshrl.u32 %v2395, 7
        %2398 = vset.pattern.permute.xlu0 %v2396
        %2399 = vperm.xlu0 %2398, %v2394
        %v2400 = vpop.permute.xlu0 %2399
        %v2401 = vsel %vm408, %v2183, %v2295
        %v2402 = vsel %vm408, %v2190, %v2302
        %v2403 = vsel %vm408, %v2197, %v2309
        %v2404 = vsel %vm408, %v2204, %v2316
        %v2405 = vsel %vm408, %v2211, %v2323
        %v2406 = vsel %vm408, %v2218, %v2330
        %v2407 = vsel %vm408, %v2225, %v2337
        %v2408 = vsel %vm408, %v2232, %v2344
        %v2409 = vsel %vm408, %v2239, %v2351
        %v2410 = vsel %vm408, %v2246, %v2358
        %v2411 = vsel %vm408, %v2253, %v2365
        %v2412 = vsel %vm408, %v2260, %v2372
        %v2413 = vsel %vm408, %v2267, %v2379
        %v2414 = vsel %vm408, %v2274, %v2386
        %v2415 = vsel %vm408, %v2281, %v2393
        %v2416 = vsel %vm408, %v2288, %v2400
        %v2417 = vrot.slane %v2153, 4
        %v2418 = vsel %vm676, %v2417, %v2151
        %v2420 = vunpack.c.l.s4 1983009808
        %v2421 = vunpack.c.0.s8 %v2420
        %v2422 = vperm.slane %v2418, %v2421
        %v2423 = vrot.slane %v2154, 4
        %v2424 = vsel %vm676, %v2423, %v2152
        %v2426 = vunpack.c.l.s4 1983009808
        %v2427 = vunpack.c.0.s8 %v2426
        %v2428 = vperm.slane %v2424, %v2427
        %v2429 = vrot.slane %v2428, 4
        %v2430 = vsel %vm676, %v2429, %v2422
        %v2431 = vrot.slane %v2422, 4
        %v2432 = vsel %vm676, %v2428, %v2431
        %v2434 = vunpack.c.l.s4 1934713408
        %v2435 = vunpack.c.0.s8 %v2434
        %v2436 = vperm.slane %v2430, %v2435
        %v2438 = vunpack.c.l.s4 1934713408
        %v2439 = vunpack.c.0.s8 %v2438
        %v2440 = vperm.slane %v2432, %v2439
        %v2441 = vrot.slane %v2436, 4
        %v2442 = vsel %vm676, 0.0, %v2441
        %v2443 = vrot.slane %v2440, 4
        %v2444 = vsel %vm676, 0.0, %v2443
        %v2445 = vrot.slane %v2157, 4
        %v2446 = vsel %vm676, %v2445, %v2155
        %v2448 = vunpack.c.l.s4 1983009808
        %v2449 = vunpack.c.0.s8 %v2448
        %v2450 = vperm.slane %v2446, %v2449
        %v2451 = vrot.slane %v2158, 4
        %v2452 = vsel %vm676, %v2451, %v2156
        %v2454 = vunpack.c.l.s4 1983009808
        %v2455 = vunpack.c.0.s8 %v2454
        %v2456 = vperm.slane %v2452, %v2455
        %v2457 = vrot.slane %v2456, 4
        %v2458 = vsel %vm676, %v2457, %v2450
        %v2459 = vrot.slane %v2450, 4
        %v2460 = vsel %vm676, %v2456, %v2459
        %v2462 = vunpack.c.l.s4 1934713408
        %v2463 = vunpack.c.0.s8 %v2462
        %v2464 = vperm.slane %v2458, %v2463
        %v2466 = vunpack.c.l.s4 1934713408
        %v2467 = vunpack.c.0.s8 %v2466
        %v2468 = vperm.slane %v2460, %v2467
        %v2469 = vrot.slane %v2464, 4
        %v2470 = vsel %vm676, 0.0, %v2469
        %v2471 = vrot.slane %v2468, 4
        %v2472 = vsel %vm676, 0.0, %v2471
        %v2473 = vrot.slane %v2161, 4
        %v2474 = vsel %vm676, %v2473, %v2159
        %v2476 = vunpack.c.l.s4 1983009808
        %v2477 = vunpack.c.0.s8 %v2476
        %v2478 = vperm.slane %v2474, %v2477
        %v2479 = vrot.slane %v2162, 4
        %v2480 = vsel %vm676, %v2479, %v2160
        %v2482 = vunpack.c.l.s4 1983009808
        %v2483 = vunpack.c.0.s8 %v2482
        %v2484 = vperm.slane %v2480, %v2483
        %v2485 = vrot.slane %v2484, 4
        %v2486 = vsel %vm676, %v2485, %v2478
        %v2487 = vrot.slane %v2478, 4
        %v2488 = vsel %vm676, %v2484, %v2487
        %v2490 = vunpack.c.l.s4 1934713408
        %v2491 = vunpack.c.0.s8 %v2490
        %v2492 = vperm.slane %v2486, %v2491
        %v2494 = vunpack.c.l.s4 1934713408
        %v2495 = vunpack.c.0.s8 %v2494
        %v2496 = vperm.slane %v2488, %v2495
        %v2497 = vrot.slane %v2492, 4
        %v2498 = vsel %vm676, 0.0, %v2497
        %v2499 = vrot.slane %v2496, 4
        %v2500 = vsel %vm676, 0.0, %v2499
        %v2501 = vrot.slane %v2165, 4
        %v2502 = vsel %vm676, %v2501, %v2163
        %v2504 = vunpack.c.l.s4 1983009808
        %v2505 = vunpack.c.0.s8 %v2504
        %v2506 = vperm.slane %v2502, %v2505
        %v2507 = vrot.slane %v2166, 4
        %v2508 = vsel %vm676, %v2507, %v2164
        %v2510 = vunpack.c.l.s4 1983009808
        %v2511 = vunpack.c.0.s8 %v2510
        %v2512 = vperm.slane %v2508, %v2511
        %v2513 = vrot.slane %v2512, 4
        %v2514 = vsel %vm676, %v2513, %v2506
        %v2515 = vrot.slane %v2506, 4
        %v2516 = vsel %vm676, %v2512, %v2515
        %v2518 = vunpack.c.l.s4 1934713408
        %v2519 = vunpack.c.0.s8 %v2518
        %v2520 = vperm.slane %v2514, %v2519
        %v2522 = vunpack.c.l.s4 1934713408
        %v2523 = vunpack.c.0.s8 %v2522
        %v2524 = vperm.slane %v2516, %v2523
        %v2525 = vrot.slane %v2520, 4
        %v2526 = vsel %vm676, 0.0, %v2525
        %v2527 = vrot.slane %v2524, 4
        %v2528 = vsel %vm676, 0.0, %v2527
        %2533 = vrot.lane.b32.xlu0 %v2442, 2
        %v2534 = vpop.permute.xlu0 %2533
        %2535 = vrot.lane.b32.xlu0 %v2470, 2
        %v2536 = vpop.permute.xlu0 %2535
        %2537 = vrot.lane.b32.xlu0 %v2498, 2
        %v2538 = vpop.permute.xlu0 %2537
        %2539 = vrot.lane.b32.xlu0 %v2526, 2
        %v2540 = vpop.permute.xlu0 %2539
        %2549 = vrot.lane.b32.xlu0 %v2440, 4
        %v2550 = vpop.permute.xlu0 %2549
        %2551 = vrot.lane.b32.xlu0 %v2468, 4
        %v2552 = vpop.permute.xlu0 %2551
        %2553 = vrot.lane.b32.xlu0 %v2496, 4
        %v2554 = vpop.permute.xlu0 %2553
        %2555 = vrot.lane.b32.xlu0 %v2524, 4
        %v2556 = vpop.permute.xlu0 %2555
        %2565 = vrot.lane.b32.xlu0 %v2444, 6
        %v2566 = vpop.permute.xlu0 %2565
        %2567 = vrot.lane.b32.xlu0 %v2472, 6
        %v2568 = vpop.permute.xlu0 %2567
        %2569 = vrot.lane.b32.xlu0 %v2500, 6
        %v2570 = vpop.permute.xlu0 %2569
        %2571 = vrot.lane.b32.xlu0 %v2528, 6
        %v2572 = vpop.permute.xlu0 %2571
        %v2577 = vsel %vm836, %v2436, %v2534
        %v2578 = vsel %vm836, %v2464, %v2536
        %v2579 = vsel %vm836, %v2492, %v2538
        %v2580 = vsel %vm836, %v2520, %v2540
        %v2581 = vsel %vm841, %v2577, %v2550
        %v2582 = vsel %vm841, %v2578, %v2552
        %v2583 = vsel %vm841, %v2579, %v2554
        %v2584 = vsel %vm841, %v2580, %v2556
        %v2585 = vsel %vm846, %v2581, %v2566
        %v2586 = vsel %vm846, %v2582, %v2568
        %v2587 = vsel %vm846, %v2583, %v2570
        %v2588 = vsel %vm846, %v2584, %v2572
        %v2589 = vrot.slane %v2403, 4
        %v2590 = vsel %vm676, %v2589, %v2401
        %v2592 = vunpack.c.l.s4 1983009808
        %v2593 = vunpack.c.0.s8 %v2592
        %v2594 = vperm.slane %v2590, %v2593
        %v2595 = vrot.slane %v2404, 4
        %v2596 = vsel %vm676, %v2595, %v2402
        %v2598 = vunpack.c.l.s4 1983009808
        %v2599 = vunpack.c.0.s8 %v2598
        %v2600 = vperm.slane %v2596, %v2599
        %v2601 = vrot.slane %v2600, 4
        %v2602 = vsel %vm676, %v2601, %v2594
        %v2603 = vrot.slane %v2594, 4
        %v2604 = vsel %vm676, %v2600, %v2603
        %v2606 = vunpack.c.l.s4 1934713408
        %v2607 = vunpack.c.0.s8 %v2606
        %v2608 = vperm.slane %v2602, %v2607
        %v2610 = vunpack.c.l.s4 1934713408
        %v2611 = vunpack.c.0.s8 %v2610
        %v2612 = vperm.slane %v2604, %v2611
        %v2613 = vrot.slane %v2608, 4
        %v2614 = vsel %vm676, 0.0, %v2613
        %v2615 = vrot.slane %v2612, 4
        %v2616 = vsel %vm676, 0.0, %v2615
        %v2617 = vrot.slane %v2407, 4
        %v2618 = vsel %vm676, %v2617, %v2405
        %v2620 = vunpack.c.l.s4 1983009808
        %v2621 = vunpack.c.0.s8 %v2620
        %v2622 = vperm.slane %v2618, %v2621
        %v2623 = vrot.slane %v2408, 4
        %v2624 = vsel %vm676, %v2623, %v2406
        %v2626 = vunpack.c.l.s4 1983009808
        %v2627 = vunpack.c.0.s8 %v2626
        %v2628 = vperm.slane %v2624, %v2627
        %v2629 = vrot.slane %v2628, 4
        %v2630 = vsel %vm676, %v2629, %v2622
        %v2631 = vrot.slane %v2622, 4
        %v2632 = vsel %vm676, %v2628, %v2631
        %v2634 = vunpack.c.l.s4 1934713408
        %v2635 = vunpack.c.0.s8 %v2634
        %v2636 = vperm.slane %v2630, %v2635
        %v2638 = vunpack.c.l.s4 1934713408
        %v2639 = vunpack.c.0.s8 %v2638
        %v2640 = vperm.slane %v2632, %v2639
        %v2641 = vrot.slane %v2636, 4
        %v2642 = vsel %vm676, 0.0, %v2641
        %v2643 = vrot.slane %v2640, 4
        %v2644 = vsel %vm676, 0.0, %v2643
        %v2645 = vrot.slane %v2411, 4
        %v2646 = vsel %vm676, %v2645, %v2409
        %v2648 = vunpack.c.l.s4 1983009808
        %v2649 = vunpack.c.0.s8 %v2648
        %v2650 = vperm.slane %v2646, %v2649
        %v2651 = vrot.slane %v2412, 4
        %v2652 = vsel %vm676, %v2651, %v2410
        %v2654 = vunpack.c.l.s4 1983009808
        %v2655 = vunpack.c.0.s8 %v2654
        %v2656 = vperm.slane %v2652, %v2655
        %v2657 = vrot.slane %v2656, 4
        %v2658 = vsel %vm676, %v2657, %v2650
        %v2659 = vrot.slane %v2650, 4
        %v2660 = vsel %vm676, %v2656, %v2659
        %v2662 = vunpack.c.l.s4 1934713408
        %v2663 = vunpack.c.0.s8 %v2662
        %v2664 = vperm.slane %v2658, %v2663
        %v2666 = vunpack.c.l.s4 1934713408
        %v2667 = vunpack.c.0.s8 %v2666
        %v2668 = vperm.slane %v2660, %v2667
        %v2669 = vrot.slane %v2664, 4
        %v2670 = vsel %vm676, 0.0, %v2669
        %v2671 = vrot.slane %v2668, 4
        %v2672 = vsel %vm676, 0.0, %v2671
        %v2673 = vrot.slane %v2415, 4
        %v2674 = vsel %vm676, %v2673, %v2413
        %v2676 = vunpack.c.l.s4 1983009808
        %v2677 = vunpack.c.0.s8 %v2676
        %v2678 = vperm.slane %v2674, %v2677
        %v2679 = vrot.slane %v2416, 4
        %v2680 = vsel %vm676, %v2679, %v2414
        %v2682 = vunpack.c.l.s4 1983009808
        %v2683 = vunpack.c.0.s8 %v2682
        %v2684 = vperm.slane %v2680, %v2683
        %v2685 = vrot.slane %v2684, 4
        %v2686 = vsel %vm676, %v2685, %v2678
        %v2687 = vrot.slane %v2678, 4
        %v2688 = vsel %vm676, %v2684, %v2687
        %v2690 = vunpack.c.l.s4 1934713408
        %v2691 = vunpack.c.0.s8 %v2690
        %v2692 = vperm.slane %v2686, %v2691
        %v2694 = vunpack.c.l.s4 1934713408
        %v2695 = vunpack.c.0.s8 %v2694
        %v2696 = vperm.slane %v2688, %v2695
        %v2697 = vrot.slane %v2692, 4
        %v2698 = vsel %vm676, 0.0, %v2697
        %v2699 = vrot.slane %v2696, 4
        %v2700 = vsel %vm676, 0.0, %v2699
        %2705 = vrot.lane.b32.xlu0 %v2614, 2
        %v2706 = vpop.permute.xlu0 %2705
        %2707 = vrot.lane.b32.xlu0 %v2642, 2
        %v2708 = vpop.permute.xlu0 %2707
        %2709 = vrot.lane.b32.xlu0 %v2670, 2
        %v2710 = vpop.permute.xlu0 %2709
        %2711 = vrot.lane.b32.xlu0 %v2698, 2
        %v2712 = vpop.permute.xlu0 %2711
        %2721 = vrot.lane.b32.xlu0 %v2612, 4
        %v2722 = vpop.permute.xlu0 %2721
        %2723 = vrot.lane.b32.xlu0 %v2640, 4
        %v2724 = vpop.permute.xlu0 %2723
        %2725 = vrot.lane.b32.xlu0 %v2668, 4
        %v2726 = vpop.permute.xlu0 %2725
        %2727 = vrot.lane.b32.xlu0 %v2696, 4
        %v2728 = vpop.permute.xlu0 %2727
        %2737 = vrot.lane.b32.xlu0 %v2616, 6
        %v2738 = vpop.permute.xlu0 %2737
        %2739 = vrot.lane.b32.xlu0 %v2644, 6
        %v2740 = vpop.permute.xlu0 %2739
        %2741 = vrot.lane.b32.xlu0 %v2672, 6
        %v2742 = vpop.permute.xlu0 %2741
        %2743 = vrot.lane.b32.xlu0 %v2700, 6
        %v2744 = vpop.permute.xlu0 %2743
        %v2749 = vsel %vm836, %v2608, %v2706
        %v2750 = vsel %vm836, %v2636, %v2708
        %v2751 = vsel %vm836, %v2664, %v2710
        %v2752 = vsel %vm836, %v2692, %v2712
        %v2753 = vsel %vm841, %v2749, %v2722
        %v2754 = vsel %vm841, %v2750, %v2724
        %v2755 = vsel %vm841, %v2751, %v2726
        %v2756 = vsel %vm841, %v2752, %v2728
        %v2757 = vsel %vm846, %v2753, %v2738
        %v2758 = vsel %vm846, %v2754, %v2740
        %v2759 = vsel %vm846, %v2755, %v2742
        %v2760 = vsel %vm846, %v2756, %v2744
        %s2761 = scalar_lea.vmem %s170, 160
        %v2762 = vld [vmem:[%s2761] sm:$0xf]
        %v2763 = vld [vmem:[%s2761 + $0x4] sm:$0xf]
        %v2764 = vld [vmem:[%s2761 + $0x8] sm:$0xf]
        %v2765 = vld [vmem:[%s2761 + $0xc] sm:$0xf]
        %s2766 = scalar_lea.vmem %s170, 176
        %v2767 = vld [vmem:[%s2766] sm:$0xf]
        %v2768 = vld [vmem:[%s2766 + $0x4] sm:$0xf]
        %v2769 = vld [vmem:[%s2766 + $0x8] sm:$0xf]
        %v2770 = vld [vmem:[%s2766 + $0xc] sm:$0xf]
        %v2771 = vperm.slane %v2762, 0
        %v2772 = vlaneseq
        %v2773 = vshrl.u32 %v2772, 7
        %2775 = vset.pattern.permute.xlu0 %v2773
        %2776 = vperm.xlu0 %2775, %v2771
        %v2777 = vpop.permute.xlu0 %2776
        %v2778 = vperm.slane %v2762, 1
        %v2779 = vlaneseq
        %v2780 = vshrl.u32 %v2779, 7
        %2782 = vset.pattern.permute.xlu0 %v2780
        %2783 = vperm.xlu0 %2782, %v2778
        %v2784 = vpop.permute.xlu0 %2783
        %v2785 = vperm.slane %v2762, 2
        %v2786 = vlaneseq
        %v2787 = vshrl.u32 %v2786, 7
        %2789 = vset.pattern.permute.xlu0 %v2787
        %2790 = vperm.xlu0 %2789, %v2785
        %v2791 = vpop.permute.xlu0 %2790
        %v2792 = vperm.slane %v2762, 3
        %v2793 = vlaneseq
        %v2794 = vshrl.u32 %v2793, 7
        %2796 = vset.pattern.permute.xlu0 %v2794
        %2797 = vperm.xlu0 %2796, %v2792
        %v2798 = vpop.permute.xlu0 %2797
        %v2799 = vperm.slane %v2763, 0
        %v2800 = vlaneseq
        %v2801 = vshrl.u32 %v2800, 7
        %2803 = vset.pattern.permute.xlu0 %v2801
        %2804 = vperm.xlu0 %2803, %v2799
        %v2805 = vpop.permute.xlu0 %2804
        %v2806 = vperm.slane %v2763, 1
        %v2807 = vlaneseq
        %v2808 = vshrl.u32 %v2807, 7
        %2810 = vset.pattern.permute.xlu0 %v2808
        %2811 = vperm.xlu0 %2810, %v2806
        %v2812 = vpop.permute.xlu0 %2811
        %v2813 = vperm.slane %v2763, 2
        %v2814 = vlaneseq
        %v2815 = vshrl.u32 %v2814, 7
        %2817 = vset.pattern.permute.xlu0 %v2815
        %2818 = vperm.xlu0 %2817, %v2813
        %v2819 = vpop.permute.xlu0 %2818
        %v2820 = vperm.slane %v2763, 3
        %v2821 = vlaneseq
        %v2822 = vshrl.u32 %v2821, 7
        %2824 = vset.pattern.permute.xlu0 %v2822
        %2825 = vperm.xlu0 %2824, %v2820
        %v2826 = vpop.permute.xlu0 %2825
        %v2827 = vperm.slane %v2764, 0
        %v2828 = vlaneseq
        %v2829 = vshrl.u32 %v2828, 7
        %2831 = vset.pattern.permute.xlu0 %v2829
        %2832 = vperm.xlu0 %2831, %v2827
        %v2833 = vpop.permute.xlu0 %2832
        %v2834 = vperm.slane %v2764, 1
        %v2835 = vlaneseq
        %v2836 = vshrl.u32 %v2835, 7
        %2838 = vset.pattern.permute.xlu0 %v2836
        %2839 = vperm.xlu0 %2838, %v2834
        %v2840 = vpop.permute.xlu0 %2839
        %v2841 = vperm.slane %v2764, 2
        %v2842 = vlaneseq
        %v2843 = vshrl.u32 %v2842, 7
        %2845 = vset.pattern.permute.xlu0 %v2843
        %2846 = vperm.xlu0 %2845, %v2841
        %v2847 = vpop.permute.xlu0 %2846
        %v2848 = vperm.slane %v2764, 3
        %v2849 = vlaneseq
        %v2850 = vshrl.u32 %v2849, 7
        %2852 = vset.pattern.permute.xlu0 %v2850
        %2853 = vperm.xlu0 %2852, %v2848
        %v2854 = vpop.permute.xlu0 %2853
        %v2855 = vperm.slane %v2765, 0
        %v2856 = vlaneseq
        %v2857 = vshrl.u32 %v2856, 7
        %2859 = vset.pattern.permute.xlu0 %v2857
        %2860 = vperm.xlu0 %2859, %v2855
        %v2861 = vpop.permute.xlu0 %2860
        %v2862 = vperm.slane %v2765, 1
        %v2863 = vlaneseq
        %v2864 = vshrl.u32 %v2863, 7
        %2866 = vset.pattern.permute.xlu0 %v2864
        %2867 = vperm.xlu0 %2866, %v2862
        %v2868 = vpop.permute.xlu0 %2867
        %v2869 = vperm.slane %v2765, 2
        %v2870 = vlaneseq
        %v2871 = vshrl.u32 %v2870, 7
        %2873 = vset.pattern.permute.xlu0 %v2871
        %2874 = vperm.xlu0 %2873, %v2869
        %v2875 = vpop.permute.xlu0 %2874
        %v2876 = vperm.slane %v2765, 3
        %v2877 = vlaneseq
        %v2878 = vshrl.u32 %v2877, 7
        %2880 = vset.pattern.permute.xlu0 %v2878
        %2881 = vperm.xlu0 %2880, %v2876
        %v2882 = vpop.permute.xlu0 %2881
        %v2883 = vperm.slane %v2767, 0
        %v2884 = vlaneseq
        %v2885 = vshrl.u32 %v2884, 7
        %2887 = vset.pattern.permute.xlu0 %v2885
        %2888 = vperm.xlu0 %2887, %v2883
        %v2889 = vpop.permute.xlu0 %2888
        %v2890 = vperm.slane %v2767, 1
        %v2891 = vlaneseq
        %v2892 = vshrl.u32 %v2891, 7
        %2894 = vset.pattern.permute.xlu0 %v2892
        %2895 = vperm.xlu0 %2894, %v2890
        %v2896 = vpop.permute.xlu0 %2895
        %v2897 = vperm.slane %v2767, 2
        %v2898 = vlaneseq
        %v2899 = vshrl.u32 %v2898, 7
        %2901 = vset.pattern.permute.xlu0 %v2899
        %2902 = vperm.xlu0 %2901, %v2897
        %v2903 = vpop.permute.xlu0 %2902
        %v2904 = vperm.slane %v2767, 3
        %v2905 = vlaneseq
        %v2906 = vshrl.u32 %v2905, 7
        %2908 = vset.pattern.permute.xlu0 %v2906
        %2909 = vperm.xlu0 %2908, %v2904
        %v2910 = vpop.permute.xlu0 %2909
        %v2911 = vperm.slane %v2768, 0
        %v2912 = vlaneseq
        %v2913 = vshrl.u32 %v2912, 7
        %2915 = vset.pattern.permute.xlu0 %v2913
        %2916 = vperm.xlu0 %2915, %v2911
        %v2917 = vpop.permute.xlu0 %2916
        %v2918 = vperm.slane %v2768, 1
        %v2919 = vlaneseq
        %v2920 = vshrl.u32 %v2919, 7
        %2922 = vset.pattern.permute.xlu0 %v2920
        %2923 = vperm.xlu0 %2922, %v2918
        %v2924 = vpop.permute.xlu0 %2923
        %v2925 = vperm.slane %v2768, 2
        %v2926 = vlaneseq
        %v2927 = vshrl.u32 %v2926, 7
        %2929 = vset.pattern.permute.xlu0 %v2927
        %2930 = vperm.xlu0 %2929, %v2925
        %v2931 = vpop.permute.xlu0 %2930
        %v2932 = vperm.slane %v2768, 3
        %v2933 = vlaneseq
        %v2934 = vshrl.u32 %v2933, 7
        %2936 = vset.pattern.permute.xlu0 %v2934
        %2937 = vperm.xlu0 %2936, %v2932
        %v2938 = vpop.permute.xlu0 %2937
        %v2939 = vperm.slane %v2769, 0
        %v2940 = vlaneseq
        %v2941 = vshrl.u32 %v2940, 7
        %2943 = vset.pattern.permute.xlu0 %v2941
        %2944 = vperm.xlu0 %2943, %v2939
        %v2945 = vpop.permute.xlu0 %2944
        %v2946 = vperm.slane %v2769, 1
        %v2947 = vlaneseq
        %v2948 = vshrl.u32 %v2947, 7
        %2950 = vset.pattern.permute.xlu0 %v2948
        %2951 = vperm.xlu0 %2950, %v2946
        %v2952 = vpop.permute.xlu0 %2951
        %v2953 = vperm.slane %v2769, 2
        %v2954 = vlaneseq
        %v2955 = vshrl.u32 %v2954, 7
        %2957 = vset.pattern.permute.xlu0 %v2955
        %2958 = vperm.xlu0 %2957, %v2953
        %v2959 = vpop.permute.xlu0 %2958
        %v2960 = vperm.slane %v2769, 3
        %v2961 = vlaneseq
        %v2962 = vshrl.u32 %v2961, 7
        %2964 = vset.pattern.permute.xlu0 %v2962
        %2965 = vperm.xlu0 %2964, %v2960
        %v2966 = vpop.permute.xlu0 %2965
        %v2967 = vperm.slane %v2770, 0
        %v2968 = vlaneseq
        %v2969 = vshrl.u32 %v2968, 7
        %2971 = vset.pattern.permute.xlu0 %v2969
        %2972 = vperm.xlu0 %2971, %v2967
        %v2973 = vpop.permute.xlu0 %2972
        %v2974 = vperm.slane %v2770, 1
        %v2975 = vlaneseq
        %v2976 = vshrl.u32 %v2975, 7
        %2978 = vset.pattern.permute.xlu0 %v2976
        %2979 = vperm.xlu0 %2978, %v2974
        %v2980 = vpop.permute.xlu0 %2979
        %v2981 = vperm.slane %v2770, 2
        %v2982 = vlaneseq
        %v2983 = vshrl.u32 %v2982, 7
        %2985 = vset.pattern.permute.xlu0 %v2983
        %2986 = vperm.xlu0 %2985, %v2981
        %v2987 = vpop.permute.xlu0 %2986
        %v2988 = vperm.slane %v2770, 3
        %v2989 = vlaneseq
        %v2990 = vshrl.u32 %v2989, 7
        %2992 = vset.pattern.permute.xlu0 %v2990
        %2993 = vperm.xlu0 %2992, %v2988
        %v2994 = vpop.permute.xlu0 %2993
        %v2995 = vsel %vm408, %v2777, %v2889
        %v2996 = vsel %vm408, %v2784, %v2896
        %v2997 = vsel %vm408, %v2791, %v2903
        %v2998 = vsel %vm408, %v2798, %v2910
        %v2999 = vsel %vm408, %v2805, %v2917
        %v3000 = vsel %vm408, %v2812, %v2924
        %v3001 = vsel %vm408, %v2819, %v2931
        %v3002 = vsel %vm408, %v2826, %v2938
        %v3003 = vsel %vm408, %v2833, %v2945
        %v3004 = vsel %vm408, %v2840, %v2952
        %v3005 = vsel %vm408, %v2847, %v2959
        %v3006 = vsel %vm408, %v2854, %v2966
        %v3007 = vsel %vm408, %v2861, %v2973
        %v3008 = vsel %vm408, %v2868, %v2980
        %v3009 = vsel %vm408, %v2875, %v2987
        %v3010 = vsel %vm408, %v2882, %v2994
        %s3011 = scalar_lea.vmem %s170, 224
        %v3012 = vld [vmem:[%s3011] sm:$0xf]
        %v3013 = vld [vmem:[%s3011 + $0x4] sm:$0xf]
        %v3014 = vld [vmem:[%s3011 + $0x8] sm:$0xf]
        %v3015 = vld [vmem:[%s3011 + $0xc] sm:$0xf]
        %s3016 = scalar_lea.vmem %s170, 240
        %v3017 = vld [vmem:[%s3016] sm:$0xf]
        %v3018 = vld [vmem:[%s3016 + $0x4] sm:$0xf]
        %v3019 = vld [vmem:[%s3016 + $0x8] sm:$0xf]
        %v3020 = vld [vmem:[%s3016 + $0xc] sm:$0xf]
        %v3021 = vperm.slane %v3012, 0
        %v3022 = vlaneseq
        %v3023 = vshrl.u32 %v3022, 7
        %3025 = vset.pattern.permute.xlu0 %v3023
        %3026 = vperm.xlu0 %3025, %v3021
        %v3027 = vpop.permute.xlu0 %3026
        %v3028 = vperm.slane %v3012, 1
        %v3029 = vlaneseq
        %v3030 = vshrl.u32 %v3029, 7
        %3032 = vset.pattern.permute.xlu0 %v3030
        %3033 = vperm.xlu0 %3032, %v3028
        %v3034 = vpop.permute.xlu0 %3033
        %v3035 = vperm.slane %v3012, 2
        %v3036 = vlaneseq
        %v3037 = vshrl.u32 %v3036, 7
        %3039 = vset.pattern.permute.xlu0 %v3037
        %3040 = vperm.xlu0 %3039, %v3035
        %v3041 = vpop.permute.xlu0 %3040
        %v3042 = vperm.slane %v3012, 3
        %v3043 = vlaneseq
        %v3044 = vshrl.u32 %v3043, 7
        %3046 = vset.pattern.permute.xlu0 %v3044
        %3047 = vperm.xlu0 %3046, %v3042
        %v3048 = vpop.permute.xlu0 %3047
        %v3049 = vperm.slane %v3013, 0
        %v3050 = vlaneseq
        %v3051 = vshrl.u32 %v3050, 7
        %3053 = vset.pattern.permute.xlu0 %v3051
        %3054 = vperm.xlu0 %3053, %v3049
        %v3055 = vpop.permute.xlu0 %3054
        %v3056 = vperm.slane %v3013, 1
        %v3057 = vlaneseq
        %v3058 = vshrl.u32 %v3057, 7
        %3060 = vset.pattern.permute.xlu0 %v3058
        %3061 = vperm.xlu0 %3060, %v3056
        %v3062 = vpop.permute.xlu0 %3061
        %v3063 = vperm.slane %v3013, 2
        %v3064 = vlaneseq
        %v3065 = vshrl.u32 %v3064, 7
        %3067 = vset.pattern.permute.xlu0 %v3065
        %3068 = vperm.xlu0 %3067, %v3063
        %v3069 = vpop.permute.xlu0 %3068
        %v3070 = vperm.slane %v3013, 3
        %v3071 = vlaneseq
        %v3072 = vshrl.u32 %v3071, 7
        %3074 = vset.pattern.permute.xlu0 %v3072
        %3075 = vperm.xlu0 %3074, %v3070
        %v3076 = vpop.permute.xlu0 %3075
        %v3077 = vperm.slane %v3014, 0
        %v3078 = vlaneseq
        %v3079 = vshrl.u32 %v3078, 7
        %3081 = vset.pattern.permute.xlu0 %v3079
        %3082 = vperm.xlu0 %3081, %v3077
        %v3083 = vpop.permute.xlu0 %3082
        %v3084 = vperm.slane %v3014, 1
        %v3085 = vlaneseq
        %v3086 = vshrl.u32 %v3085, 7
        %3088 = vset.pattern.permute.xlu0 %v3086
        %3089 = vperm.xlu0 %3088, %v3084
        %v3090 = vpop.permute.xlu0 %3089
        %v3091 = vperm.slane %v3014, 2
        %v3092 = vlaneseq
        %v3093 = vshrl.u32 %v3092, 7
        %3095 = vset.pattern.permute.xlu0 %v3093
        %3096 = vperm.xlu0 %3095, %v3091
        %v3097 = vpop.permute.xlu0 %3096
        %v3098 = vperm.slane %v3014, 3
        %v3099 = vlaneseq
        %v3100 = vshrl.u32 %v3099, 7
        %3102 = vset.pattern.permute.xlu0 %v3100
        %3103 = vperm.xlu0 %3102, %v3098
        %v3104 = vpop.permute.xlu0 %3103
        %v3105 = vperm.slane %v3015, 0
        %v3106 = vlaneseq
        %v3107 = vshrl.u32 %v3106, 7
        %3109 = vset.pattern.permute.xlu0 %v3107
        %3110 = vperm.xlu0 %3109, %v3105
        %v3111 = vpop.permute.xlu0 %3110
        %v3112 = vperm.slane %v3015, 1
        %v3113 = vlaneseq
        %v3114 = vshrl.u32 %v3113, 7
        %3116 = vset.pattern.permute.xlu0 %v3114
        %3117 = vperm.xlu0 %3116, %v3112
        %v3118 = vpop.permute.xlu0 %3117
        %v3119 = vperm.slane %v3015, 2
        %v3120 = vlaneseq
        %v3121 = vshrl.u32 %v3120, 7
        %3123 = vset.pattern.permute.xlu0 %v3121
        %3124 = vperm.xlu0 %3123, %v3119
        %v3125 = vpop.permute.xlu0 %3124
        %v3126 = vperm.slane %v3015, 3
        %v3127 = vlaneseq
        %v3128 = vshrl.u32 %v3127, 7
        %3130 = vset.pattern.permute.xlu0 %v3128
        %3131 = vperm.xlu0 %3130, %v3126
        %v3132 = vpop.permute.xlu0 %3131
        %v3133 = vperm.slane %v3017, 0
        %v3134 = vlaneseq
        %v3135 = vshrl.u32 %v3134, 7
        %3137 = vset.pattern.permute.xlu0 %v3135
        %3138 = vperm.xlu0 %3137, %v3133
        %v3139 = vpop.permute.xlu0 %3138
        %v3140 = vperm.slane %v3017, 1
        %v3141 = vlaneseq
        %v3142 = vshrl.u32 %v3141, 7
        %3144 = vset.pattern.permute.xlu0 %v3142
        %3145 = vperm.xlu0 %3144, %v3140
        %v3146 = vpop.permute.xlu0 %3145
        %v3147 = vperm.slane %v3017, 2
        %v3148 = vlaneseq
        %v3149 = vshrl.u32 %v3148, 7
        %3151 = vset.pattern.permute.xlu0 %v3149
        %3152 = vperm.xlu0 %3151, %v3147
        %v3153 = vpop.permute.xlu0 %3152
        %v3154 = vperm.slane %v3017, 3
        %v3155 = vlaneseq
        %v3156 = vshrl.u32 %v3155, 7
        %3158 = vset.pattern.permute.xlu0 %v3156
        %3159 = vperm.xlu0 %3158, %v3154
        %v3160 = vpop.permute.xlu0 %3159
        %v3161 = vperm.slane %v3018, 0
        %v3162 = vlaneseq
        %v3163 = vshrl.u32 %v3162, 7
        %3165 = vset.pattern.permute.xlu0 %v3163
        %3166 = vperm.xlu0 %3165, %v3161
        %v3167 = vpop.permute.xlu0 %3166
        %v3168 = vperm.slane %v3018, 1
        %v3169 = vlaneseq
        %v3170 = vshrl.u32 %v3169, 7
        %3172 = vset.pattern.permute.xlu0 %v3170
        %3173 = vperm.xlu0 %3172, %v3168
        %v3174 = vpop.permute.xlu0 %3173
        %v3175 = vperm.slane %v3018, 2
        %v3176 = vlaneseq
        %v3177 = vshrl.u32 %v3176, 7
        %3179 = vset.pattern.permute.xlu0 %v3177
        %3180 = vperm.xlu0 %3179, %v3175
        %v3181 = vpop.permute.xlu0 %3180
        %v3182 = vperm.slane %v3018, 3
        %v3183 = vlaneseq
        %v3184 = vshrl.u32 %v3183, 7
        %3186 = vset.pattern.permute.xlu0 %v3184
        %3187 = vperm.xlu0 %3186, %v3182
        %v3188 = vpop.permute.xlu0 %3187
        %v3189 = vperm.slane %v3019, 0
        %v3190 = vlaneseq
        %v3191 = vshrl.u32 %v3190, 7
        %3193 = vset.pattern.permute.xlu0 %v3191
        %3194 = vperm.xlu0 %3193, %v3189
        %v3195 = vpop.permute.xlu0 %3194
        %v3196 = vperm.slane %v3019, 1
        %v3197 = vlaneseq
        %v3198 = vshrl.u32 %v3197, 7
        %3200 = vset.pattern.permute.xlu0 %v3198
        %3201 = vperm.xlu0 %3200, %v3196
        %v3202 = vpop.permute.xlu0 %3201
        %v3203 = vperm.slane %v3019, 2
        %v3204 = vlaneseq
        %v3205 = vshrl.u32 %v3204, 7
        %3207 = vset.pattern.permute.xlu0 %v3205
        %3208 = vperm.xlu0 %3207, %v3203
        %v3209 = vpop.permute.xlu0 %3208
        %v3210 = vperm.slane %v3019, 3
        %v3211 = vlaneseq
        %v3212 = vshrl.u32 %v3211, 7
        %3214 = vset.pattern.permute.xlu0 %v3212
        %3215 = vperm.xlu0 %3214, %v3210
        %v3216 = vpop.permute.xlu0 %3215
        %v3217 = vperm.slane %v3020, 0
        %v3218 = vlaneseq
        %v3219 = vshrl.u32 %v3218, 7
        %3221 = vset.pattern.permute.xlu0 %v3219
        %3222 = vperm.xlu0 %3221, %v3217
        %v3223 = vpop.permute.xlu0 %3222
        %v3224 = vperm.slane %v3020, 1
        %v3225 = vlaneseq
        %v3226 = vshrl.u32 %v3225, 7
        %3228 = vset.pattern.permute.xlu0 %v3226
        %3229 = vperm.xlu0 %3228, %v3224
        %v3230 = vpop.permute.xlu0 %3229
        %v3231 = vperm.slane %v3020, 2
        %v3232 = vlaneseq
        %v3233 = vshrl.u32 %v3232, 7
        %3235 = vset.pattern.permute.xlu0 %v3233
        %3236 = vperm.xlu0 %3235, %v3231
        %v3237 = vpop.permute.xlu0 %3236
        %v3238 = vperm.slane %v3020, 3
        %v3239 = vlaneseq
        %v3240 = vshrl.u32 %v3239, 7
        %3242 = vset.pattern.permute.xlu0 %v3240
        %3243 = vperm.xlu0 %3242, %v3238
        %v3244 = vpop.permute.xlu0 %3243
        %v3245 = vsel %vm408, %v3027, %v3139
        %v3246 = vsel %vm408, %v3034, %v3146
        %v3247 = vsel %vm408, %v3041, %v3153
        %v3248 = vsel %vm408, %v3048, %v3160
        %v3249 = vsel %vm408, %v3055, %v3167
        %v3250 = vsel %vm408, %v3062, %v3174
        %v3251 = vsel %vm408, %v3069, %v3181
        %v3252 = vsel %vm408, %v3076, %v3188
        %v3253 = vsel %vm408, %v3083, %v3195
        %v3254 = vsel %vm408, %v3090, %v3202
        %v3255 = vsel %vm408, %v3097, %v3209
        %v3256 = vsel %vm408, %v3104, %v3216
        %v3257 = vsel %vm408, %v3111, %v3223
        %v3258 = vsel %vm408, %v3118, %v3230
        %v3259 = vsel %vm408, %v3125, %v3237
        %v3260 = vsel %vm408, %v3132, %v3244
        %v3261 = vrot.slane %v2997, 4
        %v3262 = vsel %vm676, %v3261, %v2995
        %v3264 = vunpack.c.l.s4 1983009808
        %v3265 = vunpack.c.0.s8 %v3264
        %v3266 = vperm.slane %v3262, %v3265
        %v3267 = vrot.slane %v2998, 4
        %v3268 = vsel %vm676, %v3267, %v2996
        %v3270 = vunpack.c.l.s4 1983009808
        %v3271 = vunpack.c.0.s8 %v3270
        %v3272 = vperm.slane %v3268, %v3271
        %v3273 = vrot.slane %v3272, 4
        %v3274 = vsel %vm676, %v3273, %v3266
        %v3275 = vrot.slane %v3266, 4
        %v3276 = vsel %vm676, %v3272, %v3275
        %v3278 = vunpack.c.l.s4 1934713408
        %v3279 = vunpack.c.0.s8 %v3278
        %v3280 = vperm.slane %v3274, %v3279
        %v3282 = vunpack.c.l.s4 1934713408
        %v3283 = vunpack.c.0.s8 %v3282
        %v3284 = vperm.slane %v3276, %v3283
        %v3285 = vrot.slane %v3280, 4
        %v3286 = vsel %vm676, 0.0, %v3285
        %v3287 = vrot.slane %v3284, 4
        %v3288 = vsel %vm676, 0.0, %v3287
        %v3289 = vrot.slane %v3001, 4
        %v3290 = vsel %vm676, %v3289, %v2999
        %v3292 = vunpack.c.l.s4 1983009808
        %v3293 = vunpack.c.0.s8 %v3292
        %v3294 = vperm.slane %v3290, %v3293
        %v3295 = vrot.slane %v3002, 4
        %v3296 = vsel %vm676, %v3295, %v3000
        %v3298 = vunpack.c.l.s4 1983009808
        %v3299 = vunpack.c.0.s8 %v3298
        %v3300 = vperm.slane %v3296, %v3299
        %v3301 = vrot.slane %v3300, 4
        %v3302 = vsel %vm676, %v3301, %v3294
        %v3303 = vrot.slane %v3294, 4
        %v3304 = vsel %vm676, %v3300, %v3303
        %v3306 = vunpack.c.l.s4 1934713408
        %v3307 = vunpack.c.0.s8 %v3306
        %v3308 = vperm.slane %v3302, %v3307
        %v3310 = vunpack.c.l.s4 1934713408
        %v3311 = vunpack.c.0.s8 %v3310
        %v3312 = vperm.slane %v3304, %v3311
        %v3313 = vrot.slane %v3308, 4
        %v3314 = vsel %vm676, 0.0, %v3313
        %v3315 = vrot.slane %v3312, 4
        %v3316 = vsel %vm676, 0.0, %v3315
        %v3317 = vrot.slane %v3005, 4
        %v3318 = vsel %vm676, %v3317, %v3003
        %v3320 = vunpack.c.l.s4 1983009808
        %v3321 = vunpack.c.0.s8 %v3320
        %v3322 = vperm.slane %v3318, %v3321
        %v3323 = vrot.slane %v3006, 4
        %v3324 = vsel %vm676, %v3323, %v3004
        %v3326 = vunpack.c.l.s4 1983009808
        %v3327 = vunpack.c.0.s8 %v3326
        %v3328 = vperm.slane %v3324, %v3327
        %v3329 = vrot.slane %v3328, 4
        %v3330 = vsel %vm676, %v3329, %v3322
        %v3331 = vrot.slane %v3322, 4
        %v3332 = vsel %vm676, %v3328, %v3331
        %v3334 = vunpack.c.l.s4 1934713408
        %v3335 = vunpack.c.0.s8 %v3334
        %v3336 = vperm.slane %v3330, %v3335
        %v3338 = vunpack.c.l.s4 1934713408
        %v3339 = vunpack.c.0.s8 %v3338
        %v3340 = vperm.slane %v3332, %v3339
        %v3341 = vrot.slane %v3336, 4
        %v3342 = vsel %vm676, 0.0, %v3341
        %v3343 = vrot.slane %v3340, 4
        %v3344 = vsel %vm676, 0.0, %v3343
        %v3345 = vrot.slane %v3009, 4
        %v3346 = vsel %vm676, %v3345, %v3007
        %v3348 = vunpack.c.l.s4 1983009808
        %v3349 = vunpack.c.0.s8 %v3348
        %v3350 = vperm.slane %v3346, %v3349
        %v3351 = vrot.slane %v3010, 4
        %v3352 = vsel %vm676, %v3351, %v3008
        %v3354 = vunpack.c.l.s4 1983009808
        %v3355 = vunpack.c.0.s8 %v3354
        %v3356 = vperm.slane %v3352, %v3355
        %v3357 = vrot.slane %v3356, 4
        %v3358 = vsel %vm676, %v3357, %v3350
        %v3359 = vrot.slane %v3350, 4
        %v3360 = vsel %vm676, %v3356, %v3359
        %v3362 = vunpack.c.l.s4 1934713408
        %v3363 = vunpack.c.0.s8 %v3362
        %v3364 = vperm.slane %v3358, %v3363
        %v3366 = vunpack.c.l.s4 1934713408
        %v3367 = vunpack.c.0.s8 %v3366
        %v3368 = vperm.slane %v3360, %v3367
        %v3369 = vrot.slane %v3364, 4
        %v3370 = vsel %vm676, 0.0, %v3369
        %v3371 = vrot.slane %v3368, 4
        %v3372 = vsel %vm676, 0.0, %v3371
        %3377 = vrot.lane.b32.xlu0 %v3286, 2
        %v3378 = vpop.permute.xlu0 %3377
        %3379 = vrot.lane.b32.xlu0 %v3314, 2
        %v3380 = vpop.permute.xlu0 %3379
        %3381 = vrot.lane.b32.xlu0 %v3342, 2
        %v3382 = vpop.permute.xlu0 %3381
        %3383 = vrot.lane.b32.xlu0 %v3370, 2
        %v3384 = vpop.permute.xlu0 %3383
        %3393 = vrot.lane.b32.xlu0 %v3284, 4
        %v3394 = vpop.permute.xlu0 %3393
        %3395 = vrot.lane.b32.xlu0 %v3312, 4
        %v3396 = vpop.permute.xlu0 %3395
        %3397 = vrot.lane.b32.xlu0 %v3340, 4
        %v3398 = vpop.permute.xlu0 %3397
        %3399 = vrot.lane.b32.xlu0 %v3368, 4
        %v3400 = vpop.permute.xlu0 %3399
        %3409 = vrot.lane.b32.xlu0 %v3288, 6
        %v3410 = vpop.permute.xlu0 %3409
        %3411 = vrot.lane.b32.xlu0 %v3316, 6
        %v3412 = vpop.permute.xlu0 %3411
        %3413 = vrot.lane.b32.xlu0 %v3344, 6
        %v3414 = vpop.permute.xlu0 %3413
        %3415 = vrot.lane.b32.xlu0 %v3372, 6
        %v3416 = vpop.permute.xlu0 %3415
        %v3421 = vsel %vm836, %v3280, %v3378
        %v3422 = vsel %vm836, %v3308, %v3380
        %v3423 = vsel %vm836, %v3336, %v3382
        %v3424 = vsel %vm836, %v3364, %v3384
        %v3425 = vsel %vm841, %v3421, %v3394
        %v3426 = vsel %vm841, %v3422, %v3396
        %v3427 = vsel %vm841, %v3423, %v3398
        %v3428 = vsel %vm841, %v3424, %v3400
        %v3429 = vsel %vm846, %v3425, %v3410
        %v3430 = vsel %vm846, %v3426, %v3412
        %v3431 = vsel %vm846, %v3427, %v3414
        %v3432 = vsel %vm846, %v3428, %v3416
        %v3433 = vrot.slane %v3247, 4
        %v3434 = vsel %vm676, %v3433, %v3245
        %v3436 = vunpack.c.l.s4 1983009808
        %v3437 = vunpack.c.0.s8 %v3436
        %v3438 = vperm.slane %v3434, %v3437
        %v3439 = vrot.slane %v3248, 4
        %v3440 = vsel %vm676, %v3439, %v3246
        %v3442 = vunpack.c.l.s4 1983009808
        %v3443 = vunpack.c.0.s8 %v3442
        %v3444 = vperm.slane %v3440, %v3443
        %v3445 = vrot.slane %v3444, 4
        %v3446 = vsel %vm676, %v3445, %v3438
        %v3447 = vrot.slane %v3438, 4
        %v3448 = vsel %vm676, %v3444, %v3447
        %v3450 = vunpack.c.l.s4 1934713408
        %v3451 = vunpack.c.0.s8 %v3450
        %v3452 = vperm.slane %v3446, %v3451
        %v3454 = vunpack.c.l.s4 1934713408
        %v3455 = vunpack.c.0.s8 %v3454
        %v3456 = vperm.slane %v3448, %v3455
        %v3457 = vrot.slane %v3452, 4
        %v3458 = vsel %vm676, 0.0, %v3457
        %v3459 = vrot.slane %v3456, 4
        %v3460 = vsel %vm676, 0.0, %v3459
        %v3461 = vrot.slane %v3251, 4
        %v3462 = vsel %vm676, %v3461, %v3249
        %v3464 = vunpack.c.l.s4 1983009808
        %v3465 = vunpack.c.0.s8 %v3464
        %v3466 = vperm.slane %v3462, %v3465
        %v3467 = vrot.slane %v3252, 4
        %v3468 = vsel %vm676, %v3467, %v3250
        %v3470 = vunpack.c.l.s4 1983009808
        %v3471 = vunpack.c.0.s8 %v3470
        %v3472 = vperm.slane %v3468, %v3471
        %v3473 = vrot.slane %v3472, 4
        %v3474 = vsel %vm676, %v3473, %v3466
        %v3475 = vrot.slane %v3466, 4
        %v3476 = vsel %vm676, %v3472, %v3475
        %v3478 = vunpack.c.l.s4 1934713408
        %v3479 = vunpack.c.0.s8 %v3478
        %v3480 = vperm.slane %v3474, %v3479
        %v3482 = vunpack.c.l.s4 1934713408
        %v3483 = vunpack.c.0.s8 %v3482
        %v3484 = vperm.slane %v3476, %v3483
        %v3485 = vrot.slane %v3480, 4
        %v3486 = vsel %vm676, 0.0, %v3485
        %v3487 = vrot.slane %v3484, 4
        %v3488 = vsel %vm676, 0.0, %v3487
        %v3489 = vrot.slane %v3255, 4
        %v3490 = vsel %vm676, %v3489, %v3253
        %v3492 = vunpack.c.l.s4 1983009808
        %v3493 = vunpack.c.0.s8 %v3492
        %v3494 = vperm.slane %v3490, %v3493
        %v3495 = vrot.slane %v3256, 4
        %v3496 = vsel %vm676, %v3495, %v3254
        %v3498 = vunpack.c.l.s4 1983009808
        %v3499 = vunpack.c.0.s8 %v3498
        %v3500 = vperm.slane %v3496, %v3499
        %v3501 = vrot.slane %v3500, 4
        %v3502 = vsel %vm676, %v3501, %v3494
        %v3503 = vrot.slane %v3494, 4
        %v3504 = vsel %vm676, %v3500, %v3503
        %v3506 = vunpack.c.l.s4 1934713408
        %v3507 = vunpack.c.0.s8 %v3506
        %v3508 = vperm.slane %v3502, %v3507
        %v3510 = vunpack.c.l.s4 1934713408
        %v3511 = vunpack.c.0.s8 %v3510
        %v3512 = vperm.slane %v3504, %v3511
        %v3513 = vrot.slane %v3508, 4
        %v3514 = vsel %vm676, 0.0, %v3513
        %v3515 = vrot.slane %v3512, 4
        %v3516 = vsel %vm676, 0.0, %v3515
        %v3517 = vrot.slane %v3259, 4
        %v3518 = vsel %vm676, %v3517, %v3257
        %v3520 = vunpack.c.l.s4 1983009808
        %v3521 = vunpack.c.0.s8 %v3520
        %v3522 = vperm.slane %v3518, %v3521
        %v3523 = vrot.slane %v3260, 4
        %v3524 = vsel %vm676, %v3523, %v3258
        %v3526 = vunpack.c.l.s4 1983009808
        %v3527 = vunpack.c.0.s8 %v3526
        %v3528 = vperm.slane %v3524, %v3527
        %v3529 = vrot.slane %v3528, 4
        %v3530 = vsel %vm676, %v3529, %v3522
        %v3531 = vrot.slane %v3522, 4
        %v3532 = vsel %vm676, %v3528, %v3531
        %v3534 = vunpack.c.l.s4 1934713408
        %v3535 = vunpack.c.0.s8 %v3534
        %v3536 = vperm.slane %v3530, %v3535
        %v3538 = vunpack.c.l.s4 1934713408
        %v3539 = vunpack.c.0.s8 %v3538
        %v3540 = vperm.slane %v3532, %v3539
        %v3541 = vrot.slane %v3536, 4
        %v3542 = vsel %vm676, 0.0, %v3541
        %v3543 = vrot.slane %v3540, 4
        %v3544 = vsel %vm676, 0.0, %v3543
        %3549 = vrot.lane.b32.xlu0 %v3458, 2
        %v3550 = vpop.permute.xlu0 %3549
        %3551 = vrot.lane.b32.xlu0 %v3486, 2
        %v3552 = vpop.permute.xlu0 %3551
        %3553 = vrot.lane.b32.xlu0 %v3514, 2
        %v3554 = vpop.permute.xlu0 %3553
        %3555 = vrot.lane.b32.xlu0 %v3542, 2
        %v3556 = vpop.permute.xlu0 %3555
        %3565 = vrot.lane.b32.xlu0 %v3456, 4
        %v3566 = vpop.permute.xlu0 %3565
        %3567 = vrot.lane.b32.xlu0 %v3484, 4
        %v3568 = vpop.permute.xlu0 %3567
        %3569 = vrot.lane.b32.xlu0 %v3512, 4
        %v3570 = vpop.permute.xlu0 %3569
        %3571 = vrot.lane.b32.xlu0 %v3540, 4
        %v3572 = vpop.permute.xlu0 %3571
        %3581 = vrot.lane.b32.xlu0 %v3460, 6
        %v3582 = vpop.permute.xlu0 %3581
        %3583 = vrot.lane.b32.xlu0 %v3488, 6
        %v3584 = vpop.permute.xlu0 %3583
        %3585 = vrot.lane.b32.xlu0 %v3516, 6
        %v3586 = vpop.permute.xlu0 %3585
        %3587 = vrot.lane.b32.xlu0 %v3544, 6
        %v3588 = vpop.permute.xlu0 %3587
        %v3593 = vsel %vm836, %v3452, %v3550
        %v3594 = vsel %vm836, %v3480, %v3552
        %v3595 = vsel %vm836, %v3508, %v3554
        %v3596 = vsel %vm836, %v3536, %v3556
        %v3597 = vsel %vm841, %v3593, %v3566
        %v3598 = vsel %vm841, %v3594, %v3568
        %v3599 = vsel %vm841, %v3595, %v3570
        %v3600 = vsel %vm841, %v3596, %v3572
        %v3601 = vsel %vm846, %v3597, %v3582
        %v3602 = vsel %vm846, %v3598, %v3584
        %v3603 = vsel %vm846, %v3599, %v3586
        %v3604 = vsel %vm846, %v3600, %v3588
        %s3605 = scalar_lea.vmem %s156, 32 [#allocation2]
        %3606 = vst.msk [vmem:[%s3605] sm:$0xf] %vm1867, %v2585
        %3607 = vst.msk [vmem:[%s3605 + $0x4] sm:$0xf] %vm1867, %v2757
        %3608 = vst.msk [vmem:[%s3605 + $0x8] sm:$0xf] %vm1867, %v2586
        %3609 = vst.msk [vmem:[%s3605 + $0xc] sm:$0xf] %vm1867, %v2758
        %3610 = vst.msk [vmem:[%s3605 + $0x10] sm:$0xf] %vm1867, %v2587
        %3611 = vst.msk [vmem:[%s3605 + $0x14] sm:$0xf] %vm1867, %v2759
        %3612 = vst.msk [vmem:[%s3605 + $0x18] sm:$0xf] %vm1867, %v2588
        %3613 = vst.msk [vmem:[%s3605 + $0x1c] sm:$0xf] %vm1867, %v2760
        %3622 = vrot.lane.b32.xlu0 %v3429, 8
        %v3623 = vpop.permute.xlu0 %3622
        %3624 = vrot.lane.b32.xlu0 %v3601, 8
        %v3625 = vpop.permute.xlu0 %3624
        %3626 = vrot.lane.b32.xlu0 %v3430, 8
        %v3627 = vpop.permute.xlu0 %3626
        %3628 = vrot.lane.b32.xlu0 %v3602, 8
        %v3629 = vpop.permute.xlu0 %3628
        %3630 = vrot.lane.b32.xlu0 %v3431, 8
        %v3631 = vpop.permute.xlu0 %3630
        %3632 = vrot.lane.b32.xlu0 %v3603, 8
        %v3633 = vpop.permute.xlu0 %3632
        %3634 = vrot.lane.b32.xlu0 %v3432, 8
        %v3635 = vpop.permute.xlu0 %3634
        %3636 = vrot.lane.b32.xlu0 %v3604, 8
        %v3637 = vpop.permute.xlu0 %3636
        %3646 = vst.msk [vmem:[%s3605] sm:$0xf] %vm1908, %v3623
        %3647 = vst.msk [vmem:[%s3605 + $0x4] sm:$0xf] %vm1908, %v3625
        %3648 = vst.msk [vmem:[%s3605 + $0x8] sm:$0xf] %vm1908, %v3627
        %3649 = vst.msk [vmem:[%s3605 + $0xc] sm:$0xf] %vm1908, %v3629
        %3650 = vst.msk [vmem:[%s3605 + $0x10] sm:$0xf] %vm1908, %v3631
        %3651 = vst.msk [vmem:[%s3605 + $0x14] sm:$0xf] %vm1908, %v3633
        %3652 = vst.msk [vmem:[%s3605 + $0x18] sm:$0xf] %vm1908, %v3635
        %3653 = vst.msk [vmem:[%s3605 + $0x1c] sm:$0xf] %vm1908, %v3637
        %s3654 = sand.u32 %s76, 1
        %s3655 = scalar_lea.sflag [#allocation3], %s3654
        %s3656 = sand.u32 %s76, 1
        %s3657 = smul.addr %s3656, 64
        %s3658 = scalar_lea.vmem [#allocation2], %s3657
        // Predicated region
        $region25: #{tpu_custom_call.1} parent=23 // pred_check
          %p3659 = pneg %p86
        $region26: #{tpu_custom_call.1} parent=23 // pred_check_branch
          %3661 = sbr.rel (%p3659) target = $region28
        $region27: #{tpu_custom_call.1} parent=23 // pred_region
          %s3662 = smul.u32 2, %s21
          %s3663 = smul.u32 8, %s22
          %3665 = vsyncadd %s3655, 0
          %s3666 = smul.addr %s3662, 8
          %s3667 = sadd.s32 %s3663, %s3666
          %s3668 = smul.addr %s20, 16
          %s3669 = sadd.s32 %s3667, %s3668
          %s3670 = smul.addr %s3669, 4
          %s3671 = scalar_lea.hbm %s1, %s3670
          %s3672 = sshll.u32 %s3658, 4
          %s3673 = int_to_ptr.vmem [resolvable:$true] %s3672
          %s3674 = sshll.u32 %s3671, 4
          %s3675 = int_to_ptr.hbm [resolvable:$true] %s3674
          %3680 = dma.vmem_to_hbm [thread:$0]  %s3673, 1024, %s3675, %s3655, 64, 64, 4
        $region28: #{tpu_custom_call.1} parent=23 // pred_fallthru
          _
      $region24: #{tpu_custom_call.1} parent=5 // pred_fallthru
        _
      %p3681 = scmp.le.s32.totalorder 2, %s10
      // Predicated region
      $region29: #{tpu_custom_call.1} parent=5 // pred_check
        %p3682 = pneg %p3681
      $region30: #{tpu_custom_call.1} parent=5 // pred_check_branch
        %3684 = sbr.rel (%p3682) target = $region32
      $region31: #{tpu_custom_call.1} parent=5 // pred_region
        %s3685 = ssub.s32 %s10, 2
        // Predicated region
        $region33: #{tpu_custom_call.1} parent=31 // pred_check
          %p3686 = pneg %p92
        $region34: #{tpu_custom_call.1} parent=31 // pred_check_branch
          %3688 = sbr.rel (%p3686) target = $region36
        $region35: #{tpu_custom_call.1} parent=31 // pred_region
          %s3689 = sand.u32 %s77, 1
          %s3690 = scalar_lea.sflag [#allocation3], %s3689
          %s3691 = sand.u32 %s77, 1
          %s3692 = smul.addr %s3691, 64
          %s3693 = scalar_lea.vmem [#allocation2], %s3692
          %3695 = dma.done %s3690, 1024
        $region36: #{tpu_custom_call.1} parent=31 // pred_fallthru
          _
      $region32: #{tpu_custom_call.1} parent=5 // pred_fallthru
        _
    $region6: #{tpu_custom_call.1} parent=1 // loop_footer
      %s14 = sadd.s32 1, %s10
    $region7: #{tpu_custom_call.1} parent=1 // loop_footer_branch
      %9 = sbr.rel target = $region3
    $region8: #{tpu_custom_call.1} parent=1 // loop_exit
      _
    %3696 = vsyncpa [#allocation3], 1
    %s3697 = scalar_lea.sflag [#allocation3], 1
    %3698 = vsyncpa %s3697, 1

</llo_original>
